<compile_context>
chip_gen: v7x
topology: tpu7x:2x2x1
jax: 0.10.0
libtpu: 0.0.40
codegen_flags: <defaults>
</compile_context>

<pallas_src>
import functools

import numpy as np
import jax
import jax.numpy as jnp
from jax.experimental import pallas as pl
from jax.experimental.pallas import tpu as pltpu

BN_EPS = 1e-3
POOL_K = 5
POOL_S = 3
C_OUT = 128      # aux conv output channels (fixed by the module)
LANE = 128


# ----------------------------- fused kernel ---------------------------------
def _fused_aux_kernel(x_ref, pmat_ref, cw_ref, cb_ref, w1_ref, b1_ref, w2_ref,
                      b2_ref, o_ref, feat_ref, *, batch, n_pool):
    c = pl.program_id(0)   # fc1/fc2 column split (1 step by default; 2 on v7x megacore)

    # ---- stage 1: avg-pool (per-position matrix) -> 1x1 conv -> folded BN bias -> ReLU --
    pm = pmat_ref[...]                          # (P, HW)      f32
    cw = cw_ref[...]                            # (C_in, 128)  f32, BN scale folded in
    cb = cb_ref[...]                            # (1, 128)     f32, conv bias + BN shift
    for n in range(batch):                      # static unroll; batch is small
        x_n = x_ref[n]                          # (C_in, HW) native-layout slab, sample n
        pooled = jax.lax.dot_general(           # (P, C_in) = pmat @ x_n^T  (pool first)
            pm, x_n, (((1,), (1,)), ((), ())),
            preferred_element_type=jnp.float32)
        y = jnp.dot(pooled, cw, preferred_element_type=jnp.float32)   # (P, 128)
        feat_ref[n] = jnp.maximum(y + cb, 0.0)

    # ---- stage 2: fc1 over flattened features; local f32 accumulator (single write) -----
    acc = None
    for p in range(n_pool):                     # static unroll, P = OH*OW = 16
        f_p = feat_ref[:, p, :].astype(jnp.bfloat16)          # (N, 128)
        w_p = w1_ref[p * C_OUT:(p + 1) * C_OUT, :]            # (128, nh_c) bf16
        d = jnp.dot(f_p, w_p, preferred_element_type=jnp.float32)
        acc = d if acc is None else acc + d
    hidden = jnp.maximum(acc + b1_ref[...], 0.0)              # (N, nh_c) f32

    # ---- stage 3: fc2; bias only on the c == 0 partial (partials summed in wrapper) -----
    logits = jnp.dot(hidden.astype(jnp.bfloat16), w2_ref[...],
                     preferred_element_type=jnp.float32)      # (N, nc_pad)
    logits = logits + b2_ref[...] * (c == 0).astype(jnp.float32)
    o_ref[0] = logits


# ----------------------------- parameter prep (done once) -------------------
def prepare_params(conv_w, conv_b, gamma, beta, rmean, rvar, w1, b1, w2, b2):
    """Fold BN into the 1x1 conv, fold the channel-major flatten into fc1, cast streamed
    weights to bf16, pad fc2 to a lane-dense 128-wide output."""
    scale = gamma * jax.lax.rsqrt(rvar + BN_EPS)
    conv_w_f = (conv_w * scale[None, :]).astype(jnp.float32)               # (C_in, 128)
    conv_bias_f = ((conv_b - rmean) * scale + beta).reshape(1, -1)         # (1, 128)

    n_feat, nh = w1.shape                                                  # (2048, 1024)
    n_pool = n_feat // C_OUT                                               # P = OH*OW
    # torch.flatten on NCHW indexes features as c*P + p; the kernel's feat scratch is
    # (N, P, 128) with channels on lanes -> permute w1 rows once: new row p*128 + c.
    w1_perm = (w1.reshape(C_OUT, n_pool, nh)
                 .transpose(1, 0, 2)
                 .reshape(n_feat, nh)
                 .astype(jnp.bfloat16))
    b1_2d = b1.reshape(1, -1).astype(jnp.float32)

    num_classes = w2.shape[1]
    nc_pad = ((num_classes + LANE - 1) // LANE) * LANE
    w2_pad = jnp.zeros((w2.shape[0], nc_pad), jnp.float32).at[:, :num_classes].set(w2)
    w2_pad = w2_pad.astype(jnp.bfloat16)
    b2_pad = jnp.zeros((1, nc_pad), jnp.float32).at[0, :num_classes].set(b2)
    return conv_w_f, conv_bias_f, w1_perm, b1_2d, w2_pad, b2_pad


# ----------------------------- forward ---------------------------------------
def inception_aux_forward(x_nchw, conv_w_f, conv_bias_f, w1_perm, b1_2d, w2_pad,
                          b2_pad, *, num_classes, col_split=1):
    N, C, H, W = x_nchw.shape
    OH = (H - POOL_K) // POOL_S + 1
    OW = (W - POOL_K) // POOL_S + 1
    P = OH * OW
    HW = H * W
    n_feat, nh = w1_perm.shape
    assert P * C_OUT == n_feat, "spatial size inconsistent with fc1 in-features"
    assert nh % col_split == 0
    nh_c = nh // col_split
    nc_pad = w2_pad.shape[1]

    # Native NCHW layout -- this reshape is layout-free (no XLA transpose round trip).
    x3 = x_nchw.reshape(N, C, HW)

    # Per-output-position pooling matrix, O(1) in batch: row p averages 5x5 window p.
    pmat = np.zeros((P, HW), np.float32)
    inv = 1.0 / (POOL_K * POOL_K)
    for p_ in range(P):
        oh, ow = divmod(p_, OW)
        for kh in range(POOL_K):
            for kw in range(POOL_K):
                pmat[p_, (oh * POOL_S + kh) * W + (ow * POOL_S + kw)] = inv
    pmat = jnp.asarray(pmat)

    kernel = functools.partial(_fused_aux_kernel, batch=N, n_pool=P)
    # col_split == 1: single grid step (v5e/v6e).  col_split > 1: shard fc1/fc2 columns
    # across the v7x TensorCores (each core streams half of the w1 HBM traffic).
    semantics = (pltpu.CORE_PARALLEL,) if col_split > 1 else (pltpu.ARBITRARY,)

    partials = pl.pallas_call(
        kernel,
        out_shape=jax.ShapeDtypeStruct((col_split, N, nc_pad), jnp.float32),
        grid=(col_split,),
        in_specs=[
            pl.BlockSpec((N, C, HW), lambda c: (0, 0, 0)),        # x, native layout
            pl.BlockSpec((P, HW), lambda c: (0, 0)),              # pooling matrix
            pl.BlockSpec((C, C_OUT), lambda c: (0, 0)),           # folded 1x1 conv weight
            pl.BlockSpec((1, C_OUT), lambda c: (0, 0)),           # folded conv/BN bias
            pl.BlockSpec((n_feat, nh_c), lambda c: (0, c)),       # fc1 weight (bf16), full K
            pl.BlockSpec((1, nh_c), lambda c: (0, c)),            # fc1 bias (half)
            pl.BlockSpec((nh_c, nc_pad), lambda c: (c, 0)),       # fc2 weight (bf16) half
            pl.BlockSpec((1, nc_pad), lambda c: (0, 0)),          # fc2 bias (padded)
        ],
        out_specs=pl.BlockSpec((1, N, nc_pad), lambda c: (c, 0, 0)),
        scratch_shapes=[pltpu.VMEM((N, P, C_OUT), jnp.float32)],  # pooled/conv/ReLU feat
        compiler_params=pltpu.CompilerParams(
            dimension_semantics=semantics,
            vmem_limit_bytes=32 * 1024 * 1024),
    )(x3, pmat, conv_w_f, conv_bias_f, w1_perm, b1_2d, w2_pad, b2_pad)

    logits = partials[0] if col_split == 1 else partials.sum(axis=0)
    return logits[:, :num_classes]


# ----------------------------- pure-JAX reference ----------------------------
def ref_forward(x, conv_w, conv_b, gamma, beta, rmean, rvar, w1, b1, w2, b2):
    N, C, H, W = x.shape
    OH = (H - 5) // 3 + 1
    OW = (W - 5) // 3 + 1
    pooled = jnp.stack([
        jnp.stack([x[:, :, oh * 3:oh * 3 + 5, ow * 3:ow * 3 + 5].mean(axis=(2, 3))
                   for ow in range(OW)], axis=-1)
        for oh in range(OH)], axis=-2)                       # (N, C, OH, OW)
    y = jnp.einsum('nchw,co->nohw', pooled, conv_w) + conv_b[None, :, None, None]
    scale = gamma / jnp.sqrt(rvar + BN_EPS)
    shift = beta - rmean * scale
    y = jnp.maximum(y * scale[None, :, None, None] + shift[None, :, None, None], 0.0)
    feat = y.reshape(N, -1)
    h = jnp.maximum(feat @ w1 + b1, 0.0)
    return h @ w2 + b2


if __name__ == "__main__":
    # Spatial must be 14x14 so 128 * 4 * 4 == 2048, matching nn.Linear(2048, 1024).
    N, C_IN, H, W = 2, 8, 14, 14
    NUM_CLASSES = 10

    key = jax.random.PRNGKey(0)
    ks = jax.random.split(key, 11)
    x = jax.random.normal(ks[0], (N, C_IN, H, W), jnp.float32)

    # Deterministic synthetic parameters (shapes from InceptionAux.__init__).
    conv_w = jax.random.normal(ks[1], (C_IN, 128), jnp.float32) * 0.1       # 1x1 conv (C_in, C_out)
    conv_b = jax.random.normal(ks[2], (128,), jnp.float32) * 0.1
    gamma = 1.0 + 0.1 * jax.random.normal(ks[3], (128,), jnp.float32)
    beta = 0.1 * jax.random.normal(ks[4], (128,), jnp.float32)
    rmean = 0.1 * jax.random.normal(ks[5], (128,), jnp.float32)
    rvar = jnp.abs(jax.random.normal(ks[6], (128,), jnp.float32)) + 0.5
    w1 = jax.random.normal(ks[7], (2048, 1024), jnp.float32) * 0.02         # fc1 (transposed)
    b1 = jax.random.normal(ks[8], (1024,), jnp.float32) * 0.02
    w2 = jax.random.normal(ks[9], (1024, NUM_CLASSES), jnp.float32) * 0.02  # fc2 (transposed)
    b2 = jax.random.normal(ks[10], (NUM_CLASSES,), jnp.float32) * 0.02

    # One-time weight preprocessing (would be cached at weight-load time in practice).
    params = prepare_params(conv_w, conv_b, gamma, beta, rmean, rvar, w1, b1, w2, b2)
    params = jax.tree_util.tree_map(jax.block_until_ready, params)

    fwd = jax.jit(functools.partial(inception_aux_forward, num_classes=NUM_CLASSES))
    out = fwd(x, *params)
    out = jax.block_until_ready(out)

    ref = ref_forward(x, conv_w, conv_b, gamma, beta, rmean, rvar, w1, b1, w2, b2)
    assert out.shape == (N, NUM_CLASSES), out.shape
    np.testing.assert_allclose(np.asarray(out), np.asarray(ref), rtol=2e-2, atol=2e-2)

    print("KERNEL_OK")
</pallas_src>

<mosaic_0001>
module attributes {stable_mosaic.version = 11 : i64} {
  func.func @_fused_aux_kernel(%arg0: i32, %arg1: memref<2x8x196xf32, #tpu.memory_space<vmem>>, %arg2: memref<16x196xf32, #tpu.memory_space<vmem>>, %arg3: memref<8x128xf32, #tpu.memory_space<vmem>>, %arg4: memref<1x128xf32, #tpu.memory_space<vmem>>, %arg5: memref<2048x1024xbf16, #tpu.memory_space<vmem>>, %arg6: memref<1x1024xf32, #tpu.memory_space<vmem>>, %arg7: memref<1024x128xbf16, #tpu.memory_space<vmem>>, %arg8: memref<1x128xf32, #tpu.memory_space<vmem>>, %arg9: memref<1x2x128xf32, #tpu.memory_space<vmem>>, %arg10: memref<2x16x128xf32, #tpu.memory_space<vmem>>) attributes {dimension_semantics = [#tpu.dimension_semantics<arbitrary>], iteration_bounds = array<i64: 1>, scalar_prefetch = 0 : i64, scratch_operands = 1 : i64, tpu.core_type = #tpu.core_type<tc>, window_params = [{pipeline_mode = #tpu.pipeline_mode<synchronous>, transform_indices = @transform_0, window_bounds = array<i64: 2, 8, 196>}, {pipeline_mode = #tpu.pipeline_mode<synchronous>, transform_indices = @transform_1, window_bounds = array<i64: 16, 196>}, {pipeline_mode = #tpu.pipeline_mode<synchronous>, transform_indices = @transform_2, window_bounds = array<i64: 8, 128>}, {pipeline_mode = #tpu.pipeline_mode<synchronous>, transform_indices = @transform_3, window_bounds = array<i64: 1, 128>}, {transform_indices = @transform_4, window_bounds = array<i64: 2048, 1024>}, {transform_indices = @transform_5, window_bounds = array<i64: 1, 1024>}, {transform_indices = @transform_6, window_bounds = array<i64: 1024, 128>}, {pipeline_mode = #tpu.pipeline_mode<synchronous>, transform_indices = @transform_7, window_bounds = array<i64: 1, 128>}, {transform_indices = @transform_8, window_bounds = array<i64: 1, 2, 128>}]} {
    %c0 = arith.constant 0 : index
    %c0_0 = arith.constant 0 : index
    %0 = vector.load %arg2[%c0, %c0_0] : memref<16x196xf32, #tpu.memory_space<vmem>>, vector<16x196xf32>
    %c0_1 = arith.constant 0 : index
    %c0_2 = arith.constant 0 : index
    %1 = vector.load %arg3[%c0_1, %c0_2] : memref<8x128xf32, #tpu.memory_space<vmem>>, vector<8x128xf32>
    %c0_3 = arith.constant 0 : index
    %c0_4 = arith.constant 0 : index
    %2 = vector.load %arg4[%c0_3, %c0_4] : memref<1x128xf32, #tpu.memory_space<vmem>>, vector<1x128xf32>
    %c0_5 = arith.constant 0 : index
    %c0_6 = arith.constant 0 : index
    %c0_7 = arith.constant 0 : index
    %3 = vector.load %arg1[%c0_5, %c0_6, %c0_7] : memref<2x8x196xf32, #tpu.memory_space<vmem>>, vector<1x8x196xf32>
    %4 = vector.shape_cast %3 : vector<1x8x196xf32> to vector<8x196xf32>
    %cst = arith.constant dense<0.000000e+00> : vector<16x8xf32>
    %5 = tpu.matmul %0, %4, %cst {dimension_numbers = #tpu.dot_dimension_numbers<[1], [1], [0], [0], [0, 0, 1, 0], [], []>} : vector<16x196xf32>, vector<8x196xf32>, vector<16x8xf32> -> vector<16x8xf32>
    %cst_8 = arith.constant dense<0.000000e+00> : vector<16x128xf32>
    %6 = tpu.matmul %5, %1, %cst_8 {dimension_numbers = #tpu.dot_dimension_numbers<[1], [0], [0], [1], [0, 0, 1, 1], [], []>} : vector<16x8xf32>, vector<8x128xf32>, vector<16x128xf32> -> vector<16x128xf32>
    %7 = vector.broadcast %2 : vector<1x128xf32> to vector<16x128xf32>
    %8 = arith.addf %6, %7 : vector<16x128xf32>
    %cst_9 = arith.constant 0.000000e+00 : f32
    %9 = vector.broadcast %cst_9 : f32 to vector<16x128xf32>
    %10 = arith.maximumf %8, %9 : vector<16x128xf32>
    %c0_10 = arith.constant 0 : index
    %c0_11 = arith.constant 0 : index
    %c0_12 = arith.constant 0 : index
    %11 = vector.load %arg10[%c0_10, %c0_11, %c0_12] : memref<2x16x128xf32, #tpu.memory_space<vmem>>, vector<1x16x128xf32>
    %12 = vector.shape_cast %11 : vector<1x16x128xf32> to vector<16x128xf32>
    %13 = vector.shape_cast %10 : vector<16x128xf32> to vector<1x16x128xf32>
    tpu.vector_store %arg10[%c0_10, %c0_11, %c0_12], %13 {strides = array<i32>} : memref<2x16x128xf32, #tpu.memory_space<vmem>>, vector<1x16x128xf32>,
    %c1 = arith.constant 1 : index
    %c0_13 = arith.constant 0 : index
    %c0_14 = arith.constant 0 : index
    %14 = vector.load %arg1[%c1, %c0_13, %c0_14] : memref<2x8x196xf32, #tpu.memory_space<vmem>>, vector<1x8x196xf32>
    %15 = vector.shape_cast %14 : vector<1x8x196xf32> to vector<8x196xf32>
    %cst_15 = arith.constant dense<0.000000e+00> : vector<16x8xf32>
    %16 = tpu.matmul %0, %15, %cst_15 {dimension_numbers = #tpu.dot_dimension_numbers<[1], [1], [0], [0], [0, 0, 1, 0], [], []>} : vector<16x196xf32>, vector<8x196xf32>, vector<16x8xf32> -> vector<16x8xf32>
    %cst_16 = arith.constant dense<0.000000e+00> : vector<16x128xf32>
    %17 = tpu.matmul %16, %1, %cst_16 {dimension_numbers = #tpu.dot_dimension_numbers<[1], [0], [0], [1], [0, 0, 1, 1], [], []>} : vector<16x8xf32>, vector<8x128xf32>, vector<16x128xf32> -> vector<16x128xf32>
    %18 = vector.broadcast %2 : vector<1x128xf32> to vector<16x128xf32>
    %19 = arith.addf %17, %18 : vector<16x128xf32>
    %cst_17 = arith.constant 0.000000e+00 : f32
    %20 = vector.broadcast %cst_17 : f32 to vector<16x128xf32>
    %21 = arith.maximumf %19, %20 : vector<16x128xf32>
    %c1_18 = arith.constant 1 : index
    %c0_19 = arith.constant 0 : index
    %c0_20 = arith.constant 0 : index
    %22 = vector.load %arg10[%c1_18, %c0_19, %c0_20] : memref<2x16x128xf32, #tpu.memory_space<vmem>>, vector<1x16x128xf32>
    %23 = vector.shape_cast %22 : vector<1x16x128xf32> to vector<16x128xf32>
    %24 = vector.shape_cast %21 : vector<16x128xf32> to vector<1x16x128xf32>
    tpu.vector_store %arg10[%c1_18, %c0_19, %c0_20], %24 {strides = array<i32>} : memref<2x16x128xf32, #tpu.memory_space<vmem>>, vector<1x16x128xf32>,
    %c0_21 = arith.constant 0 : index
    %c0_22 = arith.constant 0 : index
    %c0_23 = arith.constant 0 : index
    %25 = vector.load %arg10[%c0_21, %c0_22, %c0_23] : memref<2x16x128xf32, #tpu.memory_space<vmem>>, vector<2x1x128xf32>
    %26 = vector.shape_cast %25 : vector<2x1x128xf32> to vector<2x128xf32>
    %27 = arith.truncf %26 : vector<2x128xf32> to vector<2x128xbf16>
    %c0_24 = arith.constant 0 : index
    %c0_25 = arith.constant 0 : index
    %28 = vector.load %arg5[%c0_24, %c0_25] : memref<2048x1024xbf16, #tpu.memory_space<vmem>>, vector<128x1024xbf16>
    %cst_26 = arith.constant dense<0.000000e+00> : vector<2x1024xf32>
    %29 = tpu.matmul %27, %28, %cst_26 {dimension_numbers = #tpu.dot_dimension_numbers<[1], [0], [0], [1], [0, 0, 1, 1], [], []>} : vector<2x128xbf16>, vector<128x1024xbf16>, vector<2x1024xf32> -> vector<2x1024xf32>
    %c0_27 = arith.constant 0 : index
    %c1_28 = arith.constant 1 : index
    %c0_29 = arith.constant 0 : index
    %30 = vector.load %arg10[%c0_27, %c1_28, %c0_29] : memref<2x16x128xf32, #tpu.memory_space<vmem>>, vector<2x1x128xf32>
    %31 = vector.shape_cast %30 : vector<2x1x128xf32> to vector<2x128xf32>
    %32 = arith.truncf %31 : vector<2x128xf32> to vector<2x128xbf16>
    %c128 = arith.constant 128 : index
    %c0_30 = arith.constant 0 : index
    %33 = vector.load %arg5[%c128, %c0_30] : memref<2048x1024xbf16, #tpu.memory_space<vmem>>, vector<128x1024xbf16>
    %cst_31 = arith.constant dense<0.000000e+00> : vector<2x1024xf32>
    %34 = tpu.matmul %32, %33, %cst_31 {dimension_numbers = #tpu.dot_dimension_numbers<[1], [0], [0], [1], [0, 0, 1, 1], [], []>} : vector<2x128xbf16>, vector<128x1024xbf16>, vector<2x1024xf32> -> vector<2x1024xf32>
    %35 = arith.addf %29, %34 : vector<2x1024xf32>
    %c0_32 = arith.constant 0 : index
    %c2 = arith.constant 2 : index
    %c0_33 = arith.constant 0 : index
    %36 = vector.load %arg10[%c0_32, %c2, %c0_33] : memref<2x16x128xf32, #tpu.memory_space<vmem>>, vector<2x1x128xf32>
    %37 = vector.shape_cast %36 : vector<2x1x128xf32> to vector<2x128xf32>
    %38 = arith.truncf %37 : vector<2x128xf32> to vector<2x128xbf16>
    %c256 = arith.constant 256 : index
    %c0_34 = arith.constant 0 : index
    %39 = vector.load %arg5[%c256, %c0_34] : memref<2048x1024xbf16, #tpu.memory_space<vmem>>, vector<128x1024xbf16>
    %cst_35 = arith.constant dense<0.000000e+00> : vector<2x1024xf32>
    %40 = tpu.matmul %38, %39, %cst_35 {dimension_numbers = #tpu.dot_dimension_numbers<[1], [0], [0], [1], [0, 0, 1, 1], [], []>} : vector<2x128xbf16>, vector<128x1024xbf16>, vector<2x1024xf32> -> vector<2x1024xf32>
    %41 = arith.addf %35, %40 : vector<2x1024xf32>
    %c0_36 = arith.constant 0 : index
    %c3 = arith.constant 3 : index
    %c0_37 = arith.constant 0 : index
    %42 = vector.load %arg10[%c0_36, %c3, %c0_37] : memref<2x16x128xf32, #tpu.memory_space<vmem>>, vector<2x1x128xf32>
    %43 = vector.shape_cast %42 : vector<2x1x128xf32> to vector<2x128xf32>
    %44 = arith.truncf %43 : vector<2x128xf32> to vector<2x128xbf16>
    %c384 = arith.constant 384 : index
    %c0_38 = arith.constant 0 : index
    %45 = vector.load %arg5[%c384, %c0_38] : memref<2048x1024xbf16, #tpu.memory_space<vmem>>, vector<128x1024xbf16>
    %cst_39 = arith.constant dense<0.000000e+00> : vector<2x1024xf32>
    %46 = tpu.matmul %44, %45, %cst_39 {dimension_numbers = #tpu.dot_dimension_numbers<[1], [0], [0], [1], [0, 0, 1, 1], [], []>} : vector<2x128xbf16>, vector<128x1024xbf16>, vector<2x1024xf32> -> vector<2x1024xf32>
    %47 = arith.addf %41, %46 : vector<2x1024xf32>
    %c0_40 = arith.constant 0 : index
    %c4 = arith.constant 4 : index
    %c0_41 = arith.constant 0 : index
    %48 = vector.load %arg10[%c0_40, %c4, %c0_41] : memref<2x16x128xf32, #tpu.memory_space<vmem>>, vector<2x1x128xf32>
    %49 = vector.shape_cast %48 : vector<2x1x128xf32> to vector<2x128xf32>
    %50 = arith.truncf %49 : vector<2x128xf32> to vector<2x128xbf16>
    %c512 = arith.constant 512 : index
    %c0_42 = arith.constant 0 : index
    %51 = vector.load %arg5[%c512, %c0_42] : memref<2048x1024xbf16, #tpu.memory_space<vmem>>, vector<128x1024xbf16>
    %cst_43 = arith.constant dense<0.000000e+00> : vector<2x1024xf32>
    %52 = tpu.matmul %50, %51, %cst_43 {dimension_numbers = #tpu.dot_dimension_numbers<[1], [0], [0], [1], [0, 0, 1, 1], [], []>} : vector<2x128xbf16>, vector<128x1024xbf16>, vector<2x1024xf32> -> vector<2x1024xf32>
    %53 = arith.addf %47, %52 : vector<2x1024xf32>
    %c0_44 = arith.constant 0 : index
    %c5 = arith.constant 5 : index
    %c0_45 = arith.constant 0 : index
    %54 = vector.load %arg10[%c0_44, %c5, %c0_45] : memref<2x16x128xf32, #tpu.memory_space<vmem>>, vector<2x1x128xf32>
    %55 = vector.shape_cast %54 : vector<2x1x128xf32> to vector<2x128xf32>
    %56 = arith.truncf %55 : vector<2x128xf32> to vector<2x128xbf16>
    %c640 = arith.constant 640 : index
    %c0_46 = arith.constant 0 : index
    %57 = vector.load %arg5[%c640, %c0_46] : memref<2048x1024xbf16, #tpu.memory_space<vmem>>, vector<128x1024xbf16>
    %cst_47 = arith.constant dense<0.000000e+00> : vector<2x1024xf32>
    %58 = tpu.matmul %56, %57, %cst_47 {dimension_numbers = #tpu.dot_dimension_numbers<[1], [0], [0], [1], [0, 0, 1, 1], [], []>} : vector<2x128xbf16>, vector<128x1024xbf16>, vector<2x1024xf32> -> vector<2x1024xf32>
    %59 = arith.addf %53, %58 : vector<2x1024xf32>
    %c0_48 = arith.constant 0 : index
    %c6 = arith.constant 6 : index
    %c0_49 = arith.constant 0 : index
    %60 = vector.load %arg10[%c0_48, %c6, %c0_49] : memref<2x16x128xf32, #tpu.memory_space<vmem>>, vector<2x1x128xf32>
    %61 = vector.shape_cast %60 : vector<2x1x128xf32> to vector<2x128xf32>
    %62 = arith.truncf %61 : vector<2x128xf32> to vector<2x128xbf16>
    %c768 = arith.constant 768 : index
    %c0_50 = arith.constant 0 : index
    %63 = vector.load %arg5[%c768, %c0_50] : memref<2048x1024xbf16, #tpu.memory_space<vmem>>, vector<128x1024xbf16>
    %cst_51 = arith.constant dense<0.000000e+00> : vector<2x1024xf32>
    %64 = tpu.matmul %62, %63, %cst_51 {dimension_numbers = #tpu.dot_dimension_numbers<[1], [0], [0], [1], [0, 0, 1, 1], [], []>} : vector<2x128xbf16>, vector<128x1024xbf16>, vector<2x1024xf32> -> vector<2x1024xf32>
    %65 = arith.addf %59, %64 : vector<2x1024xf32>
    %c0_52 = arith.constant 0 : index
    %c7 = arith.constant 7 : index
    %c0_53 = arith.constant 0 : index
    %66 = vector.load %arg10[%c0_52, %c7, %c0_53] : memref<2x16x128xf32, #tpu.memory_space<vmem>>, vector<2x1x128xf32>
    %67 = vector.shape_cast %66 : vector<2x1x128xf32> to vector<2x128xf32>
    %68 = arith.truncf %67 : vector<2x128xf32> to vector<2x128xbf16>
    %c896 = arith.constant 896 : index
    %c0_54 = arith.constant 0 : index
    %69 = vector.load %arg5[%c896, %c0_54] : memref<2048x1024xbf16, #tpu.memory_space<vmem>>, vector<128x1024xbf16>
    %cst_55 = arith.constant dense<0.000000e+00> : vector<2x1024xf32>
    %70 = tpu.matmul %68, %69, %cst_55 {dimension_numbers = #tpu.dot_dimension_numbers<[1], [0], [0], [1], [0, 0, 1, 1], [], []>} : vector<2x128xbf16>, vector<128x1024xbf16>, vector<2x1024xf32> -> vector<2x1024xf32>
    %71 = arith.addf %65, %70 : vector<2x1024xf32>
    %c0_56 = arith.constant 0 : index
    %c8 = arith.constant 8 : index
    %c0_57 = arith.constant 0 : index
    %72 = vector.load %arg10[%c0_56, %c8, %c0_57] : memref<2x16x128xf32, #tpu.memory_space<vmem>>, vector<2x1x128xf32>
    %73 = vector.shape_cast %72 : vector<2x1x128xf32> to vector<2x128xf32>
    %74 = arith.truncf %73 : vector<2x128xf32> to vector<2x128xbf16>
    %c1024 = arith.constant 1024 : index
    %c0_58 = arith.constant 0 : index
    %75 = vector.load %arg5[%c1024, %c0_58] : memref<2048x1024xbf16, #tpu.memory_space<vmem>>, vector<128x1024xbf16>
    %cst_59 = arith.constant dense<0.000000e+00> : vector<2x1024xf32>
    %76 = tpu.matmul %74, %75, %cst_59 {dimension_numbers = #tpu.dot_dimension_numbers<[1], [0], [0], [1], [0, 0, 1, 1], [], []>} : vector<2x128xbf16>, vector<128x1024xbf16>, vector<2x1024xf32> -> vector<2x1024xf32>
    %77 = arith.addf %71, %76 : vector<2x1024xf32>
    %c0_60 = arith.constant 0 : index
    %c9 = arith.constant 9 : index
    %c0_61 = arith.constant 0 : index
    %78 = vector.load %arg10[%c0_60, %c9, %c0_61] : memref<2x16x128xf32, #tpu.memory_space<vmem>>, vector<2x1x128xf32>
    %79 = vector.shape_cast %78 : vector<2x1x128xf32> to vector<2x128xf32>
    %80 = arith.truncf %79 : vector<2x128xf32> to vector<2x128xbf16>
    %c1152 = arith.constant 1152 : index
    %c0_62 = arith.constant 0 : index
    %81 = vector.load %arg5[%c1152, %c0_62] : memref<2048x1024xbf16, #tpu.memory_space<vmem>>, vector<128x1024xbf16>
    %cst_63 = arith.constant dense<0.000000e+00> : vector<2x1024xf32>
    %82 = tpu.matmul %80, %81, %cst_63 {dimension_numbers = #tpu.dot_dimension_numbers<[1], [0], [0], [1], [0, 0, 1, 1], [], []>} : vector<2x128xbf16>, vector<128x1024xbf16>, vector<2x1024xf32> -> vector<2x1024xf32>
    %83 = arith.addf %77, %82 : vector<2x1024xf32>
    %c0_64 = arith.constant 0 : index
    %c10 = arith.constant 10 : index
    %c0_65 = arith.constant 0 : index
    %84 = vector.load %arg10[%c0_64, %c10, %c0_65] : memref<2x16x128xf32, #tpu.memory_space<vmem>>, vector<2x1x128xf32>
    %85 = vector.shape_cast %84 : vector<2x1x128xf32> to vector<2x128xf32>
    %86 = arith.truncf %85 : vector<2x128xf32> to vector<2x128xbf16>
    %c1280 = arith.constant 1280 : index
    %c0_66 = arith.constant 0 : index
    %87 = vector.load %arg5[%c1280, %c0_66] : memref<2048x1024xbf16, #tpu.memory_space<vmem>>, vector<128x1024xbf16>
    %cst_67 = arith.constant dense<0.000000e+00> : vector<2x1024xf32>
    %88 = tpu.matmul %86, %87, %cst_67 {dimension_numbers = #tpu.dot_dimension_numbers<[1], [0], [0], [1], [0, 0, 1, 1], [], []>} : vector<2x128xbf16>, vector<128x1024xbf16>, vector<2x1024xf32> -> vector<2x1024xf32>
    %89 = arith.addf %83, %88 : vector<2x1024xf32>
    %c0_68 = arith.constant 0 : index
    %c11 = arith.constant 11 : index
    %c0_69 = arith.constant 0 : index
    %90 = vector.load %arg10[%c0_68, %c11, %c0_69] : memref<2x16x128xf32, #tpu.memory_space<vmem>>, vector<2x1x128xf32>
    %91 = vector.shape_cast %90 : vector<2x1x128xf32> to vector<2x128xf32>
    %92 = arith.truncf %91 : vector<2x128xf32> to vector<2x128xbf16>
    %c1408 = arith.constant 1408 : index
    %c0_70 = arith.constant 0 : index
    %93 = vector.load %arg5[%c1408, %c0_70] : memref<2048x1024xbf16, #tpu.memory_space<vmem>>, vector<128x1024xbf16>
    %cst_71 = arith.constant dense<0.000000e+00> : vector<2x1024xf32>
    %94 = tpu.matmul %92, %93, %cst_71 {dimension_numbers = #tpu.dot_dimension_numbers<[1], [0], [0], [1], [0, 0, 1, 1], [], []>} : vector<2x128xbf16>, vector<128x1024xbf16>, vector<2x1024xf32> -> vector<2x1024xf32>
    %95 = arith.addf %89, %94 : vector<2x1024xf32>
    %c0_72 = arith.constant 0 : index
    %c12 = arith.constant 12 : index
    %c0_73 = arith.constant 0 : index
    %96 = vector.load %arg10[%c0_72, %c12, %c0_73] : memref<2x16x128xf32, #tpu.memory_space<vmem>>, vector<2x1x128xf32>
    %97 = vector.shape_cast %96 : vector<2x1x128xf32> to vector<2x128xf32>
    %98 = arith.truncf %97 : vector<2x128xf32> to vector<2x128xbf16>
    %c1536 = arith.constant 1536 : index
    %c0_74 = arith.constant 0 : index
    %99 = vector.load %arg5[%c1536, %c0_74] : memref<2048x1024xbf16, #tpu.memory_space<vmem>>, vector<128x1024xbf16>
    %cst_75 = arith.constant dense<0.000000e+00> : vector<2x1024xf32>
    %100 = tpu.matmul %98, %99, %cst_75 {dimension_numbers = #tpu.dot_dimension_numbers<[1], [0], [0], [1], [0, 0, 1, 1], [], []>} : vector<2x128xbf16>, vector<128x1024xbf16>, vector<2x1024xf32> -> vector<2x1024xf32>
    %101 = arith.addf %95, %100 : vector<2x1024xf32>
    %c0_76 = arith.constant 0 : index
    %c13 = arith.constant 13 : index
    %c0_77 = arith.constant 0 : index
    %102 = vector.load %arg10[%c0_76, %c13, %c0_77] : memref<2x16x128xf32, #tpu.memory_space<vmem>>, vector<2x1x128xf32>
    %103 = vector.shape_cast %102 : vector<2x1x128xf32> to vector<2x128xf32>
    %104 = arith.truncf %103 : vector<2x128xf32> to vector<2x128xbf16>
    %c1664 = arith.constant 1664 : index
    %c0_78 = arith.constant 0 : index
    %105 = vector.load %arg5[%c1664, %c0_78] : memref<2048x1024xbf16, #tpu.memory_space<vmem>>, vector<128x1024xbf16>
    %cst_79 = arith.constant dense<0.000000e+00> : vector<2x1024xf32>
    %106 = tpu.matmul %104, %105, %cst_79 {dimension_numbers = #tpu.dot_dimension_numbers<[1], [0], [0], [1], [0, 0, 1, 1], [], []>} : vector<2x128xbf16>, vector<128x1024xbf16>, vector<2x1024xf32> -> vector<2x1024xf32>
    %107 = arith.addf %101, %106 : vector<2x1024xf32>
    %c0_80 = arith.constant 0 : index
    %c14 = arith.constant 14 : index
    %c0_81 = arith.constant 0 : index
    %108 = vector.load %arg10[%c0_80, %c14, %c0_81] : memref<2x16x128xf32, #tpu.memory_space<vmem>>, vector<2x1x128xf32>
    %109 = vector.shape_cast %108 : vector<2x1x128xf32> to vector<2x128xf32>
    %110 = arith.truncf %109 : vector<2x128xf32> to vector<2x128xbf16>
    %c1792 = arith.constant 1792 : index
    %c0_82 = arith.constant 0 : index
    %111 = vector.load %arg5[%c1792, %c0_82] : memref<2048x1024xbf16, #tpu.memory_space<vmem>>, vector<128x1024xbf16>
    %cst_83 = arith.constant dense<0.000000e+00> : vector<2x1024xf32>
    %112 = tpu.matmul %110, %111, %cst_83 {dimension_numbers = #tpu.dot_dimension_numbers<[1], [0], [0], [1], [0, 0, 1, 1], [], []>} : vector<2x128xbf16>, vector<128x1024xbf16>, vector<2x1024xf32> -> vector<2x1024xf32>
    %113 = arith.addf %107, %112 : vector<2x1024xf32>
    %c0_84 = arith.constant 0 : index
    %c15 = arith.constant 15 : index
    %c0_85 = arith.constant 0 : index
    %114 = vector.load %arg10[%c0_84, %c15, %c0_85] : memref<2x16x128xf32, #tpu.memory_space<vmem>>, vector<2x1x128xf32>
    %115 = vector.shape_cast %114 : vector<2x1x128xf32> to vector<2x128xf32>
    %116 = arith.truncf %115 : vector<2x128xf32> to vector<2x128xbf16>
    %c1920 = arith.constant 1920 : index
    %c0_86 = arith.constant 0 : index
    %117 = vector.load %arg5[%c1920, %c0_86] : memref<2048x1024xbf16, #tpu.memory_space<vmem>>, vector<128x1024xbf16>
    %cst_87 = arith.constant dense<0.000000e+00> : vector<2x1024xf32>
    %118 = tpu.matmul %116, %117, %cst_87 {dimension_numbers = #tpu.dot_dimension_numbers<[1], [0], [0], [1], [0, 0, 1, 1], [], []>} : vector<2x128xbf16>, vector<128x1024xbf16>, vector<2x1024xf32> -> vector<2x1024xf32>
    %119 = arith.addf %113, %118 : vector<2x1024xf32>
    %c0_88 = arith.constant 0 : index
    %c0_89 = arith.constant 0 : index
    %120 = vector.load %arg6[%c0_88, %c0_89] : memref<1x1024xf32, #tpu.memory_space<vmem>>, vector<1x1024xf32>
    %121 = vector.broadcast %120 : vector<1x1024xf32> to vector<2x1024xf32>
    %122 = arith.addf %119, %121 : vector<2x1024xf32>
    %cst_90 = arith.constant 0.000000e+00 : f32
    %123 = vector.broadcast %cst_90 : f32 to vector<2x1024xf32>
    %124 = arith.maximumf %122, %123 : vector<2x1024xf32>
    %125 = arith.truncf %124 : vector<2x1024xf32> to vector<2x1024xbf16>
    %c0_91 = arith.constant 0 : index
    %c0_92 = arith.constant 0 : index
    %126 = vector.load %arg7[%c0_91, %c0_92] : memref<1024x128xbf16, #tpu.memory_space<vmem>>, vector<1024x128xbf16>
    %cst_93 = arith.constant dense<0.000000e+00> : vector<2x128xf32>
    %127 = tpu.matmul %125, %126, %cst_93 {dimension_numbers = #tpu.dot_dimension_numbers<[1], [0], [0], [1], [0, 0, 1, 1], [], []>} : vector<2x1024xbf16>, vector<1024x128xbf16>, vector<2x128xf32> -> vector<2x128xf32>
    %c0_94 = arith.constant 0 : index
    %c0_95 = arith.constant 0 : index
    %128 = vector.load %arg8[%c0_94, %c0_95] : memref<1x128xf32, #tpu.memory_space<vmem>>, vector<1x128xf32>
    %c0_i32 = arith.constant 0 : i32
    %129 = arith.cmpi eq, %arg0, %c0_i32 : i32
    %130 = arith.extui %129 : i1 to i32
    %131 = arith.sitofp %130 : i32 to f32
    %132 = vector.broadcast %131 : f32 to vector<1x128xf32>
    %133 = arith.mulf %128, %132 : vector<1x128xf32>
    %134 = vector.broadcast %133 : vector<1x128xf32> to vector<2x128xf32>
    %135 = arith.addf %127, %134 : vector<2x128xf32>
    %c0_96 = arith.constant 0 : index
    %c0_97 = arith.constant 0 : index
    %c0_98 = arith.constant 0 : index
    %136 = vector.load %arg9[%c0_96, %c0_97, %c0_98] : memref<1x2x128xf32, #tpu.memory_space<vmem>>, vector<1x2x128xf32>
    %137 = vector.shape_cast %136 : vector<1x2x128xf32> to vector<2x128xf32>
    %138 = vector.shape_cast %135 : vector<2x128xf32> to vector<1x2x128xf32>
    tpu.vector_store %arg9[%c0_96, %c0_97, %c0_98], %138 {strides = array<i32>} : memref<1x2x128xf32, #tpu.memory_space<vmem>>, vector<1x2x128xf32>,
    return
  }
  func.func @transform_0(%arg0: i32) -> (i32, i32, i32) {
    %c0_i32 = arith.constant 0 : i32
    %c0_i32_0 = arith.constant 0 : i32
    %c0_i32_1 = arith.constant 0 : i32
    %c0_i32_2 = arith.constant 0 : i32
    return %c0_i32, %c0_i32_0, %c0_i32_1 : i32, i32, i32
  }
  func.func @transform_1(%arg0: i32) -> (i32, i32) {
    %c0_i32 = arith.constant 0 : i32
    %c0_i32_0 = arith.constant 0 : i32
    %c0_i32_1 = arith.constant 0 : i32
    return %c0_i32, %c0_i32_0 : i32, i32
  }
  func.func @transform_2(%arg0: i32) -> (i32, i32) {
    %c0_i32 = arith.constant 0 : i32
    %c0_i32_0 = arith.constant 0 : i32
    %c0_i32_1 = arith.constant 0 : i32
    return %c0_i32, %c0_i32_0 : i32, i32
  }
  func.func @transform_3(%arg0: i32) -> (i32, i32) {
    %c0_i32 = arith.constant 0 : i32
    %c0_i32_0 = arith.constant 0 : i32
    %c0_i32_1 = arith.constant 0 : i32
    return %c0_i32, %c0_i32_0 : i32, i32
  }
  func.func @transform_4(%arg0: i32) -> (i32, i32) {
    %c0_i32 = arith.constant 0 : i32
    %c0_i32_0 = arith.constant 0 : i32
    return %c0_i32, %arg0 : i32, i32
  }
  func.func @transform_5(%arg0: i32) -> (i32, i32) {
    %c0_i32 = arith.constant 0 : i32
    %c0_i32_0 = arith.constant 0 : i32
    return %c0_i32, %arg0 : i32, i32
  }
  func.func @transform_6(%arg0: i32) -> (i32, i32) {
    %c0_i32 = arith.constant 0 : i32
    %c0_i32_0 = arith.constant 0 : i32
    return %arg0, %c0_i32 : i32, i32
  }
  func.func @transform_7(%arg0: i32) -> (i32, i32) {
    %c0_i32 = arith.constant 0 : i32
    %c0_i32_0 = arith.constant 0 : i32
    %c0_i32_1 = arith.constant 0 : i32
    return %c0_i32, %c0_i32_0 : i32, i32
  }
  func.func @transform_8(%arg0: i32) -> (i32, i32, i32) {
    %c0_i32 = arith.constant 0 : i32
    %c0_i32_0 = arith.constant 0 : i32
    %c0_i32_1 = arith.constant 0 : i32
    return %arg0, %c0_i32, %c0_i32_0 : i32, i32, i32
  }
}

</mosaic_0001>

<llo_original>
// kernel: inception_aux_forward.1
$region0: #{inception_aux_forward.1}
  #allocation0 [shape = 'u32[]', space=smem, size = 0x4, offset = 0x4, fixed_abs, tag = 'smem constant byte address 0x4 - core index']
  #allocation1 [shape = 'u32[144,128]{1,0:T(1,128)}', space=vmem, size = 0x12000, scoped, tag = 'internal scratch']
  #allocation2 [shape = 'f32[2,16,128]{2,1,0:T(8,128)}', space=vmem, size = 0x4000, scoped, tag = 'scratch operand']
  %s0 = inlined_call_operand.vmem [shape: f32[2,8,196], index: 0, kind: input, shape index: {}]
  %s1 = inlined_call_operand.hbm [shape: f32[16,196], index: 1, kind: input, shape index: {}]
  %s2 = inlined_call_operand.hbm [shape: f32[8,128], index: 2, kind: input, shape index: {}]
  %s3 = inlined_call_operand.hbm [shape: f32[1,128], index: 3, kind: input, shape index: {}]
  %s4 = inlined_call_operand.hbm [shape: bf16[2048,1024], index: 4, kind: input, shape index: {}]
  %s5 = inlined_call_operand.hbm [shape: f32[1,1024], index: 5, kind: input, shape index: {}]
  %s6 = inlined_call_operand.hbm [shape: bf16[1024,128], index: 6, kind: input, shape index: {}]
  %s7 = inlined_call_operand.hbm [shape: f32[1,128], index: 7, kind: input, shape index: {}]
  %s8 = inlined_call_operand.hbm [shape: f32[1,2,128], index: 8, kind: output, shape index: {}]
  %s9 = sld [smem:[#allocation0]]
  $region70: #{inception_aux_forward.1} parent=0
    _
  %s11 = ssub.s32 1, %s9
  %s12 = scalar_select 0, %s11, %s9
  $region1: #{inception_aux_forward.1} parent=0
    #allocation3 [shape = 'u8[16384]{0}', space=vmem, size = 0x4000, scoped, tag = 'input window, operand 1, single buffered']
    #allocation4 [shape = 's32[1]{0}', space=sflag, size = 0x4, scoped, tag = 'scoped memory for inception_aux_forward.1']
    #allocation5 [shape = 's32[1]{0}', space=sflag, size = 0x4, scoped, tag = 'scoped memory for inception_aux_forward.1']
    #allocation6 [shape = 'u8[4096]{0}', space=vmem, size = 0x1000, scoped, tag = 'input window, operand 2, single buffered']
    #allocation7 [shape = 's32[1]{0}', space=sflag, size = 0x4, scoped, tag = 'scoped memory for inception_aux_forward.1']
    #allocation8 [shape = 'u8[512]{0}', space=vmem, size = 0x400, scoped, tag = 'input window, operand 3, single buffered']
    #allocation9 [shape = 'u8[4194304]{0}', space=vmem, size = 0x400000, scoped, tag = 'input window, operand 4, single buffered']
    #allocation10 [shape = 's32[1]{0}', space=sflag, size = 0x4, scoped, tag = 'scoped memory for inception_aux_forward.1']
    #allocation11 [shape = 'u8[4096]{0}', space=vmem, size = 0x1000, scoped, tag = 'input window, operand 5, single buffered']
    #allocation12 [shape = 'u8[262144]{0}', space=vmem, size = 0x40000, scoped, tag = 'input window, operand 6, single buffered']
    #allocation13 [shape = 's32[1]{0}', space=sflag, size = 0x4, scoped, tag = 'scoped memory for inception_aux_forward.1']
    #allocation14 [shape = 'u8[512]{0}', space=vmem, size = 0x400, scoped, tag = 'input window, operand 7, single buffered']
    #allocation15 [shape = 'u8[1024]{0}', space=vmem, size = 0x400, scoped, tag = 'output window, operand 0, single buffered']
    %13 = vsyncpa [#allocation4], 0
    %14 = vsyncpa [#allocation7], 0
    %15 = vsyncpa [#allocation10], 0
    %16 = vsyncpa [#allocation13], 0
    %17 = vsyncpa [#allocation5], 0
    // Predicated region
    $region2: #{inception_aux_forward.1} parent=1 // pred_check
      _
    $region3: #{inception_aux_forward.1} parent=1 // pred_check_branch
      %19 = sbr.rel (0) target = $region5
    $region4: #{inception_aux_forward.1} parent=1 // pred_region
      _
    $region5: #{inception_aux_forward.1} parent=1 // pred_fallthru
      _
    // Predicated region
    $region6: #{inception_aux_forward.1} parent=1 // pred_check
      _
    $region7: #{inception_aux_forward.1} parent=1 // pred_check_branch
      %21 = sbr.rel (0) target = $region9
    $region8: #{inception_aux_forward.1} parent=1 // pred_region
      %s23 = ssub.s32 512, 512
      %24 = vsyncadd [#allocation4], %s23
      %s25 = sshll.u32 [#allocation3], 4
      %s26 = int_to_ptr.vmem [resolvable:$true] %s25
      %31 = dma.hbm_to_vmem [thread:$0]  %s1, 512, %s26, [#allocation4], 256, 256, 16
    $region9: #{inception_aux_forward.1} parent=1 // pred_fallthru
      _
    // Predicated region
    $region10: #{inception_aux_forward.1} parent=1 // pred_check
      _
    $region11: #{inception_aux_forward.1} parent=1 // pred_check_branch
      %33 = sbr.rel (0) target = $region13
    $region12: #{inception_aux_forward.1} parent=1 // pred_region
      %s35 = ssub.s32 128, 128
      %36 = vsyncadd [#allocation7], %s35
      %s38 = sshll.u32 [#allocation6], 4
      %s39 = int_to_ptr.vmem [resolvable:$true] %s38
      %41 = dma.hbm_to_vmem [thread:$0]  %s2, 128, %s39, [#allocation7]
    $region13: #{inception_aux_forward.1} parent=1 // pred_fallthru
      _
    // Predicated region
    $region14: #{inception_aux_forward.1} parent=1 // pred_check
      _
    $region15: #{inception_aux_forward.1} parent=1 // pred_check_branch
      %43 = sbr.rel (0) target = $region17
    $region16: #{inception_aux_forward.1} parent=1 // pred_region
      %s45 = ssub.s32 16, 16
      %46 = vsyncadd [#allocation7], %s45
      %s48 = sshll.u32 [#allocation8], 4
      %s49 = int_to_ptr.vmem [resolvable:$true] %s48
      %51 = dma.hbm_to_vmem [thread:$0]  %s3, 16, %s49, [#allocation7]
    $region17: #{inception_aux_forward.1} parent=1 // pred_fallthru
      _
    // Predicated region
    $region18: #{inception_aux_forward.1} parent=1 // pred_check
      _
    $region19: #{inception_aux_forward.1} parent=1 // pred_check_branch
      %53 = sbr.rel (0) target = $region21
    $region20: #{inception_aux_forward.1} parent=1 // pred_region
      %s55 = ssub.s32 131072, 131072
      %56 = vsyncadd [#allocation10], %s55
      %s57 = sshll.u32 [#allocation9], 4
      %s58 = int_to_ptr.vmem [resolvable:$true] %s57
      %63 = dma.hbm_to_vmem [thread:$0]  %s4, 131072, %s58, [#allocation10], 512, 512, 32
    $region21: #{inception_aux_forward.1} parent=1 // pred_fallthru
      _
    // Predicated region
    $region22: #{inception_aux_forward.1} parent=1 // pred_check
      _
    $region23: #{inception_aux_forward.1} parent=1 // pred_check_branch
      %65 = sbr.rel (0) target = $region25
    $region24: #{inception_aux_forward.1} parent=1 // pred_region
      %s67 = ssub.s32 128, 128
      %68 = vsyncadd [#allocation10], %s67
      %s70 = sshll.u32 [#allocation11], 4
      %s71 = int_to_ptr.vmem [resolvable:$true] %s70
      %73 = dma.hbm_to_vmem [thread:$0]  %s5, 128, %s71, [#allocation10]
    $region25: #{inception_aux_forward.1} parent=1 // pred_fallthru
      _
    // Predicated region
    $region26: #{inception_aux_forward.1} parent=1 // pred_check
      _
    $region27: #{inception_aux_forward.1} parent=1 // pred_check_branch
      %75 = sbr.rel (0) target = $region29
    $region28: #{inception_aux_forward.1} parent=1 // pred_region
      %s77 = ssub.s32 8192, 8192
      %78 = vsyncadd [#allocation13], %s77
      %s79 = sshll.u32 [#allocation12], 4
      %s80 = int_to_ptr.vmem [resolvable:$true] %s79
      %85 = dma.hbm_to_vmem [thread:$0]  %s6, 8192, %s80, [#allocation13], 64, 64, 4
    $region29: #{inception_aux_forward.1} parent=1 // pred_fallthru
      _
    // Predicated region
    $region30: #{inception_aux_forward.1} parent=1 // pred_check
      _
    $region31: #{inception_aux_forward.1} parent=1 // pred_check_branch
      %87 = sbr.rel (0) target = $region33
    $region32: #{inception_aux_forward.1} parent=1 // pred_region
      %s89 = ssub.s32 16, 16
      %90 = vsyncadd [#allocation13], %s89
      %s92 = sshll.u32 [#allocation14], 4
      %s93 = int_to_ptr.vmem [resolvable:$true] %s92
      %95 = dma.hbm_to_vmem [thread:$0]  %s7, 16, %s93, [#allocation13]
    $region33: #{inception_aux_forward.1} parent=1 // pred_fallthru
      _
    // Predicated region
    $region34: #{inception_aux_forward.1} parent=1 // pred_check
      _
    $region35: #{inception_aux_forward.1} parent=1 // pred_check_branch
      %97 = sbr.rel (0) target = $region37
    $region36: #{inception_aux_forward.1} parent=1 // pred_region
      %98 = dma.done [#allocation4], 512
    $region37: #{inception_aux_forward.1} parent=1 // pred_fallthru
      _
    // Predicated region
    $region38: #{inception_aux_forward.1} parent=1 // pred_check
      _
    $region39: #{inception_aux_forward.1} parent=1 // pred_check_branch
      %100 = sbr.rel (0) target = $region41
    $region40: #{inception_aux_forward.1} parent=1 // pred_region
      %101 = dma.done [#allocation7], 128
    $region41: #{inception_aux_forward.1} parent=1 // pred_fallthru
      _
    // Predicated region
    $region42: #{inception_aux_forward.1} parent=1 // pred_check
      _
    $region43: #{inception_aux_forward.1} parent=1 // pred_check_branch
      %103 = sbr.rel (0) target = $region45
    $region44: #{inception_aux_forward.1} parent=1 // pred_region
      %104 = dma.done [#allocation7], 16
    $region45: #{inception_aux_forward.1} parent=1 // pred_fallthru
      _
    // Predicated region
    $region46: #{inception_aux_forward.1} parent=1 // pred_check
      _
    $region47: #{inception_aux_forward.1} parent=1 // pred_check_branch
      %106 = sbr.rel (0) target = $region49
    $region48: #{inception_aux_forward.1} parent=1 // pred_region
      %107 = dma.done [#allocation10], 131072
    $region49: #{inception_aux_forward.1} parent=1 // pred_fallthru
      _
    // Predicated region
    $region50: #{inception_aux_forward.1} parent=1 // pred_check
      _
    $region51: #{inception_aux_forward.1} parent=1 // pred_check_branch
      %109 = sbr.rel (0) target = $region53
    $region52: #{inception_aux_forward.1} parent=1 // pred_region
      %110 = dma.done [#allocation10], 128
    $region53: #{inception_aux_forward.1} parent=1 // pred_fallthru
      _
    // Predicated region
    $region54: #{inception_aux_forward.1} parent=1 // pred_check
      _
    $region55: #{inception_aux_forward.1} parent=1 // pred_check_branch
      %112 = sbr.rel (0) target = $region57
    $region56: #{inception_aux_forward.1} parent=1 // pred_region
      %113 = dma.done [#allocation13], 8192
    $region57: #{inception_aux_forward.1} parent=1 // pred_fallthru
      _
    // Predicated region
    $region58: #{inception_aux_forward.1} parent=1 // pred_check
      _
    $region59: #{inception_aux_forward.1} parent=1 // pred_check_branch
      %115 = sbr.rel (0) target = $region61
    $region60: #{inception_aux_forward.1} parent=1 // pred_region
      %116 = dma.done [#allocation13], 16
    $region61: #{inception_aux_forward.1} parent=1 // pred_fallthru
      _
    %v118 = vld [vmem:[#allocation3] sm:$0xff]
    %v119 = vld [vmem:[#allocation3 + $0x8] sm:$0xff]
    %v120 = vld [vmem:[#allocation3 + $0x10] sm:$0xff]
    %v121 = vld [vmem:[#allocation3 + $0x18] sm:$0xff]
    %v122 = vld [vmem:[#allocation6] sm:$0xff]
    %v123 = vld [vmem:[#allocation8] sm:$0x1]
    %v124 = vld [vmem:[%s0] sm:$0xff]
    %v125 = vld [vmem:[%s0 + $0x8] sm:$0xff]
    %vm126 = vcmask 556032
    %v128 = vsel %vm126, %v119, 0
    %v131 = vsel %vm126, %v121, 0
    %v134 = vsel %vm126, %v125, 0
    %136 = vmatprep.subr.mxu0 %v134
    %137 = vmatpush1.xpose.msra.mxu0 %v124
    %138 = vmatprep.subr.mxu0 0.0
    %139 = vmatpush1.xpose.msra.mxu0 0.0
    %140 = vmatprep.subr.mxu0 0.0
    %141 = vmatpush1.xpose.msra.mxu0 0.0
    %142 = vmatprep.subr.mxu0 0.0
    %143 = vmatpush1.xpose.msra.mxu0 0.0
    %144 = vmatprep.subr.mxu0 0.0
    %145 = vmatpush1.xpose.msra.mxu0 0.0
    %146 = vmatprep.subr.mxu0 0.0
    %147 = vmatpush1.xpose.msra.mxu0 0.0
    %148 = vmatprep.subr.mxu0 0.0
    %149 = vmatpush1.xpose.msra.mxu0 0.0
    %150 = vmatprep.subr.mxu0 0.0
    %151 = vmatpush1.xpose.msra.mxu0 0.0
    %152 = vmatprep.subr.mxu0 0.0
    %153 = vmatpush1.xpose.msra.mxu0 0.0
    %154 = vmatprep.subr.mxu0 0.0
    %155 = vmatpush1.xpose.msra.mxu0 0.0
    %156 = vmatprep.subr.mxu0 0.0
    %157 = vmatpush1.xpose.msra.mxu0 0.0
    %158 = vmatprep.subr.mxu0 0.0
    %159 = vmatpush1.xpose.msra.mxu0 0.0
    %160 = vmatprep.subr.mxu0 0.0
    %161 = vmatpush1.xpose.msra.mxu0 0.0
    %162 = vmatprep.subr.mxu0 0.0
    %163 = vmatpush1.xpose.msra.mxu0 0.0
    %164 = vmatprep.subr.mxu0 0.0
    %165 = vmatpush1.xpose.msra.mxu0 0.0
    %166 = vmatprep.subr.mxu0 0.0
    %167 = vmatpush1.xpose.msra.mxu0 0.0
    %168 = vmatprep.subr.mxu0 0.0
    %169 = vmatpush1.xpose.msra.mxu0 0.0
    %170 = vmatprep.subr.mxu0 0.0
    %171 = vmatpush1.xpose.msra.mxu0 0.0
    %172 = vmatprep.subr.mxu0 0.0
    %173 = vmatpush1.xpose.msra.mxu0 0.0
    %174 = vmatprep.subr.mxu0 0.0
    %175 = vmatpush1.xpose.msra.mxu0 0.0
    %176 = vmatprep.subr.mxu0 0.0
    %177 = vmatpush1.xpose.msra.mxu0 0.0
    %178 = vmatprep.subr.mxu0 0.0
    %179 = vmatpush1.xpose.msra.mxu0 0.0
    %180 = vmatprep.subr.mxu0 0.0
    %181 = vmatpush1.xpose.msra.mxu0 0.0
    %182 = vmatprep.subr.mxu0 0.0
    %183 = vmatpush1.xpose.msra.mxu0 0.0
    %184 = vmatprep.subr.mxu0 0.0
    %185 = vmatpush1.xpose.msra.mxu0 0.0
    %186 = vmatprep.subr.mxu0 0.0
    %187 = vmatpush1.xpose.msra.mxu0 0.0
    %188 = vmatprep.subr.mxu0 0.0
    %189 = vmatpush1.xpose.msra.mxu0 0.0
    %190 = vmatprep.subr.mxu0 0.0
    %191 = vmatpush1.xpose.msra.mxu0 0.0
    %192 = vmatprep.subr.mxu0 0.0
    %193 = vmatpush1.xpose.msra.mxu0 0.0
    %194 = vmatprep.subr.mxu0 0.0
    %195 = vmatpush1.xpose.msra.mxu0 0.0
    %196 = vmatprep.subr.mxu0 0.0
    %197 = vmatpush1.xpose.msra.mxu0 0.0
    %198 = vmatprep.subr.mxu0 0.0
    %199 = vmatpush1.xpose.msra.mxu0 0.0
    %200 = vmatprep.mubr.f32.mxu0 %v128
    %201 = vmatmul.mubr.f32.gmra.mrb[0].mxu0 %v118
    %v202 = vpop.f32.mrb[0].mxu0
    %v203 = vadd.f32 0.0, %v202
    %v204 = vpop.f32.mrb[0].mxu0
    %205 = vmatprep.mubr.f32.mxu0 %v131
    %206 = vmatmul.mubr.f32.gmra.mrb[0].mxu0 %v120
    %v207 = vpop.f32.mrb[0].mxu0
    %v208 = vadd.f32 0.0, %v207
    %v209 = vpop.f32.mrb[0].mxu0
    %210 = vdwg.mxu0
    %v212 = vlaneseq
    %v213 = vshrl.u32 %v212, 7
    %v214 = vsub.s32 0, %v213
    %v215 = vrot.slane %v123, %v214
    %vm217 = vcmask 64512
    %v219 = vsel %vm217, %v203, 0
    %v222 = vsel %vm217, %v208, 0
    %224 = vmatprep.subr.mxu0 0.0
    %225 = vmatpush1.msra.mxu0 %v122
    %226 = vmatprep.subr.mxu0 0.0
    %227 = vmatpush1.msra.mxu0 0.0
    %228 = vmatprep.subr.mxu0 0.0
    %229 = vmatpush1.msra.mxu0 0.0
    %230 = vmatprep.subr.mxu0 0.0
    %231 = vmatpush1.msra.mxu0 0.0
    %232 = vmatprep.subr.mxu0 0.0
    %233 = vmatpush1.msra.mxu0 0.0
    %234 = vmatprep.subr.mxu0 0.0
    %235 = vmatpush1.msra.mxu0 0.0
    %236 = vmatprep.subr.mxu0 0.0
    %237 = vmatpush1.msra.mxu0 0.0
    %238 = vmatprep.subr.mxu0 0.0
    %239 = vmatpush1.msra.mxu0 0.0
    %240 = vmatprep.subr.mxu0 0.0
    %241 = vmatpush1.msra.mxu0 0.0
    %242 = vmatprep.subr.mxu0 0.0
    %243 = vmatpush1.msra.mxu0 0.0
    %244 = vmatprep.subr.mxu0 0.0
    %245 = vmatpush1.msra.mxu0 0.0
    %246 = vmatprep.subr.mxu0 0.0
    %247 = vmatpush1.msra.mxu0 0.0
    %248 = vmatprep.subr.mxu0 0.0
    %249 = vmatpush1.msra.mxu0 0.0
    %250 = vmatprep.subr.mxu0 0.0
    %251 = vmatpush1.msra.mxu0 0.0
    %252 = vmatprep.subr.mxu0 0.0
    %253 = vmatpush1.msra.mxu0 0.0
    %254 = vmatprep.subr.mxu0 0.0
    %255 = vmatpush1.msra.mxu0 0.0
    %256 = vmatprep.subr.mxu0 0.0
    %257 = vmatpush1.msra.mxu0 0.0
    %258 = vmatprep.subr.mxu0 0.0
    %259 = vmatpush1.msra.mxu0 0.0
    %260 = vmatprep.subr.mxu0 0.0
    %261 = vmatpush1.msra.mxu0 0.0
    %262 = vmatprep.subr.mxu0 0.0
    %263 = vmatpush1.msra.mxu0 0.0
    %264 = vmatprep.subr.mxu0 0.0
    %265 = vmatpush1.msra.mxu0 0.0
    %266 = vmatprep.subr.mxu0 0.0
    %267 = vmatpush1.msra.mxu0 0.0
    %268 = vmatprep.subr.mxu0 0.0
    %269 = vmatpush1.msra.mxu0 0.0
    %270 = vmatprep.subr.mxu0 0.0
    %271 = vmatpush1.msra.mxu0 0.0
    %272 = vmatprep.subr.mxu0 0.0
    %273 = vmatpush1.msra.mxu0 0.0
    %274 = vmatprep.subr.mxu0 0.0
    %275 = vmatpush1.msra.mxu0 0.0
    %276 = vmatprep.subr.mxu0 0.0
    %277 = vmatpush1.msra.mxu0 0.0
    %278 = vmatprep.subr.mxu0 0.0
    %279 = vmatpush1.msra.mxu0 0.0
    %280 = vmatprep.subr.mxu0 0.0
    %281 = vmatpush1.msra.mxu0 0.0
    %282 = vmatprep.subr.mxu0 0.0
    %283 = vmatpush1.msra.mxu0 0.0
    %284 = vmatprep.subr.mxu0 0.0
    %285 = vmatpush1.msra.mxu0 0.0
    %286 = vmatprep.subr.mxu0 0.0
    %287 = vmatpush1.msra.mxu0 0.0
    %288 = vmatprep.mubr.f32.mxu0 0.0
    %289 = vmatmul.mubr.f32.gmra.mrb[0].mxu0 %v219
    %v290 = vpop.f32.mrb[0].mxu0
    %v291 = vadd.f32 %v215, %v290
    %v292 = vpop.f32.mrb[0].mxu0
    %293 = vmatprep.mubr.f32.mxu0 0.0
    %294 = vmatmul.mubr.f32.gmra.mrb[0].mxu0 %v222
    %v295 = vpop.f32.mrb[0].mxu0
    %v296 = vadd.f32 %v215, %v295
    %v297 = vpop.f32.mrb[0].mxu0
    %298 = vdwg.mxu0
    %v299 = vmax.f32 %v291, 0.0
    %v300 = vmax.f32 %v296, 0.0
    %301 = vst [vmem:[#allocation2] sm:$0xff] %v299
    %302 = vst [vmem:[#allocation2 + $0x8] sm:$0xff] %v300
    %s303 = scalar_lea.vmem %s0, 16
    %v304 = vld [vmem:[%s303] sm:$0xff]
    %v305 = vld [vmem:[%s303 + $0x8] sm:$0xff]
    %v307 = vsel %vm126, %v305, 0
    %309 = vmatprep.subr.mxu0 %v307
    %310 = vmatpush1.xpose.msra.mxu0 %v304
    %311 = vmatprep.subr.mxu0 0.0
    %312 = vmatpush1.xpose.msra.mxu0 0.0
    %313 = vmatprep.subr.mxu0 0.0
    %314 = vmatpush1.xpose.msra.mxu0 0.0
    %315 = vmatprep.subr.mxu0 0.0
    %316 = vmatpush1.xpose.msra.mxu0 0.0
    %317 = vmatprep.subr.mxu0 0.0
    %318 = vmatpush1.xpose.msra.mxu0 0.0
    %319 = vmatprep.subr.mxu0 0.0
    %320 = vmatpush1.xpose.msra.mxu0 0.0
    %321 = vmatprep.subr.mxu0 0.0
    %322 = vmatpush1.xpose.msra.mxu0 0.0
    %323 = vmatprep.subr.mxu0 0.0
    %324 = vmatpush1.xpose.msra.mxu0 0.0
    %325 = vmatprep.subr.mxu0 0.0
    %326 = vmatpush1.xpose.msra.mxu0 0.0
    %327 = vmatprep.subr.mxu0 0.0
    %328 = vmatpush1.xpose.msra.mxu0 0.0
    %329 = vmatprep.subr.mxu0 0.0
    %330 = vmatpush1.xpose.msra.mxu0 0.0
    %331 = vmatprep.subr.mxu0 0.0
    %332 = vmatpush1.xpose.msra.mxu0 0.0
    %333 = vmatprep.subr.mxu0 0.0
    %334 = vmatpush1.xpose.msra.mxu0 0.0
    %335 = vmatprep.subr.mxu0 0.0
    %336 = vmatpush1.xpose.msra.mxu0 0.0
    %337 = vmatprep.subr.mxu0 0.0
    %338 = vmatpush1.xpose.msra.mxu0 0.0
    %339 = vmatprep.subr.mxu0 0.0
    %340 = vmatpush1.xpose.msra.mxu0 0.0
    %341 = vmatprep.subr.mxu0 0.0
    %342 = vmatpush1.xpose.msra.mxu0 0.0
    %343 = vmatprep.subr.mxu0 0.0
    %344 = vmatpush1.xpose.msra.mxu0 0.0
    %345 = vmatprep.subr.mxu0 0.0
    %346 = vmatpush1.xpose.msra.mxu0 0.0
    %347 = vmatprep.subr.mxu0 0.0
    %348 = vmatpush1.xpose.msra.mxu0 0.0
    %349 = vmatprep.subr.mxu0 0.0
    %350 = vmatpush1.xpose.msra.mxu0 0.0
    %351 = vmatprep.subr.mxu0 0.0
    %352 = vmatpush1.xpose.msra.mxu0 0.0
    %353 = vmatprep.subr.mxu0 0.0
    %354 = vmatpush1.xpose.msra.mxu0 0.0
    %355 = vmatprep.subr.mxu0 0.0
    %356 = vmatpush1.xpose.msra.mxu0 0.0
    %357 = vmatprep.subr.mxu0 0.0
    %358 = vmatpush1.xpose.msra.mxu0 0.0
    %359 = vmatprep.subr.mxu0 0.0
    %360 = vmatpush1.xpose.msra.mxu0 0.0
    %361 = vmatprep.subr.mxu0 0.0
    %362 = vmatpush1.xpose.msra.mxu0 0.0
    %363 = vmatprep.subr.mxu0 0.0
    %364 = vmatpush1.xpose.msra.mxu0 0.0
    %365 = vmatprep.subr.mxu0 0.0
    %366 = vmatpush1.xpose.msra.mxu0 0.0
    %367 = vmatprep.subr.mxu0 0.0
    %368 = vmatpush1.xpose.msra.mxu0 0.0
    %369 = vmatprep.subr.mxu0 0.0
    %370 = vmatpush1.xpose.msra.mxu0 0.0
    %371 = vmatprep.subr.mxu0 0.0
    %372 = vmatpush1.xpose.msra.mxu0 0.0
    %373 = vmatprep.mubr.f32.mxu0 %v128
    %374 = vmatmul.mubr.f32.gmra.mrb[0].mxu0 %v118
    %v375 = vpop.f32.mrb[0].mxu0
    %v376 = vadd.f32 0.0, %v375
    %v377 = vpop.f32.mrb[0].mxu0
    %378 = vmatprep.mubr.f32.mxu0 %v131
    %379 = vmatmul.mubr.f32.gmra.mrb[0].mxu0 %v120
    %v380 = vpop.f32.mrb[0].mxu0
    %v381 = vadd.f32 0.0, %v380
    %v382 = vpop.f32.mrb[0].mxu0
    %383 = vdwg.mxu0
    %v385 = vsel %vm217, %v376, 0
    %v388 = vsel %vm217, %v381, 0
    %390 = vmatprep.subr.mxu0 0.0
    %391 = vmatpush1.msra.mxu0 %v122
    %392 = vmatprep.subr.mxu0 0.0
    %393 = vmatpush1.msra.mxu0 0.0
    %394 = vmatprep.subr.mxu0 0.0
    %395 = vmatpush1.msra.mxu0 0.0
    %396 = vmatprep.subr.mxu0 0.0
    %397 = vmatpush1.msra.mxu0 0.0
    %398 = vmatprep.subr.mxu0 0.0
    %399 = vmatpush1.msra.mxu0 0.0
    %400 = vmatprep.subr.mxu0 0.0
    %401 = vmatpush1.msra.mxu0 0.0
    %402 = vmatprep.subr.mxu0 0.0
    %403 = vmatpush1.msra.mxu0 0.0
    %404 = vmatprep.subr.mxu0 0.0
    %405 = vmatpush1.msra.mxu0 0.0
    %406 = vmatprep.subr.mxu0 0.0
    %407 = vmatpush1.msra.mxu0 0.0
    %408 = vmatprep.subr.mxu0 0.0
    %409 = vmatpush1.msra.mxu0 0.0
    %410 = vmatprep.subr.mxu0 0.0
    %411 = vmatpush1.msra.mxu0 0.0
    %412 = vmatprep.subr.mxu0 0.0
    %413 = vmatpush1.msra.mxu0 0.0
    %414 = vmatprep.subr.mxu0 0.0
    %415 = vmatpush1.msra.mxu0 0.0
    %416 = vmatprep.subr.mxu0 0.0
    %417 = vmatpush1.msra.mxu0 0.0
    %418 = vmatprep.subr.mxu0 0.0
    %419 = vmatpush1.msra.mxu0 0.0
    %420 = vmatprep.subr.mxu0 0.0
    %421 = vmatpush1.msra.mxu0 0.0
    %422 = vmatprep.subr.mxu0 0.0
    %423 = vmatpush1.msra.mxu0 0.0
    %424 = vmatprep.subr.mxu0 0.0
    %425 = vmatpush1.msra.mxu0 0.0
    %426 = vmatprep.subr.mxu0 0.0
    %427 = vmatpush1.msra.mxu0 0.0
    %428 = vmatprep.subr.mxu0 0.0
    %429 = vmatpush1.msra.mxu0 0.0
    %430 = vmatprep.subr.mxu0 0.0
    %431 = vmatpush1.msra.mxu0 0.0
    %432 = vmatprep.subr.mxu0 0.0
    %433 = vmatpush1.msra.mxu0 0.0
    %434 = vmatprep.subr.mxu0 0.0
    %435 = vmatpush1.msra.mxu0 0.0
    %436 = vmatprep.subr.mxu0 0.0
    %437 = vmatpush1.msra.mxu0 0.0
    %438 = vmatprep.subr.mxu0 0.0
    %439 = vmatpush1.msra.mxu0 0.0
    %440 = vmatprep.subr.mxu0 0.0
    %441 = vmatpush1.msra.mxu0 0.0
    %442 = vmatprep.subr.mxu0 0.0
    %443 = vmatpush1.msra.mxu0 0.0
    %444 = vmatprep.subr.mxu0 0.0
    %445 = vmatpush1.msra.mxu0 0.0
    %446 = vmatprep.subr.mxu0 0.0
    %447 = vmatpush1.msra.mxu0 0.0
    %448 = vmatprep.subr.mxu0 0.0
    %449 = vmatpush1.msra.mxu0 0.0
    %450 = vmatprep.subr.mxu0 0.0
    %451 = vmatpush1.msra.mxu0 0.0
    %452 = vmatprep.subr.mxu0 0.0
    %453 = vmatpush1.msra.mxu0 0.0
    %454 = vmatprep.mubr.f32.mxu0 0.0
    %455 = vmatmul.mubr.f32.gmra.mrb[0].mxu0 %v385
    %v456 = vpop.f32.mrb[0].mxu0
    %v457 = vadd.f32 %v215, %v456
    %v458 = vpop.f32.mrb[0].mxu0
    %459 = vmatprep.mubr.f32.mxu0 0.0
    %460 = vmatmul.mubr.f32.gmra.mrb[0].mxu0 %v388
    %v461 = vpop.f32.mrb[0].mxu0
    %v462 = vadd.f32 %v215, %v461
    %v463 = vpop.f32.mrb[0].mxu0
    %464 = vdwg.mxu0
    %v465 = vmax.f32 %v457, 0.0
    %v466 = vmax.f32 %v462, 0.0
    %s467 = scalar_lea.vmem [#allocation2], 16
    %468 = vst [vmem:[%s467] sm:$0xff] %v465
    %469 = vst [vmem:[%s467 + $0x8] sm:$0xff] %v466
    %v470 = vld [vmem:[#allocation2] sm:$0x1]
    %v471 = vld [vmem:[#allocation2 + $0x10] sm:$0x1]
    %v472 = vpack.c.bf16 %v470, %v470
    %v473 = vpack.c.bf16 %v471, %v471
    %v474 = vld [vmem:[#allocation9] sm:$0xff]
    %v475 = vld [vmem:[#allocation9 + $0x8] sm:$0xff]
    %v476 = vld [vmem:[#allocation9 + $0x10] sm:$0xff]
    %v477 = vld [vmem:[#allocation9 + $0x18] sm:$0xff]
    %v478 = vld [vmem:[#allocation9 + $0x20] sm:$0xff]
    %v479 = vld [vmem:[#allocation9 + $0x28] sm:$0xff]
    %v480 = vld [vmem:[#allocation9 + $0x30] sm:$0xff]
    %v481 = vld [vmem:[#allocation9 + $0x38] sm:$0xff]
    %v482 = vld [vmem:[#allocation9 + $0x40] sm:$0xff]
    %v483 = vld [vmem:[#allocation9 + $0x48] sm:$0xff]
    %v484 = vld [vmem:[#allocation9 + $0x50] sm:$0xff]
    %v485 = vld [vmem:[#allocation9 + $0x58] sm:$0xff]
    %v486 = vld [vmem:[#allocation9 + $0x60] sm:$0xff]
    %v487 = vld [vmem:[#allocation9 + $0x68] sm:$0xff]
    %v488 = vld [vmem:[#allocation9 + $0x70] sm:$0xff]
    %v489 = vld [vmem:[#allocation9 + $0x78] sm:$0xff]
    %v490 = vld [vmem:[#allocation9 + $0x80] sm:$0xff]
    %v491 = vld [vmem:[#allocation9 + $0x88] sm:$0xff]
    %v492 = vld [vmem:[#allocation9 + $0x90] sm:$0xff]
    %v493 = vld [vmem:[#allocation9 + $0x98] sm:$0xff]
    %v494 = vld [vmem:[#allocation9 + $0xa0] sm:$0xff]
    %v495 = vld [vmem:[#allocation9 + $0xa8] sm:$0xff]
    %v496 = vld [vmem:[#allocation9 + $0xb0] sm:$0xff]
    %v497 = vld [vmem:[#allocation9 + $0xb8] sm:$0xff]
    %v498 = vld [vmem:[#allocation9 + $0xc0] sm:$0xff]
    %v499 = vld [vmem:[#allocation9 + $0xc8] sm:$0xff]
    %v500 = vld [vmem:[#allocation9 + $0xd0] sm:$0xff]
    %v501 = vld [vmem:[#allocation9 + $0xd8] sm:$0xff]
    %v502 = vld [vmem:[#allocation9 + $0xe0] sm:$0xff]
    %v503 = vld [vmem:[#allocation9 + $0xe8] sm:$0xff]
    %v504 = vld [vmem:[#allocation9 + $0xf0] sm:$0xff]
    %v505 = vld [vmem:[#allocation9 + $0xf8] sm:$0xff]
    %v506 = vld [vmem:[#allocation9 + $0x100] sm:$0xff]
    %v507 = vld [vmem:[#allocation9 + $0x108] sm:$0xff]
    %v508 = vld [vmem:[#allocation9 + $0x110] sm:$0xff]
    %v509 = vld [vmem:[#allocation9 + $0x118] sm:$0xff]
    %v510 = vld [vmem:[#allocation9 + $0x120] sm:$0xff]
    %v511 = vld [vmem:[#allocation9 + $0x128] sm:$0xff]
    %v512 = vld [vmem:[#allocation9 + $0x130] sm:$0xff]
    %v513 = vld [vmem:[#allocation9 + $0x138] sm:$0xff]
    %v514 = vld [vmem:[#allocation9 + $0x140] sm:$0xff]
    %v515 = vld [vmem:[#allocation9 + $0x148] sm:$0xff]
    %v516 = vld [vmem:[#allocation9 + $0x150] sm:$0xff]
    %v517 = vld [vmem:[#allocation9 + $0x158] sm:$0xff]
    %v518 = vld [vmem:[#allocation9 + $0x160] sm:$0xff]
    %v519 = vld [vmem:[#allocation9 + $0x168] sm:$0xff]
    %v520 = vld [vmem:[#allocation9 + $0x170] sm:$0xff]
    %v521 = vld [vmem:[#allocation9 + $0x178] sm:$0xff]
    %v522 = vld [vmem:[#allocation9 + $0x180] sm:$0xff]
    %v523 = vld [vmem:[#allocation9 + $0x188] sm:$0xff]
    %v524 = vld [vmem:[#allocation9 + $0x190] sm:$0xff]
    %v525 = vld [vmem:[#allocation9 + $0x198] sm:$0xff]
    %v526 = vld [vmem:[#allocation9 + $0x1a0] sm:$0xff]
    %v527 = vld [vmem:[#allocation9 + $0x1a8] sm:$0xff]
    %v528 = vld [vmem:[#allocation9 + $0x1b0] sm:$0xff]
    %v529 = vld [vmem:[#allocation9 + $0x1b8] sm:$0xff]
    %v530 = vld [vmem:[#allocation9 + $0x1c0] sm:$0xff]
    %v531 = vld [vmem:[#allocation9 + $0x1c8] sm:$0xff]
    %v532 = vld [vmem:[#allocation9 + $0x1d0] sm:$0xff]
    %v533 = vld [vmem:[#allocation9 + $0x1d8] sm:$0xff]
    %v534 = vld [vmem:[#allocation9 + $0x1e0] sm:$0xff]
    %v535 = vld [vmem:[#allocation9 + $0x1e8] sm:$0xff]
    %v536 = vld [vmem:[#allocation9 + $0x1f0] sm:$0xff]
    %v537 = vld [vmem:[#allocation9 + $0x1f8] sm:$0xff]
    %v538 = vld [vmem:[#allocation2 + $0x1] sm:$0x1]
    %v539 = vld [vmem:[#allocation2 + $0x11] sm:$0x1]
    %v540 = vpack.c.bf16 %v538, %v538
    %v541 = vpack.c.bf16 %v539, %v539
    %v542 = vld [vmem:[#allocation9 + $0x200] sm:$0xff]
    %v543 = vld [vmem:[#allocation9 + $0x208] sm:$0xff]
    %v544 = vld [vmem:[#allocation9 + $0x210] sm:$0xff]
    %v545 = vld [vmem:[#allocation9 + $0x218] sm:$0xff]
    %v546 = vld [vmem:[#allocation9 + $0x220] sm:$0xff]
    %v547 = vld [vmem:[#allocation9 + $0x228] sm:$0xff]
    %v548 = vld [vmem:[#allocation9 + $0x230] sm:$0xff]
    %v549 = vld [vmem:[#allocation9 + $0x238] sm:$0xff]
    %v550 = vld [vmem:[#allocation9 + $0x240] sm:$0xff]
    %v551 = vld [vmem:[#allocation9 + $0x248] sm:$0xff]
    %v552 = vld [vmem:[#allocation9 + $0x250] sm:$0xff]
    %v553 = vld [vmem:[#allocation9 + $0x258] sm:$0xff]
    %v554 = vld [vmem:[#allocation9 + $0x260] sm:$0xff]
    %v555 = vld [vmem:[#allocation9 + $0x268] sm:$0xff]
    %v556 = vld [vmem:[#allocation9 + $0x270] sm:$0xff]
    %v557 = vld [vmem:[#allocation9 + $0x278] sm:$0xff]
    %v558 = vld [vmem:[#allocation9 + $0x280] sm:$0xff]
    %v559 = vld [vmem:[#allocation9 + $0x288] sm:$0xff]
    %v560 = vld [vmem:[#allocation9 + $0x290] sm:$0xff]
    %v561 = vld [vmem:[#allocation9 + $0x298] sm:$0xff]
    %v562 = vld [vmem:[#allocation9 + $0x2a0] sm:$0xff]
    %v563 = vld [vmem:[#allocation9 + $0x2a8] sm:$0xff]
    %v564 = vld [vmem:[#allocation9 + $0x2b0] sm:$0xff]
    %v565 = vld [vmem:[#allocation9 + $0x2b8] sm:$0xff]
    %v566 = vld [vmem:[#allocation9 + $0x2c0] sm:$0xff]
    %v567 = vld [vmem:[#allocation9 + $0x2c8] sm:$0xff]
    %v568 = vld [vmem:[#allocation9 + $0x2d0] sm:$0xff]
    %v569 = vld [vmem:[#allocation9 + $0x2d8] sm:$0xff]
    %v570 = vld [vmem:[#allocation9 + $0x2e0] sm:$0xff]
    %v571 = vld [vmem:[#allocation9 + $0x2e8] sm:$0xff]
    %v572 = vld [vmem:[#allocation9 + $0x2f0] sm:$0xff]
    %v573 = vld [vmem:[#allocation9 + $0x2f8] sm:$0xff]
    %v574 = vld [vmem:[#allocation9 + $0x300] sm:$0xff]
    %v575 = vld [vmem:[#allocation9 + $0x308] sm:$0xff]
    %v576 = vld [vmem:[#allocation9 + $0x310] sm:$0xff]
    %v577 = vld [vmem:[#allocation9 + $0x318] sm:$0xff]
    %v578 = vld [vmem:[#allocation9 + $0x320] sm:$0xff]
    %v579 = vld [vmem:[#allocation9 + $0x328] sm:$0xff]
    %v580 = vld [vmem:[#allocation9 + $0x330] sm:$0xff]
    %v581 = vld [vmem:[#allocation9 + $0x338] sm:$0xff]
    %v582 = vld [vmem:[#allocation9 + $0x340] sm:$0xff]
    %v583 = vld [vmem:[#allocation9 + $0x348] sm:$0xff]
    %v584 = vld [vmem:[#allocation9 + $0x350] sm:$0xff]
    %v585 = vld [vmem:[#allocation9 + $0x358] sm:$0xff]
    %v586 = vld [vmem:[#allocation9 + $0x360] sm:$0xff]
    %v587 = vld [vmem:[#allocation9 + $0x368] sm:$0xff]
    %v588 = vld [vmem:[#allocation9 + $0x370] sm:$0xff]
    %v589 = vld [vmem:[#allocation9 + $0x378] sm:$0xff]
    %v590 = vld [vmem:[#allocation9 + $0x380] sm:$0xff]
    %v591 = vld [vmem:[#allocation9 + $0x388] sm:$0xff]
    %v592 = vld [vmem:[#allocation9 + $0x390] sm:$0xff]
    %v593 = vld [vmem:[#allocation9 + $0x398] sm:$0xff]
    %v594 = vld [vmem:[#allocation9 + $0x3a0] sm:$0xff]
    %v595 = vld [vmem:[#allocation9 + $0x3a8] sm:$0xff]
    %v596 = vld [vmem:[#allocation9 + $0x3b0] sm:$0xff]
    %v597 = vld [vmem:[#allocation9 + $0x3b8] sm:$0xff]
    %v598 = vld [vmem:[#allocation9 + $0x3c0] sm:$0xff]
    %v599 = vld [vmem:[#allocation9 + $0x3c8] sm:$0xff]
    %v600 = vld [vmem:[#allocation9 + $0x3d0] sm:$0xff]
    %v601 = vld [vmem:[#allocation9 + $0x3d8] sm:$0xff]
    %v602 = vld [vmem:[#allocation9 + $0x3e0] sm:$0xff]
    %v603 = vld [vmem:[#allocation9 + $0x3e8] sm:$0xff]
    %v604 = vld [vmem:[#allocation9 + $0x3f0] sm:$0xff]
    %v605 = vld [vmem:[#allocation9 + $0x3f8] sm:$0xff]
    %v608 = vunpack.c.l.b16 %v540
    %v609 = vunpack.c.l.b16 %v541
    %v610 = vrot.slane %v609, 7
    %vm611 = vcmask 1041409
    %v612 = vsel %vm611, %v610, %v608
    %v613 = vpack.c.b16 %v612, %v612
    %v679 = vunpack.c.l.b16 %v542
    %v680 = vunpack.c.h.b16 %v542
    %v681 = vunpack.c.l.b16 %v543
    %v682 = vunpack.c.h.b16 %v543
    %v683 = vunpack.c.l.b16 %v544
    %v684 = vunpack.c.h.b16 %v544
    %v685 = vunpack.c.l.b16 %v545
    %v686 = vunpack.c.h.b16 %v545
    %v687 = vunpack.c.l.b16 %v546
    %v688 = vunpack.c.h.b16 %v546
    %v689 = vunpack.c.l.b16 %v547
    %v690 = vunpack.c.h.b16 %v547
    %v691 = vunpack.c.l.b16 %v548
    %v692 = vunpack.c.h.b16 %v548
    %v693 = vunpack.c.l.b16 %v549
    %v694 = vunpack.c.h.b16 %v549
    %v695 = vunpack.c.l.b16 %v550
    %v696 = vunpack.c.h.b16 %v550
    %v697 = vunpack.c.l.b16 %v551
    %v698 = vunpack.c.h.b16 %v551
    %v699 = vunpack.c.l.b16 %v552
    %v700 = vunpack.c.h.b16 %v552
    %v701 = vunpack.c.l.b16 %v553
    %v702 = vunpack.c.h.b16 %v553
    %v703 = vunpack.c.l.b16 %v554
    %v704 = vunpack.c.h.b16 %v554
    %v705 = vunpack.c.l.b16 %v555
    %v706 = vunpack.c.h.b16 %v555
    %v707 = vunpack.c.l.b16 %v556
    %v708 = vunpack.c.h.b16 %v556
    %v709 = vunpack.c.l.b16 %v557
    %v710 = vunpack.c.h.b16 %v557
    %v711 = vunpack.c.l.b16 %v558
    %v712 = vunpack.c.h.b16 %v558
    %v713 = vunpack.c.l.b16 %v559
    %v714 = vunpack.c.h.b16 %v559
    %v715 = vunpack.c.l.b16 %v560
    %v716 = vunpack.c.h.b16 %v560
    %v717 = vunpack.c.l.b16 %v561
    %v718 = vunpack.c.h.b16 %v561
    %v719 = vunpack.c.l.b16 %v562
    %v720 = vunpack.c.h.b16 %v562
    %v721 = vunpack.c.l.b16 %v563
    %v722 = vunpack.c.h.b16 %v563
    %v723 = vunpack.c.l.b16 %v564
    %v724 = vunpack.c.h.b16 %v564
    %v725 = vunpack.c.l.b16 %v565
    %v726 = vunpack.c.h.b16 %v565
    %v727 = vunpack.c.l.b16 %v566
    %v728 = vunpack.c.h.b16 %v566
    %v729 = vunpack.c.l.b16 %v567
    %v730 = vunpack.c.h.b16 %v567
    %v731 = vunpack.c.l.b16 %v568
    %v732 = vunpack.c.h.b16 %v568
    %v733 = vunpack.c.l.b16 %v569
    %v734 = vunpack.c.h.b16 %v569
    %v735 = vunpack.c.l.b16 %v570
    %v736 = vunpack.c.h.b16 %v570
    %v737 = vunpack.c.l.b16 %v571
    %v738 = vunpack.c.h.b16 %v571
    %v739 = vunpack.c.l.b16 %v572
    %v740 = vunpack.c.h.b16 %v572
    %v741 = vunpack.c.l.b16 %v573
    %v742 = vunpack.c.h.b16 %v573
    %v743 = vunpack.c.l.b16 %v574
    %v744 = vunpack.c.h.b16 %v574
    %v745 = vunpack.c.l.b16 %v575
    %v746 = vunpack.c.h.b16 %v575
    %v747 = vunpack.c.l.b16 %v576
    %v748 = vunpack.c.h.b16 %v576
    %v749 = vunpack.c.l.b16 %v577
    %v750 = vunpack.c.h.b16 %v577
    %v751 = vunpack.c.l.b16 %v578
    %v752 = vunpack.c.h.b16 %v578
    %v753 = vunpack.c.l.b16 %v579
    %v754 = vunpack.c.h.b16 %v579
    %v755 = vunpack.c.l.b16 %v580
    %v756 = vunpack.c.h.b16 %v580
    %v757 = vunpack.c.l.b16 %v581
    %v758 = vunpack.c.h.b16 %v581
    %v759 = vunpack.c.l.b16 %v582
    %v760 = vunpack.c.h.b16 %v582
    %v761 = vunpack.c.l.b16 %v583
    %v762 = vunpack.c.h.b16 %v583
    %v763 = vunpack.c.l.b16 %v584
    %v764 = vunpack.c.h.b16 %v584
    %v765 = vunpack.c.l.b16 %v585
    %v766 = vunpack.c.h.b16 %v585
    %v767 = vunpack.c.l.b16 %v586
    %v768 = vunpack.c.h.b16 %v586
    %v769 = vunpack.c.l.b16 %v587
    %v770 = vunpack.c.h.b16 %v587
    %v771 = vunpack.c.l.b16 %v588
    %v772 = vunpack.c.h.b16 %v588
    %v773 = vunpack.c.l.b16 %v589
    %v774 = vunpack.c.h.b16 %v589
    %v775 = vunpack.c.l.b16 %v590
    %v776 = vunpack.c.h.b16 %v590
    %v777 = vunpack.c.l.b16 %v591
    %v778 = vunpack.c.h.b16 %v591
    %v779 = vunpack.c.l.b16 %v592
    %v780 = vunpack.c.h.b16 %v592
    %v781 = vunpack.c.l.b16 %v593
    %v782 = vunpack.c.h.b16 %v593
    %v783 = vunpack.c.l.b16 %v594
    %v784 = vunpack.c.h.b16 %v594
    %v785 = vunpack.c.l.b16 %v595
    %v786 = vunpack.c.h.b16 %v595
    %v787 = vunpack.c.l.b16 %v596
    %v788 = vunpack.c.h.b16 %v596
    %v789 = vunpack.c.l.b16 %v597
    %v790 = vunpack.c.h.b16 %v597
    %v791 = vunpack.c.l.b16 %v598
    %v792 = vunpack.c.h.b16 %v598
    %v793 = vunpack.c.l.b16 %v599
    %v794 = vunpack.c.h.b16 %v599
    %v795 = vunpack.c.l.b16 %v600
    %v796 = vunpack.c.h.b16 %v600
    %v797 = vunpack.c.l.b16 %v601
    %v798 = vunpack.c.h.b16 %v601
    %v799 = vunpack.c.l.b16 %v602
    %v800 = vunpack.c.h.b16 %v602
    %v801 = vunpack.c.l.b16 %v603
    %v802 = vunpack.c.h.b16 %v603
    %v803 = vunpack.c.l.b16 %v604
    %v804 = vunpack.c.h.b16 %v604
    %v805 = vunpack.c.l.b16 %v605
    %v806 = vunpack.c.h.b16 %v605
    %v807 = vpack.c.b16 %v687, %v679
    %v808 = vpack.c.b16 %v688, %v680
    %v809 = vpack.c.b16 %v689, %v681
    %v810 = vpack.c.b16 %v690, %v682
    %v811 = vpack.c.b16 %v691, %v683
    %v812 = vpack.c.b16 %v692, %v684
    %v813 = vpack.c.b16 %v693, %v685
    %v814 = vpack.c.b16 %v694, %v686
    %v815 = vpack.c.b16 %v703, %v695
    %v816 = vpack.c.b16 %v704, %v696
    %v817 = vpack.c.b16 %v705, %v697
    %v818 = vpack.c.b16 %v706, %v698
    %v819 = vpack.c.b16 %v707, %v699
    %v820 = vpack.c.b16 %v708, %v700
    %v821 = vpack.c.b16 %v709, %v701
    %v822 = vpack.c.b16 %v710, %v702
    %v823 = vpack.c.b16 %v719, %v711
    %v824 = vpack.c.b16 %v720, %v712
    %v825 = vpack.c.b16 %v721, %v713
    %v826 = vpack.c.b16 %v722, %v714
    %v827 = vpack.c.b16 %v723, %v715
    %v828 = vpack.c.b16 %v724, %v716
    %v829 = vpack.c.b16 %v725, %v717
    %v830 = vpack.c.b16 %v726, %v718
    %v831 = vpack.c.b16 %v735, %v727
    %v832 = vpack.c.b16 %v736, %v728
    %v833 = vpack.c.b16 %v737, %v729
    %v834 = vpack.c.b16 %v738, %v730
    %v835 = vpack.c.b16 %v739, %v731
    %v836 = vpack.c.b16 %v740, %v732
    %v837 = vpack.c.b16 %v741, %v733
    %v838 = vpack.c.b16 %v742, %v734
    %v839 = vpack.c.b16 %v751, %v743
    %v840 = vpack.c.b16 %v752, %v744
    %v841 = vpack.c.b16 %v753, %v745
    %v842 = vpack.c.b16 %v754, %v746
    %v843 = vpack.c.b16 %v755, %v747
    %v844 = vpack.c.b16 %v756, %v748
    %v845 = vpack.c.b16 %v757, %v749
    %v846 = vpack.c.b16 %v758, %v750
    %v847 = vpack.c.b16 %v767, %v759
    %v848 = vpack.c.b16 %v768, %v760
    %v849 = vpack.c.b16 %v769, %v761
    %v850 = vpack.c.b16 %v770, %v762
    %v851 = vpack.c.b16 %v771, %v763
    %v852 = vpack.c.b16 %v772, %v764
    %v853 = vpack.c.b16 %v773, %v765
    %v854 = vpack.c.b16 %v774, %v766
    %v855 = vpack.c.b16 %v783, %v775
    %v856 = vpack.c.b16 %v784, %v776
    %v857 = vpack.c.b16 %v785, %v777
    %v858 = vpack.c.b16 %v786, %v778
    %v859 = vpack.c.b16 %v787, %v779
    %v860 = vpack.c.b16 %v788, %v780
    %v861 = vpack.c.b16 %v789, %v781
    %v862 = vpack.c.b16 %v790, %v782
    %v863 = vpack.c.b16 %v799, %v791
    %v864 = vpack.c.b16 %v800, %v792
    %v865 = vpack.c.b16 %v801, %v793
    %v866 = vpack.c.b16 %v802, %v794
    %v867 = vpack.c.b16 %v803, %v795
    %v868 = vpack.c.b16 %v804, %v796
    %v869 = vpack.c.b16 %v805, %v797
    %v870 = vpack.c.b16 %v806, %v798
    %935 = vmatprep.subr.bf16.mxu0 %v808
    %936 = vmatpush1.bf16.msra.mxu0 %v807
    %937 = vmatprep.subr.bf16.mxu0 %v816
    %938 = vmatpush1.bf16.msra.mxu0 %v815
    %939 = vmatprep.subr.bf16.mxu0 %v824
    %940 = vmatpush1.bf16.msra.mxu0 %v823
    %941 = vmatprep.subr.bf16.mxu0 %v832
    %942 = vmatpush1.bf16.msra.mxu0 %v831
    %943 = vmatprep.subr.bf16.mxu0 %v840
    %944 = vmatpush1.bf16.msra.mxu0 %v839
    %945 = vmatprep.subr.bf16.mxu0 %v848
    %946 = vmatpush1.bf16.msra.mxu0 %v847
    %947 = vmatprep.subr.bf16.mxu0 %v856
    %948 = vmatpush1.bf16.msra.mxu0 %v855
    %949 = vmatprep.subr.bf16.mxu0 %v864
    %950 = vmatpush1.bf16.msra.mxu0 %v863
    %951 = vmatprep.subr.bf16.mxu0 0
    %952 = vmatpush1.bf16.msra.mxu0 0
    %953 = vmatprep.subr.bf16.mxu0 0
    %954 = vmatpush1.bf16.msra.mxu0 0
    %955 = vmatprep.subr.bf16.mxu0 0
    %956 = vmatpush1.bf16.msra.mxu0 0
    %957 = vmatprep.subr.bf16.mxu0 0
    %958 = vmatpush1.bf16.msra.mxu0 0
    %959 = vmatprep.subr.bf16.mxu0 0
    %960 = vmatpush1.bf16.msra.mxu0 0
    %961 = vmatprep.subr.bf16.mxu0 0
    %962 = vmatpush1.bf16.msra.mxu0 0
    %963 = vmatprep.subr.bf16.mxu0 0
    %964 = vmatpush1.bf16.msra.mxu0 0
    %965 = vmatprep.subr.bf16.mxu0 0
    %966 = vmatpush1.bf16.msra.mxu0 0
    %967 = vmatprep.mubr.bf16.mxu0 0
    %968 = vmatmul.mubr.bf16.gmra.mrb[0].mxu0 %v613
    %v969 = vpop.f32.mrb[0].mxu0
    %v970 = vadd.f32 0.0, %v969
    %v971 = vpop.f32.mrb[0].mxu0
    %v972 = vadd.f32 0.0, %v971
    %v973 = vpop.f32.mrb[0].mxu0
    %v974 = vpop.f32.mrb[0].mxu0
    %975 = vdwg.mxu0
    %976 = vmatprep.subr.bf16.mxu0 %v810
    %977 = vmatpush1.bf16.msra.mxu0 %v809
    %978 = vmatprep.subr.bf16.mxu0 %v818
    %979 = vmatpush1.bf16.msra.mxu0 %v817
    %980 = vmatprep.subr.bf16.mxu0 %v826
    %981 = vmatpush1.bf16.msra.mxu0 %v825
    %982 = vmatprep.subr.bf16.mxu0 %v834
    %983 = vmatpush1.bf16.msra.mxu0 %v833
    %984 = vmatprep.subr.bf16.mxu0 %v842
    %985 = vmatpush1.bf16.msra.mxu0 %v841
    %986 = vmatprep.subr.bf16.mxu0 %v850
    %987 = vmatpush1.bf16.msra.mxu0 %v849
    %988 = vmatprep.subr.bf16.mxu0 %v858
    %989 = vmatpush1.bf16.msra.mxu0 %v857
    %990 = vmatprep.subr.bf16.mxu0 %v866
    %991 = vmatpush1.bf16.msra.mxu0 %v865
    %992 = vmatprep.subr.bf16.mxu0 0
    %993 = vmatpush1.bf16.msra.mxu0 0
    %994 = vmatprep.subr.bf16.mxu0 0
    %995 = vmatpush1.bf16.msra.mxu0 0
    %996 = vmatprep.subr.bf16.mxu0 0
    %997 = vmatpush1.bf16.msra.mxu0 0
    %998 = vmatprep.subr.bf16.mxu0 0
    %999 = vmatpush1.bf16.msra.mxu0 0
    %1000 = vmatprep.subr.bf16.mxu0 0
    %1001 = vmatpush1.bf16.msra.mxu0 0
    %1002 = vmatprep.subr.bf16.mxu0 0
    %1003 = vmatpush1.bf16.msra.mxu0 0
    %1004 = vmatprep.subr.bf16.mxu0 0
    %1005 = vmatpush1.bf16.msra.mxu0 0
    %1006 = vmatprep.subr.bf16.mxu0 0
    %1007 = vmatpush1.bf16.msra.mxu0 0
    %1008 = vmatprep.mubr.bf16.mxu0 0
    %1009 = vmatmul.mubr.bf16.gmra.mrb[0].mxu0 %v613
    %v1010 = vpop.f32.mrb[0].mxu0
    %v1011 = vadd.f32 0.0, %v1010
    %v1012 = vpop.f32.mrb[0].mxu0
    %v1013 = vadd.f32 0.0, %v1012
    %v1014 = vpop.f32.mrb[0].mxu0
    %v1015 = vpop.f32.mrb[0].mxu0
    %1016 = vdwg.mxu0
    %1017 = vmatprep.subr.bf16.mxu0 %v812
    %1018 = vmatpush1.bf16.msra.mxu0 %v811
    %1019 = vmatprep.subr.bf16.mxu0 %v820
    %1020 = vmatpush1.bf16.msra.mxu0 %v819
    %1021 = vmatprep.subr.bf16.mxu0 %v828
    %1022 = vmatpush1.bf16.msra.mxu0 %v827
    %1023 = vmatprep.subr.bf16.mxu0 %v836
    %1024 = vmatpush1.bf16.msra.mxu0 %v835
    %1025 = vmatprep.subr.bf16.mxu0 %v844
    %1026 = vmatpush1.bf16.msra.mxu0 %v843
    %1027 = vmatprep.subr.bf16.mxu0 %v852
    %1028 = vmatpush1.bf16.msra.mxu0 %v851
    %1029 = vmatprep.subr.bf16.mxu0 %v860
    %1030 = vmatpush1.bf16.msra.mxu0 %v859
    %1031 = vmatprep.subr.bf16.mxu0 %v868
    %1032 = vmatpush1.bf16.msra.mxu0 %v867
    %1033 = vmatprep.subr.bf16.mxu0 0
    %1034 = vmatpush1.bf16.msra.mxu0 0
    %1035 = vmatprep.subr.bf16.mxu0 0
    %1036 = vmatpush1.bf16.msra.mxu0 0
    %1037 = vmatprep.subr.bf16.mxu0 0
    %1038 = vmatpush1.bf16.msra.mxu0 0
    %1039 = vmatprep.subr.bf16.mxu0 0
    %1040 = vmatpush1.bf16.msra.mxu0 0
    %1041 = vmatprep.subr.bf16.mxu0 0
    %1042 = vmatpush1.bf16.msra.mxu0 0
    %1043 = vmatprep.subr.bf16.mxu0 0
    %1044 = vmatpush1.bf16.msra.mxu0 0
    %1045 = vmatprep.subr.bf16.mxu0 0
    %1046 = vmatpush1.bf16.msra.mxu0 0
    %1047 = vmatprep.subr.bf16.mxu0 0
    %1048 = vmatpush1.bf16.msra.mxu0 0
    %1049 = vmatprep.mubr.bf16.mxu0 0
    %1050 = vmatmul.mubr.bf16.gmra.mrb[0].mxu0 %v613
    %v1051 = vpop.f32.mrb[0].mxu0
    %v1052 = vadd.f32 0.0, %v1051
    %v1053 = vpop.f32.mrb[0].mxu0
    %v1054 = vadd.f32 0.0, %v1053
    %v1055 = vpop.f32.mrb[0].mxu0
    %v1056 = vpop.f32.mrb[0].mxu0
    %1057 = vdwg.mxu0
    %1058 = vmatprep.subr.bf16.mxu0 %v814
    %1059 = vmatpush1.bf16.msra.mxu0 %v813
    %1060 = vmatprep.subr.bf16.mxu0 %v822
    %1061 = vmatpush1.bf16.msra.mxu0 %v821
    %1062 = vmatprep.subr.bf16.mxu0 %v830
    %1063 = vmatpush1.bf16.msra.mxu0 %v829
    %1064 = vmatprep.subr.bf16.mxu0 %v838
    %1065 = vmatpush1.bf16.msra.mxu0 %v837
    %1066 = vmatprep.subr.bf16.mxu0 %v846
    %1067 = vmatpush1.bf16.msra.mxu0 %v845
    %1068 = vmatprep.subr.bf16.mxu0 %v854
    %1069 = vmatpush1.bf16.msra.mxu0 %v853
    %1070 = vmatprep.subr.bf16.mxu0 %v862
    %1071 = vmatpush1.bf16.msra.mxu0 %v861
    %1072 = vmatprep.subr.bf16.mxu0 %v870
    %1073 = vmatpush1.bf16.msra.mxu0 %v869
    %1074 = vmatprep.subr.bf16.mxu0 0
    %1075 = vmatpush1.bf16.msra.mxu0 0
    %1076 = vmatprep.subr.bf16.mxu0 0
    %1077 = vmatpush1.bf16.msra.mxu0 0
    %1078 = vmatprep.subr.bf16.mxu0 0
    %1079 = vmatpush1.bf16.msra.mxu0 0
    %1080 = vmatprep.subr.bf16.mxu0 0
    %1081 = vmatpush1.bf16.msra.mxu0 0
    %1082 = vmatprep.subr.bf16.mxu0 0
    %1083 = vmatpush1.bf16.msra.mxu0 0
    %1084 = vmatprep.subr.bf16.mxu0 0
    %1085 = vmatpush1.bf16.msra.mxu0 0
    %1086 = vmatprep.subr.bf16.mxu0 0
    %1087 = vmatpush1.bf16.msra.mxu0 0
    %1088 = vmatprep.subr.bf16.mxu0 0
    %1089 = vmatpush1.bf16.msra.mxu0 0
    %1090 = vmatprep.mubr.bf16.mxu0 0
    %1091 = vmatmul.mubr.bf16.gmra.mrb[0].mxu0 %v613
    %v1092 = vpop.f32.mrb[0].mxu0
    %v1093 = vadd.f32 0.0, %v1092
    %v1094 = vpop.f32.mrb[0].mxu0
    %v1095 = vadd.f32 0.0, %v1094
    %v1096 = vpop.f32.mrb[0].mxu0
    %v1097 = vpop.f32.mrb[0].mxu0
    %1098 = vdwg.mxu0
    %v1101 = vunpack.c.l.b16 %v472
    %v1102 = vunpack.c.l.b16 %v473
    %v1103 = vrot.slane %v1102, 7
    %v1104 = vsel %vm611, %v1103, %v1101
    %v1105 = vpack.c.b16 %v1104, %v1104
    %v1171 = vunpack.c.l.b16 %v474
    %v1172 = vunpack.c.h.b16 %v474
    %v1173 = vunpack.c.l.b16 %v475
    %v1174 = vunpack.c.h.b16 %v475
    %v1175 = vunpack.c.l.b16 %v476
    %v1176 = vunpack.c.h.b16 %v476
    %v1177 = vunpack.c.l.b16 %v477
    %v1178 = vunpack.c.h.b16 %v477
    %v1179 = vunpack.c.l.b16 %v478
    %v1180 = vunpack.c.h.b16 %v478
    %v1181 = vunpack.c.l.b16 %v479
    %v1182 = vunpack.c.h.b16 %v479
    %v1183 = vunpack.c.l.b16 %v480
    %v1184 = vunpack.c.h.b16 %v480
    %v1185 = vunpack.c.l.b16 %v481
    %v1186 = vunpack.c.h.b16 %v481
    %v1187 = vunpack.c.l.b16 %v482
    %v1188 = vunpack.c.h.b16 %v482
    %v1189 = vunpack.c.l.b16 %v483
    %v1190 = vunpack.c.h.b16 %v483
    %v1191 = vunpack.c.l.b16 %v484
    %v1192 = vunpack.c.h.b16 %v484
    %v1193 = vunpack.c.l.b16 %v485
    %v1194 = vunpack.c.h.b16 %v485
    %v1195 = vunpack.c.l.b16 %v486
    %v1196 = vunpack.c.h.b16 %v486
    %v1197 = vunpack.c.l.b16 %v487
    %v1198 = vunpack.c.h.b16 %v487
    %v1199 = vunpack.c.l.b16 %v488
    %v1200 = vunpack.c.h.b16 %v488
    %v1201 = vunpack.c.l.b16 %v489
    %v1202 = vunpack.c.h.b16 %v489
    %v1203 = vunpack.c.l.b16 %v490
    %v1204 = vunpack.c.h.b16 %v490
    %v1205 = vunpack.c.l.b16 %v491
    %v1206 = vunpack.c.h.b16 %v491
    %v1207 = vunpack.c.l.b16 %v492
    %v1208 = vunpack.c.h.b16 %v492
    %v1209 = vunpack.c.l.b16 %v493
    %v1210 = vunpack.c.h.b16 %v493
    %v1211 = vunpack.c.l.b16 %v494
    %v1212 = vunpack.c.h.b16 %v494
    %v1213 = vunpack.c.l.b16 %v495
    %v1214 = vunpack.c.h.b16 %v495
    %v1215 = vunpack.c.l.b16 %v496
    %v1216 = vunpack.c.h.b16 %v496
    %v1217 = vunpack.c.l.b16 %v497
    %v1218 = vunpack.c.h.b16 %v497
    %v1219 = vunpack.c.l.b16 %v498
    %v1220 = vunpack.c.h.b16 %v498
    %v1221 = vunpack.c.l.b16 %v499
    %v1222 = vunpack.c.h.b16 %v499
    %v1223 = vunpack.c.l.b16 %v500
    %v1224 = vunpack.c.h.b16 %v500
    %v1225 = vunpack.c.l.b16 %v501
    %v1226 = vunpack.c.h.b16 %v501
    %v1227 = vunpack.c.l.b16 %v502
    %v1228 = vunpack.c.h.b16 %v502
    %v1229 = vunpack.c.l.b16 %v503
    %v1230 = vunpack.c.h.b16 %v503
    %v1231 = vunpack.c.l.b16 %v504
    %v1232 = vunpack.c.h.b16 %v504
    %v1233 = vunpack.c.l.b16 %v505
    %v1234 = vunpack.c.h.b16 %v505
    %v1235 = vunpack.c.l.b16 %v506
    %v1236 = vunpack.c.h.b16 %v506
    %v1237 = vunpack.c.l.b16 %v507
    %v1238 = vunpack.c.h.b16 %v507
    %v1239 = vunpack.c.l.b16 %v508
    %v1240 = vunpack.c.h.b16 %v508
    %v1241 = vunpack.c.l.b16 %v509
    %v1242 = vunpack.c.h.b16 %v509
    %v1243 = vunpack.c.l.b16 %v510
    %v1244 = vunpack.c.h.b16 %v510
    %v1245 = vunpack.c.l.b16 %v511
    %v1246 = vunpack.c.h.b16 %v511
    %v1247 = vunpack.c.l.b16 %v512
    %v1248 = vunpack.c.h.b16 %v512
    %v1249 = vunpack.c.l.b16 %v513
    %v1250 = vunpack.c.h.b16 %v513
    %v1251 = vunpack.c.l.b16 %v514
    %v1252 = vunpack.c.h.b16 %v514
    %v1253 = vunpack.c.l.b16 %v515
    %v1254 = vunpack.c.h.b16 %v515
    %v1255 = vunpack.c.l.b16 %v516
    %v1256 = vunpack.c.h.b16 %v516
    %v1257 = vunpack.c.l.b16 %v517
    %v1258 = vunpack.c.h.b16 %v517
    %v1259 = vunpack.c.l.b16 %v518
    %v1260 = vunpack.c.h.b16 %v518
    %v1261 = vunpack.c.l.b16 %v519
    %v1262 = vunpack.c.h.b16 %v519
    %v1263 = vunpack.c.l.b16 %v520
    %v1264 = vunpack.c.h.b16 %v520
    %v1265 = vunpack.c.l.b16 %v521
    %v1266 = vunpack.c.h.b16 %v521
    %v1267 = vunpack.c.l.b16 %v522
    %v1268 = vunpack.c.h.b16 %v522
    %v1269 = vunpack.c.l.b16 %v523
    %v1270 = vunpack.c.h.b16 %v523
    %v1271 = vunpack.c.l.b16 %v524
    %v1272 = vunpack.c.h.b16 %v524
    %v1273 = vunpack.c.l.b16 %v525
    %v1274 = vunpack.c.h.b16 %v525
    %v1275 = vunpack.c.l.b16 %v526
    %v1276 = vunpack.c.h.b16 %v526
    %v1277 = vunpack.c.l.b16 %v527
    %v1278 = vunpack.c.h.b16 %v527
    %v1279 = vunpack.c.l.b16 %v528
    %v1280 = vunpack.c.h.b16 %v528
    %v1281 = vunpack.c.l.b16 %v529
    %v1282 = vunpack.c.h.b16 %v529
    %v1283 = vunpack.c.l.b16 %v530
    %v1284 = vunpack.c.h.b16 %v530
    %v1285 = vunpack.c.l.b16 %v531
    %v1286 = vunpack.c.h.b16 %v531
    %v1287 = vunpack.c.l.b16 %v532
    %v1288 = vunpack.c.h.b16 %v532
    %v1289 = vunpack.c.l.b16 %v533
    %v1290 = vunpack.c.h.b16 %v533
    %v1291 = vunpack.c.l.b16 %v534
    %v1292 = vunpack.c.h.b16 %v534
    %v1293 = vunpack.c.l.b16 %v535
    %v1294 = vunpack.c.h.b16 %v535
    %v1295 = vunpack.c.l.b16 %v536
    %v1296 = vunpack.c.h.b16 %v536
    %v1297 = vunpack.c.l.b16 %v537
    %v1298 = vunpack.c.h.b16 %v537
    %v1299 = vpack.c.b16 %v1179, %v1171
    %v1300 = vpack.c.b16 %v1180, %v1172
    %v1301 = vpack.c.b16 %v1181, %v1173
    %v1302 = vpack.c.b16 %v1182, %v1174
    %v1303 = vpack.c.b16 %v1183, %v1175
    %v1304 = vpack.c.b16 %v1184, %v1176
    %v1305 = vpack.c.b16 %v1185, %v1177
    %v1306 = vpack.c.b16 %v1186, %v1178
    %v1307 = vpack.c.b16 %v1195, %v1187
    %v1308 = vpack.c.b16 %v1196, %v1188
    %v1309 = vpack.c.b16 %v1197, %v1189
    %v1310 = vpack.c.b16 %v1198, %v1190
    %v1311 = vpack.c.b16 %v1199, %v1191
    %v1312 = vpack.c.b16 %v1200, %v1192
    %v1313 = vpack.c.b16 %v1201, %v1193
    %v1314 = vpack.c.b16 %v1202, %v1194
    %v1315 = vpack.c.b16 %v1211, %v1203
    %v1316 = vpack.c.b16 %v1212, %v1204
    %v1317 = vpack.c.b16 %v1213, %v1205
    %v1318 = vpack.c.b16 %v1214, %v1206
    %v1319 = vpack.c.b16 %v1215, %v1207
    %v1320 = vpack.c.b16 %v1216, %v1208
    %v1321 = vpack.c.b16 %v1217, %v1209
    %v1322 = vpack.c.b16 %v1218, %v1210
    %v1323 = vpack.c.b16 %v1227, %v1219
    %v1324 = vpack.c.b16 %v1228, %v1220
    %v1325 = vpack.c.b16 %v1229, %v1221
    %v1326 = vpack.c.b16 %v1230, %v1222
    %v1327 = vpack.c.b16 %v1231, %v1223
    %v1328 = vpack.c.b16 %v1232, %v1224
    %v1329 = vpack.c.b16 %v1233, %v1225
    %v1330 = vpack.c.b16 %v1234, %v1226
    %v1331 = vpack.c.b16 %v1243, %v1235
    %v1332 = vpack.c.b16 %v1244, %v1236
    %v1333 = vpack.c.b16 %v1245, %v1237
    %v1334 = vpack.c.b16 %v1246, %v1238
    %v1335 = vpack.c.b16 %v1247, %v1239
    %v1336 = vpack.c.b16 %v1248, %v1240
    %v1337 = vpack.c.b16 %v1249, %v1241
    %v1338 = vpack.c.b16 %v1250, %v1242
    %v1339 = vpack.c.b16 %v1259, %v1251
    %v1340 = vpack.c.b16 %v1260, %v1252
    %v1341 = vpack.c.b16 %v1261, %v1253
    %v1342 = vpack.c.b16 %v1262, %v1254
    %v1343 = vpack.c.b16 %v1263, %v1255
    %v1344 = vpack.c.b16 %v1264, %v1256
    %v1345 = vpack.c.b16 %v1265, %v1257
    %v1346 = vpack.c.b16 %v1266, %v1258
    %v1347 = vpack.c.b16 %v1275, %v1267
    %v1348 = vpack.c.b16 %v1276, %v1268
    %v1349 = vpack.c.b16 %v1277, %v1269
    %v1350 = vpack.c.b16 %v1278, %v1270
    %v1351 = vpack.c.b16 %v1279, %v1271
    %v1352 = vpack.c.b16 %v1280, %v1272
    %v1353 = vpack.c.b16 %v1281, %v1273
    %v1354 = vpack.c.b16 %v1282, %v1274
    %v1355 = vpack.c.b16 %v1291, %v1283
    %v1356 = vpack.c.b16 %v1292, %v1284
    %v1357 = vpack.c.b16 %v1293, %v1285
    %v1358 = vpack.c.b16 %v1294, %v1286
    %v1359 = vpack.c.b16 %v1295, %v1287
    %v1360 = vpack.c.b16 %v1296, %v1288
    %v1361 = vpack.c.b16 %v1297, %v1289
    %v1362 = vpack.c.b16 %v1298, %v1290
    %1427 = vmatprep.subr.bf16.mxu0 %v1300
    %1428 = vmatpush1.bf16.msra.mxu0 %v1299
    %1429 = vmatprep.subr.bf16.mxu0 %v1308
    %1430 = vmatpush1.bf16.msra.mxu0 %v1307
    %1431 = vmatprep.subr.bf16.mxu0 %v1316
    %1432 = vmatpush1.bf16.msra.mxu0 %v1315
    %1433 = vmatprep.subr.bf16.mxu0 %v1324
    %1434 = vmatpush1.bf16.msra.mxu0 %v1323
    %1435 = vmatprep.subr.bf16.mxu0 %v1332
    %1436 = vmatpush1.bf16.msra.mxu0 %v1331
    %1437 = vmatprep.subr.bf16.mxu0 %v1340
    %1438 = vmatpush1.bf16.msra.mxu0 %v1339
    %1439 = vmatprep.subr.bf16.mxu0 %v1348
    %1440 = vmatpush1.bf16.msra.mxu0 %v1347
    %1441 = vmatprep.subr.bf16.mxu0 %v1356
    %1442 = vmatpush1.bf16.msra.mxu0 %v1355
    %1443 = vmatprep.subr.bf16.mxu0 0
    %1444 = vmatpush1.bf16.msra.mxu0 0
    %1445 = vmatprep.subr.bf16.mxu0 0
    %1446 = vmatpush1.bf16.msra.mxu0 0
    %1447 = vmatprep.subr.bf16.mxu0 0
    %1448 = vmatpush1.bf16.msra.mxu0 0
    %1449 = vmatprep.subr.bf16.mxu0 0
    %1450 = vmatpush1.bf16.msra.mxu0 0
    %1451 = vmatprep.subr.bf16.mxu0 0
    %1452 = vmatpush1.bf16.msra.mxu0 0
    %1453 = vmatprep.subr.bf16.mxu0 0
    %1454 = vmatpush1.bf16.msra.mxu0 0
    %1455 = vmatprep.subr.bf16.mxu0 0
    %1456 = vmatpush1.bf16.msra.mxu0 0
    %1457 = vmatprep.subr.bf16.mxu0 0
    %1458 = vmatpush1.bf16.msra.mxu0 0
    %1459 = vmatprep.mubr.bf16.mxu0 0
    %1460 = vmatmul.mubr.bf16.gmra.mrb[0].mxu0 %v1105
    %v1461 = vpop.f32.mrb[0].mxu0
    %v1462 = vadd.f32 %v970, %v1461
    %v1463 = vpop.f32.mrb[0].mxu0
    %v1464 = vadd.f32 %v972, %v1463
    %v1465 = vpop.f32.mrb[0].mxu0
    %v1466 = vpop.f32.mrb[0].mxu0
    %1467 = vdwg.mxu0
    %1468 = vmatprep.subr.bf16.mxu0 %v1302
    %1469 = vmatpush1.bf16.msra.mxu0 %v1301
    %1470 = vmatprep.subr.bf16.mxu0 %v1310
    %1471 = vmatpush1.bf16.msra.mxu0 %v1309
    %1472 = vmatprep.subr.bf16.mxu0 %v1318
    %1473 = vmatpush1.bf16.msra.mxu0 %v1317
    %1474 = vmatprep.subr.bf16.mxu0 %v1326
    %1475 = vmatpush1.bf16.msra.mxu0 %v1325
    %1476 = vmatprep.subr.bf16.mxu0 %v1334
    %1477 = vmatpush1.bf16.msra.mxu0 %v1333
    %1478 = vmatprep.subr.bf16.mxu0 %v1342
    %1479 = vmatpush1.bf16.msra.mxu0 %v1341
    %1480 = vmatprep.subr.bf16.mxu0 %v1350
    %1481 = vmatpush1.bf16.msra.mxu0 %v1349
    %1482 = vmatprep.subr.bf16.mxu0 %v1358
    %1483 = vmatpush1.bf16.msra.mxu0 %v1357
    %1484 = vmatprep.subr.bf16.mxu0 0
    %1485 = vmatpush1.bf16.msra.mxu0 0
    %1486 = vmatprep.subr.bf16.mxu0 0
    %1487 = vmatpush1.bf16.msra.mxu0 0
    %1488 = vmatprep.subr.bf16.mxu0 0
    %1489 = vmatpush1.bf16.msra.mxu0 0
    %1490 = vmatprep.subr.bf16.mxu0 0
    %1491 = vmatpush1.bf16.msra.mxu0 0
    %1492 = vmatprep.subr.bf16.mxu0 0
    %1493 = vmatpush1.bf16.msra.mxu0 0
    %1494 = vmatprep.subr.bf16.mxu0 0
    %1495 = vmatpush1.bf16.msra.mxu0 0
    %1496 = vmatprep.subr.bf16.mxu0 0
    %1497 = vmatpush1.bf16.msra.mxu0 0
    %1498 = vmatprep.subr.bf16.mxu0 0
    %1499 = vmatpush1.bf16.msra.mxu0 0
    %1500 = vmatprep.mubr.bf16.mxu0 0
    %1501 = vmatmul.mubr.bf16.gmra.mrb[0].mxu0 %v1105
    %v1502 = vpop.f32.mrb[0].mxu0
    %v1503 = vadd.f32 %v1011, %v1502
    %v1504 = vpop.f32.mrb[0].mxu0
    %v1505 = vadd.f32 %v1013, %v1504
    %v1506 = vpop.f32.mrb[0].mxu0
    %v1507 = vpop.f32.mrb[0].mxu0
    %1508 = vdwg.mxu0
    %1509 = vmatprep.subr.bf16.mxu0 %v1304
    %1510 = vmatpush1.bf16.msra.mxu0 %v1303
    %1511 = vmatprep.subr.bf16.mxu0 %v1312
    %1512 = vmatpush1.bf16.msra.mxu0 %v1311
    %1513 = vmatprep.subr.bf16.mxu0 %v1320
    %1514 = vmatpush1.bf16.msra.mxu0 %v1319
    %1515 = vmatprep.subr.bf16.mxu0 %v1328
    %1516 = vmatpush1.bf16.msra.mxu0 %v1327
    %1517 = vmatprep.subr.bf16.mxu0 %v1336
    %1518 = vmatpush1.bf16.msra.mxu0 %v1335
    %1519 = vmatprep.subr.bf16.mxu0 %v1344
    %1520 = vmatpush1.bf16.msra.mxu0 %v1343
    %1521 = vmatprep.subr.bf16.mxu0 %v1352
    %1522 = vmatpush1.bf16.msra.mxu0 %v1351
    %1523 = vmatprep.subr.bf16.mxu0 %v1360
    %1524 = vmatpush1.bf16.msra.mxu0 %v1359
    %1525 = vmatprep.subr.bf16.mxu0 0
    %1526 = vmatpush1.bf16.msra.mxu0 0
    %1527 = vmatprep.subr.bf16.mxu0 0
    %1528 = vmatpush1.bf16.msra.mxu0 0
    %1529 = vmatprep.subr.bf16.mxu0 0
    %1530 = vmatpush1.bf16.msra.mxu0 0
    %1531 = vmatprep.subr.bf16.mxu0 0
    %1532 = vmatpush1.bf16.msra.mxu0 0
    %1533 = vmatprep.subr.bf16.mxu0 0
    %1534 = vmatpush1.bf16.msra.mxu0 0
    %1535 = vmatprep.subr.bf16.mxu0 0
    %1536 = vmatpush1.bf16.msra.mxu0 0
    %1537 = vmatprep.subr.bf16.mxu0 0
    %1538 = vmatpush1.bf16.msra.mxu0 0
    %1539 = vmatprep.subr.bf16.mxu0 0
    %1540 = vmatpush1.bf16.msra.mxu0 0
    %1541 = vmatprep.mubr.bf16.mxu0 0
    %1542 = vmatmul.mubr.bf16.gmra.mrb[0].mxu0 %v1105
    %v1543 = vpop.f32.mrb[0].mxu0
    %v1544 = vadd.f32 %v1052, %v1543
    %v1545 = vpop.f32.mrb[0].mxu0
    %v1546 = vadd.f32 %v1054, %v1545
    %v1547 = vpop.f32.mrb[0].mxu0
    %v1548 = vpop.f32.mrb[0].mxu0
    %1549 = vdwg.mxu0
    %1550 = vmatprep.subr.bf16.mxu0 %v1306
    %1551 = vmatpush1.bf16.msra.mxu0 %v1305
    %1552 = vmatprep.subr.bf16.mxu0 %v1314
    %1553 = vmatpush1.bf16.msra.mxu0 %v1313
    %1554 = vmatprep.subr.bf16.mxu0 %v1322
    %1555 = vmatpush1.bf16.msra.mxu0 %v1321
    %1556 = vmatprep.subr.bf16.mxu0 %v1330
    %1557 = vmatpush1.bf16.msra.mxu0 %v1329
    %1558 = vmatprep.subr.bf16.mxu0 %v1338
    %1559 = vmatpush1.bf16.msra.mxu0 %v1337
    %1560 = vmatprep.subr.bf16.mxu0 %v1346
    %1561 = vmatpush1.bf16.msra.mxu0 %v1345
    %1562 = vmatprep.subr.bf16.mxu0 %v1354
    %1563 = vmatpush1.bf16.msra.mxu0 %v1353
    %1564 = vmatprep.subr.bf16.mxu0 %v1362
    %1565 = vmatpush1.bf16.msra.mxu0 %v1361
    %1566 = vmatprep.subr.bf16.mxu0 0
    %1567 = vmatpush1.bf16.msra.mxu0 0
    %1568 = vmatprep.subr.bf16.mxu0 0
    %1569 = vmatpush1.bf16.msra.mxu0 0
    %1570 = vmatprep.subr.bf16.mxu0 0
    %1571 = vmatpush1.bf16.msra.mxu0 0
    %1572 = vmatprep.subr.bf16.mxu0 0
    %1573 = vmatpush1.bf16.msra.mxu0 0
    %1574 = vmatprep.subr.bf16.mxu0 0
    %1575 = vmatpush1.bf16.msra.mxu0 0
    %1576 = vmatprep.subr.bf16.mxu0 0
    %1577 = vmatpush1.bf16.msra.mxu0 0
    %1578 = vmatprep.subr.bf16.mxu0 0
    %1579 = vmatpush1.bf16.msra.mxu0 0
    %1580 = vmatprep.subr.bf16.mxu0 0
    %1581 = vmatpush1.bf16.msra.mxu0 0
    %1582 = vmatprep.mubr.bf16.mxu0 0
    %1583 = vmatmul.mubr.bf16.gmra.mrb[0].mxu0 %v1105
    %v1584 = vpop.f32.mrb[0].mxu0
    %v1585 = vadd.f32 %v1093, %v1584
    %v1586 = vpop.f32.mrb[0].mxu0
    %v1587 = vadd.f32 %v1095, %v1586
    %v1588 = vpop.f32.mrb[0].mxu0
    %v1589 = vpop.f32.mrb[0].mxu0
    %1590 = vdwg.mxu0
    %v1591 = vld [vmem:[#allocation2 + $0x2] sm:$0x1]
    %v1592 = vld [vmem:[#allocation2 + $0x12] sm:$0x1]
    %v1593 = vpack.c.bf16 %v1591, %v1591
    %v1594 = vpack.c.bf16 %v1592, %v1592
    %v1595 = vld [vmem:[#allocation9 + $0x400] sm:$0xff]
    %v1596 = vld [vmem:[#allocation9 + $0x408] sm:$0xff]
    %v1597 = vld [vmem:[#allocation9 + $0x410] sm:$0xff]
    %v1598 = vld [vmem:[#allocation9 + $0x418] sm:$0xff]
    %v1599 = vld [vmem:[#allocation9 + $0x420] sm:$0xff]
    %v1600 = vld [vmem:[#allocation9 + $0x428] sm:$0xff]
    %v1601 = vld [vmem:[#allocation9 + $0x430] sm:$0xff]
    %v1602 = vld [vmem:[#allocation9 + $0x438] sm:$0xff]
    %v1603 = vld [vmem:[#allocation9 + $0x440] sm:$0xff]
    %v1604 = vld [vmem:[#allocation9 + $0x448] sm:$0xff]
    %v1605 = vld [vmem:[#allocation9 + $0x450] sm:$0xff]
    %v1606 = vld [vmem:[#allocation9 + $0x458] sm:$0xff]
    %v1607 = vld [vmem:[#allocation9 + $0x460] sm:$0xff]
    %v1608 = vld [vmem:[#allocation9 + $0x468] sm:$0xff]
    %v1609 = vld [vmem:[#allocation9 + $0x470] sm:$0xff]
    %v1610 = vld [vmem:[#allocation9 + $0x478] sm:$0xff]
    %v1611 = vld [vmem:[#allocation9 + $0x480] sm:$0xff]
    %v1612 = vld [vmem:[#allocation9 + $0x488] sm:$0xff]
    %v1613 = vld [vmem:[#allocation9 + $0x490] sm:$0xff]
    %v1614 = vld [vmem:[#allocation9 + $0x498] sm:$0xff]
    %v1615 = vld [vmem:[#allocation9 + $0x4a0] sm:$0xff]
    %v1616 = vld [vmem:[#allocation9 + $0x4a8] sm:$0xff]
    %v1617 = vld [vmem:[#allocation9 + $0x4b0] sm:$0xff]
    %v1618 = vld [vmem:[#allocation9 + $0x4b8] sm:$0xff]
    %v1619 = vld [vmem:[#allocation9 + $0x4c0] sm:$0xff]
    %v1620 = vld [vmem:[#allocation9 + $0x4c8] sm:$0xff]
    %v1621 = vld [vmem:[#allocation9 + $0x4d0] sm:$0xff]
    %v1622 = vld [vmem:[#allocation9 + $0x4d8] sm:$0xff]
    %v1623 = vld [vmem:[#allocation9 + $0x4e0] sm:$0xff]
    %v1624 = vld [vmem:[#allocation9 + $0x4e8] sm:$0xff]
    %v1625 = vld [vmem:[#allocation9 + $0x4f0] sm:$0xff]
    %v1626 = vld [vmem:[#allocation9 + $0x4f8] sm:$0xff]
    %v1627 = vld [vmem:[#allocation9 + $0x500] sm:$0xff]
    %v1628 = vld [vmem:[#allocation9 + $0x508] sm:$0xff]
    %v1629 = vld [vmem:[#allocation9 + $0x510] sm:$0xff]
    %v1630 = vld [vmem:[#allocation9 + $0x518] sm:$0xff]
    %v1631 = vld [vmem:[#allocation9 + $0x520] sm:$0xff]
    %v1632 = vld [vmem:[#allocation9 + $0x528] sm:$0xff]
    %v1633 = vld [vmem:[#allocation9 + $0x530] sm:$0xff]
    %v1634 = vld [vmem:[#allocation9 + $0x538] sm:$0xff]
    %v1635 = vld [vmem:[#allocation9 + $0x540] sm:$0xff]
    %v1636 = vld [vmem:[#allocation9 + $0x548] sm:$0xff]
    %v1637 = vld [vmem:[#allocation9 + $0x550] sm:$0xff]
    %v1638 = vld [vmem:[#allocation9 + $0x558] sm:$0xff]
    %v1639 = vld [vmem:[#allocation9 + $0x560] sm:$0xff]
    %v1640 = vld [vmem:[#allocation9 + $0x568] sm:$0xff]
    %v1641 = vld [vmem:[#allocation9 + $0x570] sm:$0xff]
    %v1642 = vld [vmem:[#allocation9 + $0x578] sm:$0xff]
    %v1643 = vld [vmem:[#allocation9 + $0x580] sm:$0xff]
    %v1644 = vld [vmem:[#allocation9 + $0x588] sm:$0xff]
    %v1645 = vld [vmem:[#allocation9 + $0x590] sm:$0xff]
    %v1646 = vld [vmem:[#allocation9 + $0x598] sm:$0xff]
    %v1647 = vld [vmem:[#allocation9 + $0x5a0] sm:$0xff]
    %v1648 = vld [vmem:[#allocation9 + $0x5a8] sm:$0xff]
    %v1649 = vld [vmem:[#allocation9 + $0x5b0] sm:$0xff]
    %v1650 = vld [vmem:[#allocation9 + $0x5b8] sm:$0xff]
    %v1651 = vld [vmem:[#allocation9 + $0x5c0] sm:$0xff]
    %v1652 = vld [vmem:[#allocation9 + $0x5c8] sm:$0xff]
    %v1653 = vld [vmem:[#allocation9 + $0x5d0] sm:$0xff]
    %v1654 = vld [vmem:[#allocation9 + $0x5d8] sm:$0xff]
    %v1655 = vld [vmem:[#allocation9 + $0x5e0] sm:$0xff]
    %v1656 = vld [vmem:[#allocation9 + $0x5e8] sm:$0xff]
    %v1657 = vld [vmem:[#allocation9 + $0x5f0] sm:$0xff]
    %v1658 = vld [vmem:[#allocation9 + $0x5f8] sm:$0xff]
    %v1661 = vunpack.c.l.b16 %v1593
    %v1662 = vunpack.c.l.b16 %v1594
    %v1663 = vrot.slane %v1662, 7
    %v1664 = vsel %vm611, %v1663, %v1661
    %v1665 = vpack.c.b16 %v1664, %v1664
    %v1731 = vunpack.c.l.b16 %v1595
    %v1732 = vunpack.c.h.b16 %v1595
    %v1733 = vunpack.c.l.b16 %v1596
    %v1734 = vunpack.c.h.b16 %v1596
    %v1735 = vunpack.c.l.b16 %v1597
    %v1736 = vunpack.c.h.b16 %v1597
    %v1737 = vunpack.c.l.b16 %v1598
    %v1738 = vunpack.c.h.b16 %v1598
    %v1739 = vunpack.c.l.b16 %v1599
    %v1740 = vunpack.c.h.b16 %v1599
    %v1741 = vunpack.c.l.b16 %v1600
    %v1742 = vunpack.c.h.b16 %v1600
    %v1743 = vunpack.c.l.b16 %v1601
    %v1744 = vunpack.c.h.b16 %v1601
    %v1745 = vunpack.c.l.b16 %v1602
    %v1746 = vunpack.c.h.b16 %v1602
    %v1747 = vunpack.c.l.b16 %v1603
    %v1748 = vunpack.c.h.b16 %v1603
    %v1749 = vunpack.c.l.b16 %v1604
    %v1750 = vunpack.c.h.b16 %v1604
    %v1751 = vunpack.c.l.b16 %v1605
    %v1752 = vunpack.c.h.b16 %v1605
    %v1753 = vunpack.c.l.b16 %v1606
    %v1754 = vunpack.c.h.b16 %v1606
    %v1755 = vunpack.c.l.b16 %v1607
    %v1756 = vunpack.c.h.b16 %v1607
    %v1757 = vunpack.c.l.b16 %v1608
    %v1758 = vunpack.c.h.b16 %v1608
    %v1759 = vunpack.c.l.b16 %v1609
    %v1760 = vunpack.c.h.b16 %v1609
    %v1761 = vunpack.c.l.b16 %v1610
    %v1762 = vunpack.c.h.b16 %v1610
    %v1763 = vunpack.c.l.b16 %v1611
    %v1764 = vunpack.c.h.b16 %v1611
    %v1765 = vunpack.c.l.b16 %v1612
    %v1766 = vunpack.c.h.b16 %v1612
    %v1767 = vunpack.c.l.b16 %v1613
    %v1768 = vunpack.c.h.b16 %v1613
    %v1769 = vunpack.c.l.b16 %v1614
    %v1770 = vunpack.c.h.b16 %v1614
    %v1771 = vunpack.c.l.b16 %v1615
    %v1772 = vunpack.c.h.b16 %v1615
    %v1773 = vunpack.c.l.b16 %v1616
    %v1774 = vunpack.c.h.b16 %v1616
    %v1775 = vunpack.c.l.b16 %v1617
    %v1776 = vunpack.c.h.b16 %v1617
    %v1777 = vunpack.c.l.b16 %v1618
    %v1778 = vunpack.c.h.b16 %v1618
    %v1779 = vunpack.c.l.b16 %v1619
    %v1780 = vunpack.c.h.b16 %v1619
    %v1781 = vunpack.c.l.b16 %v1620
    %v1782 = vunpack.c.h.b16 %v1620
    %v1783 = vunpack.c.l.b16 %v1621
    %v1784 = vunpack.c.h.b16 %v1621
    %v1785 = vunpack.c.l.b16 %v1622
    %v1786 = vunpack.c.h.b16 %v1622
    %v1787 = vunpack.c.l.b16 %v1623
    %v1788 = vunpack.c.h.b16 %v1623
    %v1789 = vunpack.c.l.b16 %v1624
    %v1790 = vunpack.c.h.b16 %v1624
    %v1791 = vunpack.c.l.b16 %v1625
    %v1792 = vunpack.c.h.b16 %v1625
    %v1793 = vunpack.c.l.b16 %v1626
    %v1794 = vunpack.c.h.b16 %v1626
    %v1795 = vunpack.c.l.b16 %v1627
    %v1796 = vunpack.c.h.b16 %v1627
    %v1797 = vunpack.c.l.b16 %v1628
    %v1798 = vunpack.c.h.b16 %v1628
    %v1799 = vunpack.c.l.b16 %v1629
    %v1800 = vunpack.c.h.b16 %v1629
    %v1801 = vunpack.c.l.b16 %v1630
    %v1802 = vunpack.c.h.b16 %v1630
    %v1803 = vunpack.c.l.b16 %v1631
    %v1804 = vunpack.c.h.b16 %v1631
    %v1805 = vunpack.c.l.b16 %v1632
    %v1806 = vunpack.c.h.b16 %v1632
    %v1807 = vunpack.c.l.b16 %v1633
    %v1808 = vunpack.c.h.b16 %v1633
    %v1809 = vunpack.c.l.b16 %v1634
    %v1810 = vunpack.c.h.b16 %v1634
    %v1811 = vunpack.c.l.b16 %v1635
    %v1812 = vunpack.c.h.b16 %v1635
    %v1813 = vunpack.c.l.b16 %v1636
    %v1814 = vunpack.c.h.b16 %v1636
    %v1815 = vunpack.c.l.b16 %v1637
    %v1816 = vunpack.c.h.b16 %v1637
    %v1817 = vunpack.c.l.b16 %v1638
    %v1818 = vunpack.c.h.b16 %v1638
    %v1819 = vunpack.c.l.b16 %v1639
    %v1820 = vunpack.c.h.b16 %v1639
    %v1821 = vunpack.c.l.b16 %v1640
    %v1822 = vunpack.c.h.b16 %v1640
    %v1823 = vunpack.c.l.b16 %v1641
    %v1824 = vunpack.c.h.b16 %v1641
    %v1825 = vunpack.c.l.b16 %v1642
    %v1826 = vunpack.c.h.b16 %v1642
    %v1827 = vunpack.c.l.b16 %v1643
    %v1828 = vunpack.c.h.b16 %v1643
    %v1829 = vunpack.c.l.b16 %v1644
    %v1830 = vunpack.c.h.b16 %v1644
    %v1831 = vunpack.c.l.b16 %v1645
    %v1832 = vunpack.c.h.b16 %v1645
    %v1833 = vunpack.c.l.b16 %v1646
    %v1834 = vunpack.c.h.b16 %v1646
    %v1835 = vunpack.c.l.b16 %v1647
    %v1836 = vunpack.c.h.b16 %v1647
    %v1837 = vunpack.c.l.b16 %v1648
    %v1838 = vunpack.c.h.b16 %v1648
    %v1839 = vunpack.c.l.b16 %v1649
    %v1840 = vunpack.c.h.b16 %v1649
    %v1841 = vunpack.c.l.b16 %v1650
    %v1842 = vunpack.c.h.b16 %v1650
    %v1843 = vunpack.c.l.b16 %v1651
    %v1844 = vunpack.c.h.b16 %v1651
    %v1845 = vunpack.c.l.b16 %v1652
    %v1846 = vunpack.c.h.b16 %v1652
    %v1847 = vunpack.c.l.b16 %v1653
    %v1848 = vunpack.c.h.b16 %v1653
    %v1849 = vunpack.c.l.b16 %v1654
    %v1850 = vunpack.c.h.b16 %v1654
    %v1851 = vunpack.c.l.b16 %v1655
    %v1852 = vunpack.c.h.b16 %v1655
    %v1853 = vunpack.c.l.b16 %v1656
    %v1854 = vunpack.c.h.b16 %v1656
    %v1855 = vunpack.c.l.b16 %v1657
    %v1856 = vunpack.c.h.b16 %v1657
    %v1857 = vunpack.c.l.b16 %v1658
    %v1858 = vunpack.c.h.b16 %v1658
    %v1859 = vpack.c.b16 %v1739, %v1731
    %v1860 = vpack.c.b16 %v1740, %v1732
    %v1861 = vpack.c.b16 %v1741, %v1733
    %v1862 = vpack.c.b16 %v1742, %v1734
    %v1863 = vpack.c.b16 %v1743, %v1735
    %v1864 = vpack.c.b16 %v1744, %v1736
    %v1865 = vpack.c.b16 %v1745, %v1737
    %v1866 = vpack.c.b16 %v1746, %v1738
    %v1867 = vpack.c.b16 %v1755, %v1747
    %v1868 = vpack.c.b16 %v1756, %v1748
    %v1869 = vpack.c.b16 %v1757, %v1749
    %v1870 = vpack.c.b16 %v1758, %v1750
    %v1871 = vpack.c.b16 %v1759, %v1751
    %v1872 = vpack.c.b16 %v1760, %v1752
    %v1873 = vpack.c.b16 %v1761, %v1753
    %v1874 = vpack.c.b16 %v1762, %v1754
    %v1875 = vpack.c.b16 %v1771, %v1763
    %v1876 = vpack.c.b16 %v1772, %v1764
    %v1877 = vpack.c.b16 %v1773, %v1765
    %v1878 = vpack.c.b16 %v1774, %v1766
    %v1879 = vpack.c.b16 %v1775, %v1767
    %v1880 = vpack.c.b16 %v1776, %v1768
    %v1881 = vpack.c.b16 %v1777, %v1769
    %v1882 = vpack.c.b16 %v1778, %v1770
    %v1883 = vpack.c.b16 %v1787, %v1779
    %v1884 = vpack.c.b16 %v1788, %v1780
    %v1885 = vpack.c.b16 %v1789, %v1781
    %v1886 = vpack.c.b16 %v1790, %v1782
    %v1887 = vpack.c.b16 %v1791, %v1783
    %v1888 = vpack.c.b16 %v1792, %v1784
    %v1889 = vpack.c.b16 %v1793, %v1785
    %v1890 = vpack.c.b16 %v1794, %v1786
    %v1891 = vpack.c.b16 %v1803, %v1795
    %v1892 = vpack.c.b16 %v1804, %v1796
    %v1893 = vpack.c.b16 %v1805, %v1797
    %v1894 = vpack.c.b16 %v1806, %v1798
    %v1895 = vpack.c.b16 %v1807, %v1799
    %v1896 = vpack.c.b16 %v1808, %v1800
    %v1897 = vpack.c.b16 %v1809, %v1801
    %v1898 = vpack.c.b16 %v1810, %v1802
    %v1899 = vpack.c.b16 %v1819, %v1811
    %v1900 = vpack.c.b16 %v1820, %v1812
    %v1901 = vpack.c.b16 %v1821, %v1813
    %v1902 = vpack.c.b16 %v1822, %v1814
    %v1903 = vpack.c.b16 %v1823, %v1815
    %v1904 = vpack.c.b16 %v1824, %v1816
    %v1905 = vpack.c.b16 %v1825, %v1817
    %v1906 = vpack.c.b16 %v1826, %v1818
    %v1907 = vpack.c.b16 %v1835, %v1827
    %v1908 = vpack.c.b16 %v1836, %v1828
    %v1909 = vpack.c.b16 %v1837, %v1829
    %v1910 = vpack.c.b16 %v1838, %v1830
    %v1911 = vpack.c.b16 %v1839, %v1831
    %v1912 = vpack.c.b16 %v1840, %v1832
    %v1913 = vpack.c.b16 %v1841, %v1833
    %v1914 = vpack.c.b16 %v1842, %v1834
    %v1915 = vpack.c.b16 %v1851, %v1843
    %v1916 = vpack.c.b16 %v1852, %v1844
    %v1917 = vpack.c.b16 %v1853, %v1845
    %v1918 = vpack.c.b16 %v1854, %v1846
    %v1919 = vpack.c.b16 %v1855, %v1847
    %v1920 = vpack.c.b16 %v1856, %v1848
    %v1921 = vpack.c.b16 %v1857, %v1849
    %v1922 = vpack.c.b16 %v1858, %v1850
    %1987 = vmatprep.subr.bf16.mxu0 %v1860
    %1988 = vmatpush1.bf16.msra.mxu0 %v1859
    %1989 = vmatprep.subr.bf16.mxu0 %v1868
    %1990 = vmatpush1.bf16.msra.mxu0 %v1867
    %1991 = vmatprep.subr.bf16.mxu0 %v1876
    %1992 = vmatpush1.bf16.msra.mxu0 %v1875
    %1993 = vmatprep.subr.bf16.mxu0 %v1884
    %1994 = vmatpush1.bf16.msra.mxu0 %v1883
    %1995 = vmatprep.subr.bf16.mxu0 %v1892
    %1996 = vmatpush1.bf16.msra.mxu0 %v1891
    %1997 = vmatprep.subr.bf16.mxu0 %v1900
    %1998 = vmatpush1.bf16.msra.mxu0 %v1899
    %1999 = vmatprep.subr.bf16.mxu0 %v1908
    %2000 = vmatpush1.bf16.msra.mxu0 %v1907
    %2001 = vmatprep.subr.bf16.mxu0 %v1916
    %2002 = vmatpush1.bf16.msra.mxu0 %v1915
    %2003 = vmatprep.subr.bf16.mxu0 0
    %2004 = vmatpush1.bf16.msra.mxu0 0
    %2005 = vmatprep.subr.bf16.mxu0 0
    %2006 = vmatpush1.bf16.msra.mxu0 0
    %2007 = vmatprep.subr.bf16.mxu0 0
    %2008 = vmatpush1.bf16.msra.mxu0 0
    %2009 = vmatprep.subr.bf16.mxu0 0
    %2010 = vmatpush1.bf16.msra.mxu0 0
    %2011 = vmatprep.subr.bf16.mxu0 0
    %2012 = vmatpush1.bf16.msra.mxu0 0
    %2013 = vmatprep.subr.bf16.mxu0 0
    %2014 = vmatpush1.bf16.msra.mxu0 0
    %2015 = vmatprep.subr.bf16.mxu0 0
    %2016 = vmatpush1.bf16.msra.mxu0 0
    %2017 = vmatprep.subr.bf16.mxu0 0
    %2018 = vmatpush1.bf16.msra.mxu0 0
    %2019 = vmatprep.mubr.bf16.mxu0 0
    %2020 = vmatmul.mubr.bf16.gmra.mrb[0].mxu0 %v1665
    %v2021 = vpop.f32.mrb[0].mxu0
    %v2022 = vadd.f32 0.0, %v2021
    %v2023 = vpop.f32.mrb[0].mxu0
    %v2024 = vadd.f32 0.0, %v2023
    %v2025 = vpop.f32.mrb[0].mxu0
    %v2026 = vpop.f32.mrb[0].mxu0
    %2027 = vdwg.mxu0
    %2028 = vmatprep.subr.bf16.mxu0 %v1862
    %2029 = vmatpush1.bf16.msra.mxu0 %v1861
    %2030 = vmatprep.subr.bf16.mxu0 %v1870
    %2031 = vmatpush1.bf16.msra.mxu0 %v1869
    %2032 = vmatprep.subr.bf16.mxu0 %v1878
    %2033 = vmatpush1.bf16.msra.mxu0 %v1877
    %2034 = vmatprep.subr.bf16.mxu0 %v1886
    %2035 = vmatpush1.bf16.msra.mxu0 %v1885
    %2036 = vmatprep.subr.bf16.mxu0 %v1894
    %2037 = vmatpush1.bf16.msra.mxu0 %v1893
    %2038 = vmatprep.subr.bf16.mxu0 %v1902
    %2039 = vmatpush1.bf16.msra.mxu0 %v1901
    %2040 = vmatprep.subr.bf16.mxu0 %v1910
    %2041 = vmatpush1.bf16.msra.mxu0 %v1909
    %2042 = vmatprep.subr.bf16.mxu0 %v1918
    %2043 = vmatpush1.bf16.msra.mxu0 %v1917
    %2044 = vmatprep.subr.bf16.mxu0 0
    %2045 = vmatpush1.bf16.msra.mxu0 0
    %2046 = vmatprep.subr.bf16.mxu0 0
    %2047 = vmatpush1.bf16.msra.mxu0 0
    %2048 = vmatprep.subr.bf16.mxu0 0
    %2049 = vmatpush1.bf16.msra.mxu0 0
    %2050 = vmatprep.subr.bf16.mxu0 0
    %2051 = vmatpush1.bf16.msra.mxu0 0
    %2052 = vmatprep.subr.bf16.mxu0 0
    %2053 = vmatpush1.bf16.msra.mxu0 0
    %2054 = vmatprep.subr.bf16.mxu0 0
    %2055 = vmatpush1.bf16.msra.mxu0 0
    %2056 = vmatprep.subr.bf16.mxu0 0
    %2057 = vmatpush1.bf16.msra.mxu0 0
    %2058 = vmatprep.subr.bf16.mxu0 0
    %2059 = vmatpush1.bf16.msra.mxu0 0
    %2060 = vmatprep.mubr.bf16.mxu0 0
    %2061 = vmatmul.mubr.bf16.gmra.mrb[0].mxu0 %v1665
    %v2062 = vpop.f32.mrb[0].mxu0
    %v2063 = vadd.f32 0.0, %v2062
    %v2064 = vpop.f32.mrb[0].mxu0
    %v2065 = vadd.f32 0.0, %v2064
    %v2066 = vpop.f32.mrb[0].mxu0
    %v2067 = vpop.f32.mrb[0].mxu0
    %2068 = vdwg.mxu0
    %2069 = vmatprep.subr.bf16.mxu0 %v1864
    %2070 = vmatpush1.bf16.msra.mxu0 %v1863
    %2071 = vmatprep.subr.bf16.mxu0 %v1872
    %2072 = vmatpush1.bf16.msra.mxu0 %v1871
    %2073 = vmatprep.subr.bf16.mxu0 %v1880
    %2074 = vmatpush1.bf16.msra.mxu0 %v1879
    %2075 = vmatprep.subr.bf16.mxu0 %v1888
    %2076 = vmatpush1.bf16.msra.mxu0 %v1887
    %2077 = vmatprep.subr.bf16.mxu0 %v1896
    %2078 = vmatpush1.bf16.msra.mxu0 %v1895
    %2079 = vmatprep.subr.bf16.mxu0 %v1904
    %2080 = vmatpush1.bf16.msra.mxu0 %v1903
    %2081 = vmatprep.subr.bf16.mxu0 %v1912
    %2082 = vmatpush1.bf16.msra.mxu0 %v1911
    %2083 = vmatprep.subr.bf16.mxu0 %v1920
    %2084 = vmatpush1.bf16.msra.mxu0 %v1919
    %2085 = vmatprep.subr.bf16.mxu0 0
    %2086 = vmatpush1.bf16.msra.mxu0 0
    %2087 = vmatprep.subr.bf16.mxu0 0
    %2088 = vmatpush1.bf16.msra.mxu0 0
    %2089 = vmatprep.subr.bf16.mxu0 0
    %2090 = vmatpush1.bf16.msra.mxu0 0
    %2091 = vmatprep.subr.bf16.mxu0 0
    %2092 = vmatpush1.bf16.msra.mxu0 0
    %2093 = vmatprep.subr.bf16.mxu0 0
    %2094 = vmatpush1.bf16.msra.mxu0 0
    %2095 = vmatprep.subr.bf16.mxu0 0
    %2096 = vmatpush1.bf16.msra.mxu0 0
    %2097 = vmatprep.subr.bf16.mxu0 0
    %2098 = vmatpush1.bf16.msra.mxu0 0
    %2099 = vmatprep.subr.bf16.mxu0 0
    %2100 = vmatpush1.bf16.msra.mxu0 0
    %2101 = vmatprep.mubr.bf16.mxu0 0
    %2102 = vmatmul.mubr.bf16.gmra.mrb[0].mxu0 %v1665
    %v2103 = vpop.f32.mrb[0].mxu0
    %v2104 = vadd.f32 0.0, %v2103
    %v2105 = vpop.f32.mrb[0].mxu0
    %v2106 = vadd.f32 0.0, %v2105
    %v2107 = vpop.f32.mrb[0].mxu0
    %v2108 = vpop.f32.mrb[0].mxu0
    %2109 = vdwg.mxu0
    %2110 = vmatprep.subr.bf16.mxu0 %v1866
    %2111 = vmatpush1.bf16.msra.mxu0 %v1865
    %2112 = vmatprep.subr.bf16.mxu0 %v1874
    %2113 = vmatpush1.bf16.msra.mxu0 %v1873
    %2114 = vmatprep.subr.bf16.mxu0 %v1882
    %2115 = vmatpush1.bf16.msra.mxu0 %v1881
    %2116 = vmatprep.subr.bf16.mxu0 %v1890
    %2117 = vmatpush1.bf16.msra.mxu0 %v1889
    %2118 = vmatprep.subr.bf16.mxu0 %v1898
    %2119 = vmatpush1.bf16.msra.mxu0 %v1897
    %2120 = vmatprep.subr.bf16.mxu0 %v1906
    %2121 = vmatpush1.bf16.msra.mxu0 %v1905
    %2122 = vmatprep.subr.bf16.mxu0 %v1914
    %2123 = vmatpush1.bf16.msra.mxu0 %v1913
    %2124 = vmatprep.subr.bf16.mxu0 %v1922
    %2125 = vmatpush1.bf16.msra.mxu0 %v1921
    %2126 = vmatprep.subr.bf16.mxu0 0
    %2127 = vmatpush1.bf16.msra.mxu0 0
    %2128 = vmatprep.subr.bf16.mxu0 0
    %2129 = vmatpush1.bf16.msra.mxu0 0
    %2130 = vmatprep.subr.bf16.mxu0 0
    %2131 = vmatpush1.bf16.msra.mxu0 0
    %2132 = vmatprep.subr.bf16.mxu0 0
    %2133 = vmatpush1.bf16.msra.mxu0 0
    %2134 = vmatprep.subr.bf16.mxu0 0
    %2135 = vmatpush1.bf16.msra.mxu0 0
    %2136 = vmatprep.subr.bf16.mxu0 0
    %2137 = vmatpush1.bf16.msra.mxu0 0
    %2138 = vmatprep.subr.bf16.mxu0 0
    %2139 = vmatpush1.bf16.msra.mxu0 0
    %2140 = vmatprep.subr.bf16.mxu0 0
    %2141 = vmatpush1.bf16.msra.mxu0 0
    %2142 = vmatprep.mubr.bf16.mxu0 0
    %2143 = vmatmul.mubr.bf16.gmra.mrb[0].mxu0 %v1665
    %v2144 = vpop.f32.mrb[0].mxu0
    %v2145 = vadd.f32 0.0, %v2144
    %v2146 = vpop.f32.mrb[0].mxu0
    %v2147 = vadd.f32 0.0, %v2146
    %v2148 = vpop.f32.mrb[0].mxu0
    %v2149 = vpop.f32.mrb[0].mxu0
    %2150 = vdwg.mxu0
    %v2151 = vadd.f32 %v1462, %v2022
    %v2152 = vadd.f32 %v1464, %v2024
    %v2153 = vadd.f32 %v1503, %v2063
    %v2154 = vadd.f32 %v1505, %v2065
    %v2155 = vadd.f32 %v1544, %v2104
    %v2156 = vadd.f32 %v1546, %v2106
    %v2157 = vadd.f32 %v1585, %v2145
    %v2158 = vadd.f32 %v1587, %v2147
    %v2159 = vld [vmem:[#allocation2 + $0x3] sm:$0x1]
    %v2160 = vld [vmem:[#allocation2 + $0x13] sm:$0x1]
    %v2161 = vpack.c.bf16 %v2159, %v2159
    %v2162 = vpack.c.bf16 %v2160, %v2160
    %v2163 = vld [vmem:[#allocation9 + $0x600] sm:$0xff]
    %v2164 = vld [vmem:[#allocation9 + $0x608] sm:$0xff]
    %v2165 = vld [vmem:[#allocation9 + $0x610] sm:$0xff]
    %v2166 = vld [vmem:[#allocation9 + $0x618] sm:$0xff]
    %v2167 = vld [vmem:[#allocation9 + $0x620] sm:$0xff]
    %v2168 = vld [vmem:[#allocation9 + $0x628] sm:$0xff]
    %v2169 = vld [vmem:[#allocation9 + $0x630] sm:$0xff]
    %v2170 = vld [vmem:[#allocation9 + $0x638] sm:$0xff]
    %v2171 = vld [vmem:[#allocation9 + $0x640] sm:$0xff]
    %v2172 = vld [vmem:[#allocation9 + $0x648] sm:$0xff]
    %v2173 = vld [vmem:[#allocation9 + $0x650] sm:$0xff]
    %v2174 = vld [vmem:[#allocation9 + $0x658] sm:$0xff]
    %v2175 = vld [vmem:[#allocation9 + $0x660] sm:$0xff]
    %v2176 = vld [vmem:[#allocation9 + $0x668] sm:$0xff]
    %v2177 = vld [vmem:[#allocation9 + $0x670] sm:$0xff]
    %v2178 = vld [vmem:[#allocation9 + $0x678] sm:$0xff]
    %v2179 = vld [vmem:[#allocation9 + $0x680] sm:$0xff]
    %v2180 = vld [vmem:[#allocation9 + $0x688] sm:$0xff]
    %v2181 = vld [vmem:[#allocation9 + $0x690] sm:$0xff]
    %v2182 = vld [vmem:[#allocation9 + $0x698] sm:$0xff]
    %v2183 = vld [vmem:[#allocation9 + $0x6a0] sm:$0xff]
    %v2184 = vld [vmem:[#allocation9 + $0x6a8] sm:$0xff]
    %v2185 = vld [vmem:[#allocation9 + $0x6b0] sm:$0xff]
    %v2186 = vld [vmem:[#allocation9 + $0x6b8] sm:$0xff]
    %v2187 = vld [vmem:[#allocation9 + $0x6c0] sm:$0xff]
    %v2188 = vld [vmem:[#allocation9 + $0x6c8] sm:$0xff]
    %v2189 = vld [vmem:[#allocation9 + $0x6d0] sm:$0xff]
    %v2190 = vld [vmem:[#allocation9 + $0x6d8] sm:$0xff]
    %v2191 = vld [vmem:[#allocation9 + $0x6e0] sm:$0xff]
    %v2192 = vld [vmem:[#allocation9 + $0x6e8] sm:$0xff]
    %v2193 = vld [vmem:[#allocation9 + $0x6f0] sm:$0xff]
    %v2194 = vld [vmem:[#allocation9 + $0x6f8] sm:$0xff]
    %v2195 = vld [vmem:[#allocation9 + $0x700] sm:$0xff]
    %v2196 = vld [vmem:[#allocation9 + $0x708] sm:$0xff]
    %v2197 = vld [vmem:[#allocation9 + $0x710] sm:$0xff]
    %v2198 = vld [vmem:[#allocation9 + $0x718] sm:$0xff]
    %v2199 = vld [vmem:[#allocation9 + $0x720] sm:$0xff]
    %v2200 = vld [vmem:[#allocation9 + $0x728] sm:$0xff]
    %v2201 = vld [vmem:[#allocation9 + $0x730] sm:$0xff]
    %v2202 = vld [vmem:[#allocation9 + $0x738] sm:$0xff]
    %v2203 = vld [vmem:[#allocation9 + $0x740] sm:$0xff]
    %v2204 = vld [vmem:[#allocation9 + $0x748] sm:$0xff]
    %v2205 = vld [vmem:[#allocation9 + $0x750] sm:$0xff]
    %v2206 = vld [vmem:[#allocation9 + $0x758] sm:$0xff]
    %v2207 = vld [vmem:[#allocation9 + $0x760] sm:$0xff]
    %v2208 = vld [vmem:[#allocation9 + $0x768] sm:$0xff]
    %v2209 = vld [vmem:[#allocation9 + $0x770] sm:$0xff]
    %v2210 = vld [vmem:[#allocation9 + $0x778] sm:$0xff]
    %v2211 = vld [vmem:[#allocation9 + $0x780] sm:$0xff]
    %v2212 = vld [vmem:[#allocation9 + $0x788] sm:$0xff]
    %v2213 = vld [vmem:[#allocation9 + $0x790] sm:$0xff]
    %v2214 = vld [vmem:[#allocation9 + $0x798] sm:$0xff]
    %v2215 = vld [vmem:[#allocation9 + $0x7a0] sm:$0xff]
    %v2216 = vld [vmem:[#allocation9 + $0x7a8] sm:$0xff]
    %v2217 = vld [vmem:[#allocation9 + $0x7b0] sm:$0xff]
    %v2218 = vld [vmem:[#allocation9 + $0x7b8] sm:$0xff]
    %v2219 = vld [vmem:[#allocation9 + $0x7c0] sm:$0xff]
    %v2220 = vld [vmem:[#allocation9 + $0x7c8] sm:$0xff]
    %v2221 = vld [vmem:[#allocation9 + $0x7d0] sm:$0xff]
    %v2222 = vld [vmem:[#allocation9 + $0x7d8] sm:$0xff]
    %v2223 = vld [vmem:[#allocation9 + $0x7e0] sm:$0xff]
    %v2224 = vld [vmem:[#allocation9 + $0x7e8] sm:$0xff]
    %v2225 = vld [vmem:[#allocation9 + $0x7f0] sm:$0xff]
    %v2226 = vld [vmem:[#allocation9 + $0x7f8] sm:$0xff]
    %v2229 = vunpack.c.l.b16 %v2161
    %v2230 = vunpack.c.l.b16 %v2162
    %v2231 = vrot.slane %v2230, 7
    %v2232 = vsel %vm611, %v2231, %v2229
    %v2233 = vpack.c.b16 %v2232, %v2232
    %v2299 = vunpack.c.l.b16 %v2163
    %v2300 = vunpack.c.h.b16 %v2163
    %v2301 = vunpack.c.l.b16 %v2164
    %v2302 = vunpack.c.h.b16 %v2164
    %v2303 = vunpack.c.l.b16 %v2165
    %v2304 = vunpack.c.h.b16 %v2165
    %v2305 = vunpack.c.l.b16 %v2166
    %v2306 = vunpack.c.h.b16 %v2166
    %v2307 = vunpack.c.l.b16 %v2167
    %v2308 = vunpack.c.h.b16 %v2167
    %v2309 = vunpack.c.l.b16 %v2168
    %v2310 = vunpack.c.h.b16 %v2168
    %v2311 = vunpack.c.l.b16 %v2169
    %v2312 = vunpack.c.h.b16 %v2169
    %v2313 = vunpack.c.l.b16 %v2170
    %v2314 = vunpack.c.h.b16 %v2170
    %v2315 = vunpack.c.l.b16 %v2171
    %v2316 = vunpack.c.h.b16 %v2171
    %v2317 = vunpack.c.l.b16 %v2172
    %v2318 = vunpack.c.h.b16 %v2172
    %v2319 = vunpack.c.l.b16 %v2173
    %v2320 = vunpack.c.h.b16 %v2173
    %v2321 = vunpack.c.l.b16 %v2174
    %v2322 = vunpack.c.h.b16 %v2174
    %v2323 = vunpack.c.l.b16 %v2175
    %v2324 = vunpack.c.h.b16 %v2175
    %v2325 = vunpack.c.l.b16 %v2176
    %v2326 = vunpack.c.h.b16 %v2176
    %v2327 = vunpack.c.l.b16 %v2177
    %v2328 = vunpack.c.h.b16 %v2177
    %v2329 = vunpack.c.l.b16 %v2178
    %v2330 = vunpack.c.h.b16 %v2178
    %v2331 = vunpack.c.l.b16 %v2179
    %v2332 = vunpack.c.h.b16 %v2179
    %v2333 = vunpack.c.l.b16 %v2180
    %v2334 = vunpack.c.h.b16 %v2180
    %v2335 = vunpack.c.l.b16 %v2181
    %v2336 = vunpack.c.h.b16 %v2181
    %v2337 = vunpack.c.l.b16 %v2182
    %v2338 = vunpack.c.h.b16 %v2182
    %v2339 = vunpack.c.l.b16 %v2183
    %v2340 = vunpack.c.h.b16 %v2183
    %v2341 = vunpack.c.l.b16 %v2184
    %v2342 = vunpack.c.h.b16 %v2184
    %v2343 = vunpack.c.l.b16 %v2185
    %v2344 = vunpack.c.h.b16 %v2185
    %v2345 = vunpack.c.l.b16 %v2186
    %v2346 = vunpack.c.h.b16 %v2186
    %v2347 = vunpack.c.l.b16 %v2187
    %v2348 = vunpack.c.h.b16 %v2187
    %v2349 = vunpack.c.l.b16 %v2188
    %v2350 = vunpack.c.h.b16 %v2188
    %v2351 = vunpack.c.l.b16 %v2189
    %v2352 = vunpack.c.h.b16 %v2189
    %v2353 = vunpack.c.l.b16 %v2190
    %v2354 = vunpack.c.h.b16 %v2190
    %v2355 = vunpack.c.l.b16 %v2191
    %v2356 = vunpack.c.h.b16 %v2191
    %v2357 = vunpack.c.l.b16 %v2192
    %v2358 = vunpack.c.h.b16 %v2192
    %v2359 = vunpack.c.l.b16 %v2193
    %v2360 = vunpack.c.h.b16 %v2193
    %v2361 = vunpack.c.l.b16 %v2194
    %v2362 = vunpack.c.h.b16 %v2194
    %v2363 = vunpack.c.l.b16 %v2195
    %v2364 = vunpack.c.h.b16 %v2195
    %v2365 = vunpack.c.l.b16 %v2196
    %v2366 = vunpack.c.h.b16 %v2196
    %v2367 = vunpack.c.l.b16 %v2197
    %v2368 = vunpack.c.h.b16 %v2197
    %v2369 = vunpack.c.l.b16 %v2198
    %v2370 = vunpack.c.h.b16 %v2198
    %v2371 = vunpack.c.l.b16 %v2199
    %v2372 = vunpack.c.h.b16 %v2199
    %v2373 = vunpack.c.l.b16 %v2200
    %v2374 = vunpack.c.h.b16 %v2200
    %v2375 = vunpack.c.l.b16 %v2201
    %v2376 = vunpack.c.h.b16 %v2201
    %v2377 = vunpack.c.l.b16 %v2202
    %v2378 = vunpack.c.h.b16 %v2202
    %v2379 = vunpack.c.l.b16 %v2203
    %v2380 = vunpack.c.h.b16 %v2203
    %v2381 = vunpack.c.l.b16 %v2204
    %v2382 = vunpack.c.h.b16 %v2204
    %v2383 = vunpack.c.l.b16 %v2205
    %v2384 = vunpack.c.h.b16 %v2205
    %v2385 = vunpack.c.l.b16 %v2206
    %v2386 = vunpack.c.h.b16 %v2206
    %v2387 = vunpack.c.l.b16 %v2207
    %v2388 = vunpack.c.h.b16 %v2207
    %v2389 = vunpack.c.l.b16 %v2208
    %v2390 = vunpack.c.h.b16 %v2208
    %v2391 = vunpack.c.l.b16 %v2209
    %v2392 = vunpack.c.h.b16 %v2209
    %v2393 = vunpack.c.l.b16 %v2210
    %v2394 = vunpack.c.h.b16 %v2210
    %v2395 = vunpack.c.l.b16 %v2211
    %v2396 = vunpack.c.h.b16 %v2211
    %v2397 = vunpack.c.l.b16 %v2212
    %v2398 = vunpack.c.h.b16 %v2212
    %v2399 = vunpack.c.l.b16 %v2213
    %v2400 = vunpack.c.h.b16 %v2213
    %v2401 = vunpack.c.l.b16 %v2214
    %v2402 = vunpack.c.h.b16 %v2214
    %v2403 = vunpack.c.l.b16 %v2215
    %v2404 = vunpack.c.h.b16 %v2215
    %v2405 = vunpack.c.l.b16 %v2216
    %v2406 = vunpack.c.h.b16 %v2216
    %v2407 = vunpack.c.l.b16 %v2217
    %v2408 = vunpack.c.h.b16 %v2217
    %v2409 = vunpack.c.l.b16 %v2218
    %v2410 = vunpack.c.h.b16 %v2218
    %v2411 = vunpack.c.l.b16 %v2219
    %v2412 = vunpack.c.h.b16 %v2219
    %v2413 = vunpack.c.l.b16 %v2220
    %v2414 = vunpack.c.h.b16 %v2220
    %v2415 = vunpack.c.l.b16 %v2221
    %v2416 = vunpack.c.h.b16 %v2221
    %v2417 = vunpack.c.l.b16 %v2222
    %v2418 = vunpack.c.h.b16 %v2222
    %v2419 = vunpack.c.l.b16 %v2223
    %v2420 = vunpack.c.h.b16 %v2223
    %v2421 = vunpack.c.l.b16 %v2224
    %v2422 = vunpack.c.h.b16 %v2224
    %v2423 = vunpack.c.l.b16 %v2225
    %v2424 = vunpack.c.h.b16 %v2225
    %v2425 = vunpack.c.l.b16 %v2226
    %v2426 = vunpack.c.h.b16 %v2226
    %v2427 = vpack.c.b16 %v2307, %v2299
    %v2428 = vpack.c.b16 %v2308, %v2300
    %v2429 = vpack.c.b16 %v2309, %v2301
    %v2430 = vpack.c.b16 %v2310, %v2302
    %v2431 = vpack.c.b16 %v2311, %v2303
    %v2432 = vpack.c.b16 %v2312, %v2304
    %v2433 = vpack.c.b16 %v2313, %v2305
    %v2434 = vpack.c.b16 %v2314, %v2306
    %v2435 = vpack.c.b16 %v2323, %v2315
    %v2436 = vpack.c.b16 %v2324, %v2316
    %v2437 = vpack.c.b16 %v2325, %v2317
    %v2438 = vpack.c.b16 %v2326, %v2318
    %v2439 = vpack.c.b16 %v2327, %v2319
    %v2440 = vpack.c.b16 %v2328, %v2320
    %v2441 = vpack.c.b16 %v2329, %v2321
    %v2442 = vpack.c.b16 %v2330, %v2322
    %v2443 = vpack.c.b16 %v2339, %v2331
    %v2444 = vpack.c.b16 %v2340, %v2332
    %v2445 = vpack.c.b16 %v2341, %v2333
    %v2446 = vpack.c.b16 %v2342, %v2334
    %v2447 = vpack.c.b16 %v2343, %v2335
    %v2448 = vpack.c.b16 %v2344, %v2336
    %v2449 = vpack.c.b16 %v2345, %v2337
    %v2450 = vpack.c.b16 %v2346, %v2338
    %v2451 = vpack.c.b16 %v2355, %v2347
    %v2452 = vpack.c.b16 %v2356, %v2348
    %v2453 = vpack.c.b16 %v2357, %v2349
    %v2454 = vpack.c.b16 %v2358, %v2350
    %v2455 = vpack.c.b16 %v2359, %v2351
    %v2456 = vpack.c.b16 %v2360, %v2352
    %v2457 = vpack.c.b16 %v2361, %v2353
    %v2458 = vpack.c.b16 %v2362, %v2354
    %v2459 = vpack.c.b16 %v2371, %v2363
    %v2460 = vpack.c.b16 %v2372, %v2364
    %v2461 = vpack.c.b16 %v2373, %v2365
    %v2462 = vpack.c.b16 %v2374, %v2366
    %v2463 = vpack.c.b16 %v2375, %v2367
    %v2464 = vpack.c.b16 %v2376, %v2368
    %v2465 = vpack.c.b16 %v2377, %v2369
    %v2466 = vpack.c.b16 %v2378, %v2370
    %v2467 = vpack.c.b16 %v2387, %v2379
    %v2468 = vpack.c.b16 %v2388, %v2380
    %v2469 = vpack.c.b16 %v2389, %v2381
    %v2470 = vpack.c.b16 %v2390, %v2382
    %v2471 = vpack.c.b16 %v2391, %v2383
    %v2472 = vpack.c.b16 %v2392, %v2384
    %v2473 = vpack.c.b16 %v2393, %v2385
    %v2474 = vpack.c.b16 %v2394, %v2386
    %v2475 = vpack.c.b16 %v2403, %v2395
    %v2476 = vpack.c.b16 %v2404, %v2396
    %v2477 = vpack.c.b16 %v2405, %v2397
    %v2478 = vpack.c.b16 %v2406, %v2398
    %v2479 = vpack.c.b16 %v2407, %v2399
    %v2480 = vpack.c.b16 %v2408, %v2400
    %v2481 = vpack.c.b16 %v2409, %v2401
    %v2482 = vpack.c.b16 %v2410, %v2402
    %v2483 = vpack.c.b16 %v2419, %v2411
    %v2484 = vpack.c.b16 %v2420, %v2412
    %v2485 = vpack.c.b16 %v2421, %v2413
    %v2486 = vpack.c.b16 %v2422, %v2414
    %v2487 = vpack.c.b16 %v2423, %v2415
    %v2488 = vpack.c.b16 %v2424, %v2416
    %v2489 = vpack.c.b16 %v2425, %v2417
    %v2490 = vpack.c.b16 %v2426, %v2418
    %2555 = vmatprep.subr.bf16.mxu0 %v2428
    %2556 = vmatpush1.bf16.msra.mxu0 %v2427
    %2557 = vmatprep.subr.bf16.mxu0 %v2436
    %2558 = vmatpush1.bf16.msra.mxu0 %v2435
    %2559 = vmatprep.subr.bf16.mxu0 %v2444
    %2560 = vmatpush1.bf16.msra.mxu0 %v2443
    %2561 = vmatprep.subr.bf16.mxu0 %v2452
    %2562 = vmatpush1.bf16.msra.mxu0 %v2451
    %2563 = vmatprep.subr.bf16.mxu0 %v2460
    %2564 = vmatpush1.bf16.msra.mxu0 %v2459
    %2565 = vmatprep.subr.bf16.mxu0 %v2468
    %2566 = vmatpush1.bf16.msra.mxu0 %v2467
    %2567 = vmatprep.subr.bf16.mxu0 %v2476
    %2568 = vmatpush1.bf16.msra.mxu0 %v2475
    %2569 = vmatprep.subr.bf16.mxu0 %v2484
    %2570 = vmatpush1.bf16.msra.mxu0 %v2483
    %2571 = vmatprep.subr.bf16.mxu0 0
    %2572 = vmatpush1.bf16.msra.mxu0 0
    %2573 = vmatprep.subr.bf16.mxu0 0
    %2574 = vmatpush1.bf16.msra.mxu0 0
    %2575 = vmatprep.subr.bf16.mxu0 0
    %2576 = vmatpush1.bf16.msra.mxu0 0
    %2577 = vmatprep.subr.bf16.mxu0 0
    %2578 = vmatpush1.bf16.msra.mxu0 0
    %2579 = vmatprep.subr.bf16.mxu0 0
    %2580 = vmatpush1.bf16.msra.mxu0 0
    %2581 = vmatprep.subr.bf16.mxu0 0
    %2582 = vmatpush1.bf16.msra.mxu0 0
    %2583 = vmatprep.subr.bf16.mxu0 0
    %2584 = vmatpush1.bf16.msra.mxu0 0
    %2585 = vmatprep.subr.bf16.mxu0 0
    %2586 = vmatpush1.bf16.msra.mxu0 0
    %2587 = vmatprep.mubr.bf16.mxu0 0
    %2588 = vmatmul.mubr.bf16.gmra.mrb[0].mxu0 %v2233
    %v2589 = vpop.f32.mrb[0].mxu0
    %v2590 = vadd.f32 0.0, %v2589
    %v2591 = vpop.f32.mrb[0].mxu0
    %v2592 = vadd.f32 0.0, %v2591
    %v2593 = vpop.f32.mrb[0].mxu0
    %v2594 = vpop.f32.mrb[0].mxu0
    %2595 = vdwg.mxu0
    %2596 = vmatprep.subr.bf16.mxu0 %v2430
    %2597 = vmatpush1.bf16.msra.mxu0 %v2429
    %2598 = vmatprep.subr.bf16.mxu0 %v2438
    %2599 = vmatpush1.bf16.msra.mxu0 %v2437
    %2600 = vmatprep.subr.bf16.mxu0 %v2446
    %2601 = vmatpush1.bf16.msra.mxu0 %v2445
    %2602 = vmatprep.subr.bf16.mxu0 %v2454
    %2603 = vmatpush1.bf16.msra.mxu0 %v2453
    %2604 = vmatprep.subr.bf16.mxu0 %v2462
    %2605 = vmatpush1.bf16.msra.mxu0 %v2461
    %2606 = vmatprep.subr.bf16.mxu0 %v2470
    %2607 = vmatpush1.bf16.msra.mxu0 %v2469
    %2608 = vmatprep.subr.bf16.mxu0 %v2478
    %2609 = vmatpush1.bf16.msra.mxu0 %v2477
    %2610 = vmatprep.subr.bf16.mxu0 %v2486
    %2611 = vmatpush1.bf16.msra.mxu0 %v2485
    %2612 = vmatprep.subr.bf16.mxu0 0
    %2613 = vmatpush1.bf16.msra.mxu0 0
    %2614 = vmatprep.subr.bf16.mxu0 0
    %2615 = vmatpush1.bf16.msra.mxu0 0
    %2616 = vmatprep.subr.bf16.mxu0 0
    %2617 = vmatpush1.bf16.msra.mxu0 0
    %2618 = vmatprep.subr.bf16.mxu0 0
    %2619 = vmatpush1.bf16.msra.mxu0 0
    %2620 = vmatprep.subr.bf16.mxu0 0
    %2621 = vmatpush1.bf16.msra.mxu0 0
    %2622 = vmatprep.subr.bf16.mxu0 0
    %2623 = vmatpush1.bf16.msra.mxu0 0
    %2624 = vmatprep.subr.bf16.mxu0 0
    %2625 = vmatpush1.bf16.msra.mxu0 0
    %2626 = vmatprep.subr.bf16.mxu0 0
    %2627 = vmatpush1.bf16.msra.mxu0 0
    %2628 = vmatprep.mubr.bf16.mxu0 0
    %2629 = vmatmul.mubr.bf16.gmra.mrb[0].mxu0 %v2233
    %v2630 = vpop.f32.mrb[0].mxu0
    %v2631 = vadd.f32 0.0, %v2630
    %v2632 = vpop.f32.mrb[0].mxu0
    %v2633 = vadd.f32 0.0, %v2632
    %v2634 = vpop.f32.mrb[0].mxu0
    %v2635 = vpop.f32.mrb[0].mxu0
    %2636 = vdwg.mxu0
    %2637 = vmatprep.subr.bf16.mxu0 %v2432
    %2638 = vmatpush1.bf16.msra.mxu0 %v2431
    %2639 = vmatprep.subr.bf16.mxu0 %v2440
    %2640 = vmatpush1.bf16.msra.mxu0 %v2439
    %2641 = vmatprep.subr.bf16.mxu0 %v2448
    %2642 = vmatpush1.bf16.msra.mxu0 %v2447
    %2643 = vmatprep.subr.bf16.mxu0 %v2456
    %2644 = vmatpush1.bf16.msra.mxu0 %v2455
    %2645 = vmatprep.subr.bf16.mxu0 %v2464
    %2646 = vmatpush1.bf16.msra.mxu0 %v2463
    %2647 = vmatprep.subr.bf16.mxu0 %v2472
    %2648 = vmatpush1.bf16.msra.mxu0 %v2471
    %2649 = vmatprep.subr.bf16.mxu0 %v2480
    %2650 = vmatpush1.bf16.msra.mxu0 %v2479
    %2651 = vmatprep.subr.bf16.mxu0 %v2488
    %2652 = vmatpush1.bf16.msra.mxu0 %v2487
    %2653 = vmatprep.subr.bf16.mxu0 0
    %2654 = vmatpush1.bf16.msra.mxu0 0
    %2655 = vmatprep.subr.bf16.mxu0 0
    %2656 = vmatpush1.bf16.msra.mxu0 0
    %2657 = vmatprep.subr.bf16.mxu0 0
    %2658 = vmatpush1.bf16.msra.mxu0 0
    %2659 = vmatprep.subr.bf16.mxu0 0
    %2660 = vmatpush1.bf16.msra.mxu0 0
    %2661 = vmatprep.subr.bf16.mxu0 0
    %2662 = vmatpush1.bf16.msra.mxu0 0
    %2663 = vmatprep.subr.bf16.mxu0 0
    %2664 = vmatpush1.bf16.msra.mxu0 0
    %2665 = vmatprep.subr.bf16.mxu0 0
    %2666 = vmatpush1.bf16.msra.mxu0 0
    %2667 = vmatprep.subr.bf16.mxu0 0
    %2668 = vmatpush1.bf16.msra.mxu0 0
    %2669 = vmatprep.mubr.bf16.mxu0 0
    %2670 = vmatmul.mubr.bf16.gmra.mrb[0].mxu0 %v2233
    %v2671 = vpop.f32.mrb[0].mxu0
    %v2672 = vadd.f32 0.0, %v2671
    %v2673 = vpop.f32.mrb[0].mxu0
    %v2674 = vadd.f32 0.0, %v2673
    %v2675 = vpop.f32.mrb[0].mxu0
    %v2676 = vpop.f32.mrb[0].mxu0
    %2677 = vdwg.mxu0
    %2678 = vmatprep.subr.bf16.mxu0 %v2434
    %2679 = vmatpush1.bf16.msra.mxu0 %v2433
    %2680 = vmatprep.subr.bf16.mxu0 %v2442
    %2681 = vmatpush1.bf16.msra.mxu0 %v2441
    %2682 = vmatprep.subr.bf16.mxu0 %v2450
    %2683 = vmatpush1.bf16.msra.mxu0 %v2449
    %2684 = vmatprep.subr.bf16.mxu0 %v2458
    %2685 = vmatpush1.bf16.msra.mxu0 %v2457
    %2686 = vmatprep.subr.bf16.mxu0 %v2466
    %2687 = vmatpush1.bf16.msra.mxu0 %v2465
    %2688 = vmatprep.subr.bf16.mxu0 %v2474
    %2689 = vmatpush1.bf16.msra.mxu0 %v2473
    %2690 = vmatprep.subr.bf16.mxu0 %v2482
    %2691 = vmatpush1.bf16.msra.mxu0 %v2481
    %2692 = vmatprep.subr.bf16.mxu0 %v2490
    %2693 = vmatpush1.bf16.msra.mxu0 %v2489
    %2694 = vmatprep.subr.bf16.mxu0 0
    %2695 = vmatpush1.bf16.msra.mxu0 0
    %2696 = vmatprep.subr.bf16.mxu0 0
    %2697 = vmatpush1.bf16.msra.mxu0 0
    %2698 = vmatprep.subr.bf16.mxu0 0
    %2699 = vmatpush1.bf16.msra.mxu0 0
    %2700 = vmatprep.subr.bf16.mxu0 0
    %2701 = vmatpush1.bf16.msra.mxu0 0
    %2702 = vmatprep.subr.bf16.mxu0 0
    %2703 = vmatpush1.bf16.msra.mxu0 0
    %2704 = vmatprep.subr.bf16.mxu0 0
    %2705 = vmatpush1.bf16.msra.mxu0 0
    %2706 = vmatprep.subr.bf16.mxu0 0
    %2707 = vmatpush1.bf16.msra.mxu0 0
    %2708 = vmatprep.subr.bf16.mxu0 0
    %2709 = vmatpush1.bf16.msra.mxu0 0
    %2710 = vmatprep.mubr.bf16.mxu0 0
    %2711 = vmatmul.mubr.bf16.gmra.mrb[0].mxu0 %v2233
    %v2712 = vpop.f32.mrb[0].mxu0
    %v2713 = vadd.f32 0.0, %v2712
    %v2714 = vpop.f32.mrb[0].mxu0
    %v2715 = vadd.f32 0.0, %v2714
    %v2716 = vpop.f32.mrb[0].mxu0
    %v2717 = vpop.f32.mrb[0].mxu0
    %2718 = vdwg.mxu0
    %v2719 = vadd.f32 %v2151, %v2590
    %v2720 = vadd.f32 %v2152, %v2592
    %v2721 = vadd.f32 %v2153, %v2631
    %v2722 = vadd.f32 %v2154, %v2633
    %v2723 = vadd.f32 %v2155, %v2672
    %v2724 = vadd.f32 %v2156, %v2674
    %v2725 = vadd.f32 %v2157, %v2713
    %v2726 = vadd.f32 %v2158, %v2715
    %v2727 = vld [vmem:[#allocation2 + $0x4] sm:$0x1]
    %v2728 = vld [vmem:[#allocation2 + $0x14] sm:$0x1]
    %v2729 = vpack.c.bf16 %v2727, %v2727
    %v2730 = vpack.c.bf16 %v2728, %v2728
    %v2731 = vld [vmem:[#allocation9 + $0x800] sm:$0xff]
    %v2732 = vld [vmem:[#allocation9 + $0x808] sm:$0xff]
    %v2733 = vld [vmem:[#allocation9 + $0x810] sm:$0xff]
    %v2734 = vld [vmem:[#allocation9 + $0x818] sm:$0xff]
    %v2735 = vld [vmem:[#allocation9 + $0x820] sm:$0xff]
    %v2736 = vld [vmem:[#allocation9 + $0x828] sm:$0xff]
    %v2737 = vld [vmem:[#allocation9 + $0x830] sm:$0xff]
    %v2738 = vld [vmem:[#allocation9 + $0x838] sm:$0xff]
    %v2739 = vld [vmem:[#allocation9 + $0x840] sm:$0xff]
    %v2740 = vld [vmem:[#allocation9 + $0x848] sm:$0xff]
    %v2741 = vld [vmem:[#allocation9 + $0x850] sm:$0xff]
    %v2742 = vld [vmem:[#allocation9 + $0x858] sm:$0xff]
    %v2743 = vld [vmem:[#allocation9 + $0x860] sm:$0xff]
    %v2744 = vld [vmem:[#allocation9 + $0x868] sm:$0xff]
    %v2745 = vld [vmem:[#allocation9 + $0x870] sm:$0xff]
    %v2746 = vld [vmem:[#allocation9 + $0x878] sm:$0xff]
    %v2747 = vld [vmem:[#allocation9 + $0x880] sm:$0xff]
    %v2748 = vld [vmem:[#allocation9 + $0x888] sm:$0xff]
    %v2749 = vld [vmem:[#allocation9 + $0x890] sm:$0xff]
    %v2750 = vld [vmem:[#allocation9 + $0x898] sm:$0xff]
    %v2751 = vld [vmem:[#allocation9 + $0x8a0] sm:$0xff]
    %v2752 = vld [vmem:[#allocation9 + $0x8a8] sm:$0xff]
    %v2753 = vld [vmem:[#allocation9 + $0x8b0] sm:$0xff]
    %v2754 = vld [vmem:[#allocation9 + $0x8b8] sm:$0xff]
    %v2755 = vld [vmem:[#allocation9 + $0x8c0] sm:$0xff]
    %v2756 = vld [vmem:[#allocation9 + $0x8c8] sm:$0xff]
    %v2757 = vld [vmem:[#allocation9 + $0x8d0] sm:$0xff]
    %v2758 = vld [vmem:[#allocation9 + $0x8d8] sm:$0xff]
    %v2759 = vld [vmem:[#allocation9 + $0x8e0] sm:$0xff]
    %v2760 = vld [vmem:[#allocation9 + $0x8e8] sm:$0xff]
    %v2761 = vld [vmem:[#allocation9 + $0x8f0] sm:$0xff]
    %v2762 = vld [vmem:[#allocation9 + $0x8f8] sm:$0xff]
    %v2763 = vld [vmem:[#allocation9 + $0x900] sm:$0xff]
    %v2764 = vld [vmem:[#allocation9 + $0x908] sm:$0xff]
    %v2765 = vld [vmem:[#allocation9 + $0x910] sm:$0xff]
    %v2766 = vld [vmem:[#allocation9 + $0x918] sm:$0xff]
    %v2767 = vld [vmem:[#allocation9 + $0x920] sm:$0xff]
    %v2768 = vld [vmem:[#allocation9 + $0x928] sm:$0xff]
    %v2769 = vld [vmem:[#allocation9 + $0x930] sm:$0xff]
    %v2770 = vld [vmem:[#allocation9 + $0x938] sm:$0xff]
    %v2771 = vld [vmem:[#allocation9 + $0x940] sm:$0xff]
    %v2772 = vld [vmem:[#allocation9 + $0x948] sm:$0xff]
    %v2773 = vld [vmem:[#allocation9 + $0x950] sm:$0xff]
    %v2774 = vld [vmem:[#allocation9 + $0x958] sm:$0xff]
    %v2775 = vld [vmem:[#allocation9 + $0x960] sm:$0xff]
    %v2776 = vld [vmem:[#allocation9 + $0x968] sm:$0xff]
    %v2777 = vld [vmem:[#allocation9 + $0x970] sm:$0xff]
    %v2778 = vld [vmem:[#allocation9 + $0x978] sm:$0xff]
    %v2779 = vld [vmem:[#allocation9 + $0x980] sm:$0xff]
    %v2780 = vld [vmem:[#allocation9 + $0x988] sm:$0xff]
    %v2781 = vld [vmem:[#allocation9 + $0x990] sm:$0xff]
    %v2782 = vld [vmem:[#allocation9 + $0x998] sm:$0xff]
    %v2783 = vld [vmem:[#allocation9 + $0x9a0] sm:$0xff]
    %v2784 = vld [vmem:[#allocation9 + $0x9a8] sm:$0xff]
    %v2785 = vld [vmem:[#allocation9 + $0x9b0] sm:$0xff]
    %v2786 = vld [vmem:[#allocation9 + $0x9b8] sm:$0xff]
    %v2787 = vld [vmem:[#allocation9 + $0x9c0] sm:$0xff]
    %v2788 = vld [vmem:[#allocation9 + $0x9c8] sm:$0xff]
    %v2789 = vld [vmem:[#allocation9 + $0x9d0] sm:$0xff]
    %v2790 = vld [vmem:[#allocation9 + $0x9d8] sm:$0xff]
    %v2791 = vld [vmem:[#allocation9 + $0x9e0] sm:$0xff]
    %v2792 = vld [vmem:[#allocation9 + $0x9e8] sm:$0xff]
    %v2793 = vld [vmem:[#allocation9 + $0x9f0] sm:$0xff]
    %v2794 = vld [vmem:[#allocation9 + $0x9f8] sm:$0xff]
    %v2797 = vunpack.c.l.b16 %v2729
    %v2798 = vunpack.c.l.b16 %v2730
    %v2799 = vrot.slane %v2798, 7
    %v2800 = vsel %vm611, %v2799, %v2797
    %v2801 = vpack.c.b16 %v2800, %v2800
    %v2867 = vunpack.c.l.b16 %v2731
    %v2868 = vunpack.c.h.b16 %v2731
    %v2869 = vunpack.c.l.b16 %v2732
    %v2870 = vunpack.c.h.b16 %v2732
    %v2871 = vunpack.c.l.b16 %v2733
    %v2872 = vunpack.c.h.b16 %v2733
    %v2873 = vunpack.c.l.b16 %v2734
    %v2874 = vunpack.c.h.b16 %v2734
    %v2875 = vunpack.c.l.b16 %v2735
    %v2876 = vunpack.c.h.b16 %v2735
    %v2877 = vunpack.c.l.b16 %v2736
    %v2878 = vunpack.c.h.b16 %v2736
    %v2879 = vunpack.c.l.b16 %v2737
    %v2880 = vunpack.c.h.b16 %v2737
    %v2881 = vunpack.c.l.b16 %v2738
    %v2882 = vunpack.c.h.b16 %v2738
    %v2883 = vunpack.c.l.b16 %v2739
    %v2884 = vunpack.c.h.b16 %v2739
    %v2885 = vunpack.c.l.b16 %v2740
    %v2886 = vunpack.c.h.b16 %v2740
    %v2887 = vunpack.c.l.b16 %v2741
    %v2888 = vunpack.c.h.b16 %v2741
    %v2889 = vunpack.c.l.b16 %v2742
    %v2890 = vunpack.c.h.b16 %v2742
    %v2891 = vunpack.c.l.b16 %v2743
    %v2892 = vunpack.c.h.b16 %v2743
    %v2893 = vunpack.c.l.b16 %v2744
    %v2894 = vunpack.c.h.b16 %v2744
    %v2895 = vunpack.c.l.b16 %v2745
    %v2896 = vunpack.c.h.b16 %v2745
    %v2897 = vunpack.c.l.b16 %v2746
    %v2898 = vunpack.c.h.b16 %v2746
    %v2899 = vunpack.c.l.b16 %v2747
    %v2900 = vunpack.c.h.b16 %v2747
    %v2901 = vunpack.c.l.b16 %v2748
    %v2902 = vunpack.c.h.b16 %v2748
    %v2903 = vunpack.c.l.b16 %v2749
    %v2904 = vunpack.c.h.b16 %v2749
    %v2905 = vunpack.c.l.b16 %v2750
    %v2906 = vunpack.c.h.b16 %v2750
    %v2907 = vunpack.c.l.b16 %v2751
    %v2908 = vunpack.c.h.b16 %v2751
    %v2909 = vunpack.c.l.b16 %v2752
    %v2910 = vunpack.c.h.b16 %v2752
    %v2911 = vunpack.c.l.b16 %v2753
    %v2912 = vunpack.c.h.b16 %v2753
    %v2913 = vunpack.c.l.b16 %v2754
    %v2914 = vunpack.c.h.b16 %v2754
    %v2915 = vunpack.c.l.b16 %v2755
    %v2916 = vunpack.c.h.b16 %v2755
    %v2917 = vunpack.c.l.b16 %v2756
    %v2918 = vunpack.c.h.b16 %v2756
    %v2919 = vunpack.c.l.b16 %v2757
    %v2920 = vunpack.c.h.b16 %v2757
    %v2921 = vunpack.c.l.b16 %v2758
    %v2922 = vunpack.c.h.b16 %v2758
    %v2923 = vunpack.c.l.b16 %v2759
    %v2924 = vunpack.c.h.b16 %v2759
    %v2925 = vunpack.c.l.b16 %v2760
    %v2926 = vunpack.c.h.b16 %v2760
    %v2927 = vunpack.c.l.b16 %v2761
    %v2928 = vunpack.c.h.b16 %v2761
    %v2929 = vunpack.c.l.b16 %v2762
    %v2930 = vunpack.c.h.b16 %v2762
    %v2931 = vunpack.c.l.b16 %v2763
    %v2932 = vunpack.c.h.b16 %v2763
    %v2933 = vunpack.c.l.b16 %v2764
    %v2934 = vunpack.c.h.b16 %v2764
    %v2935 = vunpack.c.l.b16 %v2765
    %v2936 = vunpack.c.h.b16 %v2765
    %v2937 = vunpack.c.l.b16 %v2766
    %v2938 = vunpack.c.h.b16 %v2766
    %v2939 = vunpack.c.l.b16 %v2767
    %v2940 = vunpack.c.h.b16 %v2767
    %v2941 = vunpack.c.l.b16 %v2768
    %v2942 = vunpack.c.h.b16 %v2768
    %v2943 = vunpack.c.l.b16 %v2769
    %v2944 = vunpack.c.h.b16 %v2769
    %v2945 = vunpack.c.l.b16 %v2770
    %v2946 = vunpack.c.h.b16 %v2770
    %v2947 = vunpack.c.l.b16 %v2771
    %v2948 = vunpack.c.h.b16 %v2771
    %v2949 = vunpack.c.l.b16 %v2772
    %v2950 = vunpack.c.h.b16 %v2772
    %v2951 = vunpack.c.l.b16 %v2773
    %v2952 = vunpack.c.h.b16 %v2773
    %v2953 = vunpack.c.l.b16 %v2774
    %v2954 = vunpack.c.h.b16 %v2774
    %v2955 = vunpack.c.l.b16 %v2775
    %v2956 = vunpack.c.h.b16 %v2775
    %v2957 = vunpack.c.l.b16 %v2776
    %v2958 = vunpack.c.h.b16 %v2776
    %v2959 = vunpack.c.l.b16 %v2777
    %v2960 = vunpack.c.h.b16 %v2777
    %v2961 = vunpack.c.l.b16 %v2778
    %v2962 = vunpack.c.h.b16 %v2778
    %v2963 = vunpack.c.l.b16 %v2779
    %v2964 = vunpack.c.h.b16 %v2779
    %v2965 = vunpack.c.l.b16 %v2780
    %v2966 = vunpack.c.h.b16 %v2780
    %v2967 = vunpack.c.l.b16 %v2781
    %v2968 = vunpack.c.h.b16 %v2781
    %v2969 = vunpack.c.l.b16 %v2782
    %v2970 = vunpack.c.h.b16 %v2782
    %v2971 = vunpack.c.l.b16 %v2783
    %v2972 = vunpack.c.h.b16 %v2783
    %v2973 = vunpack.c.l.b16 %v2784
    %v2974 = vunpack.c.h.b16 %v2784
    %v2975 = vunpack.c.l.b16 %v2785
    %v2976 = vunpack.c.h.b16 %v2785
    %v2977 = vunpack.c.l.b16 %v2786
    %v2978 = vunpack.c.h.b16 %v2786
    %v2979 = vunpack.c.l.b16 %v2787
    %v2980 = vunpack.c.h.b16 %v2787
    %v2981 = vunpack.c.l.b16 %v2788
    %v2982 = vunpack.c.h.b16 %v2788
    %v2983 = vunpack.c.l.b16 %v2789
    %v2984 = vunpack.c.h.b16 %v2789
    %v2985 = vunpack.c.l.b16 %v2790
    %v2986 = vunpack.c.h.b16 %v2790
    %v2987 = vunpack.c.l.b16 %v2791
    %v2988 = vunpack.c.h.b16 %v2791
    %v2989 = vunpack.c.l.b16 %v2792
    %v2990 = vunpack.c.h.b16 %v2792
    %v2991 = vunpack.c.l.b16 %v2793
    %v2992 = vunpack.c.h.b16 %v2793
    %v2993 = vunpack.c.l.b16 %v2794
    %v2994 = vunpack.c.h.b16 %v2794
    %v2995 = vpack.c.b16 %v2875, %v2867
    %v2996 = vpack.c.b16 %v2876, %v2868
    %v2997 = vpack.c.b16 %v2877, %v2869
    %v2998 = vpack.c.b16 %v2878, %v2870
    %v2999 = vpack.c.b16 %v2879, %v2871
    %v3000 = vpack.c.b16 %v2880, %v2872
    %v3001 = vpack.c.b16 %v2881, %v2873
    %v3002 = vpack.c.b16 %v2882, %v2874
    %v3003 = vpack.c.b16 %v2891, %v2883
    %v3004 = vpack.c.b16 %v2892, %v2884
    %v3005 = vpack.c.b16 %v2893, %v2885
    %v3006 = vpack.c.b16 %v2894, %v2886
    %v3007 = vpack.c.b16 %v2895, %v2887
    %v3008 = vpack.c.b16 %v2896, %v2888
    %v3009 = vpack.c.b16 %v2897, %v2889
    %v3010 = vpack.c.b16 %v2898, %v2890
    %v3011 = vpack.c.b16 %v2907, %v2899
    %v3012 = vpack.c.b16 %v2908, %v2900
    %v3013 = vpack.c.b16 %v2909, %v2901
    %v3014 = vpack.c.b16 %v2910, %v2902
    %v3015 = vpack.c.b16 %v2911, %v2903
    %v3016 = vpack.c.b16 %v2912, %v2904
    %v3017 = vpack.c.b16 %v2913, %v2905
    %v3018 = vpack.c.b16 %v2914, %v2906
    %v3019 = vpack.c.b16 %v2923, %v2915
    %v3020 = vpack.c.b16 %v2924, %v2916
    %v3021 = vpack.c.b16 %v2925, %v2917
    %v3022 = vpack.c.b16 %v2926, %v2918
    %v3023 = vpack.c.b16 %v2927, %v2919
    %v3024 = vpack.c.b16 %v2928, %v2920
    %v3025 = vpack.c.b16 %v2929, %v2921
    %v3026 = vpack.c.b16 %v2930, %v2922
    %v3027 = vpack.c.b16 %v2939, %v2931
    %v3028 = vpack.c.b16 %v2940, %v2932
    %v3029 = vpack.c.b16 %v2941, %v2933
    %v3030 = vpack.c.b16 %v2942, %v2934
    %v3031 = vpack.c.b16 %v2943, %v2935
    %v3032 = vpack.c.b16 %v2944, %v2936
    %v3033 = vpack.c.b16 %v2945, %v2937
    %v3034 = vpack.c.b16 %v2946, %v2938
    %v3035 = vpack.c.b16 %v2955, %v2947
    %v3036 = vpack.c.b16 %v2956, %v2948
    %v3037 = vpack.c.b16 %v2957, %v2949
    %v3038 = vpack.c.b16 %v2958, %v2950
    %v3039 = vpack.c.b16 %v2959, %v2951
    %v3040 = vpack.c.b16 %v2960, %v2952
    %v3041 = vpack.c.b16 %v2961, %v2953
    %v3042 = vpack.c.b16 %v2962, %v2954
    %v3043 = vpack.c.b16 %v2971, %v2963
    %v3044 = vpack.c.b16 %v2972, %v2964
    %v3045 = vpack.c.b16 %v2973, %v2965
    %v3046 = vpack.c.b16 %v2974, %v2966
    %v3047 = vpack.c.b16 %v2975, %v2967
    %v3048 = vpack.c.b16 %v2976, %v2968
    %v3049 = vpack.c.b16 %v2977, %v2969
    %v3050 = vpack.c.b16 %v2978, %v2970
    %v3051 = vpack.c.b16 %v2987, %v2979
    %v3052 = vpack.c.b16 %v2988, %v2980
    %v3053 = vpack.c.b16 %v2989, %v2981
    %v3054 = vpack.c.b16 %v2990, %v2982
    %v3055 = vpack.c.b16 %v2991, %v2983
    %v3056 = vpack.c.b16 %v2992, %v2984
    %v3057 = vpack.c.b16 %v2993, %v2985
    %v3058 = vpack.c.b16 %v2994, %v2986
    %3123 = vmatprep.subr.bf16.mxu0 %v2996
    %3124 = vmatpush1.bf16.msra.mxu0 %v2995
    %3125 = vmatprep.subr.bf16.mxu0 %v3004
    %3126 = vmatpush1.bf16.msra.mxu0 %v3003
    %3127 = vmatprep.subr.bf16.mxu0 %v3012
    %3128 = vmatpush1.bf16.msra.mxu0 %v3011
    %3129 = vmatprep.subr.bf16.mxu0 %v3020
    %3130 = vmatpush1.bf16.msra.mxu0 %v3019
    %3131 = vmatprep.subr.bf16.mxu0 %v3028
    %3132 = vmatpush1.bf16.msra.mxu0 %v3027
    %3133 = vmatprep.subr.bf16.mxu0 %v3036
    %3134 = vmatpush1.bf16.msra.mxu0 %v3035
    %3135 = vmatprep.subr.bf16.mxu0 %v3044
    %3136 = vmatpush1.bf16.msra.mxu0 %v3043
    %3137 = vmatprep.subr.bf16.mxu0 %v3052
    %3138 = vmatpush1.bf16.msra.mxu0 %v3051
    %3139 = vmatprep.subr.bf16.mxu0 0
    %3140 = vmatpush1.bf16.msra.mxu0 0
    %3141 = vmatprep.subr.bf16.mxu0 0
    %3142 = vmatpush1.bf16.msra.mxu0 0
    %3143 = vmatprep.subr.bf16.mxu0 0
    %3144 = vmatpush1.bf16.msra.mxu0 0
    %3145 = vmatprep.subr.bf16.mxu0 0
    %3146 = vmatpush1.bf16.msra.mxu0 0
    %3147 = vmatprep.subr.bf16.mxu0 0
    %3148 = vmatpush1.bf16.msra.mxu0 0
    %3149 = vmatprep.subr.bf16.mxu0 0
    %3150 = vmatpush1.bf16.msra.mxu0 0
    %3151 = vmatprep.subr.bf16.mxu0 0
    %3152 = vmatpush1.bf16.msra.mxu0 0
    %3153 = vmatprep.subr.bf16.mxu0 0
    %3154 = vmatpush1.bf16.msra.mxu0 0
    %3155 = vmatprep.mubr.bf16.mxu0 0
    %3156 = vmatmul.mubr.bf16.gmra.mrb[0].mxu0 %v2801
    %v3157 = vpop.f32.mrb[0].mxu0
    %v3158 = vadd.f32 0.0, %v3157
    %v3159 = vpop.f32.mrb[0].mxu0
    %v3160 = vadd.f32 0.0, %v3159
    %v3161 = vpop.f32.mrb[0].mxu0
    %v3162 = vpop.f32.mrb[0].mxu0
    %3163 = vdwg.mxu0
    %3164 = vmatprep.subr.bf16.mxu0 %v2998
    %3165 = vmatpush1.bf16.msra.mxu0 %v2997
    %3166 = vmatprep.subr.bf16.mxu0 %v3006
    %3167 = vmatpush1.bf16.msra.mxu0 %v3005
    %3168 = vmatprep.subr.bf16.mxu0 %v3014
    %3169 = vmatpush1.bf16.msra.mxu0 %v3013
    %3170 = vmatprep.subr.bf16.mxu0 %v3022
    %3171 = vmatpush1.bf16.msra.mxu0 %v3021
    %3172 = vmatprep.subr.bf16.mxu0 %v3030
    %3173 = vmatpush1.bf16.msra.mxu0 %v3029
    %3174 = vmatprep.subr.bf16.mxu0 %v3038
    %3175 = vmatpush1.bf16.msra.mxu0 %v3037
    %3176 = vmatprep.subr.bf16.mxu0 %v3046
    %3177 = vmatpush1.bf16.msra.mxu0 %v3045
    %3178 = vmatprep.subr.bf16.mxu0 %v3054
    %3179 = vmatpush1.bf16.msra.mxu0 %v3053
    %3180 = vmatprep.subr.bf16.mxu0 0
    %3181 = vmatpush1.bf16.msra.mxu0 0
    %3182 = vmatprep.subr.bf16.mxu0 0
    %3183 = vmatpush1.bf16.msra.mxu0 0
    %3184 = vmatprep.subr.bf16.mxu0 0
    %3185 = vmatpush1.bf16.msra.mxu0 0
    %3186 = vmatprep.subr.bf16.mxu0 0
    %3187 = vmatpush1.bf16.msra.mxu0 0
    %3188 = vmatprep.subr.bf16.mxu0 0
    %3189 = vmatpush1.bf16.msra.mxu0 0
    %3190 = vmatprep.subr.bf16.mxu0 0
    %3191 = vmatpush1.bf16.msra.mxu0 0
    %3192 = vmatprep.subr.bf16.mxu0 0
    %3193 = vmatpush1.bf16.msra.mxu0 0
    %3194 = vmatprep.subr.bf16.mxu0 0
    %3195 = vmatpush1.bf16.msra.mxu0 0
    %3196 = vmatprep.mubr.bf16.mxu0 0
    %3197 = vmatmul.mubr.bf16.gmra.mrb[0].mxu0 %v2801
    %v3198 = vpop.f32.mrb[0].mxu0
    %v3199 = vadd.f32 0.0, %v3198
    %v3200 = vpop.f32.mrb[0].mxu0
    %v3201 = vadd.f32 0.0, %v3200
    %v3202 = vpop.f32.mrb[0].mxu0
    %v3203 = vpop.f32.mrb[0].mxu0
    %3204 = vdwg.mxu0
    %3205 = vmatprep.subr.bf16.mxu0 %v3000
    %3206 = vmatpush1.bf16.msra.mxu0 %v2999
    %3207 = vmatprep.subr.bf16.mxu0 %v3008
    %3208 = vmatpush1.bf16.msra.mxu0 %v3007
    %3209 = vmatprep.subr.bf16.mxu0 %v3016
    %3210 = vmatpush1.bf16.msra.mxu0 %v3015
    %3211 = vmatprep.subr.bf16.mxu0 %v3024
    %3212 = vmatpush1.bf16.msra.mxu0 %v3023
    %3213 = vmatprep.subr.bf16.mxu0 %v3032
    %3214 = vmatpush1.bf16.msra.mxu0 %v3031
    %3215 = vmatprep.subr.bf16.mxu0 %v3040
    %3216 = vmatpush1.bf16.msra.mxu0 %v3039
    %3217 = vmatprep.subr.bf16.mxu0 %v3048
    %3218 = vmatpush1.bf16.msra.mxu0 %v3047
    %3219 = vmatprep.subr.bf16.mxu0 %v3056
    %3220 = vmatpush1.bf16.msra.mxu0 %v3055
    %3221 = vmatprep.subr.bf16.mxu0 0
    %3222 = vmatpush1.bf16.msra.mxu0 0
    %3223 = vmatprep.subr.bf16.mxu0 0
    %3224 = vmatpush1.bf16.msra.mxu0 0
    %3225 = vmatprep.subr.bf16.mxu0 0
    %3226 = vmatpush1.bf16.msra.mxu0 0
    %3227 = vmatprep.subr.bf16.mxu0 0
    %3228 = vmatpush1.bf16.msra.mxu0 0
    %3229 = vmatprep.subr.bf16.mxu0 0
    %3230 = vmatpush1.bf16.msra.mxu0 0
    %3231 = vmatprep.subr.bf16.mxu0 0
    %3232 = vmatpush1.bf16.msra.mxu0 0
    %3233 = vmatprep.subr.bf16.mxu0 0
    %3234 = vmatpush1.bf16.msra.mxu0 0
    %3235 = vmatprep.subr.bf16.mxu0 0
    %3236 = vmatpush1.bf16.msra.mxu0 0
    %3237 = vmatprep.mubr.bf16.mxu0 0
    %3238 = vmatmul.mubr.bf16.gmra.mrb[0].mxu0 %v2801
    %v3239 = vpop.f32.mrb[0].mxu0
    %v3240 = vadd.f32 0.0, %v3239
    %v3241 = vpop.f32.mrb[0].mxu0
    %v3242 = vadd.f32 0.0, %v3241
    %v3243 = vpop.f32.mrb[0].mxu0
    %v3244 = vpop.f32.mrb[0].mxu0
    %3245 = vdwg.mxu0
    %3246 = vmatprep.subr.bf16.mxu0 %v3002
    %3247 = vmatpush1.bf16.msra.mxu0 %v3001
    %3248 = vmatprep.subr.bf16.mxu0 %v3010
    %3249 = vmatpush1.bf16.msra.mxu0 %v3009
    %3250 = vmatprep.subr.bf16.mxu0 %v3018
    %3251 = vmatpush1.bf16.msra.mxu0 %v3017
    %3252 = vmatprep.subr.bf16.mxu0 %v3026
    %3253 = vmatpush1.bf16.msra.mxu0 %v3025
    %3254 = vmatprep.subr.bf16.mxu0 %v3034
    %3255 = vmatpush1.bf16.msra.mxu0 %v3033
    %3256 = vmatprep.subr.bf16.mxu0 %v3042
    %3257 = vmatpush1.bf16.msra.mxu0 %v3041
    %3258 = vmatprep.subr.bf16.mxu0 %v3050
    %3259 = vmatpush1.bf16.msra.mxu0 %v3049
    %3260 = vmatprep.subr.bf16.mxu0 %v3058
    %3261 = vmatpush1.bf16.msra.mxu0 %v3057
    %3262 = vmatprep.subr.bf16.mxu0 0
    %3263 = vmatpush1.bf16.msra.mxu0 0
    %3264 = vmatprep.subr.bf16.mxu0 0
    %3265 = vmatpush1.bf16.msra.mxu0 0
    %3266 = vmatprep.subr.bf16.mxu0 0
    %3267 = vmatpush1.bf16.msra.mxu0 0
    %3268 = vmatprep.subr.bf16.mxu0 0
    %3269 = vmatpush1.bf16.msra.mxu0 0
    %3270 = vmatprep.subr.bf16.mxu0 0
    %3271 = vmatpush1.bf16.msra.mxu0 0
    %3272 = vmatprep.subr.bf16.mxu0 0
    %3273 = vmatpush1.bf16.msra.mxu0 0
    %3274 = vmatprep.subr.bf16.mxu0 0
    %3275 = vmatpush1.bf16.msra.mxu0 0
    %3276 = vmatprep.subr.bf16.mxu0 0
    %3277 = vmatpush1.bf16.msra.mxu0 0
    %3278 = vmatprep.mubr.bf16.mxu0 0
    %3279 = vmatmul.mubr.bf16.gmra.mrb[0].mxu0 %v2801
    %v3280 = vpop.f32.mrb[0].mxu0
    %v3281 = vadd.f32 0.0, %v3280
    %v3282 = vpop.f32.mrb[0].mxu0
    %v3283 = vadd.f32 0.0, %v3282
    %v3284 = vpop.f32.mrb[0].mxu0
    %v3285 = vpop.f32.mrb[0].mxu0
    %3286 = vdwg.mxu0
    %v3287 = vadd.f32 %v2719, %v3158
    %v3288 = vadd.f32 %v2720, %v3160
    %v3289 = vadd.f32 %v2721, %v3199
    %v3290 = vadd.f32 %v2722, %v3201
    %v3291 = vadd.f32 %v2723, %v3240
    %v3292 = vadd.f32 %v2724, %v3242
    %v3293 = vadd.f32 %v2725, %v3281
    %v3294 = vadd.f32 %v2726, %v3283
    %v3295 = vld [vmem:[#allocation2 + $0x5] sm:$0x1]
    %v3296 = vld [vmem:[#allocation2 + $0x15] sm:$0x1]
    %v3297 = vpack.c.bf16 %v3295, %v3295
    %v3298 = vpack.c.bf16 %v3296, %v3296
    %v3299 = vld [vmem:[#allocation9 + $0xa00] sm:$0xff]
    %v3300 = vld [vmem:[#allocation9 + $0xa08] sm:$0xff]
    %v3301 = vld [vmem:[#allocation9 + $0xa10] sm:$0xff]
    %v3302 = vld [vmem:[#allocation9 + $0xa18] sm:$0xff]
    %v3303 = vld [vmem:[#allocation9 + $0xa20] sm:$0xff]
    %v3304 = vld [vmem:[#allocation9 + $0xa28] sm:$0xff]
    %v3305 = vld [vmem:[#allocation9 + $0xa30] sm:$0xff]
    %v3306 = vld [vmem:[#allocation9 + $0xa38] sm:$0xff]
    %v3307 = vld [vmem:[#allocation9 + $0xa40] sm:$0xff]
    %v3308 = vld [vmem:[#allocation9 + $0xa48] sm:$0xff]
    %v3309 = vld [vmem:[#allocation9 + $0xa50] sm:$0xff]
    %v3310 = vld [vmem:[#allocation9 + $0xa58] sm:$0xff]
    %v3311 = vld [vmem:[#allocation9 + $0xa60] sm:$0xff]
    %v3312 = vld [vmem:[#allocation9 + $0xa68] sm:$0xff]
    %v3313 = vld [vmem:[#allocation9 + $0xa70] sm:$0xff]
    %v3314 = vld [vmem:[#allocation9 + $0xa78] sm:$0xff]
    %v3315 = vld [vmem:[#allocation9 + $0xa80] sm:$0xff]
    %v3316 = vld [vmem:[#allocation9 + $0xa88] sm:$0xff]
    %v3317 = vld [vmem:[#allocation9 + $0xa90] sm:$0xff]
    %v3318 = vld [vmem:[#allocation9 + $0xa98] sm:$0xff]
    %v3319 = vld [vmem:[#allocation9 + $0xaa0] sm:$0xff]
    %v3320 = vld [vmem:[#allocation9 + $0xaa8] sm:$0xff]
    %v3321 = vld [vmem:[#allocation9 + $0xab0] sm:$0xff]
    %v3322 = vld [vmem:[#allocation9 + $0xab8] sm:$0xff]
    %v3323 = vld [vmem:[#allocation9 + $0xac0] sm:$0xff]
    %v3324 = vld [vmem:[#allocation9 + $0xac8] sm:$0xff]
    %v3325 = vld [vmem:[#allocation9 + $0xad0] sm:$0xff]
    %v3326 = vld [vmem:[#allocation9 + $0xad8] sm:$0xff]
    %v3327 = vld [vmem:[#allocation9 + $0xae0] sm:$0xff]
    %v3328 = vld [vmem:[#allocation9 + $0xae8] sm:$0xff]
    %v3329 = vld [vmem:[#allocation9 + $0xaf0] sm:$0xff]
    %v3330 = vld [vmem:[#allocation9 + $0xaf8] sm:$0xff]
    %v3331 = vld [vmem:[#allocation9 + $0xb00] sm:$0xff]
    %v3332 = vld [vmem:[#allocation9 + $0xb08] sm:$0xff]
    %v3333 = vld [vmem:[#allocation9 + $0xb10] sm:$0xff]
    %v3334 = vld [vmem:[#allocation9 + $0xb18] sm:$0xff]
    %v3335 = vld [vmem:[#allocation9 + $0xb20] sm:$0xff]
    %v3336 = vld [vmem:[#allocation9 + $0xb28] sm:$0xff]
    %v3337 = vld [vmem:[#allocation9 + $0xb30] sm:$0xff]
    %v3338 = vld [vmem:[#allocation9 + $0xb38] sm:$0xff]
    %v3339 = vld [vmem:[#allocation9 + $0xb40] sm:$0xff]
    %v3340 = vld [vmem:[#allocation9 + $0xb48] sm:$0xff]
    %v3341 = vld [vmem:[#allocation9 + $0xb50] sm:$0xff]
    %v3342 = vld [vmem:[#allocation9 + $0xb58] sm:$0xff]
    %v3343 = vld [vmem:[#allocation9 + $0xb60] sm:$0xff]
    %v3344 = vld [vmem:[#allocation9 + $0xb68] sm:$0xff]
    %v3345 = vld [vmem:[#allocation9 + $0xb70] sm:$0xff]
    %v3346 = vld [vmem:[#allocation9 + $0xb78] sm:$0xff]
    %v3347 = vld [vmem:[#allocation9 + $0xb80] sm:$0xff]
    %v3348 = vld [vmem:[#allocation9 + $0xb88] sm:$0xff]
    %v3349 = vld [vmem:[#allocation9 + $0xb90] sm:$0xff]
    %v3350 = vld [vmem:[#allocation9 + $0xb98] sm:$0xff]
    %v3351 = vld [vmem:[#allocation9 + $0xba0] sm:$0xff]
    %v3352 = vld [vmem:[#allocation9 + $0xba8] sm:$0xff]
    %v3353 = vld [vmem:[#allocation9 + $0xbb0] sm:$0xff]
    %v3354 = vld [vmem:[#allocation9 + $0xbb8] sm:$0xff]
    %v3355 = vld [vmem:[#allocation9 + $0xbc0] sm:$0xff]
    %v3356 = vld [vmem:[#allocation9 + $0xbc8] sm:$0xff]
    %v3357 = vld [vmem:[#allocation9 + $0xbd0] sm:$0xff]
    %v3358 = vld [vmem:[#allocation9 + $0xbd8] sm:$0xff]
    %v3359 = vld [vmem:[#allocation9 + $0xbe0] sm:$0xff]
    %v3360 = vld [vmem:[#allocation9 + $0xbe8] sm:$0xff]
    %v3361 = vld [vmem:[#allocation9 + $0xbf0] sm:$0xff]
    %v3362 = vld [vmem:[#allocation9 + $0xbf8] sm:$0xff]
    %v3365 = vunpack.c.l.b16 %v3297
    %v3366 = vunpack.c.l.b16 %v3298
    %v3367 = vrot.slane %v3366, 7
    %v3368 = vsel %vm611, %v3367, %v3365
    %v3369 = vpack.c.b16 %v3368, %v3368
    %v3435 = vunpack.c.l.b16 %v3299
    %v3436 = vunpack.c.h.b16 %v3299
    %v3437 = vunpack.c.l.b16 %v3300
    %v3438 = vunpack.c.h.b16 %v3300
    %v3439 = vunpack.c.l.b16 %v3301
    %v3440 = vunpack.c.h.b16 %v3301
    %v3441 = vunpack.c.l.b16 %v3302
    %v3442 = vunpack.c.h.b16 %v3302
    %v3443 = vunpack.c.l.b16 %v3303
    %v3444 = vunpack.c.h.b16 %v3303
    %v3445 = vunpack.c.l.b16 %v3304
    %v3446 = vunpack.c.h.b16 %v3304
    %v3447 = vunpack.c.l.b16 %v3305
    %v3448 = vunpack.c.h.b16 %v3305
    %v3449 = vunpack.c.l.b16 %v3306
    %v3450 = vunpack.c.h.b16 %v3306
    %v3451 = vunpack.c.l.b16 %v3307
    %v3452 = vunpack.c.h.b16 %v3307
    %v3453 = vunpack.c.l.b16 %v3308
    %v3454 = vunpack.c.h.b16 %v3308
    %v3455 = vunpack.c.l.b16 %v3309
    %v3456 = vunpack.c.h.b16 %v3309
    %v3457 = vunpack.c.l.b16 %v3310
    %v3458 = vunpack.c.h.b16 %v3310
    %v3459 = vunpack.c.l.b16 %v3311
    %v3460 = vunpack.c.h.b16 %v3311
    %v3461 = vunpack.c.l.b16 %v3312
    %v3462 = vunpack.c.h.b16 %v3312
    %v3463 = vunpack.c.l.b16 %v3313
    %v3464 = vunpack.c.h.b16 %v3313
    %v3465 = vunpack.c.l.b16 %v3314
    %v3466 = vunpack.c.h.b16 %v3314
    %v3467 = vunpack.c.l.b16 %v3315
    %v3468 = vunpack.c.h.b16 %v3315
    %v3469 = vunpack.c.l.b16 %v3316
    %v3470 = vunpack.c.h.b16 %v3316
    %v3471 = vunpack.c.l.b16 %v3317
    %v3472 = vunpack.c.h.b16 %v3317
    %v3473 = vunpack.c.l.b16 %v3318
    %v3474 = vunpack.c.h.b16 %v3318
    %v3475 = vunpack.c.l.b16 %v3319
    %v3476 = vunpack.c.h.b16 %v3319
    %v3477 = vunpack.c.l.b16 %v3320
    %v3478 = vunpack.c.h.b16 %v3320
    %v3479 = vunpack.c.l.b16 %v3321
    %v3480 = vunpack.c.h.b16 %v3321
    %v3481 = vunpack.c.l.b16 %v3322
    %v3482 = vunpack.c.h.b16 %v3322
    %v3483 = vunpack.c.l.b16 %v3323
    %v3484 = vunpack.c.h.b16 %v3323
    %v3485 = vunpack.c.l.b16 %v3324
    %v3486 = vunpack.c.h.b16 %v3324
    %v3487 = vunpack.c.l.b16 %v3325
    %v3488 = vunpack.c.h.b16 %v3325
    %v3489 = vunpack.c.l.b16 %v3326
    %v3490 = vunpack.c.h.b16 %v3326
    %v3491 = vunpack.c.l.b16 %v3327
    %v3492 = vunpack.c.h.b16 %v3327
    %v3493 = vunpack.c.l.b16 %v3328
    %v3494 = vunpack.c.h.b16 %v3328
    %v3495 = vunpack.c.l.b16 %v3329
    %v3496 = vunpack.c.h.b16 %v3329
    %v3497 = vunpack.c.l.b16 %v3330
    %v3498 = vunpack.c.h.b16 %v3330
    %v3499 = vunpack.c.l.b16 %v3331
    %v3500 = vunpack.c.h.b16 %v3331
    %v3501 = vunpack.c.l.b16 %v3332
    %v3502 = vunpack.c.h.b16 %v3332
    %v3503 = vunpack.c.l.b16 %v3333
    %v3504 = vunpack.c.h.b16 %v3333
    %v3505 = vunpack.c.l.b16 %v3334
    %v3506 = vunpack.c.h.b16 %v3334
    %v3507 = vunpack.c.l.b16 %v3335
    %v3508 = vunpack.c.h.b16 %v3335
    %v3509 = vunpack.c.l.b16 %v3336
    %v3510 = vunpack.c.h.b16 %v3336
    %v3511 = vunpack.c.l.b16 %v3337
    %v3512 = vunpack.c.h.b16 %v3337
    %v3513 = vunpack.c.l.b16 %v3338
    %v3514 = vunpack.c.h.b16 %v3338
    %v3515 = vunpack.c.l.b16 %v3339
    %v3516 = vunpack.c.h.b16 %v3339
    %v3517 = vunpack.c.l.b16 %v3340
    %v3518 = vunpack.c.h.b16 %v3340
    %v3519 = vunpack.c.l.b16 %v3341
    %v3520 = vunpack.c.h.b16 %v3341
    %v3521 = vunpack.c.l.b16 %v3342
    %v3522 = vunpack.c.h.b16 %v3342
    %v3523 = vunpack.c.l.b16 %v3343
    %v3524 = vunpack.c.h.b16 %v3343
    %v3525 = vunpack.c.l.b16 %v3344
    %v3526 = vunpack.c.h.b16 %v3344
    %v3527 = vunpack.c.l.b16 %v3345
    %v3528 = vunpack.c.h.b16 %v3345
    %v3529 = vunpack.c.l.b16 %v3346
    %v3530 = vunpack.c.h.b16 %v3346
    %v3531 = vunpack.c.l.b16 %v3347
    %v3532 = vunpack.c.h.b16 %v3347
    %v3533 = vunpack.c.l.b16 %v3348
    %v3534 = vunpack.c.h.b16 %v3348
    %v3535 = vunpack.c.l.b16 %v3349
    %v3536 = vunpack.c.h.b16 %v3349
    %v3537 = vunpack.c.l.b16 %v3350
    %v3538 = vunpack.c.h.b16 %v3350
    %v3539 = vunpack.c.l.b16 %v3351
    %v3540 = vunpack.c.h.b16 %v3351
    %v3541 = vunpack.c.l.b16 %v3352
    %v3542 = vunpack.c.h.b16 %v3352
    %v3543 = vunpack.c.l.b16 %v3353
    %v3544 = vunpack.c.h.b16 %v3353
    %v3545 = vunpack.c.l.b16 %v3354
    %v3546 = vunpack.c.h.b16 %v3354
    %v3547 = vunpack.c.l.b16 %v3355
    %v3548 = vunpack.c.h.b16 %v3355
    %v3549 = vunpack.c.l.b16 %v3356
    %v3550 = vunpack.c.h.b16 %v3356
    %v3551 = vunpack.c.l.b16 %v3357
    %v3552 = vunpack.c.h.b16 %v3357
    %v3553 = vunpack.c.l.b16 %v3358
    %v3554 = vunpack.c.h.b16 %v3358
    %v3555 = vunpack.c.l.b16 %v3359
    %v3556 = vunpack.c.h.b16 %v3359
    %v3557 = vunpack.c.l.b16 %v3360
    %v3558 = vunpack.c.h.b16 %v3360
    %v3559 = vunpack.c.l.b16 %v3361
    %v3560 = vunpack.c.h.b16 %v3361
    %v3561 = vunpack.c.l.b16 %v3362
    %v3562 = vunpack.c.h.b16 %v3362
    %v3563 = vpack.c.b16 %v3443, %v3435
    %v3564 = vpack.c.b16 %v3444, %v3436
    %v3565 = vpack.c.b16 %v3445, %v3437
    %v3566 = vpack.c.b16 %v3446, %v3438
    %v3567 = vpack.c.b16 %v3447, %v3439
    %v3568 = vpack.c.b16 %v3448, %v3440
    %v3569 = vpack.c.b16 %v3449, %v3441
    %v3570 = vpack.c.b16 %v3450, %v3442
    %v3571 = vpack.c.b16 %v3459, %v3451
    %v3572 = vpack.c.b16 %v3460, %v3452
    %v3573 = vpack.c.b16 %v3461, %v3453
    %v3574 = vpack.c.b16 %v3462, %v3454
    %v3575 = vpack.c.b16 %v3463, %v3455
    %v3576 = vpack.c.b16 %v3464, %v3456
    %v3577 = vpack.c.b16 %v3465, %v3457
    %v3578 = vpack.c.b16 %v3466, %v3458
    %v3579 = vpack.c.b16 %v3475, %v3467
    %v3580 = vpack.c.b16 %v3476, %v3468
    %v3581 = vpack.c.b16 %v3477, %v3469
    %v3582 = vpack.c.b16 %v3478, %v3470
    %v3583 = vpack.c.b16 %v3479, %v3471
    %v3584 = vpack.c.b16 %v3480, %v3472
    %v3585 = vpack.c.b16 %v3481, %v3473
    %v3586 = vpack.c.b16 %v3482, %v3474
    %v3587 = vpack.c.b16 %v3491, %v3483
    %v3588 = vpack.c.b16 %v3492, %v3484
    %v3589 = vpack.c.b16 %v3493, %v3485
    %v3590 = vpack.c.b16 %v3494, %v3486
    %v3591 = vpack.c.b16 %v3495, %v3487
    %v3592 = vpack.c.b16 %v3496, %v3488
    %v3593 = vpack.c.b16 %v3497, %v3489
    %v3594 = vpack.c.b16 %v3498, %v3490
    %v3595 = vpack.c.b16 %v3507, %v3499
    %v3596 = vpack.c.b16 %v3508, %v3500
    %v3597 = vpack.c.b16 %v3509, %v3501
    %v3598 = vpack.c.b16 %v3510, %v3502
    %v3599 = vpack.c.b16 %v3511, %v3503
    %v3600 = vpack.c.b16 %v3512, %v3504
    %v3601 = vpack.c.b16 %v3513, %v3505
    %v3602 = vpack.c.b16 %v3514, %v3506
    %v3603 = vpack.c.b16 %v3523, %v3515
    %v3604 = vpack.c.b16 %v3524, %v3516
    %v3605 = vpack.c.b16 %v3525, %v3517
    %v3606 = vpack.c.b16 %v3526, %v3518
    %v3607 = vpack.c.b16 %v3527, %v3519
    %v3608 = vpack.c.b16 %v3528, %v3520
    %v3609 = vpack.c.b16 %v3529, %v3521
    %v3610 = vpack.c.b16 %v3530, %v3522
    %v3611 = vpack.c.b16 %v3539, %v3531
    %v3612 = vpack.c.b16 %v3540, %v3532
    %v3613 = vpack.c.b16 %v3541, %v3533
    %v3614 = vpack.c.b16 %v3542, %v3534
    %v3615 = vpack.c.b16 %v3543, %v3535
    %v3616 = vpack.c.b16 %v3544, %v3536
    %v3617 = vpack.c.b16 %v3545, %v3537
    %v3618 = vpack.c.b16 %v3546, %v3538
    %v3619 = vpack.c.b16 %v3555, %v3547
    %v3620 = vpack.c.b16 %v3556, %v3548
    %v3621 = vpack.c.b16 %v3557, %v3549
    %v3622 = vpack.c.b16 %v3558, %v3550
    %v3623 = vpack.c.b16 %v3559, %v3551
    %v3624 = vpack.c.b16 %v3560, %v3552
    %v3625 = vpack.c.b16 %v3561, %v3553
    %v3626 = vpack.c.b16 %v3562, %v3554
    %3691 = vmatprep.subr.bf16.mxu0 %v3564
    %3692 = vmatpush1.bf16.msra.mxu0 %v3563
    %3693 = vmatprep.subr.bf16.mxu0 %v3572
    %3694 = vmatpush1.bf16.msra.mxu0 %v3571
    %3695 = vmatprep.subr.bf16.mxu0 %v3580
    %3696 = vmatpush1.bf16.msra.mxu0 %v3579
    %3697 = vmatprep.subr.bf16.mxu0 %v3588
    %3698 = vmatpush1.bf16.msra.mxu0 %v3587
    %3699 = vmatprep.subr.bf16.mxu0 %v3596
    %3700 = vmatpush1.bf16.msra.mxu0 %v3595
    %3701 = vmatprep.subr.bf16.mxu0 %v3604
    %3702 = vmatpush1.bf16.msra.mxu0 %v3603
    %3703 = vmatprep.subr.bf16.mxu0 %v3612
    %3704 = vmatpush1.bf16.msra.mxu0 %v3611
    %3705 = vmatprep.subr.bf16.mxu0 %v3620
    %3706 = vmatpush1.bf16.msra.mxu0 %v3619
    %3707 = vmatprep.subr.bf16.mxu0 0
    %3708 = vmatpush1.bf16.msra.mxu0 0
    %3709 = vmatprep.subr.bf16.mxu0 0
    %3710 = vmatpush1.bf16.msra.mxu0 0
    %3711 = vmatprep.subr.bf16.mxu0 0
    %3712 = vmatpush1.bf16.msra.mxu0 0
    %3713 = vmatprep.subr.bf16.mxu0 0
    %3714 = vmatpush1.bf16.msra.mxu0 0
    %3715 = vmatprep.subr.bf16.mxu0 0
    %3716 = vmatpush1.bf16.msra.mxu0 0
    %3717 = vmatprep.subr.bf16.mxu0 0
    %3718 = vmatpush1.bf16.msra.mxu0 0
    %3719 = vmatprep.subr.bf16.mxu0 0
    %3720 = vmatpush1.bf16.msra.mxu0 0
    %3721 = vmatprep.subr.bf16.mxu0 0
    %3722 = vmatpush1.bf16.msra.mxu0 0
    %3723 = vmatprep.mubr.bf16.mxu0 0
    %3724 = vmatmul.mubr.bf16.gmra.mrb[0].mxu0 %v3369
    %v3725 = vpop.f32.mrb[0].mxu0
    %v3726 = vadd.f32 0.0, %v3725
    %v3727 = vpop.f32.mrb[0].mxu0
    %v3728 = vadd.f32 0.0, %v3727
    %v3729 = vpop.f32.mrb[0].mxu0
    %v3730 = vpop.f32.mrb[0].mxu0
    %3731 = vdwg.mxu0
    %3732 = vmatprep.subr.bf16.mxu0 %v3566
    %3733 = vmatpush1.bf16.msra.mxu0 %v3565
    %3734 = vmatprep.subr.bf16.mxu0 %v3574
    %3735 = vmatpush1.bf16.msra.mxu0 %v3573
    %3736 = vmatprep.subr.bf16.mxu0 %v3582
    %3737 = vmatpush1.bf16.msra.mxu0 %v3581
    %3738 = vmatprep.subr.bf16.mxu0 %v3590
    %3739 = vmatpush1.bf16.msra.mxu0 %v3589
    %3740 = vmatprep.subr.bf16.mxu0 %v3598
    %3741 = vmatpush1.bf16.msra.mxu0 %v3597
    %3742 = vmatprep.subr.bf16.mxu0 %v3606
    %3743 = vmatpush1.bf16.msra.mxu0 %v3605
    %3744 = vmatprep.subr.bf16.mxu0 %v3614
    %3745 = vmatpush1.bf16.msra.mxu0 %v3613
    %3746 = vmatprep.subr.bf16.mxu0 %v3622
    %3747 = vmatpush1.bf16.msra.mxu0 %v3621
    %3748 = vmatprep.subr.bf16.mxu0 0
    %3749 = vmatpush1.bf16.msra.mxu0 0
    %3750 = vmatprep.subr.bf16.mxu0 0
    %3751 = vmatpush1.bf16.msra.mxu0 0
    %3752 = vmatprep.subr.bf16.mxu0 0
    %3753 = vmatpush1.bf16.msra.mxu0 0
    %3754 = vmatprep.subr.bf16.mxu0 0
    %3755 = vmatpush1.bf16.msra.mxu0 0
    %3756 = vmatprep.subr.bf16.mxu0 0
    %3757 = vmatpush1.bf16.msra.mxu0 0
    %3758 = vmatprep.subr.bf16.mxu0 0
    %3759 = vmatpush1.bf16.msra.mxu0 0
    %3760 = vmatprep.subr.bf16.mxu0 0
    %3761 = vmatpush1.bf16.msra.mxu0 0
    %3762 = vmatprep.subr.bf16.mxu0 0
    %3763 = vmatpush1.bf16.msra.mxu0 0
    %3764 = vmatprep.mubr.bf16.mxu0 0
    %3765 = vmatmul.mubr.bf16.gmra.mrb[0].mxu0 %v3369
    %v3766 = vpop.f32.mrb[0].mxu0
    %v3767 = vadd.f32 0.0, %v3766
    %v3768 = vpop.f32.mrb[0].mxu0
    %v3769 = vadd.f32 0.0, %v3768
    %v3770 = vpop.f32.mrb[0].mxu0
    %v3771 = vpop.f32.mrb[0].mxu0
    %3772 = vdwg.mxu0
    %3773 = vmatprep.subr.bf16.mxu0 %v3568
    %3774 = vmatpush1.bf16.msra.mxu0 %v3567
    %3775 = vmatprep.subr.bf16.mxu0 %v3576
    %3776 = vmatpush1.bf16.msra.mxu0 %v3575
    %3777 = vmatprep.subr.bf16.mxu0 %v3584
    %3778 = vmatpush1.bf16.msra.mxu0 %v3583
    %3779 = vmatprep.subr.bf16.mxu0 %v3592
    %3780 = vmatpush1.bf16.msra.mxu0 %v3591
    %3781 = vmatprep.subr.bf16.mxu0 %v3600
    %3782 = vmatpush1.bf16.msra.mxu0 %v3599
    %3783 = vmatprep.subr.bf16.mxu0 %v3608
    %3784 = vmatpush1.bf16.msra.mxu0 %v3607
    %3785 = vmatprep.subr.bf16.mxu0 %v3616
    %3786 = vmatpush1.bf16.msra.mxu0 %v3615
    %3787 = vmatprep.subr.bf16.mxu0 %v3624
    %3788 = vmatpush1.bf16.msra.mxu0 %v3623
    %3789 = vmatprep.subr.bf16.mxu0 0
    %3790 = vmatpush1.bf16.msra.mxu0 0
    %3791 = vmatprep.subr.bf16.mxu0 0
    %3792 = vmatpush1.bf16.msra.mxu0 0
    %3793 = vmatprep.subr.bf16.mxu0 0
    %3794 = vmatpush1.bf16.msra.mxu0 0
    %3795 = vmatprep.subr.bf16.mxu0 0
    %3796 = vmatpush1.bf16.msra.mxu0 0
    %3797 = vmatprep.subr.bf16.mxu0 0
    %3798 = vmatpush1.bf16.msra.mxu0 0
    %3799 = vmatprep.subr.bf16.mxu0 0
    %3800 = vmatpush1.bf16.msra.mxu0 0
    %3801 = vmatprep.subr.bf16.mxu0 0
    %3802 = vmatpush1.bf16.msra.mxu0 0
    %3803 = vmatprep.subr.bf16.mxu0 0
    %3804 = vmatpush1.bf16.msra.mxu0 0
    %3805 = vmatprep.mubr.bf16.mxu0 0
    %3806 = vmatmul.mubr.bf16.gmra.mrb[0].mxu0 %v3369
    %v3807 = vpop.f32.mrb[0].mxu0
    %v3808 = vadd.f32 0.0, %v3807
    %v3809 = vpop.f32.mrb[0].mxu0
    %v3810 = vadd.f32 0.0, %v3809
    %v3811 = vpop.f32.mrb[0].mxu0
    %v3812 = vpop.f32.mrb[0].mxu0
    %3813 = vdwg.mxu0
    %3814 = vmatprep.subr.bf16.mxu0 %v3570
    %3815 = vmatpush1.bf16.msra.mxu0 %v3569
    %3816 = vmatprep.subr.bf16.mxu0 %v3578
    %3817 = vmatpush1.bf16.msra.mxu0 %v3577
    %3818 = vmatprep.subr.bf16.mxu0 %v3586
    %3819 = vmatpush1.bf16.msra.mxu0 %v3585
    %3820 = vmatprep.subr.bf16.mxu0 %v3594
    %3821 = vmatpush1.bf16.msra.mxu0 %v3593
    %3822 = vmatprep.subr.bf16.mxu0 %v3602
    %3823 = vmatpush1.bf16.msra.mxu0 %v3601
    %3824 = vmatprep.subr.bf16.mxu0 %v3610
    %3825 = vmatpush1.bf16.msra.mxu0 %v3609
    %3826 = vmatprep.subr.bf16.mxu0 %v3618
    %3827 = vmatpush1.bf16.msra.mxu0 %v3617
    %3828 = vmatprep.subr.bf16.mxu0 %v3626
    %3829 = vmatpush1.bf16.msra.mxu0 %v3625
    %3830 = vmatprep.subr.bf16.mxu0 0
    %3831 = vmatpush1.bf16.msra.mxu0 0
    %3832 = vmatprep.subr.bf16.mxu0 0
    %3833 = vmatpush1.bf16.msra.mxu0 0
    %3834 = vmatprep.subr.bf16.mxu0 0
    %3835 = vmatpush1.bf16.msra.mxu0 0
    %3836 = vmatprep.subr.bf16.mxu0 0
    %3837 = vmatpush1.bf16.msra.mxu0 0
    %3838 = vmatprep.subr.bf16.mxu0 0
    %3839 = vmatpush1.bf16.msra.mxu0 0
    %3840 = vmatprep.subr.bf16.mxu0 0
    %3841 = vmatpush1.bf16.msra.mxu0 0
    %3842 = vmatprep.subr.bf16.mxu0 0
    %3843 = vmatpush1.bf16.msra.mxu0 0
    %3844 = vmatprep.subr.bf16.mxu0 0
    %3845 = vmatpush1.bf16.msra.mxu0 0
    %3846 = vmatprep.mubr.bf16.mxu0 0
    %3847 = vmatmul.mubr.bf16.gmra.mrb[0].mxu0 %v3369
    %v3848 = vpop.f32.mrb[0].mxu0
    %v3849 = vadd.f32 0.0, %v3848
    %v3850 = vpop.f32.mrb[0].mxu0
    %v3851 = vadd.f32 0.0, %v3850
    %v3852 = vpop.f32.mrb[0].mxu0
    %v3853 = vpop.f32.mrb[0].mxu0
    %3854 = vdwg.mxu0
    %v3855 = vadd.f32 %v3287, %v3726
    %v3856 = vadd.f32 %v3288, %v3728
    %v3857 = vadd.f32 %v3289, %v3767
    %v3858 = vadd.f32 %v3290, %v3769
    %v3859 = vadd.f32 %v3291, %v3808
    %v3860 = vadd.f32 %v3292, %v3810
    %v3861 = vadd.f32 %v3293, %v3849
    %v3862 = vadd.f32 %v3294, %v3851
    %v3863 = vld [vmem:[#allocation2 + $0x6] sm:$0x1]
    %v3864 = vld [vmem:[#allocation2 + $0x16] sm:$0x1]
    %v3865 = vpack.c.bf16 %v3863, %v3863
    %v3866 = vpack.c.bf16 %v3864, %v3864
    %v3867 = vld [vmem:[#allocation9 + $0xc00] sm:$0xff]
    %v3868 = vld [vmem:[#allocation9 + $0xc08] sm:$0xff]
    %v3869 = vld [vmem:[#allocation9 + $0xc10] sm:$0xff]
    %v3870 = vld [vmem:[#allocation9 + $0xc18] sm:$0xff]
    %v3871 = vld [vmem:[#allocation9 + $0xc20] sm:$0xff]
    %v3872 = vld [vmem:[#allocation9 + $0xc28] sm:$0xff]
    %v3873 = vld [vmem:[#allocation9 + $0xc30] sm:$0xff]
    %v3874 = vld [vmem:[#allocation9 + $0xc38] sm:$0xff]
    %v3875 = vld [vmem:[#allocation9 + $0xc40] sm:$0xff]
    %v3876 = vld [vmem:[#allocation9 + $0xc48] sm:$0xff]
    %v3877 = vld [vmem:[#allocation9 + $0xc50] sm:$0xff]
    %v3878 = vld [vmem:[#allocation9 + $0xc58] sm:$0xff]
    %v3879 = vld [vmem:[#allocation9 + $0xc60] sm:$0xff]
    %v3880 = vld [vmem:[#allocation9 + $0xc68] sm:$0xff]
    %v3881 = vld [vmem:[#allocation9 + $0xc70] sm:$0xff]
    %v3882 = vld [vmem:[#allocation9 + $0xc78] sm:$0xff]
    %v3883 = vld [vmem:[#allocation9 + $0xc80] sm:$0xff]
    %v3884 = vld [vmem:[#allocation9 + $0xc88] sm:$0xff]
    %v3885 = vld [vmem:[#allocation9 + $0xc90] sm:$0xff]
    %v3886 = vld [vmem:[#allocation9 + $0xc98] sm:$0xff]
    %v3887 = vld [vmem:[#allocation9 + $0xca0] sm:$0xff]
    %v3888 = vld [vmem:[#allocation9 + $0xca8] sm:$0xff]
    %v3889 = vld [vmem:[#allocation9 + $0xcb0] sm:$0xff]
    %v3890 = vld [vmem:[#allocation9 + $0xcb8] sm:$0xff]
    %v3891 = vld [vmem:[#allocation9 + $0xcc0] sm:$0xff]
    %v3892 = vld [vmem:[#allocation9 + $0xcc8] sm:$0xff]
    %v3893 = vld [vmem:[#allocation9 + $0xcd0] sm:$0xff]
    %v3894 = vld [vmem:[#allocation9 + $0xcd8] sm:$0xff]
    %v3895 = vld [vmem:[#allocation9 + $0xce0] sm:$0xff]
    %v3896 = vld [vmem:[#allocation9 + $0xce8] sm:$0xff]
    %v3897 = vld [vmem:[#allocation9 + $0xcf0] sm:$0xff]
    %v3898 = vld [vmem:[#allocation9 + $0xcf8] sm:$0xff]
    %v3899 = vld [vmem:[#allocation9 + $0xd00] sm:$0xff]
    %v3900 = vld [vmem:[#allocation9 + $0xd08] sm:$0xff]
    %v3901 = vld [vmem:[#allocation9 + $0xd10] sm:$0xff]
    %v3902 = vld [vmem:[#allocation9 + $0xd18] sm:$0xff]
    %v3903 = vld [vmem:[#allocation9 + $0xd20] sm:$0xff]
    %v3904 = vld [vmem:[#allocation9 + $0xd28] sm:$0xff]
    %v3905 = vld [vmem:[#allocation9 + $0xd30] sm:$0xff]
    %v3906 = vld [vmem:[#allocation9 + $0xd38] sm:$0xff]
    %v3907 = vld [vmem:[#allocation9 + $0xd40] sm:$0xff]
    %v3908 = vld [vmem:[#allocation9 + $0xd48] sm:$0xff]
    %v3909 = vld [vmem:[#allocation9 + $0xd50] sm:$0xff]
    %v3910 = vld [vmem:[#allocation9 + $0xd58] sm:$0xff]
    %v3911 = vld [vmem:[#allocation9 + $0xd60] sm:$0xff]
    %v3912 = vld [vmem:[#allocation9 + $0xd68] sm:$0xff]
    %v3913 = vld [vmem:[#allocation9 + $0xd70] sm:$0xff]
    %v3914 = vld [vmem:[#allocation9 + $0xd78] sm:$0xff]
    %v3915 = vld [vmem:[#allocation9 + $0xd80] sm:$0xff]
    %v3916 = vld [vmem:[#allocation9 + $0xd88] sm:$0xff]
    %v3917 = vld [vmem:[#allocation9 + $0xd90] sm:$0xff]
    %v3918 = vld [vmem:[#allocation9 + $0xd98] sm:$0xff]
    %v3919 = vld [vmem:[#allocation9 + $0xda0] sm:$0xff]
    %v3920 = vld [vmem:[#allocation9 + $0xda8] sm:$0xff]
    %v3921 = vld [vmem:[#allocation9 + $0xdb0] sm:$0xff]
    %v3922 = vld [vmem:[#allocation9 + $0xdb8] sm:$0xff]
    %v3923 = vld [vmem:[#allocation9 + $0xdc0] sm:$0xff]
    %v3924 = vld [vmem:[#allocation9 + $0xdc8] sm:$0xff]
    %v3925 = vld [vmem:[#allocation9 + $0xdd0] sm:$0xff]
    %v3926 = vld [vmem:[#allocation9 + $0xdd8] sm:$0xff]
    %v3927 = vld [vmem:[#allocation9 + $0xde0] sm:$0xff]
    %v3928 = vld [vmem:[#allocation9 + $0xde8] sm:$0xff]
    %v3929 = vld [vmem:[#allocation9 + $0xdf0] sm:$0xff]
    %v3930 = vld [vmem:[#allocation9 + $0xdf8] sm:$0xff]
    %v3933 = vunpack.c.l.b16 %v3865
    %v3934 = vunpack.c.l.b16 %v3866
    %v3935 = vrot.slane %v3934, 7
    %v3936 = vsel %vm611, %v3935, %v3933
    %v3937 = vpack.c.b16 %v3936, %v3936
    %v4003 = vunpack.c.l.b16 %v3867
    %v4004 = vunpack.c.h.b16 %v3867
    %v4005 = vunpack.c.l.b16 %v3868
    %v4006 = vunpack.c.h.b16 %v3868
    %v4007 = vunpack.c.l.b16 %v3869
    %v4008 = vunpack.c.h.b16 %v3869
    %v4009 = vunpack.c.l.b16 %v3870
    %v4010 = vunpack.c.h.b16 %v3870
    %v4011 = vunpack.c.l.b16 %v3871
    %v4012 = vunpack.c.h.b16 %v3871
    %v4013 = vunpack.c.l.b16 %v3872
    %v4014 = vunpack.c.h.b16 %v3872
    %v4015 = vunpack.c.l.b16 %v3873
    %v4016 = vunpack.c.h.b16 %v3873
    %v4017 = vunpack.c.l.b16 %v3874
    %v4018 = vunpack.c.h.b16 %v3874
    %v4019 = vunpack.c.l.b16 %v3875
    %v4020 = vunpack.c.h.b16 %v3875
    %v4021 = vunpack.c.l.b16 %v3876
    %v4022 = vunpack.c.h.b16 %v3876
    %v4023 = vunpack.c.l.b16 %v3877
    %v4024 = vunpack.c.h.b16 %v3877
    %v4025 = vunpack.c.l.b16 %v3878
    %v4026 = vunpack.c.h.b16 %v3878
    %v4027 = vunpack.c.l.b16 %v3879
    %v4028 = vunpack.c.h.b16 %v3879
    %v4029 = vunpack.c.l.b16 %v3880
    %v4030 = vunpack.c.h.b16 %v3880
    %v4031 = vunpack.c.l.b16 %v3881
    %v4032 = vunpack.c.h.b16 %v3881
    %v4033 = vunpack.c.l.b16 %v3882
    %v4034 = vunpack.c.h.b16 %v3882
    %v4035 = vunpack.c.l.b16 %v3883
    %v4036 = vunpack.c.h.b16 %v3883
    %v4037 = vunpack.c.l.b16 %v3884
    %v4038 = vunpack.c.h.b16 %v3884
    %v4039 = vunpack.c.l.b16 %v3885
    %v4040 = vunpack.c.h.b16 %v3885
    %v4041 = vunpack.c.l.b16 %v3886
    %v4042 = vunpack.c.h.b16 %v3886
    %v4043 = vunpack.c.l.b16 %v3887
    %v4044 = vunpack.c.h.b16 %v3887
    %v4045 = vunpack.c.l.b16 %v3888
    %v4046 = vunpack.c.h.b16 %v3888
    %v4047 = vunpack.c.l.b16 %v3889
    %v4048 = vunpack.c.h.b16 %v3889
    %v4049 = vunpack.c.l.b16 %v3890
    %v4050 = vunpack.c.h.b16 %v3890
    %v4051 = vunpack.c.l.b16 %v3891
    %v4052 = vunpack.c.h.b16 %v3891
    %v4053 = vunpack.c.l.b16 %v3892
    %v4054 = vunpack.c.h.b16 %v3892
    %v4055 = vunpack.c.l.b16 %v3893
    %v4056 = vunpack.c.h.b16 %v3893
    %v4057 = vunpack.c.l.b16 %v3894
    %v4058 = vunpack.c.h.b16 %v3894
    %v4059 = vunpack.c.l.b16 %v3895
    %v4060 = vunpack.c.h.b16 %v3895
    %v4061 = vunpack.c.l.b16 %v3896
    %v4062 = vunpack.c.h.b16 %v3896
    %v4063 = vunpack.c.l.b16 %v3897
    %v4064 = vunpack.c.h.b16 %v3897
    %v4065 = vunpack.c.l.b16 %v3898
    %v4066 = vunpack.c.h.b16 %v3898
    %v4067 = vunpack.c.l.b16 %v3899
    %v4068 = vunpack.c.h.b16 %v3899
    %v4069 = vunpack.c.l.b16 %v3900
    %v4070 = vunpack.c.h.b16 %v3900
    %v4071 = vunpack.c.l.b16 %v3901
    %v4072 = vunpack.c.h.b16 %v3901
    %v4073 = vunpack.c.l.b16 %v3902
    %v4074 = vunpack.c.h.b16 %v3902
    %v4075 = vunpack.c.l.b16 %v3903
    %v4076 = vunpack.c.h.b16 %v3903
    %v4077 = vunpack.c.l.b16 %v3904
    %v4078 = vunpack.c.h.b16 %v3904
    %v4079 = vunpack.c.l.b16 %v3905
    %v4080 = vunpack.c.h.b16 %v3905
    %v4081 = vunpack.c.l.b16 %v3906
    %v4082 = vunpack.c.h.b16 %v3906
    %v4083 = vunpack.c.l.b16 %v3907
    %v4084 = vunpack.c.h.b16 %v3907
    %v4085 = vunpack.c.l.b16 %v3908
    %v4086 = vunpack.c.h.b16 %v3908
    %v4087 = vunpack.c.l.b16 %v3909
    %v4088 = vunpack.c.h.b16 %v3909
    %v4089 = vunpack.c.l.b16 %v3910
    %v4090 = vunpack.c.h.b16 %v3910
    %v4091 = vunpack.c.l.b16 %v3911
    %v4092 = vunpack.c.h.b16 %v3911
    %v4093 = vunpack.c.l.b16 %v3912
    %v4094 = vunpack.c.h.b16 %v3912
    %v4095 = vunpack.c.l.b16 %v3913
    %v4096 = vunpack.c.h.b16 %v3913
    %v4097 = vunpack.c.l.b16 %v3914
    %v4098 = vunpack.c.h.b16 %v3914
    %v4099 = vunpack.c.l.b16 %v3915
    %v4100 = vunpack.c.h.b16 %v3915
    %v4101 = vunpack.c.l.b16 %v3916
    %v4102 = vunpack.c.h.b16 %v3916
    %v4103 = vunpack.c.l.b16 %v3917
    %v4104 = vunpack.c.h.b16 %v3917
    %v4105 = vunpack.c.l.b16 %v3918
    %v4106 = vunpack.c.h.b16 %v3918
    %v4107 = vunpack.c.l.b16 %v3919
    %v4108 = vunpack.c.h.b16 %v3919
    %v4109 = vunpack.c.l.b16 %v3920
    %v4110 = vunpack.c.h.b16 %v3920
    %v4111 = vunpack.c.l.b16 %v3921
    %v4112 = vunpack.c.h.b16 %v3921
    %v4113 = vunpack.c.l.b16 %v3922
    %v4114 = vunpack.c.h.b16 %v3922
    %v4115 = vunpack.c.l.b16 %v3923
    %v4116 = vunpack.c.h.b16 %v3923
    %v4117 = vunpack.c.l.b16 %v3924
    %v4118 = vunpack.c.h.b16 %v3924
    %v4119 = vunpack.c.l.b16 %v3925
    %v4120 = vunpack.c.h.b16 %v3925
    %v4121 = vunpack.c.l.b16 %v3926
    %v4122 = vunpack.c.h.b16 %v3926
    %v4123 = vunpack.c.l.b16 %v3927
    %v4124 = vunpack.c.h.b16 %v3927
    %v4125 = vunpack.c.l.b16 %v3928
    %v4126 = vunpack.c.h.b16 %v3928
    %v4127 = vunpack.c.l.b16 %v3929
    %v4128 = vunpack.c.h.b16 %v3929
    %v4129 = vunpack.c.l.b16 %v3930
    %v4130 = vunpack.c.h.b16 %v3930
    %v4131 = vpack.c.b16 %v4011, %v4003
    %v4132 = vpack.c.b16 %v4012, %v4004
    %v4133 = vpack.c.b16 %v4013, %v4005
    %v4134 = vpack.c.b16 %v4014, %v4006
    %v4135 = vpack.c.b16 %v4015, %v4007
    %v4136 = vpack.c.b16 %v4016, %v4008
    %v4137 = vpack.c.b16 %v4017, %v4009
    %v4138 = vpack.c.b16 %v4018, %v4010
    %v4139 = vpack.c.b16 %v4027, %v4019
    %v4140 = vpack.c.b16 %v4028, %v4020
    %v4141 = vpack.c.b16 %v4029, %v4021
    %v4142 = vpack.c.b16 %v4030, %v4022
    %v4143 = vpack.c.b16 %v4031, %v4023
    %v4144 = vpack.c.b16 %v4032, %v4024
    %v4145 = vpack.c.b16 %v4033, %v4025
    %v4146 = vpack.c.b16 %v4034, %v4026
    %v4147 = vpack.c.b16 %v4043, %v4035
    %v4148 = vpack.c.b16 %v4044, %v4036
    %v4149 = vpack.c.b16 %v4045, %v4037
    %v4150 = vpack.c.b16 %v4046, %v4038
    %v4151 = vpack.c.b16 %v4047, %v4039
    %v4152 = vpack.c.b16 %v4048, %v4040
    %v4153 = vpack.c.b16 %v4049, %v4041
    %v4154 = vpack.c.b16 %v4050, %v4042
    %v4155 = vpack.c.b16 %v4059, %v4051
    %v4156 = vpack.c.b16 %v4060, %v4052
    %v4157 = vpack.c.b16 %v4061, %v4053
    %v4158 = vpack.c.b16 %v4062, %v4054
    %v4159 = vpack.c.b16 %v4063, %v4055
    %v4160 = vpack.c.b16 %v4064, %v4056
    %v4161 = vpack.c.b16 %v4065, %v4057
    %v4162 = vpack.c.b16 %v4066, %v4058
    %v4163 = vpack.c.b16 %v4075, %v4067
    %v4164 = vpack.c.b16 %v4076, %v4068
    %v4165 = vpack.c.b16 %v4077, %v4069
    %v4166 = vpack.c.b16 %v4078, %v4070
    %v4167 = vpack.c.b16 %v4079, %v4071
    %v4168 = vpack.c.b16 %v4080, %v4072
    %v4169 = vpack.c.b16 %v4081, %v4073
    %v4170 = vpack.c.b16 %v4082, %v4074
    %v4171 = vpack.c.b16 %v4091, %v4083
    %v4172 = vpack.c.b16 %v4092, %v4084
    %v4173 = vpack.c.b16 %v4093, %v4085
    %v4174 = vpack.c.b16 %v4094, %v4086
    %v4175 = vpack.c.b16 %v4095, %v4087
    %v4176 = vpack.c.b16 %v4096, %v4088
    %v4177 = vpack.c.b16 %v4097, %v4089
    %v4178 = vpack.c.b16 %v4098, %v4090
    %v4179 = vpack.c.b16 %v4107, %v4099
    %v4180 = vpack.c.b16 %v4108, %v4100
    %v4181 = vpack.c.b16 %v4109, %v4101
    %v4182 = vpack.c.b16 %v4110, %v4102
    %v4183 = vpack.c.b16 %v4111, %v4103
    %v4184 = vpack.c.b16 %v4112, %v4104
    %v4185 = vpack.c.b16 %v4113, %v4105
    %v4186 = vpack.c.b16 %v4114, %v4106
    %v4187 = vpack.c.b16 %v4123, %v4115
    %v4188 = vpack.c.b16 %v4124, %v4116
    %v4189 = vpack.c.b16 %v4125, %v4117
    %v4190 = vpack.c.b16 %v4126, %v4118
    %v4191 = vpack.c.b16 %v4127, %v4119
    %v4192 = vpack.c.b16 %v4128, %v4120
    %v4193 = vpack.c.b16 %v4129, %v4121
    %v4194 = vpack.c.b16 %v4130, %v4122
    %4259 = vmatprep.subr.bf16.mxu0 %v4132
    %4260 = vmatpush1.bf16.msra.mxu0 %v4131
    %4261 = vmatprep.subr.bf16.mxu0 %v4140
    %4262 = vmatpush1.bf16.msra.mxu0 %v4139
    %4263 = vmatprep.subr.bf16.mxu0 %v4148
    %4264 = vmatpush1.bf16.msra.mxu0 %v4147
    %4265 = vmatprep.subr.bf16.mxu0 %v4156
    %4266 = vmatpush1.bf16.msra.mxu0 %v4155
    %4267 = vmatprep.subr.bf16.mxu0 %v4164
    %4268 = vmatpush1.bf16.msra.mxu0 %v4163
    %4269 = vmatprep.subr.bf16.mxu0 %v4172
    %4270 = vmatpush1.bf16.msra.mxu0 %v4171
    %4271 = vmatprep.subr.bf16.mxu0 %v4180
    %4272 = vmatpush1.bf16.msra.mxu0 %v4179
    %4273 = vmatprep.subr.bf16.mxu0 %v4188
    %4274 = vmatpush1.bf16.msra.mxu0 %v4187
    %4275 = vmatprep.subr.bf16.mxu0 0
    %4276 = vmatpush1.bf16.msra.mxu0 0
    %4277 = vmatprep.subr.bf16.mxu0 0
    %4278 = vmatpush1.bf16.msra.mxu0 0
    %4279 = vmatprep.subr.bf16.mxu0 0
    %4280 = vmatpush1.bf16.msra.mxu0 0
    %4281 = vmatprep.subr.bf16.mxu0 0
    %4282 = vmatpush1.bf16.msra.mxu0 0
    %4283 = vmatprep.subr.bf16.mxu0 0
    %4284 = vmatpush1.bf16.msra.mxu0 0
    %4285 = vmatprep.subr.bf16.mxu0 0
    %4286 = vmatpush1.bf16.msra.mxu0 0
    %4287 = vmatprep.subr.bf16.mxu0 0
    %4288 = vmatpush1.bf16.msra.mxu0 0
    %4289 = vmatprep.subr.bf16.mxu0 0
    %4290 = vmatpush1.bf16.msra.mxu0 0
    %4291 = vmatprep.mubr.bf16.mxu0 0
    %4292 = vmatmul.mubr.bf16.gmra.mrb[0].mxu0 %v3937
    %v4293 = vpop.f32.mrb[0].mxu0
    %v4294 = vadd.f32 0.0, %v4293
    %v4295 = vpop.f32.mrb[0].mxu0
    %v4296 = vadd.f32 0.0, %v4295
    %v4297 = vpop.f32.mrb[0].mxu0
    %v4298 = vpop.f32.mrb[0].mxu0
    %4299 = vdwg.mxu0
    %4300 = vmatprep.subr.bf16.mxu0 %v4134
    %4301 = vmatpush1.bf16.msra.mxu0 %v4133
    %4302 = vmatprep.subr.bf16.mxu0 %v4142
    %4303 = vmatpush1.bf16.msra.mxu0 %v4141
    %4304 = vmatprep.subr.bf16.mxu0 %v4150
    %4305 = vmatpush1.bf16.msra.mxu0 %v4149
    %4306 = vmatprep.subr.bf16.mxu0 %v4158
    %4307 = vmatpush1.bf16.msra.mxu0 %v4157
    %4308 = vmatprep.subr.bf16.mxu0 %v4166
    %4309 = vmatpush1.bf16.msra.mxu0 %v4165
    %4310 = vmatprep.subr.bf16.mxu0 %v4174
    %4311 = vmatpush1.bf16.msra.mxu0 %v4173
    %4312 = vmatprep.subr.bf16.mxu0 %v4182
    %4313 = vmatpush1.bf16.msra.mxu0 %v4181
    %4314 = vmatprep.subr.bf16.mxu0 %v4190
    %4315 = vmatpush1.bf16.msra.mxu0 %v4189
    %4316 = vmatprep.subr.bf16.mxu0 0
    %4317 = vmatpush1.bf16.msra.mxu0 0
    %4318 = vmatprep.subr.bf16.mxu0 0
    %4319 = vmatpush1.bf16.msra.mxu0 0
    %4320 = vmatprep.subr.bf16.mxu0 0
    %4321 = vmatpush1.bf16.msra.mxu0 0
    %4322 = vmatprep.subr.bf16.mxu0 0
    %4323 = vmatpush1.bf16.msra.mxu0 0
    %4324 = vmatprep.subr.bf16.mxu0 0
    %4325 = vmatpush1.bf16.msra.mxu0 0
    %4326 = vmatprep.subr.bf16.mxu0 0
    %4327 = vmatpush1.bf16.msra.mxu0 0
    %4328 = vmatprep.subr.bf16.mxu0 0
    %4329 = vmatpush1.bf16.msra.mxu0 0
    %4330 = vmatprep.subr.bf16.mxu0 0
    %4331 = vmatpush1.bf16.msra.mxu0 0
    %4332 = vmatprep.mubr.bf16.mxu0 0
    %4333 = vmatmul.mubr.bf16.gmra.mrb[0].mxu0 %v3937
    %v4334 = vpop.f32.mrb[0].mxu0
    %v4335 = vadd.f32 0.0, %v4334
    %v4336 = vpop.f32.mrb[0].mxu0
    %v4337 = vadd.f32 0.0, %v4336
    %v4338 = vpop.f32.mrb[0].mxu0
    %v4339 = vpop.f32.mrb[0].mxu0
    %4340 = vdwg.mxu0
    %4341 = vmatprep.subr.bf16.mxu0 %v4136
    %4342 = vmatpush1.bf16.msra.mxu0 %v4135
    %4343 = vmatprep.subr.bf16.mxu0 %v4144
    %4344 = vmatpush1.bf16.msra.mxu0 %v4143
    %4345 = vmatprep.subr.bf16.mxu0 %v4152
    %4346 = vmatpush1.bf16.msra.mxu0 %v4151
    %4347 = vmatprep.subr.bf16.mxu0 %v4160
    %4348 = vmatpush1.bf16.msra.mxu0 %v4159
    %4349 = vmatprep.subr.bf16.mxu0 %v4168
    %4350 = vmatpush1.bf16.msra.mxu0 %v4167
    %4351 = vmatprep.subr.bf16.mxu0 %v4176
    %4352 = vmatpush1.bf16.msra.mxu0 %v4175
    %4353 = vmatprep.subr.bf16.mxu0 %v4184
    %4354 = vmatpush1.bf16.msra.mxu0 %v4183
    %4355 = vmatprep.subr.bf16.mxu0 %v4192
    %4356 = vmatpush1.bf16.msra.mxu0 %v4191
    %4357 = vmatprep.subr.bf16.mxu0 0
    %4358 = vmatpush1.bf16.msra.mxu0 0
    %4359 = vmatprep.subr.bf16.mxu0 0
    %4360 = vmatpush1.bf16.msra.mxu0 0
    %4361 = vmatprep.subr.bf16.mxu0 0
    %4362 = vmatpush1.bf16.msra.mxu0 0
    %4363 = vmatprep.subr.bf16.mxu0 0
    %4364 = vmatpush1.bf16.msra.mxu0 0
    %4365 = vmatprep.subr.bf16.mxu0 0
    %4366 = vmatpush1.bf16.msra.mxu0 0
    %4367 = vmatprep.subr.bf16.mxu0 0
    %4368 = vmatpush1.bf16.msra.mxu0 0
    %4369 = vmatprep.subr.bf16.mxu0 0
    %4370 = vmatpush1.bf16.msra.mxu0 0
    %4371 = vmatprep.subr.bf16.mxu0 0
    %4372 = vmatpush1.bf16.msra.mxu0 0
    %4373 = vmatprep.mubr.bf16.mxu0 0
    %4374 = vmatmul.mubr.bf16.gmra.mrb[0].mxu0 %v3937
    %v4375 = vpop.f32.mrb[0].mxu0
    %v4376 = vadd.f32 0.0, %v4375
    %v4377 = vpop.f32.mrb[0].mxu0
    %v4378 = vadd.f32 0.0, %v4377
    %v4379 = vpop.f32.mrb[0].mxu0
    %v4380 = vpop.f32.mrb[0].mxu0
    %4381 = vdwg.mxu0
    %4382 = vmatprep.subr.bf16.mxu0 %v4138
    %4383 = vmatpush1.bf16.msra.mxu0 %v4137
    %4384 = vmatprep.subr.bf16.mxu0 %v4146
    %4385 = vmatpush1.bf16.msra.mxu0 %v4145
    %4386 = vmatprep.subr.bf16.mxu0 %v4154
    %4387 = vmatpush1.bf16.msra.mxu0 %v4153
    %4388 = vmatprep.subr.bf16.mxu0 %v4162
    %4389 = vmatpush1.bf16.msra.mxu0 %v4161
    %4390 = vmatprep.subr.bf16.mxu0 %v4170
    %4391 = vmatpush1.bf16.msra.mxu0 %v4169
    %4392 = vmatprep.subr.bf16.mxu0 %v4178
    %4393 = vmatpush1.bf16.msra.mxu0 %v4177
    %4394 = vmatprep.subr.bf16.mxu0 %v4186
    %4395 = vmatpush1.bf16.msra.mxu0 %v4185
    %4396 = vmatprep.subr.bf16.mxu0 %v4194
    %4397 = vmatpush1.bf16.msra.mxu0 %v4193
    %4398 = vmatprep.subr.bf16.mxu0 0
    %4399 = vmatpush1.bf16.msra.mxu0 0
    %4400 = vmatprep.subr.bf16.mxu0 0
    %4401 = vmatpush1.bf16.msra.mxu0 0
    %4402 = vmatprep.subr.bf16.mxu0 0
    %4403 = vmatpush1.bf16.msra.mxu0 0
    %4404 = vmatprep.subr.bf16.mxu0 0
    %4405 = vmatpush1.bf16.msra.mxu0 0
    %4406 = vmatprep.subr.bf16.mxu0 0
    %4407 = vmatpush1.bf16.msra.mxu0 0
    %4408 = vmatprep.subr.bf16.mxu0 0
    %4409 = vmatpush1.bf16.msra.mxu0 0
    %4410 = vmatprep.subr.bf16.mxu0 0
    %4411 = vmatpush1.bf16.msra.mxu0 0
    %4412 = vmatprep.subr.bf16.mxu0 0
    %4413 = vmatpush1.bf16.msra.mxu0 0
    %4414 = vmatprep.mubr.bf16.mxu0 0
    %4415 = vmatmul.mubr.bf16.gmra.mrb[0].mxu0 %v3937
    %v4416 = vpop.f32.mrb[0].mxu0
    %v4417 = vadd.f32 0.0, %v4416
    %v4418 = vpop.f32.mrb[0].mxu0
    %v4419 = vadd.f32 0.0, %v4418
    %v4420 = vpop.f32.mrb[0].mxu0
    %v4421 = vpop.f32.mrb[0].mxu0
    %4422 = vdwg.mxu0
    %v4423 = vadd.f32 %v3855, %v4294
    %v4424 = vadd.f32 %v3856, %v4296
    %v4425 = vadd.f32 %v3857, %v4335
    %v4426 = vadd.f32 %v3858, %v4337
    %v4427 = vadd.f32 %v3859, %v4376
    %v4428 = vadd.f32 %v3860, %v4378
    %v4429 = vadd.f32 %v3861, %v4417
    %v4430 = vadd.f32 %v3862, %v4419
    %v4431 = vld [vmem:[#allocation2 + $0x7] sm:$0x1]
    %v4432 = vld [vmem:[#allocation2 + $0x17] sm:$0x1]
    %v4433 = vpack.c.bf16 %v4431, %v4431
    %v4434 = vpack.c.bf16 %v4432, %v4432
    %v4435 = vld [vmem:[#allocation9 + $0xe00] sm:$0xff]
    %v4436 = vld [vmem:[#allocation9 + $0xe08] sm:$0xff]
    %v4437 = vld [vmem:[#allocation9 + $0xe10] sm:$0xff]
    %v4438 = vld [vmem:[#allocation9 + $0xe18] sm:$0xff]
    %v4439 = vld [vmem:[#allocation9 + $0xe20] sm:$0xff]
    %v4440 = vld [vmem:[#allocation9 + $0xe28] sm:$0xff]
    %v4441 = vld [vmem:[#allocation9 + $0xe30] sm:$0xff]
    %v4442 = vld [vmem:[#allocation9 + $0xe38] sm:$0xff]
    %v4443 = vld [vmem:[#allocation9 + $0xe40] sm:$0xff]
    %v4444 = vld [vmem:[#allocation9 + $0xe48] sm:$0xff]
    %v4445 = vld [vmem:[#allocation9 + $0xe50] sm:$0xff]
    %v4446 = vld [vmem:[#allocation9 + $0xe58] sm:$0xff]
    %v4447 = vld [vmem:[#allocation9 + $0xe60] sm:$0xff]
    %v4448 = vld [vmem:[#allocation9 + $0xe68] sm:$0xff]
    %v4449 = vld [vmem:[#allocation9 + $0xe70] sm:$0xff]
    %v4450 = vld [vmem:[#allocation9 + $0xe78] sm:$0xff]
    %v4451 = vld [vmem:[#allocation9 + $0xe80] sm:$0xff]
    %v4452 = vld [vmem:[#allocation9 + $0xe88] sm:$0xff]
    %v4453 = vld [vmem:[#allocation9 + $0xe90] sm:$0xff]
    %v4454 = vld [vmem:[#allocation9 + $0xe98] sm:$0xff]
    %v4455 = vld [vmem:[#allocation9 + $0xea0] sm:$0xff]
    %v4456 = vld [vmem:[#allocation9 + $0xea8] sm:$0xff]
    %v4457 = vld [vmem:[#allocation9 + $0xeb0] sm:$0xff]
    %v4458 = vld [vmem:[#allocation9 + $0xeb8] sm:$0xff]
    %v4459 = vld [vmem:[#allocation9 + $0xec0] sm:$0xff]
    %v4460 = vld [vmem:[#allocation9 + $0xec8] sm:$0xff]
    %v4461 = vld [vmem:[#allocation9 + $0xed0] sm:$0xff]
    %v4462 = vld [vmem:[#allocation9 + $0xed8] sm:$0xff]
    %v4463 = vld [vmem:[#allocation9 + $0xee0] sm:$0xff]
    %v4464 = vld [vmem:[#allocation9 + $0xee8] sm:$0xff]
    %v4465 = vld [vmem:[#allocation9 + $0xef0] sm:$0xff]
    %v4466 = vld [vmem:[#allocation9 + $0xef8] sm:$0xff]
    %v4467 = vld [vmem:[#allocation9 + $0xf00] sm:$0xff]
    %v4468 = vld [vmem:[#allocation9 + $0xf08] sm:$0xff]
    %v4469 = vld [vmem:[#allocation9 + $0xf10] sm:$0xff]
    %v4470 = vld [vmem:[#allocation9 + $0xf18] sm:$0xff]
    %v4471 = vld [vmem:[#allocation9 + $0xf20] sm:$0xff]
    %v4472 = vld [vmem:[#allocation9 + $0xf28] sm:$0xff]
    %v4473 = vld [vmem:[#allocation9 + $0xf30] sm:$0xff]
    %v4474 = vld [vmem:[#allocation9 + $0xf38] sm:$0xff]
    %v4475 = vld [vmem:[#allocation9 + $0xf40] sm:$0xff]
    %v4476 = vld [vmem:[#allocation9 + $0xf48] sm:$0xff]
    %v4477 = vld [vmem:[#allocation9 + $0xf50] sm:$0xff]
    %v4478 = vld [vmem:[#allocation9 + $0xf58] sm:$0xff]
    %v4479 = vld [vmem:[#allocation9 + $0xf60] sm:$0xff]
    %v4480 = vld [vmem:[#allocation9 + $0xf68] sm:$0xff]
    %v4481 = vld [vmem:[#allocation9 + $0xf70] sm:$0xff]
    %v4482 = vld [vmem:[#allocation9 + $0xf78] sm:$0xff]
    %v4483 = vld [vmem:[#allocation9 + $0xf80] sm:$0xff]
    %v4484 = vld [vmem:[#allocation9 + $0xf88] sm:$0xff]
    %v4485 = vld [vmem:[#allocation9 + $0xf90] sm:$0xff]
    %v4486 = vld [vmem:[#allocation9 + $0xf98] sm:$0xff]
    %v4487 = vld [vmem:[#allocation9 + $0xfa0] sm:$0xff]
    %v4488 = vld [vmem:[#allocation9 + $0xfa8] sm:$0xff]
    %v4489 = vld [vmem:[#allocation9 + $0xfb0] sm:$0xff]
    %v4490 = vld [vmem:[#allocation9 + $0xfb8] sm:$0xff]
    %v4491 = vld [vmem:[#allocation9 + $0xfc0] sm:$0xff]
    %v4492 = vld [vmem:[#allocation9 + $0xfc8] sm:$0xff]
    %v4493 = vld [vmem:[#allocation9 + $0xfd0] sm:$0xff]
    %v4494 = vld [vmem:[#allocation9 + $0xfd8] sm:$0xff]
    %v4495 = vld [vmem:[#allocation9 + $0xfe0] sm:$0xff]
    %v4496 = vld [vmem:[#allocation9 + $0xfe8] sm:$0xff]
    %v4497 = vld [vmem:[#allocation9 + $0xff0] sm:$0xff]
    %v4498 = vld [vmem:[#allocation9 + $0xff8] sm:$0xff]
    %v4501 = vunpack.c.l.b16 %v4433
    %v4502 = vunpack.c.l.b16 %v4434
    %v4503 = vrot.slane %v4502, 7
    %v4504 = vsel %vm611, %v4503, %v4501
    %v4505 = vpack.c.b16 %v4504, %v4504
    %v4571 = vunpack.c.l.b16 %v4435
    %v4572 = vunpack.c.h.b16 %v4435
    %v4573 = vunpack.c.l.b16 %v4436
    %v4574 = vunpack.c.h.b16 %v4436
    %v4575 = vunpack.c.l.b16 %v4437
    %v4576 = vunpack.c.h.b16 %v4437
    %v4577 = vunpack.c.l.b16 %v4438
    %v4578 = vunpack.c.h.b16 %v4438
    %v4579 = vunpack.c.l.b16 %v4439
    %v4580 = vunpack.c.h.b16 %v4439
    %v4581 = vunpack.c.l.b16 %v4440
    %v4582 = vunpack.c.h.b16 %v4440
    %v4583 = vunpack.c.l.b16 %v4441
    %v4584 = vunpack.c.h.b16 %v4441
    %v4585 = vunpack.c.l.b16 %v4442
    %v4586 = vunpack.c.h.b16 %v4442
    %v4587 = vunpack.c.l.b16 %v4443
    %v4588 = vunpack.c.h.b16 %v4443
    %v4589 = vunpack.c.l.b16 %v4444
    %v4590 = vunpack.c.h.b16 %v4444
    %v4591 = vunpack.c.l.b16 %v4445
    %v4592 = vunpack.c.h.b16 %v4445
    %v4593 = vunpack.c.l.b16 %v4446
    %v4594 = vunpack.c.h.b16 %v4446
    %v4595 = vunpack.c.l.b16 %v4447
    %v4596 = vunpack.c.h.b16 %v4447
    %v4597 = vunpack.c.l.b16 %v4448
    %v4598 = vunpack.c.h.b16 %v4448
    %v4599 = vunpack.c.l.b16 %v4449
    %v4600 = vunpack.c.h.b16 %v4449
    %v4601 = vunpack.c.l.b16 %v4450
    %v4602 = vunpack.c.h.b16 %v4450
    %v4603 = vunpack.c.l.b16 %v4451
    %v4604 = vunpack.c.h.b16 %v4451
    %v4605 = vunpack.c.l.b16 %v4452
    %v4606 = vunpack.c.h.b16 %v4452
    %v4607 = vunpack.c.l.b16 %v4453
    %v4608 = vunpack.c.h.b16 %v4453
    %v4609 = vunpack.c.l.b16 %v4454
    %v4610 = vunpack.c.h.b16 %v4454
    %v4611 = vunpack.c.l.b16 %v4455
    %v4612 = vunpack.c.h.b16 %v4455
    %v4613 = vunpack.c.l.b16 %v4456
    %v4614 = vunpack.c.h.b16 %v4456
    %v4615 = vunpack.c.l.b16 %v4457
    %v4616 = vunpack.c.h.b16 %v4457
    %v4617 = vunpack.c.l.b16 %v4458
    %v4618 = vunpack.c.h.b16 %v4458
    %v4619 = vunpack.c.l.b16 %v4459
    %v4620 = vunpack.c.h.b16 %v4459
    %v4621 = vunpack.c.l.b16 %v4460
    %v4622 = vunpack.c.h.b16 %v4460
    %v4623 = vunpack.c.l.b16 %v4461
    %v4624 = vunpack.c.h.b16 %v4461
    %v4625 = vunpack.c.l.b16 %v4462
    %v4626 = vunpack.c.h.b16 %v4462
    %v4627 = vunpack.c.l.b16 %v4463
    %v4628 = vunpack.c.h.b16 %v4463
    %v4629 = vunpack.c.l.b16 %v4464
    %v4630 = vunpack.c.h.b16 %v4464
    %v4631 = vunpack.c.l.b16 %v4465
    %v4632 = vunpack.c.h.b16 %v4465
    %v4633 = vunpack.c.l.b16 %v4466
    %v4634 = vunpack.c.h.b16 %v4466
    %v4635 = vunpack.c.l.b16 %v4467
    %v4636 = vunpack.c.h.b16 %v4467
    %v4637 = vunpack.c.l.b16 %v4468
    %v4638 = vunpack.c.h.b16 %v4468
    %v4639 = vunpack.c.l.b16 %v4469
    %v4640 = vunpack.c.h.b16 %v4469
    %v4641 = vunpack.c.l.b16 %v4470
    %v4642 = vunpack.c.h.b16 %v4470
    %v4643 = vunpack.c.l.b16 %v4471
    %v4644 = vunpack.c.h.b16 %v4471
    %v4645 = vunpack.c.l.b16 %v4472
    %v4646 = vunpack.c.h.b16 %v4472
    %v4647 = vunpack.c.l.b16 %v4473
    %v4648 = vunpack.c.h.b16 %v4473
    %v4649 = vunpack.c.l.b16 %v4474
    %v4650 = vunpack.c.h.b16 %v4474
    %v4651 = vunpack.c.l.b16 %v4475
    %v4652 = vunpack.c.h.b16 %v4475
    %v4653 = vunpack.c.l.b16 %v4476
    %v4654 = vunpack.c.h.b16 %v4476
    %v4655 = vunpack.c.l.b16 %v4477
    %v4656 = vunpack.c.h.b16 %v4477
    %v4657 = vunpack.c.l.b16 %v4478
    %v4658 = vunpack.c.h.b16 %v4478
    %v4659 = vunpack.c.l.b16 %v4479
    %v4660 = vunpack.c.h.b16 %v4479
    %v4661 = vunpack.c.l.b16 %v4480
    %v4662 = vunpack.c.h.b16 %v4480
    %v4663 = vunpack.c.l.b16 %v4481
    %v4664 = vunpack.c.h.b16 %v4481
    %v4665 = vunpack.c.l.b16 %v4482
    %v4666 = vunpack.c.h.b16 %v4482
    %v4667 = vunpack.c.l.b16 %v4483
    %v4668 = vunpack.c.h.b16 %v4483
    %v4669 = vunpack.c.l.b16 %v4484
    %v4670 = vunpack.c.h.b16 %v4484
    %v4671 = vunpack.c.l.b16 %v4485
    %v4672 = vunpack.c.h.b16 %v4485
    %v4673 = vunpack.c.l.b16 %v4486
    %v4674 = vunpack.c.h.b16 %v4486
    %v4675 = vunpack.c.l.b16 %v4487
    %v4676 = vunpack.c.h.b16 %v4487
    %v4677 = vunpack.c.l.b16 %v4488
    %v4678 = vunpack.c.h.b16 %v4488
    %v4679 = vunpack.c.l.b16 %v4489
    %v4680 = vunpack.c.h.b16 %v4489
    %v4681 = vunpack.c.l.b16 %v4490
    %v4682 = vunpack.c.h.b16 %v4490
    %v4683 = vunpack.c.l.b16 %v4491
    %v4684 = vunpack.c.h.b16 %v4491
    %v4685 = vunpack.c.l.b16 %v4492
    %v4686 = vunpack.c.h.b16 %v4492
    %v4687 = vunpack.c.l.b16 %v4493
    %v4688 = vunpack.c.h.b16 %v4493
    %v4689 = vunpack.c.l.b16 %v4494
    %v4690 = vunpack.c.h.b16 %v4494
    %v4691 = vunpack.c.l.b16 %v4495
    %v4692 = vunpack.c.h.b16 %v4495
    %v4693 = vunpack.c.l.b16 %v4496
    %v4694 = vunpack.c.h.b16 %v4496
    %v4695 = vunpack.c.l.b16 %v4497
    %v4696 = vunpack.c.h.b16 %v4497
    %v4697 = vunpack.c.l.b16 %v4498
    %v4698 = vunpack.c.h.b16 %v4498
    %v4699 = vpack.c.b16 %v4579, %v4571
    %v4700 = vpack.c.b16 %v4580, %v4572
    %v4701 = vpack.c.b16 %v4581, %v4573
    %v4702 = vpack.c.b16 %v4582, %v4574
    %v4703 = vpack.c.b16 %v4583, %v4575
    %v4704 = vpack.c.b16 %v4584, %v4576
    %v4705 = vpack.c.b16 %v4585, %v4577
    %v4706 = vpack.c.b16 %v4586, %v4578
    %v4707 = vpack.c.b16 %v4595, %v4587
    %v4708 = vpack.c.b16 %v4596, %v4588
    %v4709 = vpack.c.b16 %v4597, %v4589
    %v4710 = vpack.c.b16 %v4598, %v4590
    %v4711 = vpack.c.b16 %v4599, %v4591
    %v4712 = vpack.c.b16 %v4600, %v4592
    %v4713 = vpack.c.b16 %v4601, %v4593
    %v4714 = vpack.c.b16 %v4602, %v4594
    %v4715 = vpack.c.b16 %v4611, %v4603
    %v4716 = vpack.c.b16 %v4612, %v4604
    %v4717 = vpack.c.b16 %v4613, %v4605
    %v4718 = vpack.c.b16 %v4614, %v4606
    %v4719 = vpack.c.b16 %v4615, %v4607
    %v4720 = vpack.c.b16 %v4616, %v4608
    %v4721 = vpack.c.b16 %v4617, %v4609
    %v4722 = vpack.c.b16 %v4618, %v4610
    %v4723 = vpack.c.b16 %v4627, %v4619
    %v4724 = vpack.c.b16 %v4628, %v4620
    %v4725 = vpack.c.b16 %v4629, %v4621
    %v4726 = vpack.c.b16 %v4630, %v4622
    %v4727 = vpack.c.b16 %v4631, %v4623
    %v4728 = vpack.c.b16 %v4632, %v4624
    %v4729 = vpack.c.b16 %v4633, %v4625
    %v4730 = vpack.c.b16 %v4634, %v4626
    %v4731 = vpack.c.b16 %v4643, %v4635
    %v4732 = vpack.c.b16 %v4644, %v4636
    %v4733 = vpack.c.b16 %v4645, %v4637
    %v4734 = vpack.c.b16 %v4646, %v4638
    %v4735 = vpack.c.b16 %v4647, %v4639
    %v4736 = vpack.c.b16 %v4648, %v4640
    %v4737 = vpack.c.b16 %v4649, %v4641
    %v4738 = vpack.c.b16 %v4650, %v4642
    %v4739 = vpack.c.b16 %v4659, %v4651
    %v4740 = vpack.c.b16 %v4660, %v4652
    %v4741 = vpack.c.b16 %v4661, %v4653
    %v4742 = vpack.c.b16 %v4662, %v4654
    %v4743 = vpack.c.b16 %v4663, %v4655
    %v4744 = vpack.c.b16 %v4664, %v4656
    %v4745 = vpack.c.b16 %v4665, %v4657
    %v4746 = vpack.c.b16 %v4666, %v4658
    %v4747 = vpack.c.b16 %v4675, %v4667
    %v4748 = vpack.c.b16 %v4676, %v4668
    %v4749 = vpack.c.b16 %v4677, %v4669
    %v4750 = vpack.c.b16 %v4678, %v4670
    %v4751 = vpack.c.b16 %v4679, %v4671
    %v4752 = vpack.c.b16 %v4680, %v4672
    %v4753 = vpack.c.b16 %v4681, %v4673
    %v4754 = vpack.c.b16 %v4682, %v4674
    %v4755 = vpack.c.b16 %v4691, %v4683
    %v4756 = vpack.c.b16 %v4692, %v4684
    %v4757 = vpack.c.b16 %v4693, %v4685
    %v4758 = vpack.c.b16 %v4694, %v4686
    %v4759 = vpack.c.b16 %v4695, %v4687
    %v4760 = vpack.c.b16 %v4696, %v4688
    %v4761 = vpack.c.b16 %v4697, %v4689
    %v4762 = vpack.c.b16 %v4698, %v4690
    %4827 = vmatprep.subr.bf16.mxu0 %v4700
    %4828 = vmatpush1.bf16.msra.mxu0 %v4699
    %4829 = vmatprep.subr.bf16.mxu0 %v4708
    %4830 = vmatpush1.bf16.msra.mxu0 %v4707
    %4831 = vmatprep.subr.bf16.mxu0 %v4716
    %4832 = vmatpush1.bf16.msra.mxu0 %v4715
    %4833 = vmatprep.subr.bf16.mxu0 %v4724
    %4834 = vmatpush1.bf16.msra.mxu0 %v4723
    %4835 = vmatprep.subr.bf16.mxu0 %v4732
    %4836 = vmatpush1.bf16.msra.mxu0 %v4731
    %4837 = vmatprep.subr.bf16.mxu0 %v4740
    %4838 = vmatpush1.bf16.msra.mxu0 %v4739
    %4839 = vmatprep.subr.bf16.mxu0 %v4748
    %4840 = vmatpush1.bf16.msra.mxu0 %v4747
    %4841 = vmatprep.subr.bf16.mxu0 %v4756
    %4842 = vmatpush1.bf16.msra.mxu0 %v4755
    %4843 = vmatprep.subr.bf16.mxu0 0
    %4844 = vmatpush1.bf16.msra.mxu0 0
    %4845 = vmatprep.subr.bf16.mxu0 0
    %4846 = vmatpush1.bf16.msra.mxu0 0
    %4847 = vmatprep.subr.bf16.mxu0 0
    %4848 = vmatpush1.bf16.msra.mxu0 0
    %4849 = vmatprep.subr.bf16.mxu0 0
    %4850 = vmatpush1.bf16.msra.mxu0 0
    %4851 = vmatprep.subr.bf16.mxu0 0
    %4852 = vmatpush1.bf16.msra.mxu0 0
    %4853 = vmatprep.subr.bf16.mxu0 0
    %4854 = vmatpush1.bf16.msra.mxu0 0
    %4855 = vmatprep.subr.bf16.mxu0 0
    %4856 = vmatpush1.bf16.msra.mxu0 0
    %4857 = vmatprep.subr.bf16.mxu0 0
    %4858 = vmatpush1.bf16.msra.mxu0 0
    %4859 = vmatprep.mubr.bf16.mxu0 0
    %4860 = vmatmul.mubr.bf16.gmra.mrb[0].mxu0 %v4505
    %v4861 = vpop.f32.mrb[0].mxu0
    %v4862 = vadd.f32 0.0, %v4861
    %v4863 = vpop.f32.mrb[0].mxu0
    %v4864 = vadd.f32 0.0, %v4863
    %v4865 = vpop.f32.mrb[0].mxu0
    %v4866 = vpop.f32.mrb[0].mxu0
    %4867 = vdwg.mxu0
    %4868 = vmatprep.subr.bf16.mxu0 %v4702
    %4869 = vmatpush1.bf16.msra.mxu0 %v4701
    %4870 = vmatprep.subr.bf16.mxu0 %v4710
    %4871 = vmatpush1.bf16.msra.mxu0 %v4709
    %4872 = vmatprep.subr.bf16.mxu0 %v4718
    %4873 = vmatpush1.bf16.msra.mxu0 %v4717
    %4874 = vmatprep.subr.bf16.mxu0 %v4726
    %4875 = vmatpush1.bf16.msra.mxu0 %v4725
    %4876 = vmatprep.subr.bf16.mxu0 %v4734
    %4877 = vmatpush1.bf16.msra.mxu0 %v4733
    %4878 = vmatprep.subr.bf16.mxu0 %v4742
    %4879 = vmatpush1.bf16.msra.mxu0 %v4741
    %4880 = vmatprep.subr.bf16.mxu0 %v4750
    %4881 = vmatpush1.bf16.msra.mxu0 %v4749
    %4882 = vmatprep.subr.bf16.mxu0 %v4758
    %4883 = vmatpush1.bf16.msra.mxu0 %v4757
    %4884 = vmatprep.subr.bf16.mxu0 0
    %4885 = vmatpush1.bf16.msra.mxu0 0
    %4886 = vmatprep.subr.bf16.mxu0 0
    %4887 = vmatpush1.bf16.msra.mxu0 0
    %4888 = vmatprep.subr.bf16.mxu0 0
    %4889 = vmatpush1.bf16.msra.mxu0 0
    %4890 = vmatprep.subr.bf16.mxu0 0
    %4891 = vmatpush1.bf16.msra.mxu0 0
    %4892 = vmatprep.subr.bf16.mxu0 0
    %4893 = vmatpush1.bf16.msra.mxu0 0
    %4894 = vmatprep.subr.bf16.mxu0 0
    %4895 = vmatpush1.bf16.msra.mxu0 0
    %4896 = vmatprep.subr.bf16.mxu0 0
    %4897 = vmatpush1.bf16.msra.mxu0 0
    %4898 = vmatprep.subr.bf16.mxu0 0
    %4899 = vmatpush1.bf16.msra.mxu0 0
    %4900 = vmatprep.mubr.bf16.mxu0 0
    %4901 = vmatmul.mubr.bf16.gmra.mrb[0].mxu0 %v4505
    %v4902 = vpop.f32.mrb[0].mxu0
    %v4903 = vadd.f32 0.0, %v4902
    %v4904 = vpop.f32.mrb[0].mxu0
    %v4905 = vadd.f32 0.0, %v4904
    %v4906 = vpop.f32.mrb[0].mxu0
    %v4907 = vpop.f32.mrb[0].mxu0
    %4908 = vdwg.mxu0
    %4909 = vmatprep.subr.bf16.mxu0 %v4704
    %4910 = vmatpush1.bf16.msra.mxu0 %v4703
    %4911 = vmatprep.subr.bf16.mxu0 %v4712
    %4912 = vmatpush1.bf16.msra.mxu0 %v4711
    %4913 = vmatprep.subr.bf16.mxu0 %v4720
    %4914 = vmatpush1.bf16.msra.mxu0 %v4719
    %4915 = vmatprep.subr.bf16.mxu0 %v4728
    %4916 = vmatpush1.bf16.msra.mxu0 %v4727
    %4917 = vmatprep.subr.bf16.mxu0 %v4736
    %4918 = vmatpush1.bf16.msra.mxu0 %v4735
    %4919 = vmatprep.subr.bf16.mxu0 %v4744
    %4920 = vmatpush1.bf16.msra.mxu0 %v4743
    %4921 = vmatprep.subr.bf16.mxu0 %v4752
    %4922 = vmatpush1.bf16.msra.mxu0 %v4751
    %4923 = vmatprep.subr.bf16.mxu0 %v4760
    %4924 = vmatpush1.bf16.msra.mxu0 %v4759
    %4925 = vmatprep.subr.bf16.mxu0 0
    %4926 = vmatpush1.bf16.msra.mxu0 0
    %4927 = vmatprep.subr.bf16.mxu0 0
    %4928 = vmatpush1.bf16.msra.mxu0 0
    %4929 = vmatprep.subr.bf16.mxu0 0
    %4930 = vmatpush1.bf16.msra.mxu0 0
    %4931 = vmatprep.subr.bf16.mxu0 0
    %4932 = vmatpush1.bf16.msra.mxu0 0
    %4933 = vmatprep.subr.bf16.mxu0 0
    %4934 = vmatpush1.bf16.msra.mxu0 0
    %4935 = vmatprep.subr.bf16.mxu0 0
    %4936 = vmatpush1.bf16.msra.mxu0 0
    %4937 = vmatprep.subr.bf16.mxu0 0
    %4938 = vmatpush1.bf16.msra.mxu0 0
    %4939 = vmatprep.subr.bf16.mxu0 0
    %4940 = vmatpush1.bf16.msra.mxu0 0
    %4941 = vmatprep.mubr.bf16.mxu0 0
    %4942 = vmatmul.mubr.bf16.gmra.mrb[0].mxu0 %v4505
    %v4943 = vpop.f32.mrb[0].mxu0
    %v4944 = vadd.f32 0.0, %v4943
    %v4945 = vpop.f32.mrb[0].mxu0
    %v4946 = vadd.f32 0.0, %v4945
    %v4947 = vpop.f32.mrb[0].mxu0
    %v4948 = vpop.f32.mrb[0].mxu0
    %4949 = vdwg.mxu0
    %4950 = vmatprep.subr.bf16.mxu0 %v4706
    %4951 = vmatpush1.bf16.msra.mxu0 %v4705
    %4952 = vmatprep.subr.bf16.mxu0 %v4714
    %4953 = vmatpush1.bf16.msra.mxu0 %v4713
    %4954 = vmatprep.subr.bf16.mxu0 %v4722
    %4955 = vmatpush1.bf16.msra.mxu0 %v4721
    %4956 = vmatprep.subr.bf16.mxu0 %v4730
    %4957 = vmatpush1.bf16.msra.mxu0 %v4729
    %4958 = vmatprep.subr.bf16.mxu0 %v4738
    %4959 = vmatpush1.bf16.msra.mxu0 %v4737
    %4960 = vmatprep.subr.bf16.mxu0 %v4746
    %4961 = vmatpush1.bf16.msra.mxu0 %v4745
    %4962 = vmatprep.subr.bf16.mxu0 %v4754
    %4963 = vmatpush1.bf16.msra.mxu0 %v4753
    %4964 = vmatprep.subr.bf16.mxu0 %v4762
    %4965 = vmatpush1.bf16.msra.mxu0 %v4761
    %4966 = vmatprep.subr.bf16.mxu0 0
    %4967 = vmatpush1.bf16.msra.mxu0 0
    %4968 = vmatprep.subr.bf16.mxu0 0
    %4969 = vmatpush1.bf16.msra.mxu0 0
    %4970 = vmatprep.subr.bf16.mxu0 0
    %4971 = vmatpush1.bf16.msra.mxu0 0
    %4972 = vmatprep.subr.bf16.mxu0 0
    %4973 = vmatpush1.bf16.msra.mxu0 0
    %4974 = vmatprep.subr.bf16.mxu0 0
    %4975 = vmatpush1.bf16.msra.mxu0 0
    %4976 = vmatprep.subr.bf16.mxu0 0
    %4977 = vmatpush1.bf16.msra.mxu0 0
    %4978 = vmatprep.subr.bf16.mxu0 0
    %4979 = vmatpush1.bf16.msra.mxu0 0
    %4980 = vmatprep.subr.bf16.mxu0 0
    %4981 = vmatpush1.bf16.msra.mxu0 0
    %4982 = vmatprep.mubr.bf16.mxu0 0
    %4983 = vmatmul.mubr.bf16.gmra.mrb[0].mxu0 %v4505
    %v4984 = vpop.f32.mrb[0].mxu0
    %v4985 = vadd.f32 0.0, %v4984
    %v4986 = vpop.f32.mrb[0].mxu0
    %v4987 = vadd.f32 0.0, %v4986
    %v4988 = vpop.f32.mrb[0].mxu0
    %v4989 = vpop.f32.mrb[0].mxu0
    %4990 = vdwg.mxu0
    %v4991 = vadd.f32 %v4423, %v4862
    %v4992 = vadd.f32 %v4424, %v4864
    %v4993 = vadd.f32 %v4425, %v4903
    %v4994 = vadd.f32 %v4426, %v4905
    %v4995 = vadd.f32 %v4427, %v4944
    %v4996 = vadd.f32 %v4428, %v4946
    %v4997 = vadd.f32 %v4429, %v4985
    %v4998 = vadd.f32 %v4430, %v4987
    %v4999 = vld [vmem:[#allocation2 + $0x8] sm:$0x1]
    %v5000 = vld [vmem:[#allocation2 + $0x18] sm:$0x1]
    %v5001 = vpack.c.bf16 %v4999, %v4999
    %v5002 = vpack.c.bf16 %v5000, %v5000
    %v5003 = vld [vmem:[#allocation9 + $0x1000] sm:$0xff]
    %v5004 = vld [vmem:[#allocation9 + $0x1008] sm:$0xff]
    %v5005 = vld [vmem:[#allocation9 + $0x1010] sm:$0xff]
    %v5006 = vld [vmem:[#allocation9 + $0x1018] sm:$0xff]
    %v5007 = vld [vmem:[#allocation9 + $0x1020] sm:$0xff]
    %v5008 = vld [vmem:[#allocation9 + $0x1028] sm:$0xff]
    %v5009 = vld [vmem:[#allocation9 + $0x1030] sm:$0xff]
    %v5010 = vld [vmem:[#allocation9 + $0x1038] sm:$0xff]
    %v5011 = vld [vmem:[#allocation9 + $0x1040] sm:$0xff]
    %v5012 = vld [vmem:[#allocation9 + $0x1048] sm:$0xff]
    %v5013 = vld [vmem:[#allocation9 + $0x1050] sm:$0xff]
    %v5014 = vld [vmem:[#allocation9 + $0x1058] sm:$0xff]
    %v5015 = vld [vmem:[#allocation9 + $0x1060] sm:$0xff]
    %v5016 = vld [vmem:[#allocation9 + $0x1068] sm:$0xff]
    %v5017 = vld [vmem:[#allocation9 + $0x1070] sm:$0xff]
    %v5018 = vld [vmem:[#allocation9 + $0x1078] sm:$0xff]
    %v5019 = vld [vmem:[#allocation9 + $0x1080] sm:$0xff]
    %v5020 = vld [vmem:[#allocation9 + $0x1088] sm:$0xff]
    %v5021 = vld [vmem:[#allocation9 + $0x1090] sm:$0xff]
    %v5022 = vld [vmem:[#allocation9 + $0x1098] sm:$0xff]
    %v5023 = vld [vmem:[#allocation9 + $0x10a0] sm:$0xff]
    %v5024 = vld [vmem:[#allocation9 + $0x10a8] sm:$0xff]
    %v5025 = vld [vmem:[#allocation9 + $0x10b0] sm:$0xff]
    %v5026 = vld [vmem:[#allocation9 + $0x10b8] sm:$0xff]
    %v5027 = vld [vmem:[#allocation9 + $0x10c0] sm:$0xff]
    %v5028 = vld [vmem:[#allocation9 + $0x10c8] sm:$0xff]
    %v5029 = vld [vmem:[#allocation9 + $0x10d0] sm:$0xff]
    %v5030 = vld [vmem:[#allocation9 + $0x10d8] sm:$0xff]
    %v5031 = vld [vmem:[#allocation9 + $0x10e0] sm:$0xff]
    %v5032 = vld [vmem:[#allocation9 + $0x10e8] sm:$0xff]
    %v5033 = vld [vmem:[#allocation9 + $0x10f0] sm:$0xff]
    %v5034 = vld [vmem:[#allocation9 + $0x10f8] sm:$0xff]
    %v5035 = vld [vmem:[#allocation9 + $0x1100] sm:$0xff]
    %v5036 = vld [vmem:[#allocation9 + $0x1108] sm:$0xff]
    %v5037 = vld [vmem:[#allocation9 + $0x1110] sm:$0xff]
    %v5038 = vld [vmem:[#allocation9 + $0x1118] sm:$0xff]
    %v5039 = vld [vmem:[#allocation9 + $0x1120] sm:$0xff]
    %v5040 = vld [vmem:[#allocation9 + $0x1128] sm:$0xff]
    %v5041 = vld [vmem:[#allocation9 + $0x1130] sm:$0xff]
    %v5042 = vld [vmem:[#allocation9 + $0x1138] sm:$0xff]
    %v5043 = vld [vmem:[#allocation9 + $0x1140] sm:$0xff]
    %v5044 = vld [vmem:[#allocation9 + $0x1148] sm:$0xff]
    %v5045 = vld [vmem:[#allocation9 + $0x1150] sm:$0xff]
    %v5046 = vld [vmem:[#allocation9 + $0x1158] sm:$0xff]
    %v5047 = vld [vmem:[#allocation9 + $0x1160] sm:$0xff]
    %v5048 = vld [vmem:[#allocation9 + $0x1168] sm:$0xff]
    %v5049 = vld [vmem:[#allocation9 + $0x1170] sm:$0xff]
    %v5050 = vld [vmem:[#allocation9 + $0x1178] sm:$0xff]
    %v5051 = vld [vmem:[#allocation9 + $0x1180] sm:$0xff]
    %v5052 = vld [vmem:[#allocation9 + $0x1188] sm:$0xff]
    %v5053 = vld [vmem:[#allocation9 + $0x1190] sm:$0xff]
    %v5054 = vld [vmem:[#allocation9 + $0x1198] sm:$0xff]
    %v5055 = vld [vmem:[#allocation9 + $0x11a0] sm:$0xff]
    %v5056 = vld [vmem:[#allocation9 + $0x11a8] sm:$0xff]
    %v5057 = vld [vmem:[#allocation9 + $0x11b0] sm:$0xff]
    %v5058 = vld [vmem:[#allocation9 + $0x11b8] sm:$0xff]
    %v5059 = vld [vmem:[#allocation9 + $0x11c0] sm:$0xff]
    %v5060 = vld [vmem:[#allocation9 + $0x11c8] sm:$0xff]
    %v5061 = vld [vmem:[#allocation9 + $0x11d0] sm:$0xff]
    %v5062 = vld [vmem:[#allocation9 + $0x11d8] sm:$0xff]
    %v5063 = vld [vmem:[#allocation9 + $0x11e0] sm:$0xff]
    %v5064 = vld [vmem:[#allocation9 + $0x11e8] sm:$0xff]
    %v5065 = vld [vmem:[#allocation9 + $0x11f0] sm:$0xff]
    %v5066 = vld [vmem:[#allocation9 + $0x11f8] sm:$0xff]
    %v5069 = vunpack.c.l.b16 %v5001
    %v5070 = vunpack.c.l.b16 %v5002
    %v5071 = vrot.slane %v5070, 7
    %v5072 = vsel %vm611, %v5071, %v5069
    %v5073 = vpack.c.b16 %v5072, %v5072
    %v5139 = vunpack.c.l.b16 %v5003
    %v5140 = vunpack.c.h.b16 %v5003
    %v5141 = vunpack.c.l.b16 %v5004
    %v5142 = vunpack.c.h.b16 %v5004
    %v5143 = vunpack.c.l.b16 %v5005
    %v5144 = vunpack.c.h.b16 %v5005
    %v5145 = vunpack.c.l.b16 %v5006
    %v5146 = vunpack.c.h.b16 %v5006
    %v5147 = vunpack.c.l.b16 %v5007
    %v5148 = vunpack.c.h.b16 %v5007
    %v5149 = vunpack.c.l.b16 %v5008
    %v5150 = vunpack.c.h.b16 %v5008
    %v5151 = vunpack.c.l.b16 %v5009
    %v5152 = vunpack.c.h.b16 %v5009
    %v5153 = vunpack.c.l.b16 %v5010
    %v5154 = vunpack.c.h.b16 %v5010
    %v5155 = vunpack.c.l.b16 %v5011
    %v5156 = vunpack.c.h.b16 %v5011
    %v5157 = vunpack.c.l.b16 %v5012
    %v5158 = vunpack.c.h.b16 %v5012
    %v5159 = vunpack.c.l.b16 %v5013
    %v5160 = vunpack.c.h.b16 %v5013
    %v5161 = vunpack.c.l.b16 %v5014
    %v5162 = vunpack.c.h.b16 %v5014
    %v5163 = vunpack.c.l.b16 %v5015
    %v5164 = vunpack.c.h.b16 %v5015
    %v5165 = vunpack.c.l.b16 %v5016
    %v5166 = vunpack.c.h.b16 %v5016
    %v5167 = vunpack.c.l.b16 %v5017
    %v5168 = vunpack.c.h.b16 %v5017
    %v5169 = vunpack.c.l.b16 %v5018
    %v5170 = vunpack.c.h.b16 %v5018
    %v5171 = vunpack.c.l.b16 %v5019
    %v5172 = vunpack.c.h.b16 %v5019
    %v5173 = vunpack.c.l.b16 %v5020
    %v5174 = vunpack.c.h.b16 %v5020
    %v5175 = vunpack.c.l.b16 %v5021
    %v5176 = vunpack.c.h.b16 %v5021
    %v5177 = vunpack.c.l.b16 %v5022
    %v5178 = vunpack.c.h.b16 %v5022
    %v5179 = vunpack.c.l.b16 %v5023
    %v5180 = vunpack.c.h.b16 %v5023
    %v5181 = vunpack.c.l.b16 %v5024
    %v5182 = vunpack.c.h.b16 %v5024
    %v5183 = vunpack.c.l.b16 %v5025
    %v5184 = vunpack.c.h.b16 %v5025
    %v5185 = vunpack.c.l.b16 %v5026
    %v5186 = vunpack.c.h.b16 %v5026
    %v5187 = vunpack.c.l.b16 %v5027
    %v5188 = vunpack.c.h.b16 %v5027
    %v5189 = vunpack.c.l.b16 %v5028
    %v5190 = vunpack.c.h.b16 %v5028
    %v5191 = vunpack.c.l.b16 %v5029
    %v5192 = vunpack.c.h.b16 %v5029
    %v5193 = vunpack.c.l.b16 %v5030
    %v5194 = vunpack.c.h.b16 %v5030
    %v5195 = vunpack.c.l.b16 %v5031
    %v5196 = vunpack.c.h.b16 %v5031
    %v5197 = vunpack.c.l.b16 %v5032
    %v5198 = vunpack.c.h.b16 %v5032
    %v5199 = vunpack.c.l.b16 %v5033
    %v5200 = vunpack.c.h.b16 %v5033
    %v5201 = vunpack.c.l.b16 %v5034
    %v5202 = vunpack.c.h.b16 %v5034
    %v5203 = vunpack.c.l.b16 %v5035
    %v5204 = vunpack.c.h.b16 %v5035
    %v5205 = vunpack.c.l.b16 %v5036
    %v5206 = vunpack.c.h.b16 %v5036
    %v5207 = vunpack.c.l.b16 %v5037
    %v5208 = vunpack.c.h.b16 %v5037
    %v5209 = vunpack.c.l.b16 %v5038
    %v5210 = vunpack.c.h.b16 %v5038
    %v5211 = vunpack.c.l.b16 %v5039
    %v5212 = vunpack.c.h.b16 %v5039
    %v5213 = vunpack.c.l.b16 %v5040
    %v5214 = vunpack.c.h.b16 %v5040
    %v5215 = vunpack.c.l.b16 %v5041
    %v5216 = vunpack.c.h.b16 %v5041
    %v5217 = vunpack.c.l.b16 %v5042
    %v5218 = vunpack.c.h.b16 %v5042
    %v5219 = vunpack.c.l.b16 %v5043
    %v5220 = vunpack.c.h.b16 %v5043
    %v5221 = vunpack.c.l.b16 %v5044
    %v5222 = vunpack.c.h.b16 %v5044
    %v5223 = vunpack.c.l.b16 %v5045
    %v5224 = vunpack.c.h.b16 %v5045
    %v5225 = vunpack.c.l.b16 %v5046
    %v5226 = vunpack.c.h.b16 %v5046
    %v5227 = vunpack.c.l.b16 %v5047
    %v5228 = vunpack.c.h.b16 %v5047
    %v5229 = vunpack.c.l.b16 %v5048
    %v5230 = vunpack.c.h.b16 %v5048
    %v5231 = vunpack.c.l.b16 %v5049
    %v5232 = vunpack.c.h.b16 %v5049
    %v5233 = vunpack.c.l.b16 %v5050
    %v5234 = vunpack.c.h.b16 %v5050
    %v5235 = vunpack.c.l.b16 %v5051
    %v5236 = vunpack.c.h.b16 %v5051
    %v5237 = vunpack.c.l.b16 %v5052
    %v5238 = vunpack.c.h.b16 %v5052
    %v5239 = vunpack.c.l.b16 %v5053
    %v5240 = vunpack.c.h.b16 %v5053
    %v5241 = vunpack.c.l.b16 %v5054
    %v5242 = vunpack.c.h.b16 %v5054
    %v5243 = vunpack.c.l.b16 %v5055
    %v5244 = vunpack.c.h.b16 %v5055
    %v5245 = vunpack.c.l.b16 %v5056
    %v5246 = vunpack.c.h.b16 %v5056
    %v5247 = vunpack.c.l.b16 %v5057
    %v5248 = vunpack.c.h.b16 %v5057
    %v5249 = vunpack.c.l.b16 %v5058
    %v5250 = vunpack.c.h.b16 %v5058
    %v5251 = vunpack.c.l.b16 %v5059
    %v5252 = vunpack.c.h.b16 %v5059
    %v5253 = vunpack.c.l.b16 %v5060
    %v5254 = vunpack.c.h.b16 %v5060
    %v5255 = vunpack.c.l.b16 %v5061
    %v5256 = vunpack.c.h.b16 %v5061
    %v5257 = vunpack.c.l.b16 %v5062
    %v5258 = vunpack.c.h.b16 %v5062
    %v5259 = vunpack.c.l.b16 %v5063
    %v5260 = vunpack.c.h.b16 %v5063
    %v5261 = vunpack.c.l.b16 %v5064
    %v5262 = vunpack.c.h.b16 %v5064
    %v5263 = vunpack.c.l.b16 %v5065
    %v5264 = vunpack.c.h.b16 %v5065
    %v5265 = vunpack.c.l.b16 %v5066
    %v5266 = vunpack.c.h.b16 %v5066
    %v5267 = vpack.c.b16 %v5147, %v5139
    %v5268 = vpack.c.b16 %v5148, %v5140
    %v5269 = vpack.c.b16 %v5149, %v5141
    %v5270 = vpack.c.b16 %v5150, %v5142
    %v5271 = vpack.c.b16 %v5151, %v5143
    %v5272 = vpack.c.b16 %v5152, %v5144
    %v5273 = vpack.c.b16 %v5153, %v5145
    %v5274 = vpack.c.b16 %v5154, %v5146
    %v5275 = vpack.c.b16 %v5163, %v5155
    %v5276 = vpack.c.b16 %v5164, %v5156
    %v5277 = vpack.c.b16 %v5165, %v5157
    %v5278 = vpack.c.b16 %v5166, %v5158
    %v5279 = vpack.c.b16 %v5167, %v5159
    %v5280 = vpack.c.b16 %v5168, %v5160
    %v5281 = vpack.c.b16 %v5169, %v5161
    %v5282 = vpack.c.b16 %v5170, %v5162
    %v5283 = vpack.c.b16 %v5179, %v5171
    %v5284 = vpack.c.b16 %v5180, %v5172
    %v5285 = vpack.c.b16 %v5181, %v5173
    %v5286 = vpack.c.b16 %v5182, %v5174
    %v5287 = vpack.c.b16 %v5183, %v5175
    %v5288 = vpack.c.b16 %v5184, %v5176
    %v5289 = vpack.c.b16 %v5185, %v5177
    %v5290 = vpack.c.b16 %v5186, %v5178
    %v5291 = vpack.c.b16 %v5195, %v5187
    %v5292 = vpack.c.b16 %v5196, %v5188
    %v5293 = vpack.c.b16 %v5197, %v5189
    %v5294 = vpack.c.b16 %v5198, %v5190
    %v5295 = vpack.c.b16 %v5199, %v5191
    %v5296 = vpack.c.b16 %v5200, %v5192
    %v5297 = vpack.c.b16 %v5201, %v5193
    %v5298 = vpack.c.b16 %v5202, %v5194
    %v5299 = vpack.c.b16 %v5211, %v5203
    %v5300 = vpack.c.b16 %v5212, %v5204
    %v5301 = vpack.c.b16 %v5213, %v5205
    %v5302 = vpack.c.b16 %v5214, %v5206
    %v5303 = vpack.c.b16 %v5215, %v5207
    %v5304 = vpack.c.b16 %v5216, %v5208
    %v5305 = vpack.c.b16 %v5217, %v5209
    %v5306 = vpack.c.b16 %v5218, %v5210
    %v5307 = vpack.c.b16 %v5227, %v5219
    %v5308 = vpack.c.b16 %v5228, %v5220
    %v5309 = vpack.c.b16 %v5229, %v5221
    %v5310 = vpack.c.b16 %v5230, %v5222
    %v5311 = vpack.c.b16 %v5231, %v5223
    %v5312 = vpack.c.b16 %v5232, %v5224
    %v5313 = vpack.c.b16 %v5233, %v5225
    %v5314 = vpack.c.b16 %v5234, %v5226
    %v5315 = vpack.c.b16 %v5243, %v5235
    %v5316 = vpack.c.b16 %v5244, %v5236
    %v5317 = vpack.c.b16 %v5245, %v5237
    %v5318 = vpack.c.b16 %v5246, %v5238
    %v5319 = vpack.c.b16 %v5247, %v5239
    %v5320 = vpack.c.b16 %v5248, %v5240
    %v5321 = vpack.c.b16 %v5249, %v5241
    %v5322 = vpack.c.b16 %v5250, %v5242
    %v5323 = vpack.c.b16 %v5259, %v5251
    %v5324 = vpack.c.b16 %v5260, %v5252
    %v5325 = vpack.c.b16 %v5261, %v5253
    %v5326 = vpack.c.b16 %v5262, %v5254
    %v5327 = vpack.c.b16 %v5263, %v5255
    %v5328 = vpack.c.b16 %v5264, %v5256
    %v5329 = vpack.c.b16 %v5265, %v5257
    %v5330 = vpack.c.b16 %v5266, %v5258
    %5395 = vmatprep.subr.bf16.mxu0 %v5268
    %5396 = vmatpush1.bf16.msra.mxu0 %v5267
    %5397 = vmatprep.subr.bf16.mxu0 %v5276
    %5398 = vmatpush1.bf16.msra.mxu0 %v5275
    %5399 = vmatprep.subr.bf16.mxu0 %v5284
    %5400 = vmatpush1.bf16.msra.mxu0 %v5283
    %5401 = vmatprep.subr.bf16.mxu0 %v5292
    %5402 = vmatpush1.bf16.msra.mxu0 %v5291
    %5403 = vmatprep.subr.bf16.mxu0 %v5300
    %5404 = vmatpush1.bf16.msra.mxu0 %v5299
    %5405 = vmatprep.subr.bf16.mxu0 %v5308
    %5406 = vmatpush1.bf16.msra.mxu0 %v5307
    %5407 = vmatprep.subr.bf16.mxu0 %v5316
    %5408 = vmatpush1.bf16.msra.mxu0 %v5315
    %5409 = vmatprep.subr.bf16.mxu0 %v5324
    %5410 = vmatpush1.bf16.msra.mxu0 %v5323
    %5411 = vmatprep.subr.bf16.mxu0 0
    %5412 = vmatpush1.bf16.msra.mxu0 0
    %5413 = vmatprep.subr.bf16.mxu0 0
    %5414 = vmatpush1.bf16.msra.mxu0 0
    %5415 = vmatprep.subr.bf16.mxu0 0
    %5416 = vmatpush1.bf16.msra.mxu0 0
    %5417 = vmatprep.subr.bf16.mxu0 0
    %5418 = vmatpush1.bf16.msra.mxu0 0
    %5419 = vmatprep.subr.bf16.mxu0 0
    %5420 = vmatpush1.bf16.msra.mxu0 0
    %5421 = vmatprep.subr.bf16.mxu0 0
    %5422 = vmatpush1.bf16.msra.mxu0 0
    %5423 = vmatprep.subr.bf16.mxu0 0
    %5424 = vmatpush1.bf16.msra.mxu0 0
    %5425 = vmatprep.subr.bf16.mxu0 0
    %5426 = vmatpush1.bf16.msra.mxu0 0
    %5427 = vmatprep.mubr.bf16.mxu0 0
    %5428 = vmatmul.mubr.bf16.gmra.mrb[0].mxu0 %v5073
    %v5429 = vpop.f32.mrb[0].mxu0
    %v5430 = vadd.f32 0.0, %v5429
    %v5431 = vpop.f32.mrb[0].mxu0
    %v5432 = vadd.f32 0.0, %v5431
    %v5433 = vpop.f32.mrb[0].mxu0
    %v5434 = vpop.f32.mrb[0].mxu0
    %5435 = vdwg.mxu0
    %5436 = vmatprep.subr.bf16.mxu0 %v5270
    %5437 = vmatpush1.bf16.msra.mxu0 %v5269
    %5438 = vmatprep.subr.bf16.mxu0 %v5278
    %5439 = vmatpush1.bf16.msra.mxu0 %v5277
    %5440 = vmatprep.subr.bf16.mxu0 %v5286
    %5441 = vmatpush1.bf16.msra.mxu0 %v5285
    %5442 = vmatprep.subr.bf16.mxu0 %v5294
    %5443 = vmatpush1.bf16.msra.mxu0 %v5293
    %5444 = vmatprep.subr.bf16.mxu0 %v5302
    %5445 = vmatpush1.bf16.msra.mxu0 %v5301
    %5446 = vmatprep.subr.bf16.mxu0 %v5310
    %5447 = vmatpush1.bf16.msra.mxu0 %v5309
    %5448 = vmatprep.subr.bf16.mxu0 %v5318
    %5449 = vmatpush1.bf16.msra.mxu0 %v5317
    %5450 = vmatprep.subr.bf16.mxu0 %v5326
    %5451 = vmatpush1.bf16.msra.mxu0 %v5325
    %5452 = vmatprep.subr.bf16.mxu0 0
    %5453 = vmatpush1.bf16.msra.mxu0 0
    %5454 = vmatprep.subr.bf16.mxu0 0
    %5455 = vmatpush1.bf16.msra.mxu0 0
    %5456 = vmatprep.subr.bf16.mxu0 0
    %5457 = vmatpush1.bf16.msra.mxu0 0
    %5458 = vmatprep.subr.bf16.mxu0 0
    %5459 = vmatpush1.bf16.msra.mxu0 0
    %5460 = vmatprep.subr.bf16.mxu0 0
    %5461 = vmatpush1.bf16.msra.mxu0 0
    %5462 = vmatprep.subr.bf16.mxu0 0
    %5463 = vmatpush1.bf16.msra.mxu0 0
    %5464 = vmatprep.subr.bf16.mxu0 0
    %5465 = vmatpush1.bf16.msra.mxu0 0
    %5466 = vmatprep.subr.bf16.mxu0 0
    %5467 = vmatpush1.bf16.msra.mxu0 0
    %5468 = vmatprep.mubr.bf16.mxu0 0
    %5469 = vmatmul.mubr.bf16.gmra.mrb[0].mxu0 %v5073
    %v5470 = vpop.f32.mrb[0].mxu0
    %v5471 = vadd.f32 0.0, %v5470
    %v5472 = vpop.f32.mrb[0].mxu0
    %v5473 = vadd.f32 0.0, %v5472
    %v5474 = vpop.f32.mrb[0].mxu0
    %v5475 = vpop.f32.mrb[0].mxu0
    %5476 = vdwg.mxu0
    %5477 = vmatprep.subr.bf16.mxu0 %v5272
    %5478 = vmatpush1.bf16.msra.mxu0 %v5271
    %5479 = vmatprep.subr.bf16.mxu0 %v5280
    %5480 = vmatpush1.bf16.msra.mxu0 %v5279
    %5481 = vmatprep.subr.bf16.mxu0 %v5288
    %5482 = vmatpush1.bf16.msra.mxu0 %v5287
    %5483 = vmatprep.subr.bf16.mxu0 %v5296
    %5484 = vmatpush1.bf16.msra.mxu0 %v5295
    %5485 = vmatprep.subr.bf16.mxu0 %v5304
    %5486 = vmatpush1.bf16.msra.mxu0 %v5303
    %5487 = vmatprep.subr.bf16.mxu0 %v5312
    %5488 = vmatpush1.bf16.msra.mxu0 %v5311
    %5489 = vmatprep.subr.bf16.mxu0 %v5320
    %5490 = vmatpush1.bf16.msra.mxu0 %v5319
    %5491 = vmatprep.subr.bf16.mxu0 %v5328
    %5492 = vmatpush1.bf16.msra.mxu0 %v5327
    %5493 = vmatprep.subr.bf16.mxu0 0
    %5494 = vmatpush1.bf16.msra.mxu0 0
    %5495 = vmatprep.subr.bf16.mxu0 0
    %5496 = vmatpush1.bf16.msra.mxu0 0
    %5497 = vmatprep.subr.bf16.mxu0 0
    %5498 = vmatpush1.bf16.msra.mxu0 0
    %5499 = vmatprep.subr.bf16.mxu0 0
    %5500 = vmatpush1.bf16.msra.mxu0 0
    %5501 = vmatprep.subr.bf16.mxu0 0
    %5502 = vmatpush1.bf16.msra.mxu0 0
    %5503 = vmatprep.subr.bf16.mxu0 0
    %5504 = vmatpush1.bf16.msra.mxu0 0
    %5505 = vmatprep.subr.bf16.mxu0 0
    %5506 = vmatpush1.bf16.msra.mxu0 0
    %5507 = vmatprep.subr.bf16.mxu0 0
    %5508 = vmatpush1.bf16.msra.mxu0 0
    %5509 = vmatprep.mubr.bf16.mxu0 0
    %5510 = vmatmul.mubr.bf16.gmra.mrb[0].mxu0 %v5073
    %v5511 = vpop.f32.mrb[0].mxu0
    %v5512 = vadd.f32 0.0, %v5511
    %v5513 = vpop.f32.mrb[0].mxu0
    %v5514 = vadd.f32 0.0, %v5513
    %v5515 = vpop.f32.mrb[0].mxu0
    %v5516 = vpop.f32.mrb[0].mxu0
    %5517 = vdwg.mxu0
    %5518 = vmatprep.subr.bf16.mxu0 %v5274
    %5519 = vmatpush1.bf16.msra.mxu0 %v5273
    %5520 = vmatprep.subr.bf16.mxu0 %v5282
    %5521 = vmatpush1.bf16.msra.mxu0 %v5281
    %5522 = vmatprep.subr.bf16.mxu0 %v5290
    %5523 = vmatpush1.bf16.msra.mxu0 %v5289
    %5524 = vmatprep.subr.bf16.mxu0 %v5298
    %5525 = vmatpush1.bf16.msra.mxu0 %v5297
    %5526 = vmatprep.subr.bf16.mxu0 %v5306
    %5527 = vmatpush1.bf16.msra.mxu0 %v5305
    %5528 = vmatprep.subr.bf16.mxu0 %v5314
    %5529 = vmatpush1.bf16.msra.mxu0 %v5313
    %5530 = vmatprep.subr.bf16.mxu0 %v5322
    %5531 = vmatpush1.bf16.msra.mxu0 %v5321
    %5532 = vmatprep.subr.bf16.mxu0 %v5330
    %5533 = vmatpush1.bf16.msra.mxu0 %v5329
    %5534 = vmatprep.subr.bf16.mxu0 0
    %5535 = vmatpush1.bf16.msra.mxu0 0
    %5536 = vmatprep.subr.bf16.mxu0 0
    %5537 = vmatpush1.bf16.msra.mxu0 0
    %5538 = vmatprep.subr.bf16.mxu0 0
    %5539 = vmatpush1.bf16.msra.mxu0 0
    %5540 = vmatprep.subr.bf16.mxu0 0
    %5541 = vmatpush1.bf16.msra.mxu0 0
    %5542 = vmatprep.subr.bf16.mxu0 0
    %5543 = vmatpush1.bf16.msra.mxu0 0
    %5544 = vmatprep.subr.bf16.mxu0 0
    %5545 = vmatpush1.bf16.msra.mxu0 0
    %5546 = vmatprep.subr.bf16.mxu0 0
    %5547 = vmatpush1.bf16.msra.mxu0 0
    %5548 = vmatprep.subr.bf16.mxu0 0
    %5549 = vmatpush1.bf16.msra.mxu0 0
    %5550 = vmatprep.mubr.bf16.mxu0 0
    %5551 = vmatmul.mubr.bf16.gmra.mrb[0].mxu0 %v5073
    %v5552 = vpop.f32.mrb[0].mxu0
    %v5553 = vadd.f32 0.0, %v5552
    %v5554 = vpop.f32.mrb[0].mxu0
    %v5555 = vadd.f32 0.0, %v5554
    %v5556 = vpop.f32.mrb[0].mxu0
    %v5557 = vpop.f32.mrb[0].mxu0
    %5558 = vdwg.mxu0
    %v5559 = vadd.f32 %v4991, %v5430
    %v5560 = vadd.f32 %v4992, %v5432
    %v5561 = vadd.f32 %v4993, %v5471
    %v5562 = vadd.f32 %v4994, %v5473
    %v5563 = vadd.f32 %v4995, %v5512
    %v5564 = vadd.f32 %v4996, %v5514
    %v5565 = vadd.f32 %v4997, %v5553
    %v5566 = vadd.f32 %v4998, %v5555
    %v5567 = vld [vmem:[#allocation2 + $0x9] sm:$0x1]
    %v5568 = vld [vmem:[#allocation2 + $0x19] sm:$0x1]
    %v5569 = vpack.c.bf16 %v5567, %v5567
    %v5570 = vpack.c.bf16 %v5568, %v5568
    %v5571 = vld [vmem:[#allocation9 + $0x1200] sm:$0xff]
    %v5572 = vld [vmem:[#allocation9 + $0x1208] sm:$0xff]
    %v5573 = vld [vmem:[#allocation9 + $0x1210] sm:$0xff]
    %v5574 = vld [vmem:[#allocation9 + $0x1218] sm:$0xff]
    %v5575 = vld [vmem:[#allocation9 + $0x1220] sm:$0xff]
    %v5576 = vld [vmem:[#allocation9 + $0x1228] sm:$0xff]
    %v5577 = vld [vmem:[#allocation9 + $0x1230] sm:$0xff]
    %v5578 = vld [vmem:[#allocation9 + $0x1238] sm:$0xff]
    %v5579 = vld [vmem:[#allocation9 + $0x1240] sm:$0xff]
    %v5580 = vld [vmem:[#allocation9 + $0x1248] sm:$0xff]
    %v5581 = vld [vmem:[#allocation9 + $0x1250] sm:$0xff]
    %v5582 = vld [vmem:[#allocation9 + $0x1258] sm:$0xff]
    %v5583 = vld [vmem:[#allocation9 + $0x1260] sm:$0xff]
    %v5584 = vld [vmem:[#allocation9 + $0x1268] sm:$0xff]
    %v5585 = vld [vmem:[#allocation9 + $0x1270] sm:$0xff]
    %v5586 = vld [vmem:[#allocation9 + $0x1278] sm:$0xff]
    %v5587 = vld [vmem:[#allocation9 + $0x1280] sm:$0xff]
    %v5588 = vld [vmem:[#allocation9 + $0x1288] sm:$0xff]
    %v5589 = vld [vmem:[#allocation9 + $0x1290] sm:$0xff]
    %v5590 = vld [vmem:[#allocation9 + $0x1298] sm:$0xff]
    %v5591 = vld [vmem:[#allocation9 + $0x12a0] sm:$0xff]
    %v5592 = vld [vmem:[#allocation9 + $0x12a8] sm:$0xff]
    %v5593 = vld [vmem:[#allocation9 + $0x12b0] sm:$0xff]
    %v5594 = vld [vmem:[#allocation9 + $0x12b8] sm:$0xff]
    %v5595 = vld [vmem:[#allocation9 + $0x12c0] sm:$0xff]
    %v5596 = vld [vmem:[#allocation9 + $0x12c8] sm:$0xff]
    %v5597 = vld [vmem:[#allocation9 + $0x12d0] sm:$0xff]
    %v5598 = vld [vmem:[#allocation9 + $0x12d8] sm:$0xff]
    %v5599 = vld [vmem:[#allocation9 + $0x12e0] sm:$0xff]
    %v5600 = vld [vmem:[#allocation9 + $0x12e8] sm:$0xff]
    %v5601 = vld [vmem:[#allocation9 + $0x12f0] sm:$0xff]
    %v5602 = vld [vmem:[#allocation9 + $0x12f8] sm:$0xff]
    %v5603 = vld [vmem:[#allocation9 + $0x1300] sm:$0xff]
    %v5604 = vld [vmem:[#allocation9 + $0x1308] sm:$0xff]
    %v5605 = vld [vmem:[#allocation9 + $0x1310] sm:$0xff]
    %v5606 = vld [vmem:[#allocation9 + $0x1318] sm:$0xff]
    %v5607 = vld [vmem:[#allocation9 + $0x1320] sm:$0xff]
    %v5608 = vld [vmem:[#allocation9 + $0x1328] sm:$0xff]
    %v5609 = vld [vmem:[#allocation9 + $0x1330] sm:$0xff]
    %v5610 = vld [vmem:[#allocation9 + $0x1338] sm:$0xff]
    %v5611 = vld [vmem:[#allocation9 + $0x1340] sm:$0xff]
    %v5612 = vld [vmem:[#allocation9 + $0x1348] sm:$0xff]
    %v5613 = vld [vmem:[#allocation9 + $0x1350] sm:$0xff]
    %v5614 = vld [vmem:[#allocation9 + $0x1358] sm:$0xff]
    %v5615 = vld [vmem:[#allocation9 + $0x1360] sm:$0xff]
    %v5616 = vld [vmem:[#allocation9 + $0x1368] sm:$0xff]
    %v5617 = vld [vmem:[#allocation9 + $0x1370] sm:$0xff]
    %v5618 = vld [vmem:[#allocation9 + $0x1378] sm:$0xff]
    %v5619 = vld [vmem:[#allocation9 + $0x1380] sm:$0xff]
    %v5620 = vld [vmem:[#allocation9 + $0x1388] sm:$0xff]
    %v5621 = vld [vmem:[#allocation9 + $0x1390] sm:$0xff]
    %v5622 = vld [vmem:[#allocation9 + $0x1398] sm:$0xff]
    %v5623 = vld [vmem:[#allocation9 + $0x13a0] sm:$0xff]
    %v5624 = vld [vmem:[#allocation9 + $0x13a8] sm:$0xff]
    %v5625 = vld [vmem:[#allocation9 + $0x13b0] sm:$0xff]
    %v5626 = vld [vmem:[#allocation9 + $0x13b8] sm:$0xff]
    %v5627 = vld [vmem:[#allocation9 + $0x13c0] sm:$0xff]
    %v5628 = vld [vmem:[#allocation9 + $0x13c8] sm:$0xff]
    %v5629 = vld [vmem:[#allocation9 + $0x13d0] sm:$0xff]
    %v5630 = vld [vmem:[#allocation9 + $0x13d8] sm:$0xff]
    %v5631 = vld [vmem:[#allocation9 + $0x13e0] sm:$0xff]
    %v5632 = vld [vmem:[#allocation9 + $0x13e8] sm:$0xff]
    %v5633 = vld [vmem:[#allocation9 + $0x13f0] sm:$0xff]
    %v5634 = vld [vmem:[#allocation9 + $0x13f8] sm:$0xff]
    %v5637 = vunpack.c.l.b16 %v5569
    %v5638 = vunpack.c.l.b16 %v5570
    %v5639 = vrot.slane %v5638, 7
    %v5640 = vsel %vm611, %v5639, %v5637
    %v5641 = vpack.c.b16 %v5640, %v5640
    %v5707 = vunpack.c.l.b16 %v5571
    %v5708 = vunpack.c.h.b16 %v5571
    %v5709 = vunpack.c.l.b16 %v5572
    %v5710 = vunpack.c.h.b16 %v5572
    %v5711 = vunpack.c.l.b16 %v5573
    %v5712 = vunpack.c.h.b16 %v5573
    %v5713 = vunpack.c.l.b16 %v5574
    %v5714 = vunpack.c.h.b16 %v5574
    %v5715 = vunpack.c.l.b16 %v5575
    %v5716 = vunpack.c.h.b16 %v5575
    %v5717 = vunpack.c.l.b16 %v5576
    %v5718 = vunpack.c.h.b16 %v5576
    %v5719 = vunpack.c.l.b16 %v5577
    %v5720 = vunpack.c.h.b16 %v5577
    %v5721 = vunpack.c.l.b16 %v5578
    %v5722 = vunpack.c.h.b16 %v5578
    %v5723 = vunpack.c.l.b16 %v5579
    %v5724 = vunpack.c.h.b16 %v5579
    %v5725 = vunpack.c.l.b16 %v5580
    %v5726 = vunpack.c.h.b16 %v5580
    %v5727 = vunpack.c.l.b16 %v5581
    %v5728 = vunpack.c.h.b16 %v5581
    %v5729 = vunpack.c.l.b16 %v5582
    %v5730 = vunpack.c.h.b16 %v5582
    %v5731 = vunpack.c.l.b16 %v5583
    %v5732 = vunpack.c.h.b16 %v5583
    %v5733 = vunpack.c.l.b16 %v5584
    %v5734 = vunpack.c.h.b16 %v5584
    %v5735 = vunpack.c.l.b16 %v5585
    %v5736 = vunpack.c.h.b16 %v5585
    %v5737 = vunpack.c.l.b16 %v5586
    %v5738 = vunpack.c.h.b16 %v5586
    %v5739 = vunpack.c.l.b16 %v5587
    %v5740 = vunpack.c.h.b16 %v5587
    %v5741 = vunpack.c.l.b16 %v5588
    %v5742 = vunpack.c.h.b16 %v5588
    %v5743 = vunpack.c.l.b16 %v5589
    %v5744 = vunpack.c.h.b16 %v5589
    %v5745 = vunpack.c.l.b16 %v5590
    %v5746 = vunpack.c.h.b16 %v5590
    %v5747 = vunpack.c.l.b16 %v5591
    %v5748 = vunpack.c.h.b16 %v5591
    %v5749 = vunpack.c.l.b16 %v5592
    %v5750 = vunpack.c.h.b16 %v5592
    %v5751 = vunpack.c.l.b16 %v5593
    %v5752 = vunpack.c.h.b16 %v5593
    %v5753 = vunpack.c.l.b16 %v5594
    %v5754 = vunpack.c.h.b16 %v5594
    %v5755 = vunpack.c.l.b16 %v5595
    %v5756 = vunpack.c.h.b16 %v5595
    %v5757 = vunpack.c.l.b16 %v5596
    %v5758 = vunpack.c.h.b16 %v5596
    %v5759 = vunpack.c.l.b16 %v5597
    %v5760 = vunpack.c.h.b16 %v5597
    %v5761 = vunpack.c.l.b16 %v5598
    %v5762 = vunpack.c.h.b16 %v5598
    %v5763 = vunpack.c.l.b16 %v5599
    %v5764 = vunpack.c.h.b16 %v5599
    %v5765 = vunpack.c.l.b16 %v5600
    %v5766 = vunpack.c.h.b16 %v5600
    %v5767 = vunpack.c.l.b16 %v5601
    %v5768 = vunpack.c.h.b16 %v5601
    %v5769 = vunpack.c.l.b16 %v5602
    %v5770 = vunpack.c.h.b16 %v5602
    %v5771 = vunpack.c.l.b16 %v5603
    %v5772 = vunpack.c.h.b16 %v5603
    %v5773 = vunpack.c.l.b16 %v5604
    %v5774 = vunpack.c.h.b16 %v5604
    %v5775 = vunpack.c.l.b16 %v5605
    %v5776 = vunpack.c.h.b16 %v5605
    %v5777 = vunpack.c.l.b16 %v5606
    %v5778 = vunpack.c.h.b16 %v5606
    %v5779 = vunpack.c.l.b16 %v5607
    %v5780 = vunpack.c.h.b16 %v5607
    %v5781 = vunpack.c.l.b16 %v5608
    %v5782 = vunpack.c.h.b16 %v5608
    %v5783 = vunpack.c.l.b16 %v5609
    %v5784 = vunpack.c.h.b16 %v5609
    %v5785 = vunpack.c.l.b16 %v5610
    %v5786 = vunpack.c.h.b16 %v5610
    %v5787 = vunpack.c.l.b16 %v5611
    %v5788 = vunpack.c.h.b16 %v5611
    %v5789 = vunpack.c.l.b16 %v5612
    %v5790 = vunpack.c.h.b16 %v5612
    %v5791 = vunpack.c.l.b16 %v5613
    %v5792 = vunpack.c.h.b16 %v5613
    %v5793 = vunpack.c.l.b16 %v5614
    %v5794 = vunpack.c.h.b16 %v5614
    %v5795 = vunpack.c.l.b16 %v5615
    %v5796 = vunpack.c.h.b16 %v5615
    %v5797 = vunpack.c.l.b16 %v5616
    %v5798 = vunpack.c.h.b16 %v5616
    %v5799 = vunpack.c.l.b16 %v5617
    %v5800 = vunpack.c.h.b16 %v5617
    %v5801 = vunpack.c.l.b16 %v5618
    %v5802 = vunpack.c.h.b16 %v5618
    %v5803 = vunpack.c.l.b16 %v5619
    %v5804 = vunpack.c.h.b16 %v5619
    %v5805 = vunpack.c.l.b16 %v5620
    %v5806 = vunpack.c.h.b16 %v5620
    %v5807 = vunpack.c.l.b16 %v5621
    %v5808 = vunpack.c.h.b16 %v5621
    %v5809 = vunpack.c.l.b16 %v5622
    %v5810 = vunpack.c.h.b16 %v5622
    %v5811 = vunpack.c.l.b16 %v5623
    %v5812 = vunpack.c.h.b16 %v5623
    %v5813 = vunpack.c.l.b16 %v5624
    %v5814 = vunpack.c.h.b16 %v5624
    %v5815 = vunpack.c.l.b16 %v5625
    %v5816 = vunpack.c.h.b16 %v5625
    %v5817 = vunpack.c.l.b16 %v5626
    %v5818 = vunpack.c.h.b16 %v5626
    %v5819 = vunpack.c.l.b16 %v5627
    %v5820 = vunpack.c.h.b16 %v5627
    %v5821 = vunpack.c.l.b16 %v5628
    %v5822 = vunpack.c.h.b16 %v5628
    %v5823 = vunpack.c.l.b16 %v5629
    %v5824 = vunpack.c.h.b16 %v5629
    %v5825 = vunpack.c.l.b16 %v5630
    %v5826 = vunpack.c.h.b16 %v5630
    %v5827 = vunpack.c.l.b16 %v5631
    %v5828 = vunpack.c.h.b16 %v5631
    %v5829 = vunpack.c.l.b16 %v5632
    %v5830 = vunpack.c.h.b16 %v5632
    %v5831 = vunpack.c.l.b16 %v5633
    %v5832 = vunpack.c.h.b16 %v5633
    %v5833 = vunpack.c.l.b16 %v5634
    %v5834 = vunpack.c.h.b16 %v5634
    %v5835 = vpack.c.b16 %v5715, %v5707
    %v5836 = vpack.c.b16 %v5716, %v5708
    %v5837 = vpack.c.b16 %v5717, %v5709
    %v5838 = vpack.c.b16 %v5718, %v5710
    %v5839 = vpack.c.b16 %v5719, %v5711
    %v5840 = vpack.c.b16 %v5720, %v5712
    %v5841 = vpack.c.b16 %v5721, %v5713
    %v5842 = vpack.c.b16 %v5722, %v5714
    %v5843 = vpack.c.b16 %v5731, %v5723
    %v5844 = vpack.c.b16 %v5732, %v5724
    %v5845 = vpack.c.b16 %v5733, %v5725
    %v5846 = vpack.c.b16 %v5734, %v5726
    %v5847 = vpack.c.b16 %v5735, %v5727
    %v5848 = vpack.c.b16 %v5736, %v5728
    %v5849 = vpack.c.b16 %v5737, %v5729
    %v5850 = vpack.c.b16 %v5738, %v5730
    %v5851 = vpack.c.b16 %v5747, %v5739
    %v5852 = vpack.c.b16 %v5748, %v5740
    %v5853 = vpack.c.b16 %v5749, %v5741
    %v5854 = vpack.c.b16 %v5750, %v5742
    %v5855 = vpack.c.b16 %v5751, %v5743
    %v5856 = vpack.c.b16 %v5752, %v5744
    %v5857 = vpack.c.b16 %v5753, %v5745
    %v5858 = vpack.c.b16 %v5754, %v5746
    %v5859 = vpack.c.b16 %v5763, %v5755
    %v5860 = vpack.c.b16 %v5764, %v5756
    %v5861 = vpack.c.b16 %v5765, %v5757
    %v5862 = vpack.c.b16 %v5766, %v5758
    %v5863 = vpack.c.b16 %v5767, %v5759
    %v5864 = vpack.c.b16 %v5768, %v5760
    %v5865 = vpack.c.b16 %v5769, %v5761
    %v5866 = vpack.c.b16 %v5770, %v5762
    %v5867 = vpack.c.b16 %v5779, %v5771
    %v5868 = vpack.c.b16 %v5780, %v5772
    %v5869 = vpack.c.b16 %v5781, %v5773
    %v5870 = vpack.c.b16 %v5782, %v5774
    %v5871 = vpack.c.b16 %v5783, %v5775
    %v5872 = vpack.c.b16 %v5784, %v5776
    %v5873 = vpack.c.b16 %v5785, %v5777
    %v5874 = vpack.c.b16 %v5786, %v5778
    %v5875 = vpack.c.b16 %v5795, %v5787
    %v5876 = vpack.c.b16 %v5796, %v5788
    %v5877 = vpack.c.b16 %v5797, %v5789
    %v5878 = vpack.c.b16 %v5798, %v5790
    %v5879 = vpack.c.b16 %v5799, %v5791
    %v5880 = vpack.c.b16 %v5800, %v5792
    %v5881 = vpack.c.b16 %v5801, %v5793
    %v5882 = vpack.c.b16 %v5802, %v5794
    %v5883 = vpack.c.b16 %v5811, %v5803
    %v5884 = vpack.c.b16 %v5812, %v5804
    %v5885 = vpack.c.b16 %v5813, %v5805
    %v5886 = vpack.c.b16 %v5814, %v5806
    %v5887 = vpack.c.b16 %v5815, %v5807
    %v5888 = vpack.c.b16 %v5816, %v5808
    %v5889 = vpack.c.b16 %v5817, %v5809
    %v5890 = vpack.c.b16 %v5818, %v5810
    %v5891 = vpack.c.b16 %v5827, %v5819
    %v5892 = vpack.c.b16 %v5828, %v5820
    %v5893 = vpack.c.b16 %v5829, %v5821
    %v5894 = vpack.c.b16 %v5830, %v5822
    %v5895 = vpack.c.b16 %v5831, %v5823
    %v5896 = vpack.c.b16 %v5832, %v5824
    %v5897 = vpack.c.b16 %v5833, %v5825
    %v5898 = vpack.c.b16 %v5834, %v5826
    %5963 = vmatprep.subr.bf16.mxu0 %v5836
    %5964 = vmatpush1.bf16.msra.mxu0 %v5835
    %5965 = vmatprep.subr.bf16.mxu0 %v5844
    %5966 = vmatpush1.bf16.msra.mxu0 %v5843
    %5967 = vmatprep.subr.bf16.mxu0 %v5852
    %5968 = vmatpush1.bf16.msra.mxu0 %v5851
    %5969 = vmatprep.subr.bf16.mxu0 %v5860
    %5970 = vmatpush1.bf16.msra.mxu0 %v5859
    %5971 = vmatprep.subr.bf16.mxu0 %v5868
    %5972 = vmatpush1.bf16.msra.mxu0 %v5867
    %5973 = vmatprep.subr.bf16.mxu0 %v5876
    %5974 = vmatpush1.bf16.msra.mxu0 %v5875
    %5975 = vmatprep.subr.bf16.mxu0 %v5884
    %5976 = vmatpush1.bf16.msra.mxu0 %v5883
    %5977 = vmatprep.subr.bf16.mxu0 %v5892
    %5978 = vmatpush1.bf16.msra.mxu0 %v5891
    %5979 = vmatprep.subr.bf16.mxu0 0
    %5980 = vmatpush1.bf16.msra.mxu0 0
    %5981 = vmatprep.subr.bf16.mxu0 0
    %5982 = vmatpush1.bf16.msra.mxu0 0
    %5983 = vmatprep.subr.bf16.mxu0 0
    %5984 = vmatpush1.bf16.msra.mxu0 0
    %5985 = vmatprep.subr.bf16.mxu0 0
    %5986 = vmatpush1.bf16.msra.mxu0 0
    %5987 = vmatprep.subr.bf16.mxu0 0
    %5988 = vmatpush1.bf16.msra.mxu0 0
    %5989 = vmatprep.subr.bf16.mxu0 0
    %5990 = vmatpush1.bf16.msra.mxu0 0
    %5991 = vmatprep.subr.bf16.mxu0 0
    %5992 = vmatpush1.bf16.msra.mxu0 0
    %5993 = vmatprep.subr.bf16.mxu0 0
    %5994 = vmatpush1.bf16.msra.mxu0 0
    %5995 = vmatprep.mubr.bf16.mxu0 0
    %5996 = vmatmul.mubr.bf16.gmra.mrb[0].mxu0 %v5641
    %v5997 = vpop.f32.mrb[0].mxu0
    %v5998 = vadd.f32 0.0, %v5997
    %v5999 = vpop.f32.mrb[0].mxu0
    %v6000 = vadd.f32 0.0, %v5999
    %v6001 = vpop.f32.mrb[0].mxu0
    %v6002 = vpop.f32.mrb[0].mxu0
    %6003 = vdwg.mxu0
    %6004 = vmatprep.subr.bf16.mxu0 %v5838
    %6005 = vmatpush1.bf16.msra.mxu0 %v5837
    %6006 = vmatprep.subr.bf16.mxu0 %v5846
    %6007 = vmatpush1.bf16.msra.mxu0 %v5845
    %6008 = vmatprep.subr.bf16.mxu0 %v5854
    %6009 = vmatpush1.bf16.msra.mxu0 %v5853
    %6010 = vmatprep.subr.bf16.mxu0 %v5862
    %6011 = vmatpush1.bf16.msra.mxu0 %v5861
    %6012 = vmatprep.subr.bf16.mxu0 %v5870
    %6013 = vmatpush1.bf16.msra.mxu0 %v5869
    %6014 = vmatprep.subr.bf16.mxu0 %v5878
    %6015 = vmatpush1.bf16.msra.mxu0 %v5877
    %6016 = vmatprep.subr.bf16.mxu0 %v5886
    %6017 = vmatpush1.bf16.msra.mxu0 %v5885
    %6018 = vmatprep.subr.bf16.mxu0 %v5894
    %6019 = vmatpush1.bf16.msra.mxu0 %v5893
    %6020 = vmatprep.subr.bf16.mxu0 0
    %6021 = vmatpush1.bf16.msra.mxu0 0
    %6022 = vmatprep.subr.bf16.mxu0 0
    %6023 = vmatpush1.bf16.msra.mxu0 0
    %6024 = vmatprep.subr.bf16.mxu0 0
    %6025 = vmatpush1.bf16.msra.mxu0 0
    %6026 = vmatprep.subr.bf16.mxu0 0
    %6027 = vmatpush1.bf16.msra.mxu0 0
    %6028 = vmatprep.subr.bf16.mxu0 0
    %6029 = vmatpush1.bf16.msra.mxu0 0
    %6030 = vmatprep.subr.bf16.mxu0 0
    %6031 = vmatpush1.bf16.msra.mxu0 0
    %6032 = vmatprep.subr.bf16.mxu0 0
    %6033 = vmatpush1.bf16.msra.mxu0 0
    %6034 = vmatprep.subr.bf16.mxu0 0
    %6035 = vmatpush1.bf16.msra.mxu0 0
    %6036 = vmatprep.mubr.bf16.mxu0 0
    %6037 = vmatmul.mubr.bf16.gmra.mrb[0].mxu0 %v5641
    %v6038 = vpop.f32.mrb[0].mxu0
    %v6039 = vadd.f32 0.0, %v6038
    %v6040 = vpop.f32.mrb[0].mxu0
    %v6041 = vadd.f32 0.0, %v6040
    %v6042 = vpop.f32.mrb[0].mxu0
    %v6043 = vpop.f32.mrb[0].mxu0
    %6044 = vdwg.mxu0
    %6045 = vmatprep.subr.bf16.mxu0 %v5840
    %6046 = vmatpush1.bf16.msra.mxu0 %v5839
    %6047 = vmatprep.subr.bf16.mxu0 %v5848
    %6048 = vmatpush1.bf16.msra.mxu0 %v5847
    %6049 = vmatprep.subr.bf16.mxu0 %v5856
    %6050 = vmatpush1.bf16.msra.mxu0 %v5855
    %6051 = vmatprep.subr.bf16.mxu0 %v5864
    %6052 = vmatpush1.bf16.msra.mxu0 %v5863
    %6053 = vmatprep.subr.bf16.mxu0 %v5872
    %6054 = vmatpush1.bf16.msra.mxu0 %v5871
    %6055 = vmatprep.subr.bf16.mxu0 %v5880
    %6056 = vmatpush1.bf16.msra.mxu0 %v5879
    %6057 = vmatprep.subr.bf16.mxu0 %v5888
    %6058 = vmatpush1.bf16.msra.mxu0 %v5887
    %6059 = vmatprep.subr.bf16.mxu0 %v5896
    %6060 = vmatpush1.bf16.msra.mxu0 %v5895
    %6061 = vmatprep.subr.bf16.mxu0 0
    %6062 = vmatpush1.bf16.msra.mxu0 0
    %6063 = vmatprep.subr.bf16.mxu0 0
    %6064 = vmatpush1.bf16.msra.mxu0 0
    %6065 = vmatprep.subr.bf16.mxu0 0
    %6066 = vmatpush1.bf16.msra.mxu0 0
    %6067 = vmatprep.subr.bf16.mxu0 0
    %6068 = vmatpush1.bf16.msra.mxu0 0
    %6069 = vmatprep.subr.bf16.mxu0 0
    %6070 = vmatpush1.bf16.msra.mxu0 0
    %6071 = vmatprep.subr.bf16.mxu0 0
    %6072 = vmatpush1.bf16.msra.mxu0 0
    %6073 = vmatprep.subr.bf16.mxu0 0
    %6074 = vmatpush1.bf16.msra.mxu0 0
    %6075 = vmatprep.subr.bf16.mxu0 0
    %6076 = vmatpush1.bf16.msra.mxu0 0
    %6077 = vmatprep.mubr.bf16.mxu0 0
    %6078 = vmatmul.mubr.bf16.gmra.mrb[0].mxu0 %v5641
    %v6079 = vpop.f32.mrb[0].mxu0
    %v6080 = vadd.f32 0.0, %v6079
    %v6081 = vpop.f32.mrb[0].mxu0
    %v6082 = vadd.f32 0.0, %v6081
    %v6083 = vpop.f32.mrb[0].mxu0
    %v6084 = vpop.f32.mrb[0].mxu0
    %6085 = vdwg.mxu0
    %6086 = vmatprep.subr.bf16.mxu0 %v5842
    %6087 = vmatpush1.bf16.msra.mxu0 %v5841
    %6088 = vmatprep.subr.bf16.mxu0 %v5850
    %6089 = vmatpush1.bf16.msra.mxu0 %v5849
    %6090 = vmatprep.subr.bf16.mxu0 %v5858
    %6091 = vmatpush1.bf16.msra.mxu0 %v5857
    %6092 = vmatprep.subr.bf16.mxu0 %v5866
    %6093 = vmatpush1.bf16.msra.mxu0 %v5865
    %6094 = vmatprep.subr.bf16.mxu0 %v5874
    %6095 = vmatpush1.bf16.msra.mxu0 %v5873
    %6096 = vmatprep.subr.bf16.mxu0 %v5882
    %6097 = vmatpush1.bf16.msra.mxu0 %v5881
    %6098 = vmatprep.subr.bf16.mxu0 %v5890
    %6099 = vmatpush1.bf16.msra.mxu0 %v5889
    %6100 = vmatprep.subr.bf16.mxu0 %v5898
    %6101 = vmatpush1.bf16.msra.mxu0 %v5897
    %6102 = vmatprep.subr.bf16.mxu0 0
    %6103 = vmatpush1.bf16.msra.mxu0 0
    %6104 = vmatprep.subr.bf16.mxu0 0
    %6105 = vmatpush1.bf16.msra.mxu0 0
    %6106 = vmatprep.subr.bf16.mxu0 0
    %6107 = vmatpush1.bf16.msra.mxu0 0
    %6108 = vmatprep.subr.bf16.mxu0 0
    %6109 = vmatpush1.bf16.msra.mxu0 0
    %6110 = vmatprep.subr.bf16.mxu0 0
    %6111 = vmatpush1.bf16.msra.mxu0 0
    %6112 = vmatprep.subr.bf16.mxu0 0
    %6113 = vmatpush1.bf16.msra.mxu0 0
    %6114 = vmatprep.subr.bf16.mxu0 0
    %6115 = vmatpush1.bf16.msra.mxu0 0
    %6116 = vmatprep.subr.bf16.mxu0 0
    %6117 = vmatpush1.bf16.msra.mxu0 0
    %6118 = vmatprep.mubr.bf16.mxu0 0
    %6119 = vmatmul.mubr.bf16.gmra.mrb[0].mxu0 %v5641
    %v6120 = vpop.f32.mrb[0].mxu0
    %v6121 = vadd.f32 0.0, %v6120
    %v6122 = vpop.f32.mrb[0].mxu0
    %v6123 = vadd.f32 0.0, %v6122
    %v6124 = vpop.f32.mrb[0].mxu0
    %v6125 = vpop.f32.mrb[0].mxu0
    %6126 = vdwg.mxu0
    %v6127 = vadd.f32 %v5559, %v5998
    %v6128 = vadd.f32 %v5560, %v6000
    %v6129 = vadd.f32 %v5561, %v6039
    %v6130 = vadd.f32 %v5562, %v6041
    %v6131 = vadd.f32 %v5563, %v6080
    %v6132 = vadd.f32 %v5564, %v6082
    %v6133 = vadd.f32 %v5565, %v6121
    %v6134 = vadd.f32 %v5566, %v6123
    %v6135 = vld [vmem:[#allocation2 + $0xa] sm:$0x1]
    %v6136 = vld [vmem:[#allocation2 + $0x1a] sm:$0x1]
    %v6137 = vpack.c.bf16 %v6135, %v6135
    %v6138 = vpack.c.bf16 %v6136, %v6136
    %v6139 = vld [vmem:[#allocation9 + $0x1400] sm:$0xff]
    %v6140 = vld [vmem:[#allocation9 + $0x1408] sm:$0xff]
    %v6141 = vld [vmem:[#allocation9 + $0x1410] sm:$0xff]
    %v6142 = vld [vmem:[#allocation9 + $0x1418] sm:$0xff]
    %v6143 = vld [vmem:[#allocation9 + $0x1420] sm:$0xff]
    %v6144 = vld [vmem:[#allocation9 + $0x1428] sm:$0xff]
    %v6145 = vld [vmem:[#allocation9 + $0x1430] sm:$0xff]
    %v6146 = vld [vmem:[#allocation9 + $0x1438] sm:$0xff]
    %v6147 = vld [vmem:[#allocation9 + $0x1440] sm:$0xff]
    %v6148 = vld [vmem:[#allocation9 + $0x1448] sm:$0xff]
    %v6149 = vld [vmem:[#allocation9 + $0x1450] sm:$0xff]
    %v6150 = vld [vmem:[#allocation9 + $0x1458] sm:$0xff]
    %v6151 = vld [vmem:[#allocation9 + $0x1460] sm:$0xff]
    %v6152 = vld [vmem:[#allocation9 + $0x1468] sm:$0xff]
    %v6153 = vld [vmem:[#allocation9 + $0x1470] sm:$0xff]
    %v6154 = vld [vmem:[#allocation9 + $0x1478] sm:$0xff]
    %v6155 = vld [vmem:[#allocation9 + $0x1480] sm:$0xff]
    %v6156 = vld [vmem:[#allocation9 + $0x1488] sm:$0xff]
    %v6157 = vld [vmem:[#allocation9 + $0x1490] sm:$0xff]
    %v6158 = vld [vmem:[#allocation9 + $0x1498] sm:$0xff]
    %v6159 = vld [vmem:[#allocation9 + $0x14a0] sm:$0xff]
    %v6160 = vld [vmem:[#allocation9 + $0x14a8] sm:$0xff]
    %v6161 = vld [vmem:[#allocation9 + $0x14b0] sm:$0xff]
    %v6162 = vld [vmem:[#allocation9 + $0x14b8] sm:$0xff]
    %v6163 = vld [vmem:[#allocation9 + $0x14c0] sm:$0xff]
    %v6164 = vld [vmem:[#allocation9 + $0x14c8] sm:$0xff]
    %v6165 = vld [vmem:[#allocation9 + $0x14d0] sm:$0xff]
    %v6166 = vld [vmem:[#allocation9 + $0x14d8] sm:$0xff]
    %v6167 = vld [vmem:[#allocation9 + $0x14e0] sm:$0xff]
    %v6168 = vld [vmem:[#allocation9 + $0x14e8] sm:$0xff]
    %v6169 = vld [vmem:[#allocation9 + $0x14f0] sm:$0xff]
    %v6170 = vld [vmem:[#allocation9 + $0x14f8] sm:$0xff]
    %v6171 = vld [vmem:[#allocation9 + $0x1500] sm:$0xff]
    %v6172 = vld [vmem:[#allocation9 + $0x1508] sm:$0xff]
    %v6173 = vld [vmem:[#allocation9 + $0x1510] sm:$0xff]
    %v6174 = vld [vmem:[#allocation9 + $0x1518] sm:$0xff]
    %v6175 = vld [vmem:[#allocation9 + $0x1520] sm:$0xff]
    %v6176 = vld [vmem:[#allocation9 + $0x1528] sm:$0xff]
    %v6177 = vld [vmem:[#allocation9 + $0x1530] sm:$0xff]
    %v6178 = vld [vmem:[#allocation9 + $0x1538] sm:$0xff]
    %v6179 = vld [vmem:[#allocation9 + $0x1540] sm:$0xff]
    %v6180 = vld [vmem:[#allocation9 + $0x1548] sm:$0xff]
    %v6181 = vld [vmem:[#allocation9 + $0x1550] sm:$0xff]
    %v6182 = vld [vmem:[#allocation9 + $0x1558] sm:$0xff]
    %v6183 = vld [vmem:[#allocation9 + $0x1560] sm:$0xff]
    %v6184 = vld [vmem:[#allocation9 + $0x1568] sm:$0xff]
    %v6185 = vld [vmem:[#allocation9 + $0x1570] sm:$0xff]
    %v6186 = vld [vmem:[#allocation9 + $0x1578] sm:$0xff]
    %v6187 = vld [vmem:[#allocation9 + $0x1580] sm:$0xff]
    %v6188 = vld [vmem:[#allocation9 + $0x1588] sm:$0xff]
    %v6189 = vld [vmem:[#allocation9 + $0x1590] sm:$0xff]
    %v6190 = vld [vmem:[#allocation9 + $0x1598] sm:$0xff]
    %v6191 = vld [vmem:[#allocation9 + $0x15a0] sm:$0xff]
    %v6192 = vld [vmem:[#allocation9 + $0x15a8] sm:$0xff]
    %v6193 = vld [vmem:[#allocation9 + $0x15b0] sm:$0xff]
    %v6194 = vld [vmem:[#allocation9 + $0x15b8] sm:$0xff]
    %v6195 = vld [vmem:[#allocation9 + $0x15c0] sm:$0xff]
    %v6196 = vld [vmem:[#allocation9 + $0x15c8] sm:$0xff]
    %v6197 = vld [vmem:[#allocation9 + $0x15d0] sm:$0xff]
    %v6198 = vld [vmem:[#allocation9 + $0x15d8] sm:$0xff]
    %v6199 = vld [vmem:[#allocation9 + $0x15e0] sm:$0xff]
    %v6200 = vld [vmem:[#allocation9 + $0x15e8] sm:$0xff]
    %v6201 = vld [vmem:[#allocation9 + $0x15f0] sm:$0xff]
    %v6202 = vld [vmem:[#allocation9 + $0x15f8] sm:$0xff]
    %v6205 = vunpack.c.l.b16 %v6137
    %v6206 = vunpack.c.l.b16 %v6138
    %v6207 = vrot.slane %v6206, 7
    %v6208 = vsel %vm611, %v6207, %v6205
    %v6209 = vpack.c.b16 %v6208, %v6208
    %v6275 = vunpack.c.l.b16 %v6139
    %v6276 = vunpack.c.h.b16 %v6139
    %v6277 = vunpack.c.l.b16 %v6140
    %v6278 = vunpack.c.h.b16 %v6140
    %v6279 = vunpack.c.l.b16 %v6141
    %v6280 = vunpack.c.h.b16 %v6141
    %v6281 = vunpack.c.l.b16 %v6142
    %v6282 = vunpack.c.h.b16 %v6142
    %v6283 = vunpack.c.l.b16 %v6143
    %v6284 = vunpack.c.h.b16 %v6143
    %v6285 = vunpack.c.l.b16 %v6144
    %v6286 = vunpack.c.h.b16 %v6144
    %v6287 = vunpack.c.l.b16 %v6145
    %v6288 = vunpack.c.h.b16 %v6145
    %v6289 = vunpack.c.l.b16 %v6146
    %v6290 = vunpack.c.h.b16 %v6146
    %v6291 = vunpack.c.l.b16 %v6147
    %v6292 = vunpack.c.h.b16 %v6147
    %v6293 = vunpack.c.l.b16 %v6148
    %v6294 = vunpack.c.h.b16 %v6148
    %v6295 = vunpack.c.l.b16 %v6149
    %v6296 = vunpack.c.h.b16 %v6149
    %v6297 = vunpack.c.l.b16 %v6150
    %v6298 = vunpack.c.h.b16 %v6150
    %v6299 = vunpack.c.l.b16 %v6151
    %v6300 = vunpack.c.h.b16 %v6151
    %v6301 = vunpack.c.l.b16 %v6152
    %v6302 = vunpack.c.h.b16 %v6152
    %v6303 = vunpack.c.l.b16 %v6153
    %v6304 = vunpack.c.h.b16 %v6153
    %v6305 = vunpack.c.l.b16 %v6154
    %v6306 = vunpack.c.h.b16 %v6154
    %v6307 = vunpack.c.l.b16 %v6155
    %v6308 = vunpack.c.h.b16 %v6155
    %v6309 = vunpack.c.l.b16 %v6156
    %v6310 = vunpack.c.h.b16 %v6156
    %v6311 = vunpack.c.l.b16 %v6157
    %v6312 = vunpack.c.h.b16 %v6157
    %v6313 = vunpack.c.l.b16 %v6158
    %v6314 = vunpack.c.h.b16 %v6158
    %v6315 = vunpack.c.l.b16 %v6159
    %v6316 = vunpack.c.h.b16 %v6159
    %v6317 = vunpack.c.l.b16 %v6160
    %v6318 = vunpack.c.h.b16 %v6160
    %v6319 = vunpack.c.l.b16 %v6161
    %v6320 = vunpack.c.h.b16 %v6161
    %v6321 = vunpack.c.l.b16 %v6162
    %v6322 = vunpack.c.h.b16 %v6162
    %v6323 = vunpack.c.l.b16 %v6163
    %v6324 = vunpack.c.h.b16 %v6163
    %v6325 = vunpack.c.l.b16 %v6164
    %v6326 = vunpack.c.h.b16 %v6164
    %v6327 = vunpack.c.l.b16 %v6165
    %v6328 = vunpack.c.h.b16 %v6165
    %v6329 = vunpack.c.l.b16 %v6166
    %v6330 = vunpack.c.h.b16 %v6166
    %v6331 = vunpack.c.l.b16 %v6167
    %v6332 = vunpack.c.h.b16 %v6167
    %v6333 = vunpack.c.l.b16 %v6168
    %v6334 = vunpack.c.h.b16 %v6168
    %v6335 = vunpack.c.l.b16 %v6169
    %v6336 = vunpack.c.h.b16 %v6169
    %v6337 = vunpack.c.l.b16 %v6170
    %v6338 = vunpack.c.h.b16 %v6170
    %v6339 = vunpack.c.l.b16 %v6171
    %v6340 = vunpack.c.h.b16 %v6171
    %v6341 = vunpack.c.l.b16 %v6172
    %v6342 = vunpack.c.h.b16 %v6172
    %v6343 = vunpack.c.l.b16 %v6173
    %v6344 = vunpack.c.h.b16 %v6173
    %v6345 = vunpack.c.l.b16 %v6174
    %v6346 = vunpack.c.h.b16 %v6174
    %v6347 = vunpack.c.l.b16 %v6175
    %v6348 = vunpack.c.h.b16 %v6175
    %v6349 = vunpack.c.l.b16 %v6176
    %v6350 = vunpack.c.h.b16 %v6176
    %v6351 = vunpack.c.l.b16 %v6177
    %v6352 = vunpack.c.h.b16 %v6177
    %v6353 = vunpack.c.l.b16 %v6178
    %v6354 = vunpack.c.h.b16 %v6178
    %v6355 = vunpack.c.l.b16 %v6179
    %v6356 = vunpack.c.h.b16 %v6179
    %v6357 = vunpack.c.l.b16 %v6180
    %v6358 = vunpack.c.h.b16 %v6180
    %v6359 = vunpack.c.l.b16 %v6181
    %v6360 = vunpack.c.h.b16 %v6181
    %v6361 = vunpack.c.l.b16 %v6182
    %v6362 = vunpack.c.h.b16 %v6182
    %v6363 = vunpack.c.l.b16 %v6183
    %v6364 = vunpack.c.h.b16 %v6183
    %v6365 = vunpack.c.l.b16 %v6184
    %v6366 = vunpack.c.h.b16 %v6184
    %v6367 = vunpack.c.l.b16 %v6185
    %v6368 = vunpack.c.h.b16 %v6185
    %v6369 = vunpack.c.l.b16 %v6186
    %v6370 = vunpack.c.h.b16 %v6186
    %v6371 = vunpack.c.l.b16 %v6187
    %v6372 = vunpack.c.h.b16 %v6187
    %v6373 = vunpack.c.l.b16 %v6188
    %v6374 = vunpack.c.h.b16 %v6188
    %v6375 = vunpack.c.l.b16 %v6189
    %v6376 = vunpack.c.h.b16 %v6189
    %v6377 = vunpack.c.l.b16 %v6190
    %v6378 = vunpack.c.h.b16 %v6190
    %v6379 = vunpack.c.l.b16 %v6191
    %v6380 = vunpack.c.h.b16 %v6191
    %v6381 = vunpack.c.l.b16 %v6192
    %v6382 = vunpack.c.h.b16 %v6192
    %v6383 = vunpack.c.l.b16 %v6193
    %v6384 = vunpack.c.h.b16 %v6193
    %v6385 = vunpack.c.l.b16 %v6194
    %v6386 = vunpack.c.h.b16 %v6194
    %v6387 = vunpack.c.l.b16 %v6195
    %v6388 = vunpack.c.h.b16 %v6195
    %v6389 = vunpack.c.l.b16 %v6196
    %v6390 = vunpack.c.h.b16 %v6196
    %v6391 = vunpack.c.l.b16 %v6197
    %v6392 = vunpack.c.h.b16 %v6197
    %v6393 = vunpack.c.l.b16 %v6198
    %v6394 = vunpack.c.h.b16 %v6198
    %v6395 = vunpack.c.l.b16 %v6199
    %v6396 = vunpack.c.h.b16 %v6199
    %v6397 = vunpack.c.l.b16 %v6200
    %v6398 = vunpack.c.h.b16 %v6200
    %v6399 = vunpack.c.l.b16 %v6201
    %v6400 = vunpack.c.h.b16 %v6201
    %v6401 = vunpack.c.l.b16 %v6202
    %v6402 = vunpack.c.h.b16 %v6202
    %v6403 = vpack.c.b16 %v6283, %v6275
    %v6404 = vpack.c.b16 %v6284, %v6276
    %v6405 = vpack.c.b16 %v6285, %v6277
    %v6406 = vpack.c.b16 %v6286, %v6278
    %v6407 = vpack.c.b16 %v6287, %v6279
    %v6408 = vpack.c.b16 %v6288, %v6280
    %v6409 = vpack.c.b16 %v6289, %v6281
    %v6410 = vpack.c.b16 %v6290, %v6282
    %v6411 = vpack.c.b16 %v6299, %v6291
    %v6412 = vpack.c.b16 %v6300, %v6292
    %v6413 = vpack.c.b16 %v6301, %v6293
    %v6414 = vpack.c.b16 %v6302, %v6294
    %v6415 = vpack.c.b16 %v6303, %v6295
    %v6416 = vpack.c.b16 %v6304, %v6296
    %v6417 = vpack.c.b16 %v6305, %v6297
    %v6418 = vpack.c.b16 %v6306, %v6298
    %v6419 = vpack.c.b16 %v6315, %v6307
    %v6420 = vpack.c.b16 %v6316, %v6308
    %v6421 = vpack.c.b16 %v6317, %v6309
    %v6422 = vpack.c.b16 %v6318, %v6310
    %v6423 = vpack.c.b16 %v6319, %v6311
    %v6424 = vpack.c.b16 %v6320, %v6312
    %v6425 = vpack.c.b16 %v6321, %v6313
    %v6426 = vpack.c.b16 %v6322, %v6314
    %v6427 = vpack.c.b16 %v6331, %v6323
    %v6428 = vpack.c.b16 %v6332, %v6324
    %v6429 = vpack.c.b16 %v6333, %v6325
    %v6430 = vpack.c.b16 %v6334, %v6326
    %v6431 = vpack.c.b16 %v6335, %v6327
    %v6432 = vpack.c.b16 %v6336, %v6328
    %v6433 = vpack.c.b16 %v6337, %v6329
    %v6434 = vpack.c.b16 %v6338, %v6330
    %v6435 = vpack.c.b16 %v6347, %v6339
    %v6436 = vpack.c.b16 %v6348, %v6340
    %v6437 = vpack.c.b16 %v6349, %v6341
    %v6438 = vpack.c.b16 %v6350, %v6342
    %v6439 = vpack.c.b16 %v6351, %v6343
    %v6440 = vpack.c.b16 %v6352, %v6344
    %v6441 = vpack.c.b16 %v6353, %v6345
    %v6442 = vpack.c.b16 %v6354, %v6346
    %v6443 = vpack.c.b16 %v6363, %v6355
    %v6444 = vpack.c.b16 %v6364, %v6356
    %v6445 = vpack.c.b16 %v6365, %v6357
    %v6446 = vpack.c.b16 %v6366, %v6358
    %v6447 = vpack.c.b16 %v6367, %v6359
    %v6448 = vpack.c.b16 %v6368, %v6360
    %v6449 = vpack.c.b16 %v6369, %v6361
    %v6450 = vpack.c.b16 %v6370, %v6362
    %v6451 = vpack.c.b16 %v6379, %v6371
    %v6452 = vpack.c.b16 %v6380, %v6372
    %v6453 = vpack.c.b16 %v6381, %v6373
    %v6454 = vpack.c.b16 %v6382, %v6374
    %v6455 = vpack.c.b16 %v6383, %v6375
    %v6456 = vpack.c.b16 %v6384, %v6376
    %v6457 = vpack.c.b16 %v6385, %v6377
    %v6458 = vpack.c.b16 %v6386, %v6378
    %v6459 = vpack.c.b16 %v6395, %v6387
    %v6460 = vpack.c.b16 %v6396, %v6388
    %v6461 = vpack.c.b16 %v6397, %v6389
    %v6462 = vpack.c.b16 %v6398, %v6390
    %v6463 = vpack.c.b16 %v6399, %v6391
    %v6464 = vpack.c.b16 %v6400, %v6392
    %v6465 = vpack.c.b16 %v6401, %v6393
    %v6466 = vpack.c.b16 %v6402, %v6394
    %6531 = vmatprep.subr.bf16.mxu0 %v6404
    %6532 = vmatpush1.bf16.msra.mxu0 %v6403
    %6533 = vmatprep.subr.bf16.mxu0 %v6412
    %6534 = vmatpush1.bf16.msra.mxu0 %v6411
    %6535 = vmatprep.subr.bf16.mxu0 %v6420
    %6536 = vmatpush1.bf16.msra.mxu0 %v6419
    %6537 = vmatprep.subr.bf16.mxu0 %v6428
    %6538 = vmatpush1.bf16.msra.mxu0 %v6427
    %6539 = vmatprep.subr.bf16.mxu0 %v6436
    %6540 = vmatpush1.bf16.msra.mxu0 %v6435
    %6541 = vmatprep.subr.bf16.mxu0 %v6444
    %6542 = vmatpush1.bf16.msra.mxu0 %v6443
    %6543 = vmatprep.subr.bf16.mxu0 %v6452
    %6544 = vmatpush1.bf16.msra.mxu0 %v6451
    %6545 = vmatprep.subr.bf16.mxu0 %v6460
    %6546 = vmatpush1.bf16.msra.mxu0 %v6459
    %6547 = vmatprep.subr.bf16.mxu0 0
    %6548 = vmatpush1.bf16.msra.mxu0 0
    %6549 = vmatprep.subr.bf16.mxu0 0
    %6550 = vmatpush1.bf16.msra.mxu0 0
    %6551 = vmatprep.subr.bf16.mxu0 0
    %6552 = vmatpush1.bf16.msra.mxu0 0
    %6553 = vmatprep.subr.bf16.mxu0 0
    %6554 = vmatpush1.bf16.msra.mxu0 0
    %6555 = vmatprep.subr.bf16.mxu0 0
    %6556 = vmatpush1.bf16.msra.mxu0 0
    %6557 = vmatprep.subr.bf16.mxu0 0
    %6558 = vmatpush1.bf16.msra.mxu0 0
    %6559 = vmatprep.subr.bf16.mxu0 0
    %6560 = vmatpush1.bf16.msra.mxu0 0
    %6561 = vmatprep.subr.bf16.mxu0 0
    %6562 = vmatpush1.bf16.msra.mxu0 0
    %6563 = vmatprep.mubr.bf16.mxu0 0
    %6564 = vmatmul.mubr.bf16.gmra.mrb[0].mxu0 %v6209
    %v6565 = vpop.f32.mrb[0].mxu0
    %v6566 = vadd.f32 0.0, %v6565
    %v6567 = vpop.f32.mrb[0].mxu0
    %v6568 = vadd.f32 0.0, %v6567
    %v6569 = vpop.f32.mrb[0].mxu0
    %v6570 = vpop.f32.mrb[0].mxu0
    %6571 = vdwg.mxu0
    %6572 = vmatprep.subr.bf16.mxu0 %v6406
    %6573 = vmatpush1.bf16.msra.mxu0 %v6405
    %6574 = vmatprep.subr.bf16.mxu0 %v6414
    %6575 = vmatpush1.bf16.msra.mxu0 %v6413
    %6576 = vmatprep.subr.bf16.mxu0 %v6422
    %6577 = vmatpush1.bf16.msra.mxu0 %v6421
    %6578 = vmatprep.subr.bf16.mxu0 %v6430
    %6579 = vmatpush1.bf16.msra.mxu0 %v6429
    %6580 = vmatprep.subr.bf16.mxu0 %v6438
    %6581 = vmatpush1.bf16.msra.mxu0 %v6437
    %6582 = vmatprep.subr.bf16.mxu0 %v6446
    %6583 = vmatpush1.bf16.msra.mxu0 %v6445
    %6584 = vmatprep.subr.bf16.mxu0 %v6454
    %6585 = vmatpush1.bf16.msra.mxu0 %v6453
    %6586 = vmatprep.subr.bf16.mxu0 %v6462
    %6587 = vmatpush1.bf16.msra.mxu0 %v6461
    %6588 = vmatprep.subr.bf16.mxu0 0
    %6589 = vmatpush1.bf16.msra.mxu0 0
    %6590 = vmatprep.subr.bf16.mxu0 0
    %6591 = vmatpush1.bf16.msra.mxu0 0
    %6592 = vmatprep.subr.bf16.mxu0 0
    %6593 = vmatpush1.bf16.msra.mxu0 0
    %6594 = vmatprep.subr.bf16.mxu0 0
    %6595 = vmatpush1.bf16.msra.mxu0 0
    %6596 = vmatprep.subr.bf16.mxu0 0
    %6597 = vmatpush1.bf16.msra.mxu0 0
    %6598 = vmatprep.subr.bf16.mxu0 0
    %6599 = vmatpush1.bf16.msra.mxu0 0
    %6600 = vmatprep.subr.bf16.mxu0 0
    %6601 = vmatpush1.bf16.msra.mxu0 0
    %6602 = vmatprep.subr.bf16.mxu0 0
    %6603 = vmatpush1.bf16.msra.mxu0 0
    %6604 = vmatprep.mubr.bf16.mxu0 0
    %6605 = vmatmul.mubr.bf16.gmra.mrb[0].mxu0 %v6209
    %v6606 = vpop.f32.mrb[0].mxu0
    %v6607 = vadd.f32 0.0, %v6606
    %v6608 = vpop.f32.mrb[0].mxu0
    %v6609 = vadd.f32 0.0, %v6608
    %v6610 = vpop.f32.mrb[0].mxu0
    %v6611 = vpop.f32.mrb[0].mxu0
    %6612 = vdwg.mxu0
    %6613 = vmatprep.subr.bf16.mxu0 %v6408
    %6614 = vmatpush1.bf16.msra.mxu0 %v6407
    %6615 = vmatprep.subr.bf16.mxu0 %v6416
    %6616 = vmatpush1.bf16.msra.mxu0 %v6415
    %6617 = vmatprep.subr.bf16.mxu0 %v6424
    %6618 = vmatpush1.bf16.msra.mxu0 %v6423
    %6619 = vmatprep.subr.bf16.mxu0 %v6432
    %6620 = vmatpush1.bf16.msra.mxu0 %v6431
    %6621 = vmatprep.subr.bf16.mxu0 %v6440
    %6622 = vmatpush1.bf16.msra.mxu0 %v6439
    %6623 = vmatprep.subr.bf16.mxu0 %v6448
    %6624 = vmatpush1.bf16.msra.mxu0 %v6447
    %6625 = vmatprep.subr.bf16.mxu0 %v6456
    %6626 = vmatpush1.bf16.msra.mxu0 %v6455
    %6627 = vmatprep.subr.bf16.mxu0 %v6464
    %6628 = vmatpush1.bf16.msra.mxu0 %v6463
    %6629 = vmatprep.subr.bf16.mxu0 0
    %6630 = vmatpush1.bf16.msra.mxu0 0
    %6631 = vmatprep.subr.bf16.mxu0 0
    %6632 = vmatpush1.bf16.msra.mxu0 0
    %6633 = vmatprep.subr.bf16.mxu0 0
    %6634 = vmatpush1.bf16.msra.mxu0 0
    %6635 = vmatprep.subr.bf16.mxu0 0
    %6636 = vmatpush1.bf16.msra.mxu0 0
    %6637 = vmatprep.subr.bf16.mxu0 0
    %6638 = vmatpush1.bf16.msra.mxu0 0
    %6639 = vmatprep.subr.bf16.mxu0 0
    %6640 = vmatpush1.bf16.msra.mxu0 0
    %6641 = vmatprep.subr.bf16.mxu0 0
    %6642 = vmatpush1.bf16.msra.mxu0 0
    %6643 = vmatprep.subr.bf16.mxu0 0
    %6644 = vmatpush1.bf16.msra.mxu0 0
    %6645 = vmatprep.mubr.bf16.mxu0 0
    %6646 = vmatmul.mubr.bf16.gmra.mrb[0].mxu0 %v6209
    %v6647 = vpop.f32.mrb[0].mxu0
    %v6648 = vadd.f32 0.0, %v6647
    %v6649 = vpop.f32.mrb[0].mxu0
    %v6650 = vadd.f32 0.0, %v6649
    %v6651 = vpop.f32.mrb[0].mxu0
    %v6652 = vpop.f32.mrb[0].mxu0
    %6653 = vdwg.mxu0
    %6654 = vmatprep.subr.bf16.mxu0 %v6410
    %6655 = vmatpush1.bf16.msra.mxu0 %v6409
    %6656 = vmatprep.subr.bf16.mxu0 %v6418
    %6657 = vmatpush1.bf16.msra.mxu0 %v6417
    %6658 = vmatprep.subr.bf16.mxu0 %v6426
    %6659 = vmatpush1.bf16.msra.mxu0 %v6425
    %6660 = vmatprep.subr.bf16.mxu0 %v6434
    %6661 = vmatpush1.bf16.msra.mxu0 %v6433
    %6662 = vmatprep.subr.bf16.mxu0 %v6442
    %6663 = vmatpush1.bf16.msra.mxu0 %v6441
    %6664 = vmatprep.subr.bf16.mxu0 %v6450
    %6665 = vmatpush1.bf16.msra.mxu0 %v6449
    %6666 = vmatprep.subr.bf16.mxu0 %v6458
    %6667 = vmatpush1.bf16.msra.mxu0 %v6457
    %6668 = vmatprep.subr.bf16.mxu0 %v6466
    %6669 = vmatpush1.bf16.msra.mxu0 %v6465
    %6670 = vmatprep.subr.bf16.mxu0 0
    %6671 = vmatpush1.bf16.msra.mxu0 0
    %6672 = vmatprep.subr.bf16.mxu0 0
    %6673 = vmatpush1.bf16.msra.mxu0 0
    %6674 = vmatprep.subr.bf16.mxu0 0
    %6675 = vmatpush1.bf16.msra.mxu0 0
    %6676 = vmatprep.subr.bf16.mxu0 0
    %6677 = vmatpush1.bf16.msra.mxu0 0
    %6678 = vmatprep.subr.bf16.mxu0 0
    %6679 = vmatpush1.bf16.msra.mxu0 0
    %6680 = vmatprep.subr.bf16.mxu0 0
    %6681 = vmatpush1.bf16.msra.mxu0 0
    %6682 = vmatprep.subr.bf16.mxu0 0
    %6683 = vmatpush1.bf16.msra.mxu0 0
    %6684 = vmatprep.subr.bf16.mxu0 0
    %6685 = vmatpush1.bf16.msra.mxu0 0
    %6686 = vmatprep.mubr.bf16.mxu0 0
    %6687 = vmatmul.mubr.bf16.gmra.mrb[0].mxu0 %v6209
    %v6688 = vpop.f32.mrb[0].mxu0
    %v6689 = vadd.f32 0.0, %v6688
    %v6690 = vpop.f32.mrb[0].mxu0
    %v6691 = vadd.f32 0.0, %v6690
    %v6692 = vpop.f32.mrb[0].mxu0
    %v6693 = vpop.f32.mrb[0].mxu0
    %6694 = vdwg.mxu0
    %v6695 = vadd.f32 %v6127, %v6566
    %v6696 = vadd.f32 %v6128, %v6568
    %v6697 = vadd.f32 %v6129, %v6607
    %v6698 = vadd.f32 %v6130, %v6609
    %v6699 = vadd.f32 %v6131, %v6648
    %v6700 = vadd.f32 %v6132, %v6650
    %v6701 = vadd.f32 %v6133, %v6689
    %v6702 = vadd.f32 %v6134, %v6691
    %v6703 = vld [vmem:[#allocation2 + $0xb] sm:$0x1]
    %v6704 = vld [vmem:[#allocation2 + $0x1b] sm:$0x1]
    %v6705 = vpack.c.bf16 %v6703, %v6703
    %v6706 = vpack.c.bf16 %v6704, %v6704
    %v6707 = vld [vmem:[#allocation9 + $0x1600] sm:$0xff]
    %v6708 = vld [vmem:[#allocation9 + $0x1608] sm:$0xff]
    %v6709 = vld [vmem:[#allocation9 + $0x1610] sm:$0xff]
    %v6710 = vld [vmem:[#allocation9 + $0x1618] sm:$0xff]
    %v6711 = vld [vmem:[#allocation9 + $0x1620] sm:$0xff]
    %v6712 = vld [vmem:[#allocation9 + $0x1628] sm:$0xff]
    %v6713 = vld [vmem:[#allocation9 + $0x1630] sm:$0xff]
    %v6714 = vld [vmem:[#allocation9 + $0x1638] sm:$0xff]
    %v6715 = vld [vmem:[#allocation9 + $0x1640] sm:$0xff]
    %v6716 = vld [vmem:[#allocation9 + $0x1648] sm:$0xff]
    %v6717 = vld [vmem:[#allocation9 + $0x1650] sm:$0xff]
    %v6718 = vld [vmem:[#allocation9 + $0x1658] sm:$0xff]
    %v6719 = vld [vmem:[#allocation9 + $0x1660] sm:$0xff]
    %v6720 = vld [vmem:[#allocation9 + $0x1668] sm:$0xff]
    %v6721 = vld [vmem:[#allocation9 + $0x1670] sm:$0xff]
    %v6722 = vld [vmem:[#allocation9 + $0x1678] sm:$0xff]
    %v6723 = vld [vmem:[#allocation9 + $0x1680] sm:$0xff]
    %v6724 = vld [vmem:[#allocation9 + $0x1688] sm:$0xff]
    %v6725 = vld [vmem:[#allocation9 + $0x1690] sm:$0xff]
    %v6726 = vld [vmem:[#allocation9 + $0x1698] sm:$0xff]
    %v6727 = vld [vmem:[#allocation9 + $0x16a0] sm:$0xff]
    %v6728 = vld [vmem:[#allocation9 + $0x16a8] sm:$0xff]
    %v6729 = vld [vmem:[#allocation9 + $0x16b0] sm:$0xff]
    %v6730 = vld [vmem:[#allocation9 + $0x16b8] sm:$0xff]
    %v6731 = vld [vmem:[#allocation9 + $0x16c0] sm:$0xff]
    %v6732 = vld [vmem:[#allocation9 + $0x16c8] sm:$0xff]
    %v6733 = vld [vmem:[#allocation9 + $0x16d0] sm:$0xff]
    %v6734 = vld [vmem:[#allocation9 + $0x16d8] sm:$0xff]
    %v6735 = vld [vmem:[#allocation9 + $0x16e0] sm:$0xff]
    %v6736 = vld [vmem:[#allocation9 + $0x16e8] sm:$0xff]
    %v6737 = vld [vmem:[#allocation9 + $0x16f0] sm:$0xff]
    %v6738 = vld [vmem:[#allocation9 + $0x16f8] sm:$0xff]
    %v6739 = vld [vmem:[#allocation9 + $0x1700] sm:$0xff]
    %v6740 = vld [vmem:[#allocation9 + $0x1708] sm:$0xff]
    %v6741 = vld [vmem:[#allocation9 + $0x1710] sm:$0xff]
    %v6742 = vld [vmem:[#allocation9 + $0x1718] sm:$0xff]
    %v6743 = vld [vmem:[#allocation9 + $0x1720] sm:$0xff]
    %v6744 = vld [vmem:[#allocation9 + $0x1728] sm:$0xff]
    %v6745 = vld [vmem:[#allocation9 + $0x1730] sm:$0xff]
    %v6746 = vld [vmem:[#allocation9 + $0x1738] sm:$0xff]
    %v6747 = vld [vmem:[#allocation9 + $0x1740] sm:$0xff]
    %v6748 = vld [vmem:[#allocation9 + $0x1748] sm:$0xff]
    %v6749 = vld [vmem:[#allocation9 + $0x1750] sm:$0xff]
    %v6750 = vld [vmem:[#allocation9 + $0x1758] sm:$0xff]
    %v6751 = vld [vmem:[#allocation9 + $0x1760] sm:$0xff]
    %v6752 = vld [vmem:[#allocation9 + $0x1768] sm:$0xff]
    %v6753 = vld [vmem:[#allocation9 + $0x1770] sm:$0xff]
    %v6754 = vld [vmem:[#allocation9 + $0x1778] sm:$0xff]
    %v6755 = vld [vmem:[#allocation9 + $0x1780] sm:$0xff]
    %v6756 = vld [vmem:[#allocation9 + $0x1788] sm:$0xff]
    %v6757 = vld [vmem:[#allocation9 + $0x1790] sm:$0xff]
    %v6758 = vld [vmem:[#allocation9 + $0x1798] sm:$0xff]
    %v6759 = vld [vmem:[#allocation9 + $0x17a0] sm:$0xff]
    %v6760 = vld [vmem:[#allocation9 + $0x17a8] sm:$0xff]
    %v6761 = vld [vmem:[#allocation9 + $0x17b0] sm:$0xff]
    %v6762 = vld [vmem:[#allocation9 + $0x17b8] sm:$0xff]
    %v6763 = vld [vmem:[#allocation9 + $0x17c0] sm:$0xff]
    %v6764 = vld [vmem:[#allocation9 + $0x17c8] sm:$0xff]
    %v6765 = vld [vmem:[#allocation9 + $0x17d0] sm:$0xff]
    %v6766 = vld [vmem:[#allocation9 + $0x17d8] sm:$0xff]
    %v6767 = vld [vmem:[#allocation9 + $0x17e0] sm:$0xff]
    %v6768 = vld [vmem:[#allocation9 + $0x17e8] sm:$0xff]
    %v6769 = vld [vmem:[#allocation9 + $0x17f0] sm:$0xff]
    %v6770 = vld [vmem:[#allocation9 + $0x17f8] sm:$0xff]
    %v6773 = vunpack.c.l.b16 %v6705
    %v6774 = vunpack.c.l.b16 %v6706
    %v6775 = vrot.slane %v6774, 7
    %v6776 = vsel %vm611, %v6775, %v6773
    %v6777 = vpack.c.b16 %v6776, %v6776
    %v6843 = vunpack.c.l.b16 %v6707
    %v6844 = vunpack.c.h.b16 %v6707
    %v6845 = vunpack.c.l.b16 %v6708
    %v6846 = vunpack.c.h.b16 %v6708
    %v6847 = vunpack.c.l.b16 %v6709
    %v6848 = vunpack.c.h.b16 %v6709
    %v6849 = vunpack.c.l.b16 %v6710
    %v6850 = vunpack.c.h.b16 %v6710
    %v6851 = vunpack.c.l.b16 %v6711
    %v6852 = vunpack.c.h.b16 %v6711
    %v6853 = vunpack.c.l.b16 %v6712
    %v6854 = vunpack.c.h.b16 %v6712
    %v6855 = vunpack.c.l.b16 %v6713
    %v6856 = vunpack.c.h.b16 %v6713
    %v6857 = vunpack.c.l.b16 %v6714
    %v6858 = vunpack.c.h.b16 %v6714
    %v6859 = vunpack.c.l.b16 %v6715
    %v6860 = vunpack.c.h.b16 %v6715
    %v6861 = vunpack.c.l.b16 %v6716
    %v6862 = vunpack.c.h.b16 %v6716
    %v6863 = vunpack.c.l.b16 %v6717
    %v6864 = vunpack.c.h.b16 %v6717
    %v6865 = vunpack.c.l.b16 %v6718
    %v6866 = vunpack.c.h.b16 %v6718
    %v6867 = vunpack.c.l.b16 %v6719
    %v6868 = vunpack.c.h.b16 %v6719
    %v6869 = vunpack.c.l.b16 %v6720
    %v6870 = vunpack.c.h.b16 %v6720
    %v6871 = vunpack.c.l.b16 %v6721
    %v6872 = vunpack.c.h.b16 %v6721
    %v6873 = vunpack.c.l.b16 %v6722
    %v6874 = vunpack.c.h.b16 %v6722
    %v6875 = vunpack.c.l.b16 %v6723
    %v6876 = vunpack.c.h.b16 %v6723
    %v6877 = vunpack.c.l.b16 %v6724
    %v6878 = vunpack.c.h.b16 %v6724
    %v6879 = vunpack.c.l.b16 %v6725
    %v6880 = vunpack.c.h.b16 %v6725
    %v6881 = vunpack.c.l.b16 %v6726
    %v6882 = vunpack.c.h.b16 %v6726
    %v6883 = vunpack.c.l.b16 %v6727
    %v6884 = vunpack.c.h.b16 %v6727
    %v6885 = vunpack.c.l.b16 %v6728
    %v6886 = vunpack.c.h.b16 %v6728
    %v6887 = vunpack.c.l.b16 %v6729
    %v6888 = vunpack.c.h.b16 %v6729
    %v6889 = vunpack.c.l.b16 %v6730
    %v6890 = vunpack.c.h.b16 %v6730
    %v6891 = vunpack.c.l.b16 %v6731
    %v6892 = vunpack.c.h.b16 %v6731
    %v6893 = vunpack.c.l.b16 %v6732
    %v6894 = vunpack.c.h.b16 %v6732
    %v6895 = vunpack.c.l.b16 %v6733
    %v6896 = vunpack.c.h.b16 %v6733
    %v6897 = vunpack.c.l.b16 %v6734
    %v6898 = vunpack.c.h.b16 %v6734
    %v6899 = vunpack.c.l.b16 %v6735
    %v6900 = vunpack.c.h.b16 %v6735
    %v6901 = vunpack.c.l.b16 %v6736
    %v6902 = vunpack.c.h.b16 %v6736
    %v6903 = vunpack.c.l.b16 %v6737
    %v6904 = vunpack.c.h.b16 %v6737
    %v6905 = vunpack.c.l.b16 %v6738
    %v6906 = vunpack.c.h.b16 %v6738
    %v6907 = vunpack.c.l.b16 %v6739
    %v6908 = vunpack.c.h.b16 %v6739
    %v6909 = vunpack.c.l.b16 %v6740
    %v6910 = vunpack.c.h.b16 %v6740
    %v6911 = vunpack.c.l.b16 %v6741
    %v6912 = vunpack.c.h.b16 %v6741
    %v6913 = vunpack.c.l.b16 %v6742
    %v6914 = vunpack.c.h.b16 %v6742
    %v6915 = vunpack.c.l.b16 %v6743
    %v6916 = vunpack.c.h.b16 %v6743
    %v6917 = vunpack.c.l.b16 %v6744
    %v6918 = vunpack.c.h.b16 %v6744
    %v6919 = vunpack.c.l.b16 %v6745
    %v6920 = vunpack.c.h.b16 %v6745
    %v6921 = vunpack.c.l.b16 %v6746
    %v6922 = vunpack.c.h.b16 %v6746
    %v6923 = vunpack.c.l.b16 %v6747
    %v6924 = vunpack.c.h.b16 %v6747
    %v6925 = vunpack.c.l.b16 %v6748
    %v6926 = vunpack.c.h.b16 %v6748
    %v6927 = vunpack.c.l.b16 %v6749
    %v6928 = vunpack.c.h.b16 %v6749
    %v6929 = vunpack.c.l.b16 %v6750
    %v6930 = vunpack.c.h.b16 %v6750
    %v6931 = vunpack.c.l.b16 %v6751
    %v6932 = vunpack.c.h.b16 %v6751
    %v6933 = vunpack.c.l.b16 %v6752
    %v6934 = vunpack.c.h.b16 %v6752
    %v6935 = vunpack.c.l.b16 %v6753
    %v6936 = vunpack.c.h.b16 %v6753
    %v6937 = vunpack.c.l.b16 %v6754
    %v6938 = vunpack.c.h.b16 %v6754
    %v6939 = vunpack.c.l.b16 %v6755
    %v6940 = vunpack.c.h.b16 %v6755
    %v6941 = vunpack.c.l.b16 %v6756
    %v6942 = vunpack.c.h.b16 %v6756
    %v6943 = vunpack.c.l.b16 %v6757
    %v6944 = vunpack.c.h.b16 %v6757
    %v6945 = vunpack.c.l.b16 %v6758
    %v6946 = vunpack.c.h.b16 %v6758
    %v6947 = vunpack.c.l.b16 %v6759
    %v6948 = vunpack.c.h.b16 %v6759
    %v6949 = vunpack.c.l.b16 %v6760
    %v6950 = vunpack.c.h.b16 %v6760
    %v6951 = vunpack.c.l.b16 %v6761
    %v6952 = vunpack.c.h.b16 %v6761
    %v6953 = vunpack.c.l.b16 %v6762
    %v6954 = vunpack.c.h.b16 %v6762
    %v6955 = vunpack.c.l.b16 %v6763
    %v6956 = vunpack.c.h.b16 %v6763
    %v6957 = vunpack.c.l.b16 %v6764
    %v6958 = vunpack.c.h.b16 %v6764
    %v6959 = vunpack.c.l.b16 %v6765
    %v6960 = vunpack.c.h.b16 %v6765
    %v6961 = vunpack.c.l.b16 %v6766
    %v6962 = vunpack.c.h.b16 %v6766
    %v6963 = vunpack.c.l.b16 %v6767
    %v6964 = vunpack.c.h.b16 %v6767
    %v6965 = vunpack.c.l.b16 %v6768
    %v6966 = vunpack.c.h.b16 %v6768
    %v6967 = vunpack.c.l.b16 %v6769
    %v6968 = vunpack.c.h.b16 %v6769
    %v6969 = vunpack.c.l.b16 %v6770
    %v6970 = vunpack.c.h.b16 %v6770
    %v6971 = vpack.c.b16 %v6851, %v6843
    %v6972 = vpack.c.b16 %v6852, %v6844
    %v6973 = vpack.c.b16 %v6853, %v6845
    %v6974 = vpack.c.b16 %v6854, %v6846
    %v6975 = vpack.c.b16 %v6855, %v6847
    %v6976 = vpack.c.b16 %v6856, %v6848
    %v6977 = vpack.c.b16 %v6857, %v6849
    %v6978 = vpack.c.b16 %v6858, %v6850
    %v6979 = vpack.c.b16 %v6867, %v6859
    %v6980 = vpack.c.b16 %v6868, %v6860
    %v6981 = vpack.c.b16 %v6869, %v6861
    %v6982 = vpack.c.b16 %v6870, %v6862
    %v6983 = vpack.c.b16 %v6871, %v6863
    %v6984 = vpack.c.b16 %v6872, %v6864
    %v6985 = vpack.c.b16 %v6873, %v6865
    %v6986 = vpack.c.b16 %v6874, %v6866
    %v6987 = vpack.c.b16 %v6883, %v6875
    %v6988 = vpack.c.b16 %v6884, %v6876
    %v6989 = vpack.c.b16 %v6885, %v6877
    %v6990 = vpack.c.b16 %v6886, %v6878
    %v6991 = vpack.c.b16 %v6887, %v6879
    %v6992 = vpack.c.b16 %v6888, %v6880
    %v6993 = vpack.c.b16 %v6889, %v6881
    %v6994 = vpack.c.b16 %v6890, %v6882
    %v6995 = vpack.c.b16 %v6899, %v6891
    %v6996 = vpack.c.b16 %v6900, %v6892
    %v6997 = vpack.c.b16 %v6901, %v6893
    %v6998 = vpack.c.b16 %v6902, %v6894
    %v6999 = vpack.c.b16 %v6903, %v6895
    %v7000 = vpack.c.b16 %v6904, %v6896
    %v7001 = vpack.c.b16 %v6905, %v6897
    %v7002 = vpack.c.b16 %v6906, %v6898
    %v7003 = vpack.c.b16 %v6915, %v6907
    %v7004 = vpack.c.b16 %v6916, %v6908
    %v7005 = vpack.c.b16 %v6917, %v6909
    %v7006 = vpack.c.b16 %v6918, %v6910
    %v7007 = vpack.c.b16 %v6919, %v6911
    %v7008 = vpack.c.b16 %v6920, %v6912
    %v7009 = vpack.c.b16 %v6921, %v6913
    %v7010 = vpack.c.b16 %v6922, %v6914
    %v7011 = vpack.c.b16 %v6931, %v6923
    %v7012 = vpack.c.b16 %v6932, %v6924
    %v7013 = vpack.c.b16 %v6933, %v6925
    %v7014 = vpack.c.b16 %v6934, %v6926
    %v7015 = vpack.c.b16 %v6935, %v6927
    %v7016 = vpack.c.b16 %v6936, %v6928
    %v7017 = vpack.c.b16 %v6937, %v6929
    %v7018 = vpack.c.b16 %v6938, %v6930
    %v7019 = vpack.c.b16 %v6947, %v6939
    %v7020 = vpack.c.b16 %v6948, %v6940
    %v7021 = vpack.c.b16 %v6949, %v6941
    %v7022 = vpack.c.b16 %v6950, %v6942
    %v7023 = vpack.c.b16 %v6951, %v6943
    %v7024 = vpack.c.b16 %v6952, %v6944
    %v7025 = vpack.c.b16 %v6953, %v6945
    %v7026 = vpack.c.b16 %v6954, %v6946
    %v7027 = vpack.c.b16 %v6963, %v6955
    %v7028 = vpack.c.b16 %v6964, %v6956
    %v7029 = vpack.c.b16 %v6965, %v6957
    %v7030 = vpack.c.b16 %v6966, %v6958
    %v7031 = vpack.c.b16 %v6967, %v6959
    %v7032 = vpack.c.b16 %v6968, %v6960
    %v7033 = vpack.c.b16 %v6969, %v6961
    %v7034 = vpack.c.b16 %v6970, %v6962
    %7099 = vmatprep.subr.bf16.mxu0 %v6972
    %7100 = vmatpush1.bf16.msra.mxu0 %v6971
    %7101 = vmatprep.subr.bf16.mxu0 %v6980
    %7102 = vmatpush1.bf16.msra.mxu0 %v6979
    %7103 = vmatprep.subr.bf16.mxu0 %v6988
    %7104 = vmatpush1.bf16.msra.mxu0 %v6987
    %7105 = vmatprep.subr.bf16.mxu0 %v6996
    %7106 = vmatpush1.bf16.msra.mxu0 %v6995
    %7107 = vmatprep.subr.bf16.mxu0 %v7004
    %7108 = vmatpush1.bf16.msra.mxu0 %v7003
    %7109 = vmatprep.subr.bf16.mxu0 %v7012
    %7110 = vmatpush1.bf16.msra.mxu0 %v7011
    %7111 = vmatprep.subr.bf16.mxu0 %v7020
    %7112 = vmatpush1.bf16.msra.mxu0 %v7019
    %7113 = vmatprep.subr.bf16.mxu0 %v7028
    %7114 = vmatpush1.bf16.msra.mxu0 %v7027
    %7115 = vmatprep.subr.bf16.mxu0 0
    %7116 = vmatpush1.bf16.msra.mxu0 0
    %7117 = vmatprep.subr.bf16.mxu0 0
    %7118 = vmatpush1.bf16.msra.mxu0 0
    %7119 = vmatprep.subr.bf16.mxu0 0
    %7120 = vmatpush1.bf16.msra.mxu0 0
    %7121 = vmatprep.subr.bf16.mxu0 0
    %7122 = vmatpush1.bf16.msra.mxu0 0
    %7123 = vmatprep.subr.bf16.mxu0 0
    %7124 = vmatpush1.bf16.msra.mxu0 0
    %7125 = vmatprep.subr.bf16.mxu0 0
    %7126 = vmatpush1.bf16.msra.mxu0 0
    %7127 = vmatprep.subr.bf16.mxu0 0
    %7128 = vmatpush1.bf16.msra.mxu0 0
    %7129 = vmatprep.subr.bf16.mxu0 0
    %7130 = vmatpush1.bf16.msra.mxu0 0
    %7131 = vmatprep.mubr.bf16.mxu0 0
    %7132 = vmatmul.mubr.bf16.gmra.mrb[0].mxu0 %v6777
    %v7133 = vpop.f32.mrb[0].mxu0
    %v7134 = vadd.f32 0.0, %v7133
    %v7135 = vpop.f32.mrb[0].mxu0
    %v7136 = vadd.f32 0.0, %v7135
    %v7137 = vpop.f32.mrb[0].mxu0
    %v7138 = vpop.f32.mrb[0].mxu0
    %7139 = vdwg.mxu0
    %7140 = vmatprep.subr.bf16.mxu0 %v6974
    %7141 = vmatpush1.bf16.msra.mxu0 %v6973
    %7142 = vmatprep.subr.bf16.mxu0 %v6982
    %7143 = vmatpush1.bf16.msra.mxu0 %v6981
    %7144 = vmatprep.subr.bf16.mxu0 %v6990
    %7145 = vmatpush1.bf16.msra.mxu0 %v6989
    %7146 = vmatprep.subr.bf16.mxu0 %v6998
    %7147 = vmatpush1.bf16.msra.mxu0 %v6997
    %7148 = vmatprep.subr.bf16.mxu0 %v7006
    %7149 = vmatpush1.bf16.msra.mxu0 %v7005
    %7150 = vmatprep.subr.bf16.mxu0 %v7014
    %7151 = vmatpush1.bf16.msra.mxu0 %v7013
    %7152 = vmatprep.subr.bf16.mxu0 %v7022
    %7153 = vmatpush1.bf16.msra.mxu0 %v7021
    %7154 = vmatprep.subr.bf16.mxu0 %v7030
    %7155 = vmatpush1.bf16.msra.mxu0 %v7029
    %7156 = vmatprep.subr.bf16.mxu0 0
    %7157 = vmatpush1.bf16.msra.mxu0 0
    %7158 = vmatprep.subr.bf16.mxu0 0
    %7159 = vmatpush1.bf16.msra.mxu0 0
    %7160 = vmatprep.subr.bf16.mxu0 0
    %7161 = vmatpush1.bf16.msra.mxu0 0
    %7162 = vmatprep.subr.bf16.mxu0 0
    %7163 = vmatpush1.bf16.msra.mxu0 0
    %7164 = vmatprep.subr.bf16.mxu0 0
    %7165 = vmatpush1.bf16.msra.mxu0 0
    %7166 = vmatprep.subr.bf16.mxu0 0
    %7167 = vmatpush1.bf16.msra.mxu0 0
    %7168 = vmatprep.subr.bf16.mxu0 0
    %7169 = vmatpush1.bf16.msra.mxu0 0
    %7170 = vmatprep.subr.bf16.mxu0 0
    %7171 = vmatpush1.bf16.msra.mxu0 0
    %7172 = vmatprep.mubr.bf16.mxu0 0
    %7173 = vmatmul.mubr.bf16.gmra.mrb[0].mxu0 %v6777
    %v7174 = vpop.f32.mrb[0].mxu0
    %v7175 = vadd.f32 0.0, %v7174
    %v7176 = vpop.f32.mrb[0].mxu0
    %v7177 = vadd.f32 0.0, %v7176
    %v7178 = vpop.f32.mrb[0].mxu0
    %v7179 = vpop.f32.mrb[0].mxu0
    %7180 = vdwg.mxu0
    %7181 = vmatprep.subr.bf16.mxu0 %v6976
    %7182 = vmatpush1.bf16.msra.mxu0 %v6975
    %7183 = vmatprep.subr.bf16.mxu0 %v6984
    %7184 = vmatpush1.bf16.msra.mxu0 %v6983
    %7185 = vmatprep.subr.bf16.mxu0 %v6992
    %7186 = vmatpush1.bf16.msra.mxu0 %v6991
    %7187 = vmatprep.subr.bf16.mxu0 %v7000
    %7188 = vmatpush1.bf16.msra.mxu0 %v6999
    %7189 = vmatprep.subr.bf16.mxu0 %v7008
    %7190 = vmatpush1.bf16.msra.mxu0 %v7007
    %7191 = vmatprep.subr.bf16.mxu0 %v7016
    %7192 = vmatpush1.bf16.msra.mxu0 %v7015
    %7193 = vmatprep.subr.bf16.mxu0 %v7024
    %7194 = vmatpush1.bf16.msra.mxu0 %v7023
    %7195 = vmatprep.subr.bf16.mxu0 %v7032
    %7196 = vmatpush1.bf16.msra.mxu0 %v7031
    %7197 = vmatprep.subr.bf16.mxu0 0
    %7198 = vmatpush1.bf16.msra.mxu0 0
    %7199 = vmatprep.subr.bf16.mxu0 0
    %7200 = vmatpush1.bf16.msra.mxu0 0
    %7201 = vmatprep.subr.bf16.mxu0 0
    %7202 = vmatpush1.bf16.msra.mxu0 0
    %7203 = vmatprep.subr.bf16.mxu0 0
    %7204 = vmatpush1.bf16.msra.mxu0 0
    %7205 = vmatprep.subr.bf16.mxu0 0
    %7206 = vmatpush1.bf16.msra.mxu0 0
    %7207 = vmatprep.subr.bf16.mxu0 0
    %7208 = vmatpush1.bf16.msra.mxu0 0
    %7209 = vmatprep.subr.bf16.mxu0 0
    %7210 = vmatpush1.bf16.msra.mxu0 0
    %7211 = vmatprep.subr.bf16.mxu0 0
    %7212 = vmatpush1.bf16.msra.mxu0 0
    %7213 = vmatprep.mubr.bf16.mxu0 0
    %7214 = vmatmul.mubr.bf16.gmra.mrb[0].mxu0 %v6777
    %v7215 = vpop.f32.mrb[0].mxu0
    %v7216 = vadd.f32 0.0, %v7215
    %v7217 = vpop.f32.mrb[0].mxu0
    %v7218 = vadd.f32 0.0, %v7217
    %v7219 = vpop.f32.mrb[0].mxu0
    %v7220 = vpop.f32.mrb[0].mxu0
    %7221 = vdwg.mxu0
    %7222 = vmatprep.subr.bf16.mxu0 %v6978
    %7223 = vmatpush1.bf16.msra.mxu0 %v6977
    %7224 = vmatprep.subr.bf16.mxu0 %v6986
    %7225 = vmatpush1.bf16.msra.mxu0 %v6985
    %7226 = vmatprep.subr.bf16.mxu0 %v6994
    %7227 = vmatpush1.bf16.msra.mxu0 %v6993
    %7228 = vmatprep.subr.bf16.mxu0 %v7002
    %7229 = vmatpush1.bf16.msra.mxu0 %v7001
    %7230 = vmatprep.subr.bf16.mxu0 %v7010
    %7231 = vmatpush1.bf16.msra.mxu0 %v7009
    %7232 = vmatprep.subr.bf16.mxu0 %v7018
    %7233 = vmatpush1.bf16.msra.mxu0 %v7017
    %7234 = vmatprep.subr.bf16.mxu0 %v7026
    %7235 = vmatpush1.bf16.msra.mxu0 %v7025
    %7236 = vmatprep.subr.bf16.mxu0 %v7034
    %7237 = vmatpush1.bf16.msra.mxu0 %v7033
    %7238 = vmatprep.subr.bf16.mxu0 0
    %7239 = vmatpush1.bf16.msra.mxu0 0
    %7240 = vmatprep.subr.bf16.mxu0 0
    %7241 = vmatpush1.bf16.msra.mxu0 0
    %7242 = vmatprep.subr.bf16.mxu0 0
    %7243 = vmatpush1.bf16.msra.mxu0 0
    %7244 = vmatprep.subr.bf16.mxu0 0
    %7245 = vmatpush1.bf16.msra.mxu0 0
    %7246 = vmatprep.subr.bf16.mxu0 0
    %7247 = vmatpush1.bf16.msra.mxu0 0
    %7248 = vmatprep.subr.bf16.mxu0 0
    %7249 = vmatpush1.bf16.msra.mxu0 0
    %7250 = vmatprep.subr.bf16.mxu0 0
    %7251 = vmatpush1.bf16.msra.mxu0 0
    %7252 = vmatprep.subr.bf16.mxu0 0
    %7253 = vmatpush1.bf16.msra.mxu0 0
    %7254 = vmatprep.mubr.bf16.mxu0 0
    %7255 = vmatmul.mubr.bf16.gmra.mrb[0].mxu0 %v6777
    %v7256 = vpop.f32.mrb[0].mxu0
    %v7257 = vadd.f32 0.0, %v7256
    %v7258 = vpop.f32.mrb[0].mxu0
    %v7259 = vadd.f32 0.0, %v7258
    %v7260 = vpop.f32.mrb[0].mxu0
    %v7261 = vpop.f32.mrb[0].mxu0
    %7262 = vdwg.mxu0
    %v7263 = vadd.f32 %v6695, %v7134
    %v7264 = vadd.f32 %v6696, %v7136
    %v7265 = vadd.f32 %v6697, %v7175
    %v7266 = vadd.f32 %v6698, %v7177
    %v7267 = vadd.f32 %v6699, %v7216
    %v7268 = vadd.f32 %v6700, %v7218
    %v7269 = vadd.f32 %v6701, %v7257
    %v7270 = vadd.f32 %v6702, %v7259
    %v7271 = vld [vmem:[#allocation2 + $0xc] sm:$0x1]
    %v7272 = vld [vmem:[#allocation2 + $0x1c] sm:$0x1]
    %v7273 = vpack.c.bf16 %v7271, %v7271
    %v7274 = vpack.c.bf16 %v7272, %v7272
    %v7275 = vld [vmem:[#allocation9 + $0x1800] sm:$0xff]
    %v7276 = vld [vmem:[#allocation9 + $0x1808] sm:$0xff]
    %v7277 = vld [vmem:[#allocation9 + $0x1810] sm:$0xff]
    %v7278 = vld [vmem:[#allocation9 + $0x1818] sm:$0xff]
    %v7279 = vld [vmem:[#allocation9 + $0x1820] sm:$0xff]
    %v7280 = vld [vmem:[#allocation9 + $0x1828] sm:$0xff]
    %v7281 = vld [vmem:[#allocation9 + $0x1830] sm:$0xff]
    %v7282 = vld [vmem:[#allocation9 + $0x1838] sm:$0xff]
    %v7283 = vld [vmem:[#allocation9 + $0x1840] sm:$0xff]
    %v7284 = vld [vmem:[#allocation9 + $0x1848] sm:$0xff]
    %v7285 = vld [vmem:[#allocation9 + $0x1850] sm:$0xff]
    %v7286 = vld [vmem:[#allocation9 + $0x1858] sm:$0xff]
    %v7287 = vld [vmem:[#allocation9 + $0x1860] sm:$0xff]
    %v7288 = vld [vmem:[#allocation9 + $0x1868] sm:$0xff]
    %v7289 = vld [vmem:[#allocation9 + $0x1870] sm:$0xff]
    %v7290 = vld [vmem:[#allocation9 + $0x1878] sm:$0xff]
    %v7291 = vld [vmem:[#allocation9 + $0x1880] sm:$0xff]
    %v7292 = vld [vmem:[#allocation9 + $0x1888] sm:$0xff]
    %v7293 = vld [vmem:[#allocation9 + $0x1890] sm:$0xff]
    %v7294 = vld [vmem:[#allocation9 + $0x1898] sm:$0xff]
    %v7295 = vld [vmem:[#allocation9 + $0x18a0] sm:$0xff]
    %v7296 = vld [vmem:[#allocation9 + $0x18a8] sm:$0xff]
    %v7297 = vld [vmem:[#allocation9 + $0x18b0] sm:$0xff]
    %v7298 = vld [vmem:[#allocation9 + $0x18b8] sm:$0xff]
    %v7299 = vld [vmem:[#allocation9 + $0x18c0] sm:$0xff]
    %v7300 = vld [vmem:[#allocation9 + $0x18c8] sm:$0xff]
    %v7301 = vld [vmem:[#allocation9 + $0x18d0] sm:$0xff]
    %v7302 = vld [vmem:[#allocation9 + $0x18d8] sm:$0xff]
    %v7303 = vld [vmem:[#allocation9 + $0x18e0] sm:$0xff]
    %v7304 = vld [vmem:[#allocation9 + $0x18e8] sm:$0xff]
    %v7305 = vld [vmem:[#allocation9 + $0x18f0] sm:$0xff]
    %v7306 = vld [vmem:[#allocation9 + $0x18f8] sm:$0xff]
    %v7307 = vld [vmem:[#allocation9 + $0x1900] sm:$0xff]
    %v7308 = vld [vmem:[#allocation9 + $0x1908] sm:$0xff]
    %v7309 = vld [vmem:[#allocation9 + $0x1910] sm:$0xff]
    %v7310 = vld [vmem:[#allocation9 + $0x1918] sm:$0xff]
    %v7311 = vld [vmem:[#allocation9 + $0x1920] sm:$0xff]
    %v7312 = vld [vmem:[#allocation9 + $0x1928] sm:$0xff]
    %v7313 = vld [vmem:[#allocation9 + $0x1930] sm:$0xff]
    %v7314 = vld [vmem:[#allocation9 + $0x1938] sm:$0xff]
    %v7315 = vld [vmem:[#allocation9 + $0x1940] sm:$0xff]
    %v7316 = vld [vmem:[#allocation9 + $0x1948] sm:$0xff]
    %v7317 = vld [vmem:[#allocation9 + $0x1950] sm:$0xff]
    %v7318 = vld [vmem:[#allocation9 + $0x1958] sm:$0xff]
    %v7319 = vld [vmem:[#allocation9 + $0x1960] sm:$0xff]
    %v7320 = vld [vmem:[#allocation9 + $0x1968] sm:$0xff]
    %v7321 = vld [vmem:[#allocation9 + $0x1970] sm:$0xff]
    %v7322 = vld [vmem:[#allocation9 + $0x1978] sm:$0xff]
    %v7323 = vld [vmem:[#allocation9 + $0x1980] sm:$0xff]
    %v7324 = vld [vmem:[#allocation9 + $0x1988] sm:$0xff]
    %v7325 = vld [vmem:[#allocation9 + $0x1990] sm:$0xff]
    %v7326 = vld [vmem:[#allocation9 + $0x1998] sm:$0xff]
    %v7327 = vld [vmem:[#allocation9 + $0x19a0] sm:$0xff]
    %v7328 = vld [vmem:[#allocation9 + $0x19a8] sm:$0xff]
    %v7329 = vld [vmem:[#allocation9 + $0x19b0] sm:$0xff]
    %v7330 = vld [vmem:[#allocation9 + $0x19b8] sm:$0xff]
    %v7331 = vld [vmem:[#allocation9 + $0x19c0] sm:$0xff]
    %v7332 = vld [vmem:[#allocation9 + $0x19c8] sm:$0xff]
    %v7333 = vld [vmem:[#allocation9 + $0x19d0] sm:$0xff]
    %v7334 = vld [vmem:[#allocation9 + $0x19d8] sm:$0xff]
    %v7335 = vld [vmem:[#allocation9 + $0x19e0] sm:$0xff]
    %v7336 = vld [vmem:[#allocation9 + $0x19e8] sm:$0xff]
    %v7337 = vld [vmem:[#allocation9 + $0x19f0] sm:$0xff]
    %v7338 = vld [vmem:[#allocation9 + $0x19f8] sm:$0xff]
    %v7341 = vunpack.c.l.b16 %v7273
    %v7342 = vunpack.c.l.b16 %v7274
    %v7343 = vrot.slane %v7342, 7
    %v7344 = vsel %vm611, %v7343, %v7341
    %v7345 = vpack.c.b16 %v7344, %v7344
    %v7411 = vunpack.c.l.b16 %v7275
    %v7412 = vunpack.c.h.b16 %v7275
    %v7413 = vunpack.c.l.b16 %v7276
    %v7414 = vunpack.c.h.b16 %v7276
    %v7415 = vunpack.c.l.b16 %v7277
    %v7416 = vunpack.c.h.b16 %v7277
    %v7417 = vunpack.c.l.b16 %v7278
    %v7418 = vunpack.c.h.b16 %v7278
    %v7419 = vunpack.c.l.b16 %v7279
    %v7420 = vunpack.c.h.b16 %v7279
    %v7421 = vunpack.c.l.b16 %v7280
    %v7422 = vunpack.c.h.b16 %v7280
    %v7423 = vunpack.c.l.b16 %v7281
    %v7424 = vunpack.c.h.b16 %v7281
    %v7425 = vunpack.c.l.b16 %v7282
    %v7426 = vunpack.c.h.b16 %v7282
    %v7427 = vunpack.c.l.b16 %v7283
    %v7428 = vunpack.c.h.b16 %v7283
    %v7429 = vunpack.c.l.b16 %v7284
    %v7430 = vunpack.c.h.b16 %v7284
    %v7431 = vunpack.c.l.b16 %v7285
    %v7432 = vunpack.c.h.b16 %v7285
    %v7433 = vunpack.c.l.b16 %v7286
    %v7434 = vunpack.c.h.b16 %v7286
    %v7435 = vunpack.c.l.b16 %v7287
    %v7436 = vunpack.c.h.b16 %v7287
    %v7437 = vunpack.c.l.b16 %v7288
    %v7438 = vunpack.c.h.b16 %v7288
    %v7439 = vunpack.c.l.b16 %v7289
    %v7440 = vunpack.c.h.b16 %v7289
    %v7441 = vunpack.c.l.b16 %v7290
    %v7442 = vunpack.c.h.b16 %v7290
    %v7443 = vunpack.c.l.b16 %v7291
    %v7444 = vunpack.c.h.b16 %v7291
    %v7445 = vunpack.c.l.b16 %v7292
    %v7446 = vunpack.c.h.b16 %v7292
    %v7447 = vunpack.c.l.b16 %v7293
    %v7448 = vunpack.c.h.b16 %v7293
    %v7449 = vunpack.c.l.b16 %v7294
    %v7450 = vunpack.c.h.b16 %v7294
    %v7451 = vunpack.c.l.b16 %v7295
    %v7452 = vunpack.c.h.b16 %v7295
    %v7453 = vunpack.c.l.b16 %v7296
    %v7454 = vunpack.c.h.b16 %v7296
    %v7455 = vunpack.c.l.b16 %v7297
    %v7456 = vunpack.c.h.b16 %v7297
    %v7457 = vunpack.c.l.b16 %v7298
    %v7458 = vunpack.c.h.b16 %v7298
    %v7459 = vunpack.c.l.b16 %v7299
    %v7460 = vunpack.c.h.b16 %v7299
    %v7461 = vunpack.c.l.b16 %v7300
    %v7462 = vunpack.c.h.b16 %v7300
    %v7463 = vunpack.c.l.b16 %v7301
    %v7464 = vunpack.c.h.b16 %v7301
    %v7465 = vunpack.c.l.b16 %v7302
    %v7466 = vunpack.c.h.b16 %v7302
    %v7467 = vunpack.c.l.b16 %v7303
    %v7468 = vunpack.c.h.b16 %v7303
    %v7469 = vunpack.c.l.b16 %v7304
    %v7470 = vunpack.c.h.b16 %v7304
    %v7471 = vunpack.c.l.b16 %v7305
    %v7472 = vunpack.c.h.b16 %v7305
    %v7473 = vunpack.c.l.b16 %v7306
    %v7474 = vunpack.c.h.b16 %v7306
    %v7475 = vunpack.c.l.b16 %v7307
    %v7476 = vunpack.c.h.b16 %v7307
    %v7477 = vunpack.c.l.b16 %v7308
    %v7478 = vunpack.c.h.b16 %v7308
    %v7479 = vunpack.c.l.b16 %v7309
    %v7480 = vunpack.c.h.b16 %v7309
    %v7481 = vunpack.c.l.b16 %v7310
    %v7482 = vunpack.c.h.b16 %v7310
    %v7483 = vunpack.c.l.b16 %v7311
    %v7484 = vunpack.c.h.b16 %v7311
    %v7485 = vunpack.c.l.b16 %v7312
    %v7486 = vunpack.c.h.b16 %v7312
    %v7487 = vunpack.c.l.b16 %v7313
    %v7488 = vunpack.c.h.b16 %v7313
    %v7489 = vunpack.c.l.b16 %v7314
    %v7490 = vunpack.c.h.b16 %v7314
    %v7491 = vunpack.c.l.b16 %v7315
    %v7492 = vunpack.c.h.b16 %v7315
    %v7493 = vunpack.c.l.b16 %v7316
    %v7494 = vunpack.c.h.b16 %v7316
    %v7495 = vunpack.c.l.b16 %v7317
    %v7496 = vunpack.c.h.b16 %v7317
    %v7497 = vunpack.c.l.b16 %v7318
    %v7498 = vunpack.c.h.b16 %v7318
    %v7499 = vunpack.c.l.b16 %v7319
    %v7500 = vunpack.c.h.b16 %v7319
    %v7501 = vunpack.c.l.b16 %v7320
    %v7502 = vunpack.c.h.b16 %v7320
    %v7503 = vunpack.c.l.b16 %v7321
    %v7504 = vunpack.c.h.b16 %v7321
    %v7505 = vunpack.c.l.b16 %v7322
    %v7506 = vunpack.c.h.b16 %v7322
    %v7507 = vunpack.c.l.b16 %v7323
    %v7508 = vunpack.c.h.b16 %v7323
    %v7509 = vunpack.c.l.b16 %v7324
    %v7510 = vunpack.c.h.b16 %v7324
    %v7511 = vunpack.c.l.b16 %v7325
    %v7512 = vunpack.c.h.b16 %v7325
    %v7513 = vunpack.c.l.b16 %v7326
    %v7514 = vunpack.c.h.b16 %v7326
    %v7515 = vunpack.c.l.b16 %v7327
    %v7516 = vunpack.c.h.b16 %v7327
    %v7517 = vunpack.c.l.b16 %v7328
    %v7518 = vunpack.c.h.b16 %v7328
    %v7519 = vunpack.c.l.b16 %v7329
    %v7520 = vunpack.c.h.b16 %v7329
    %v7521 = vunpack.c.l.b16 %v7330
    %v7522 = vunpack.c.h.b16 %v7330
    %v7523 = vunpack.c.l.b16 %v7331
    %v7524 = vunpack.c.h.b16 %v7331
    %v7525 = vunpack.c.l.b16 %v7332
    %v7526 = vunpack.c.h.b16 %v7332
    %v7527 = vunpack.c.l.b16 %v7333
    %v7528 = vunpack.c.h.b16 %v7333
    %v7529 = vunpack.c.l.b16 %v7334
    %v7530 = vunpack.c.h.b16 %v7334
    %v7531 = vunpack.c.l.b16 %v7335
    %v7532 = vunpack.c.h.b16 %v7335
    %v7533 = vunpack.c.l.b16 %v7336
    %v7534 = vunpack.c.h.b16 %v7336
    %v7535 = vunpack.c.l.b16 %v7337
    %v7536 = vunpack.c.h.b16 %v7337
    %v7537 = vunpack.c.l.b16 %v7338
    %v7538 = vunpack.c.h.b16 %v7338
    %v7539 = vpack.c.b16 %v7419, %v7411
    %v7540 = vpack.c.b16 %v7420, %v7412
    %v7541 = vpack.c.b16 %v7421, %v7413
    %v7542 = vpack.c.b16 %v7422, %v7414
    %v7543 = vpack.c.b16 %v7423, %v7415
    %v7544 = vpack.c.b16 %v7424, %v7416
    %v7545 = vpack.c.b16 %v7425, %v7417
    %v7546 = vpack.c.b16 %v7426, %v7418
    %v7547 = vpack.c.b16 %v7435, %v7427
    %v7548 = vpack.c.b16 %v7436, %v7428
    %v7549 = vpack.c.b16 %v7437, %v7429
    %v7550 = vpack.c.b16 %v7438, %v7430
    %v7551 = vpack.c.b16 %v7439, %v7431
    %v7552 = vpack.c.b16 %v7440, %v7432
    %v7553 = vpack.c.b16 %v7441, %v7433
    %v7554 = vpack.c.b16 %v7442, %v7434
    %v7555 = vpack.c.b16 %v7451, %v7443
    %v7556 = vpack.c.b16 %v7452, %v7444
    %v7557 = vpack.c.b16 %v7453, %v7445
    %v7558 = vpack.c.b16 %v7454, %v7446
    %v7559 = vpack.c.b16 %v7455, %v7447
    %v7560 = vpack.c.b16 %v7456, %v7448
    %v7561 = vpack.c.b16 %v7457, %v7449
    %v7562 = vpack.c.b16 %v7458, %v7450
    %v7563 = vpack.c.b16 %v7467, %v7459
    %v7564 = vpack.c.b16 %v7468, %v7460
    %v7565 = vpack.c.b16 %v7469, %v7461
    %v7566 = vpack.c.b16 %v7470, %v7462
    %v7567 = vpack.c.b16 %v7471, %v7463
    %v7568 = vpack.c.b16 %v7472, %v7464
    %v7569 = vpack.c.b16 %v7473, %v7465
    %v7570 = vpack.c.b16 %v7474, %v7466
    %v7571 = vpack.c.b16 %v7483, %v7475
    %v7572 = vpack.c.b16 %v7484, %v7476
    %v7573 = vpack.c.b16 %v7485, %v7477
    %v7574 = vpack.c.b16 %v7486, %v7478
    %v7575 = vpack.c.b16 %v7487, %v7479
    %v7576 = vpack.c.b16 %v7488, %v7480
    %v7577 = vpack.c.b16 %v7489, %v7481
    %v7578 = vpack.c.b16 %v7490, %v7482
    %v7579 = vpack.c.b16 %v7499, %v7491
    %v7580 = vpack.c.b16 %v7500, %v7492
    %v7581 = vpack.c.b16 %v7501, %v7493
    %v7582 = vpack.c.b16 %v7502, %v7494
    %v7583 = vpack.c.b16 %v7503, %v7495
    %v7584 = vpack.c.b16 %v7504, %v7496
    %v7585 = vpack.c.b16 %v7505, %v7497
    %v7586 = vpack.c.b16 %v7506, %v7498
    %v7587 = vpack.c.b16 %v7515, %v7507
    %v7588 = vpack.c.b16 %v7516, %v7508
    %v7589 = vpack.c.b16 %v7517, %v7509
    %v7590 = vpack.c.b16 %v7518, %v7510
    %v7591 = vpack.c.b16 %v7519, %v7511
    %v7592 = vpack.c.b16 %v7520, %v7512
    %v7593 = vpack.c.b16 %v7521, %v7513
    %v7594 = vpack.c.b16 %v7522, %v7514
    %v7595 = vpack.c.b16 %v7531, %v7523
    %v7596 = vpack.c.b16 %v7532, %v7524
    %v7597 = vpack.c.b16 %v7533, %v7525
    %v7598 = vpack.c.b16 %v7534, %v7526
    %v7599 = vpack.c.b16 %v7535, %v7527
    %v7600 = vpack.c.b16 %v7536, %v7528
    %v7601 = vpack.c.b16 %v7537, %v7529
    %v7602 = vpack.c.b16 %v7538, %v7530
    %7667 = vmatprep.subr.bf16.mxu0 %v7540
    %7668 = vmatpush1.bf16.msra.mxu0 %v7539
    %7669 = vmatprep.subr.bf16.mxu0 %v7548
    %7670 = vmatpush1.bf16.msra.mxu0 %v7547
    %7671 = vmatprep.subr.bf16.mxu0 %v7556
    %7672 = vmatpush1.bf16.msra.mxu0 %v7555
    %7673 = vmatprep.subr.bf16.mxu0 %v7564
    %7674 = vmatpush1.bf16.msra.mxu0 %v7563
    %7675 = vmatprep.subr.bf16.mxu0 %v7572
    %7676 = vmatpush1.bf16.msra.mxu0 %v7571
    %7677 = vmatprep.subr.bf16.mxu0 %v7580
    %7678 = vmatpush1.bf16.msra.mxu0 %v7579
    %7679 = vmatprep.subr.bf16.mxu0 %v7588
    %7680 = vmatpush1.bf16.msra.mxu0 %v7587
    %7681 = vmatprep.subr.bf16.mxu0 %v7596
    %7682 = vmatpush1.bf16.msra.mxu0 %v7595
    %7683 = vmatprep.subr.bf16.mxu0 0
    %7684 = vmatpush1.bf16.msra.mxu0 0
    %7685 = vmatprep.subr.bf16.mxu0 0
    %7686 = vmatpush1.bf16.msra.mxu0 0
    %7687 = vmatprep.subr.bf16.mxu0 0
    %7688 = vmatpush1.bf16.msra.mxu0 0
    %7689 = vmatprep.subr.bf16.mxu0 0
    %7690 = vmatpush1.bf16.msra.mxu0 0
    %7691 = vmatprep.subr.bf16.mxu0 0
    %7692 = vmatpush1.bf16.msra.mxu0 0
    %7693 = vmatprep.subr.bf16.mxu0 0
    %7694 = vmatpush1.bf16.msra.mxu0 0
    %7695 = vmatprep.subr.bf16.mxu0 0
    %7696 = vmatpush1.bf16.msra.mxu0 0
    %7697 = vmatprep.subr.bf16.mxu0 0
    %7698 = vmatpush1.bf16.msra.mxu0 0
    %7699 = vmatprep.mubr.bf16.mxu0 0
    %7700 = vmatmul.mubr.bf16.gmra.mrb[0].mxu0 %v7345
    %v7701 = vpop.f32.mrb[0].mxu0
    %v7702 = vadd.f32 0.0, %v7701
    %v7703 = vpop.f32.mrb[0].mxu0
    %v7704 = vadd.f32 0.0, %v7703
    %v7705 = vpop.f32.mrb[0].mxu0
    %v7706 = vpop.f32.mrb[0].mxu0
    %7707 = vdwg.mxu0
    %7708 = vmatprep.subr.bf16.mxu0 %v7542
    %7709 = vmatpush1.bf16.msra.mxu0 %v7541
    %7710 = vmatprep.subr.bf16.mxu0 %v7550
    %7711 = vmatpush1.bf16.msra.mxu0 %v7549
    %7712 = vmatprep.subr.bf16.mxu0 %v7558
    %7713 = vmatpush1.bf16.msra.mxu0 %v7557
    %7714 = vmatprep.subr.bf16.mxu0 %v7566
    %7715 = vmatpush1.bf16.msra.mxu0 %v7565
    %7716 = vmatprep.subr.bf16.mxu0 %v7574
    %7717 = vmatpush1.bf16.msra.mxu0 %v7573
    %7718 = vmatprep.subr.bf16.mxu0 %v7582
    %7719 = vmatpush1.bf16.msra.mxu0 %v7581
    %7720 = vmatprep.subr.bf16.mxu0 %v7590
    %7721 = vmatpush1.bf16.msra.mxu0 %v7589
    %7722 = vmatprep.subr.bf16.mxu0 %v7598
    %7723 = vmatpush1.bf16.msra.mxu0 %v7597
    %7724 = vmatprep.subr.bf16.mxu0 0
    %7725 = vmatpush1.bf16.msra.mxu0 0
    %7726 = vmatprep.subr.bf16.mxu0 0
    %7727 = vmatpush1.bf16.msra.mxu0 0
    %7728 = vmatprep.subr.bf16.mxu0 0
    %7729 = vmatpush1.bf16.msra.mxu0 0
    %7730 = vmatprep.subr.bf16.mxu0 0
    %7731 = vmatpush1.bf16.msra.mxu0 0
    %7732 = vmatprep.subr.bf16.mxu0 0
    %7733 = vmatpush1.bf16.msra.mxu0 0
    %7734 = vmatprep.subr.bf16.mxu0 0
    %7735 = vmatpush1.bf16.msra.mxu0 0
    %7736 = vmatprep.subr.bf16.mxu0 0
    %7737 = vmatpush1.bf16.msra.mxu0 0
    %7738 = vmatprep.subr.bf16.mxu0 0
    %7739 = vmatpush1.bf16.msra.mxu0 0
    %7740 = vmatprep.mubr.bf16.mxu0 0
    %7741 = vmatmul.mubr.bf16.gmra.mrb[0].mxu0 %v7345
    %v7742 = vpop.f32.mrb[0].mxu0
    %v7743 = vadd.f32 0.0, %v7742
    %v7744 = vpop.f32.mrb[0].mxu0
    %v7745 = vadd.f32 0.0, %v7744
    %v7746 = vpop.f32.mrb[0].mxu0
    %v7747 = vpop.f32.mrb[0].mxu0
    %7748 = vdwg.mxu0
    %7749 = vmatprep.subr.bf16.mxu0 %v7544
    %7750 = vmatpush1.bf16.msra.mxu0 %v7543
    %7751 = vmatprep.subr.bf16.mxu0 %v7552
    %7752 = vmatpush1.bf16.msra.mxu0 %v7551
    %7753 = vmatprep.subr.bf16.mxu0 %v7560
    %7754 = vmatpush1.bf16.msra.mxu0 %v7559
    %7755 = vmatprep.subr.bf16.mxu0 %v7568
    %7756 = vmatpush1.bf16.msra.mxu0 %v7567
    %7757 = vmatprep.subr.bf16.mxu0 %v7576
    %7758 = vmatpush1.bf16.msra.mxu0 %v7575
    %7759 = vmatprep.subr.bf16.mxu0 %v7584
    %7760 = vmatpush1.bf16.msra.mxu0 %v7583
    %7761 = vmatprep.subr.bf16.mxu0 %v7592
    %7762 = vmatpush1.bf16.msra.mxu0 %v7591
    %7763 = vmatprep.subr.bf16.mxu0 %v7600
    %7764 = vmatpush1.bf16.msra.mxu0 %v7599
    %7765 = vmatprep.subr.bf16.mxu0 0
    %7766 = vmatpush1.bf16.msra.mxu0 0
    %7767 = vmatprep.subr.bf16.mxu0 0
    %7768 = vmatpush1.bf16.msra.mxu0 0
    %7769 = vmatprep.subr.bf16.mxu0 0
    %7770 = vmatpush1.bf16.msra.mxu0 0
    %7771 = vmatprep.subr.bf16.mxu0 0
    %7772 = vmatpush1.bf16.msra.mxu0 0
    %7773 = vmatprep.subr.bf16.mxu0 0
    %7774 = vmatpush1.bf16.msra.mxu0 0
    %7775 = vmatprep.subr.bf16.mxu0 0
    %7776 = vmatpush1.bf16.msra.mxu0 0
    %7777 = vmatprep.subr.bf16.mxu0 0
    %7778 = vmatpush1.bf16.msra.mxu0 0
    %7779 = vmatprep.subr.bf16.mxu0 0
    %7780 = vmatpush1.bf16.msra.mxu0 0
    %7781 = vmatprep.mubr.bf16.mxu0 0
    %7782 = vmatmul.mubr.bf16.gmra.mrb[0].mxu0 %v7345
    %v7783 = vpop.f32.mrb[0].mxu0
    %v7784 = vadd.f32 0.0, %v7783
    %v7785 = vpop.f32.mrb[0].mxu0
    %v7786 = vadd.f32 0.0, %v7785
    %v7787 = vpop.f32.mrb[0].mxu0
    %v7788 = vpop.f32.mrb[0].mxu0
    %7789 = vdwg.mxu0
    %7790 = vmatprep.subr.bf16.mxu0 %v7546
    %7791 = vmatpush1.bf16.msra.mxu0 %v7545
    %7792 = vmatprep.subr.bf16.mxu0 %v7554
    %7793 = vmatpush1.bf16.msra.mxu0 %v7553
    %7794 = vmatprep.subr.bf16.mxu0 %v7562
    %7795 = vmatpush1.bf16.msra.mxu0 %v7561
    %7796 = vmatprep.subr.bf16.mxu0 %v7570
    %7797 = vmatpush1.bf16.msra.mxu0 %v7569
    %7798 = vmatprep.subr.bf16.mxu0 %v7578
    %7799 = vmatpush1.bf16.msra.mxu0 %v7577
    %7800 = vmatprep.subr.bf16.mxu0 %v7586
    %7801 = vmatpush1.bf16.msra.mxu0 %v7585
    %7802 = vmatprep.subr.bf16.mxu0 %v7594
    %7803 = vmatpush1.bf16.msra.mxu0 %v7593
    %7804 = vmatprep.subr.bf16.mxu0 %v7602
    %7805 = vmatpush1.bf16.msra.mxu0 %v7601
    %7806 = vmatprep.subr.bf16.mxu0 0
    %7807 = vmatpush1.bf16.msra.mxu0 0
    %7808 = vmatprep.subr.bf16.mxu0 0
    %7809 = vmatpush1.bf16.msra.mxu0 0
    %7810 = vmatprep.subr.bf16.mxu0 0
    %7811 = vmatpush1.bf16.msra.mxu0 0
    %7812 = vmatprep.subr.bf16.mxu0 0
    %7813 = vmatpush1.bf16.msra.mxu0 0
    %7814 = vmatprep.subr.bf16.mxu0 0
    %7815 = vmatpush1.bf16.msra.mxu0 0
    %7816 = vmatprep.subr.bf16.mxu0 0
    %7817 = vmatpush1.bf16.msra.mxu0 0
    %7818 = vmatprep.subr.bf16.mxu0 0
    %7819 = vmatpush1.bf16.msra.mxu0 0
    %7820 = vmatprep.subr.bf16.mxu0 0
    %7821 = vmatpush1.bf16.msra.mxu0 0
    %7822 = vmatprep.mubr.bf16.mxu0 0
    %7823 = vmatmul.mubr.bf16.gmra.mrb[0].mxu0 %v7345
    %v7824 = vpop.f32.mrb[0].mxu0
    %v7825 = vadd.f32 0.0, %v7824
    %v7826 = vpop.f32.mrb[0].mxu0
    %v7827 = vadd.f32 0.0, %v7826
    %v7828 = vpop.f32.mrb[0].mxu0
    %v7829 = vpop.f32.mrb[0].mxu0
    %7830 = vdwg.mxu0
    %v7831 = vadd.f32 %v7263, %v7702
    %v7832 = vadd.f32 %v7264, %v7704
    %v7833 = vadd.f32 %v7265, %v7743
    %v7834 = vadd.f32 %v7266, %v7745
    %v7835 = vadd.f32 %v7267, %v7784
    %v7836 = vadd.f32 %v7268, %v7786
    %v7837 = vadd.f32 %v7269, %v7825
    %v7838 = vadd.f32 %v7270, %v7827
    %v7839 = vld [vmem:[#allocation2 + $0xd] sm:$0x1]
    %v7840 = vld [vmem:[#allocation2 + $0x1d] sm:$0x1]
    %v7841 = vpack.c.bf16 %v7839, %v7839
    %v7842 = vpack.c.bf16 %v7840, %v7840
    %v7843 = vld [vmem:[#allocation9 + $0x1a00] sm:$0xff]
    %v7844 = vld [vmem:[#allocation9 + $0x1a08] sm:$0xff]
    %v7845 = vld [vmem:[#allocation9 + $0x1a10] sm:$0xff]
    %v7846 = vld [vmem:[#allocation9 + $0x1a18] sm:$0xff]
    %v7847 = vld [vmem:[#allocation9 + $0x1a20] sm:$0xff]
    %v7848 = vld [vmem:[#allocation9 + $0x1a28] sm:$0xff]
    %v7849 = vld [vmem:[#allocation9 + $0x1a30] sm:$0xff]
    %v7850 = vld [vmem:[#allocation9 + $0x1a38] sm:$0xff]
    %v7851 = vld [vmem:[#allocation9 + $0x1a40] sm:$0xff]
    %v7852 = vld [vmem:[#allocation9 + $0x1a48] sm:$0xff]
    %v7853 = vld [vmem:[#allocation9 + $0x1a50] sm:$0xff]
    %v7854 = vld [vmem:[#allocation9 + $0x1a58] sm:$0xff]
    %v7855 = vld [vmem:[#allocation9 + $0x1a60] sm:$0xff]
    %v7856 = vld [vmem:[#allocation9 + $0x1a68] sm:$0xff]
    %v7857 = vld [vmem:[#allocation9 + $0x1a70] sm:$0xff]
    %v7858 = vld [vmem:[#allocation9 + $0x1a78] sm:$0xff]
    %v7859 = vld [vmem:[#allocation9 + $0x1a80] sm:$0xff]
    %v7860 = vld [vmem:[#allocation9 + $0x1a88] sm:$0xff]
    %v7861 = vld [vmem:[#allocation9 + $0x1a90] sm:$0xff]
    %v7862 = vld [vmem:[#allocation9 + $0x1a98] sm:$0xff]
    %v7863 = vld [vmem:[#allocation9 + $0x1aa0] sm:$0xff]
    %v7864 = vld [vmem:[#allocation9 + $0x1aa8] sm:$0xff]
    %v7865 = vld [vmem:[#allocation9 + $0x1ab0] sm:$0xff]
    %v7866 = vld [vmem:[#allocation9 + $0x1ab8] sm:$0xff]
    %v7867 = vld [vmem:[#allocation9 + $0x1ac0] sm:$0xff]
    %v7868 = vld [vmem:[#allocation9 + $0x1ac8] sm:$0xff]
    %v7869 = vld [vmem:[#allocation9 + $0x1ad0] sm:$0xff]
    %v7870 = vld [vmem:[#allocation9 + $0x1ad8] sm:$0xff]
    %v7871 = vld [vmem:[#allocation9 + $0x1ae0] sm:$0xff]
    %v7872 = vld [vmem:[#allocation9 + $0x1ae8] sm:$0xff]
    %v7873 = vld [vmem:[#allocation9 + $0x1af0] sm:$0xff]
    %v7874 = vld [vmem:[#allocation9 + $0x1af8] sm:$0xff]
    %v7875 = vld [vmem:[#allocation9 + $0x1b00] sm:$0xff]
    %v7876 = vld [vmem:[#allocation9 + $0x1b08] sm:$0xff]
    %v7877 = vld [vmem:[#allocation9 + $0x1b10] sm:$0xff]
    %v7878 = vld [vmem:[#allocation9 + $0x1b18] sm:$0xff]
    %v7879 = vld [vmem:[#allocation9 + $0x1b20] sm:$0xff]
    %v7880 = vld [vmem:[#allocation9 + $0x1b28] sm:$0xff]
    %v7881 = vld [vmem:[#allocation9 + $0x1b30] sm:$0xff]
    %v7882 = vld [vmem:[#allocation9 + $0x1b38] sm:$0xff]
    %v7883 = vld [vmem:[#allocation9 + $0x1b40] sm:$0xff]
    %v7884 = vld [vmem:[#allocation9 + $0x1b48] sm:$0xff]
    %v7885 = vld [vmem:[#allocation9 + $0x1b50] sm:$0xff]
    %v7886 = vld [vmem:[#allocation9 + $0x1b58] sm:$0xff]
    %v7887 = vld [vmem:[#allocation9 + $0x1b60] sm:$0xff]
    %v7888 = vld [vmem:[#allocation9 + $0x1b68] sm:$0xff]
    %v7889 = vld [vmem:[#allocation9 + $0x1b70] sm:$0xff]
    %v7890 = vld [vmem:[#allocation9 + $0x1b78] sm:$0xff]
    %v7891 = vld [vmem:[#allocation9 + $0x1b80] sm:$0xff]
    %v7892 = vld [vmem:[#allocation9 + $0x1b88] sm:$0xff]
    %v7893 = vld [vmem:[#allocation9 + $0x1b90] sm:$0xff]
    %v7894 = vld [vmem:[#allocation9 + $0x1b98] sm:$0xff]
    %v7895 = vld [vmem:[#allocation9 + $0x1ba0] sm:$0xff]
    %v7896 = vld [vmem:[#allocation9 + $0x1ba8] sm:$0xff]
    %v7897 = vld [vmem:[#allocation9 + $0x1bb0] sm:$0xff]
    %v7898 = vld [vmem:[#allocation9 + $0x1bb8] sm:$0xff]
    %v7899 = vld [vmem:[#allocation9 + $0x1bc0] sm:$0xff]
    %v7900 = vld [vmem:[#allocation9 + $0x1bc8] sm:$0xff]
    %v7901 = vld [vmem:[#allocation9 + $0x1bd0] sm:$0xff]
    %v7902 = vld [vmem:[#allocation9 + $0x1bd8] sm:$0xff]
    %v7903 = vld [vmem:[#allocation9 + $0x1be0] sm:$0xff]
    %v7904 = vld [vmem:[#allocation9 + $0x1be8] sm:$0xff]
    %v7905 = vld [vmem:[#allocation9 + $0x1bf0] sm:$0xff]
    %v7906 = vld [vmem:[#allocation9 + $0x1bf8] sm:$0xff]
    %v7909 = vunpack.c.l.b16 %v7841
    %v7910 = vunpack.c.l.b16 %v7842
    %v7911 = vrot.slane %v7910, 7
    %v7912 = vsel %vm611, %v7911, %v7909
    %v7913 = vpack.c.b16 %v7912, %v7912
    %v7979 = vunpack.c.l.b16 %v7843
    %v7980 = vunpack.c.h.b16 %v7843
    %v7981 = vunpack.c.l.b16 %v7844
    %v7982 = vunpack.c.h.b16 %v7844
    %v7983 = vunpack.c.l.b16 %v7845
    %v7984 = vunpack.c.h.b16 %v7845
    %v7985 = vunpack.c.l.b16 %v7846
    %v7986 = vunpack.c.h.b16 %v7846
    %v7987 = vunpack.c.l.b16 %v7847
    %v7988 = vunpack.c.h.b16 %v7847
    %v7989 = vunpack.c.l.b16 %v7848
    %v7990 = vunpack.c.h.b16 %v7848
    %v7991 = vunpack.c.l.b16 %v7849
    %v7992 = vunpack.c.h.b16 %v7849
    %v7993 = vunpack.c.l.b16 %v7850
    %v7994 = vunpack.c.h.b16 %v7850
    %v7995 = vunpack.c.l.b16 %v7851
    %v7996 = vunpack.c.h.b16 %v7851
    %v7997 = vunpack.c.l.b16 %v7852
    %v7998 = vunpack.c.h.b16 %v7852
    %v7999 = vunpack.c.l.b16 %v7853
    %v8000 = vunpack.c.h.b16 %v7853
    %v8001 = vunpack.c.l.b16 %v7854
    %v8002 = vunpack.c.h.b16 %v7854
    %v8003 = vunpack.c.l.b16 %v7855
    %v8004 = vunpack.c.h.b16 %v7855
    %v8005 = vunpack.c.l.b16 %v7856
    %v8006 = vunpack.c.h.b16 %v7856
    %v8007 = vunpack.c.l.b16 %v7857
    %v8008 = vunpack.c.h.b16 %v7857
    %v8009 = vunpack.c.l.b16 %v7858
    %v8010 = vunpack.c.h.b16 %v7858
    %v8011 = vunpack.c.l.b16 %v7859
    %v8012 = vunpack.c.h.b16 %v7859
    %v8013 = vunpack.c.l.b16 %v7860
    %v8014 = vunpack.c.h.b16 %v7860
    %v8015 = vunpack.c.l.b16 %v7861
    %v8016 = vunpack.c.h.b16 %v7861
    %v8017 = vunpack.c.l.b16 %v7862
    %v8018 = vunpack.c.h.b16 %v7862
    %v8019 = vunpack.c.l.b16 %v7863
    %v8020 = vunpack.c.h.b16 %v7863
    %v8021 = vunpack.c.l.b16 %v7864
    %v8022 = vunpack.c.h.b16 %v7864
    %v8023 = vunpack.c.l.b16 %v7865
    %v8024 = vunpack.c.h.b16 %v7865
    %v8025 = vunpack.c.l.b16 %v7866
    %v8026 = vunpack.c.h.b16 %v7866
    %v8027 = vunpack.c.l.b16 %v7867
    %v8028 = vunpack.c.h.b16 %v7867
    %v8029 = vunpack.c.l.b16 %v7868
    %v8030 = vunpack.c.h.b16 %v7868
    %v8031 = vunpack.c.l.b16 %v7869
    %v8032 = vunpack.c.h.b16 %v7869
    %v8033 = vunpack.c.l.b16 %v7870
    %v8034 = vunpack.c.h.b16 %v7870
    %v8035 = vunpack.c.l.b16 %v7871
    %v8036 = vunpack.c.h.b16 %v7871
    %v8037 = vunpack.c.l.b16 %v7872
    %v8038 = vunpack.c.h.b16 %v7872
    %v8039 = vunpack.c.l.b16 %v7873
    %v8040 = vunpack.c.h.b16 %v7873
    %v8041 = vunpack.c.l.b16 %v7874
    %v8042 = vunpack.c.h.b16 %v7874
    %v8043 = vunpack.c.l.b16 %v7875
    %v8044 = vunpack.c.h.b16 %v7875
    %v8045 = vunpack.c.l.b16 %v7876
    %v8046 = vunpack.c.h.b16 %v7876
    %v8047 = vunpack.c.l.b16 %v7877
    %v8048 = vunpack.c.h.b16 %v7877
    %v8049 = vunpack.c.l.b16 %v7878
    %v8050 = vunpack.c.h.b16 %v7878
    %v8051 = vunpack.c.l.b16 %v7879
    %v8052 = vunpack.c.h.b16 %v7879
    %v8053 = vunpack.c.l.b16 %v7880
    %v8054 = vunpack.c.h.b16 %v7880
    %v8055 = vunpack.c.l.b16 %v7881
    %v8056 = vunpack.c.h.b16 %v7881
    %v8057 = vunpack.c.l.b16 %v7882
    %v8058 = vunpack.c.h.b16 %v7882
    %v8059 = vunpack.c.l.b16 %v7883
    %v8060 = vunpack.c.h.b16 %v7883
    %v8061 = vunpack.c.l.b16 %v7884
    %v8062 = vunpack.c.h.b16 %v7884
    %v8063 = vunpack.c.l.b16 %v7885
    %v8064 = vunpack.c.h.b16 %v7885
    %v8065 = vunpack.c.l.b16 %v7886
    %v8066 = vunpack.c.h.b16 %v7886
    %v8067 = vunpack.c.l.b16 %v7887
    %v8068 = vunpack.c.h.b16 %v7887
    %v8069 = vunpack.c.l.b16 %v7888
    %v8070 = vunpack.c.h.b16 %v7888
    %v8071 = vunpack.c.l.b16 %v7889
    %v8072 = vunpack.c.h.b16 %v7889
    %v8073 = vunpack.c.l.b16 %v7890
    %v8074 = vunpack.c.h.b16 %v7890
    %v8075 = vunpack.c.l.b16 %v7891
    %v8076 = vunpack.c.h.b16 %v7891
    %v8077 = vunpack.c.l.b16 %v7892
    %v8078 = vunpack.c.h.b16 %v7892
    %v8079 = vunpack.c.l.b16 %v7893
    %v8080 = vunpack.c.h.b16 %v7893
    %v8081 = vunpack.c.l.b16 %v7894
    %v8082 = vunpack.c.h.b16 %v7894
    %v8083 = vunpack.c.l.b16 %v7895
    %v8084 = vunpack.c.h.b16 %v7895
    %v8085 = vunpack.c.l.b16 %v7896
    %v8086 = vunpack.c.h.b16 %v7896
    %v8087 = vunpack.c.l.b16 %v7897
    %v8088 = vunpack.c.h.b16 %v7897
    %v8089 = vunpack.c.l.b16 %v7898
    %v8090 = vunpack.c.h.b16 %v7898
    %v8091 = vunpack.c.l.b16 %v7899
    %v8092 = vunpack.c.h.b16 %v7899
    %v8093 = vunpack.c.l.b16 %v7900
    %v8094 = vunpack.c.h.b16 %v7900
    %v8095 = vunpack.c.l.b16 %v7901
    %v8096 = vunpack.c.h.b16 %v7901
    %v8097 = vunpack.c.l.b16 %v7902
    %v8098 = vunpack.c.h.b16 %v7902
    %v8099 = vunpack.c.l.b16 %v7903
    %v8100 = vunpack.c.h.b16 %v7903
    %v8101 = vunpack.c.l.b16 %v7904
    %v8102 = vunpack.c.h.b16 %v7904
    %v8103 = vunpack.c.l.b16 %v7905
    %v8104 = vunpack.c.h.b16 %v7905
    %v8105 = vunpack.c.l.b16 %v7906
    %v8106 = vunpack.c.h.b16 %v7906
    %v8107 = vpack.c.b16 %v7987, %v7979
    %v8108 = vpack.c.b16 %v7988, %v7980
    %v8109 = vpack.c.b16 %v7989, %v7981
    %v8110 = vpack.c.b16 %v7990, %v7982
    %v8111 = vpack.c.b16 %v7991, %v7983
    %v8112 = vpack.c.b16 %v7992, %v7984
    %v8113 = vpack.c.b16 %v7993, %v7985
    %v8114 = vpack.c.b16 %v7994, %v7986
    %v8115 = vpack.c.b16 %v8003, %v7995
    %v8116 = vpack.c.b16 %v8004, %v7996
    %v8117 = vpack.c.b16 %v8005, %v7997
    %v8118 = vpack.c.b16 %v8006, %v7998
    %v8119 = vpack.c.b16 %v8007, %v7999
    %v8120 = vpack.c.b16 %v8008, %v8000
    %v8121 = vpack.c.b16 %v8009, %v8001
    %v8122 = vpack.c.b16 %v8010, %v8002
    %v8123 = vpack.c.b16 %v8019, %v8011
    %v8124 = vpack.c.b16 %v8020, %v8012
    %v8125 = vpack.c.b16 %v8021, %v8013
    %v8126 = vpack.c.b16 %v8022, %v8014
    %v8127 = vpack.c.b16 %v8023, %v8015
    %v8128 = vpack.c.b16 %v8024, %v8016
    %v8129 = vpack.c.b16 %v8025, %v8017
    %v8130 = vpack.c.b16 %v8026, %v8018
    %v8131 = vpack.c.b16 %v8035, %v8027
    %v8132 = vpack.c.b16 %v8036, %v8028
    %v8133 = vpack.c.b16 %v8037, %v8029
    %v8134 = vpack.c.b16 %v8038, %v8030
    %v8135 = vpack.c.b16 %v8039, %v8031
    %v8136 = vpack.c.b16 %v8040, %v8032
    %v8137 = vpack.c.b16 %v8041, %v8033
    %v8138 = vpack.c.b16 %v8042, %v8034
    %v8139 = vpack.c.b16 %v8051, %v8043
    %v8140 = vpack.c.b16 %v8052, %v8044
    %v8141 = vpack.c.b16 %v8053, %v8045
    %v8142 = vpack.c.b16 %v8054, %v8046
    %v8143 = vpack.c.b16 %v8055, %v8047
    %v8144 = vpack.c.b16 %v8056, %v8048
    %v8145 = vpack.c.b16 %v8057, %v8049
    %v8146 = vpack.c.b16 %v8058, %v8050
    %v8147 = vpack.c.b16 %v8067, %v8059
    %v8148 = vpack.c.b16 %v8068, %v8060
    %v8149 = vpack.c.b16 %v8069, %v8061
    %v8150 = vpack.c.b16 %v8070, %v8062
    %v8151 = vpack.c.b16 %v8071, %v8063
    %v8152 = vpack.c.b16 %v8072, %v8064
    %v8153 = vpack.c.b16 %v8073, %v8065
    %v8154 = vpack.c.b16 %v8074, %v8066
    %v8155 = vpack.c.b16 %v8083, %v8075
    %v8156 = vpack.c.b16 %v8084, %v8076
    %v8157 = vpack.c.b16 %v8085, %v8077
    %v8158 = vpack.c.b16 %v8086, %v8078
    %v8159 = vpack.c.b16 %v8087, %v8079
    %v8160 = vpack.c.b16 %v8088, %v8080
    %v8161 = vpack.c.b16 %v8089, %v8081
    %v8162 = vpack.c.b16 %v8090, %v8082
    %v8163 = vpack.c.b16 %v8099, %v8091
    %v8164 = vpack.c.b16 %v8100, %v8092
    %v8165 = vpack.c.b16 %v8101, %v8093
    %v8166 = vpack.c.b16 %v8102, %v8094
    %v8167 = vpack.c.b16 %v8103, %v8095
    %v8168 = vpack.c.b16 %v8104, %v8096
    %v8169 = vpack.c.b16 %v8105, %v8097
    %v8170 = vpack.c.b16 %v8106, %v8098
    %8235 = vmatprep.subr.bf16.mxu0 %v8108
    %8236 = vmatpush1.bf16.msra.mxu0 %v8107
    %8237 = vmatprep.subr.bf16.mxu0 %v8116
    %8238 = vmatpush1.bf16.msra.mxu0 %v8115
    %8239 = vmatprep.subr.bf16.mxu0 %v8124
    %8240 = vmatpush1.bf16.msra.mxu0 %v8123
    %8241 = vmatprep.subr.bf16.mxu0 %v8132
    %8242 = vmatpush1.bf16.msra.mxu0 %v8131
    %8243 = vmatprep.subr.bf16.mxu0 %v8140
    %8244 = vmatpush1.bf16.msra.mxu0 %v8139
    %8245 = vmatprep.subr.bf16.mxu0 %v8148
    %8246 = vmatpush1.bf16.msra.mxu0 %v8147
    %8247 = vmatprep.subr.bf16.mxu0 %v8156
    %8248 = vmatpush1.bf16.msra.mxu0 %v8155
    %8249 = vmatprep.subr.bf16.mxu0 %v8164
    %8250 = vmatpush1.bf16.msra.mxu0 %v8163
    %8251 = vmatprep.subr.bf16.mxu0 0
    %8252 = vmatpush1.bf16.msra.mxu0 0
    %8253 = vmatprep.subr.bf16.mxu0 0
    %8254 = vmatpush1.bf16.msra.mxu0 0
    %8255 = vmatprep.subr.bf16.mxu0 0
    %8256 = vmatpush1.bf16.msra.mxu0 0
    %8257 = vmatprep.subr.bf16.mxu0 0
    %8258 = vmatpush1.bf16.msra.mxu0 0
    %8259 = vmatprep.subr.bf16.mxu0 0
    %8260 = vmatpush1.bf16.msra.mxu0 0
    %8261 = vmatprep.subr.bf16.mxu0 0
    %8262 = vmatpush1.bf16.msra.mxu0 0
    %8263 = vmatprep.subr.bf16.mxu0 0
    %8264 = vmatpush1.bf16.msra.mxu0 0
    %8265 = vmatprep.subr.bf16.mxu0 0
    %8266 = vmatpush1.bf16.msra.mxu0 0
    %8267 = vmatprep.mubr.bf16.mxu0 0
    %8268 = vmatmul.mubr.bf16.gmra.mrb[0].mxu0 %v7913
    %v8269 = vpop.f32.mrb[0].mxu0
    %v8270 = vadd.f32 0.0, %v8269
    %v8271 = vpop.f32.mrb[0].mxu0
    %v8272 = vadd.f32 0.0, %v8271
    %v8273 = vpop.f32.mrb[0].mxu0
    %v8274 = vpop.f32.mrb[0].mxu0
    %8275 = vdwg.mxu0
    %8276 = vmatprep.subr.bf16.mxu0 %v8110
    %8277 = vmatpush1.bf16.msra.mxu0 %v8109
    %8278 = vmatprep.subr.bf16.mxu0 %v8118
    %8279 = vmatpush1.bf16.msra.mxu0 %v8117
    %8280 = vmatprep.subr.bf16.mxu0 %v8126
    %8281 = vmatpush1.bf16.msra.mxu0 %v8125
    %8282 = vmatprep.subr.bf16.mxu0 %v8134
    %8283 = vmatpush1.bf16.msra.mxu0 %v8133
    %8284 = vmatprep.subr.bf16.mxu0 %v8142
    %8285 = vmatpush1.bf16.msra.mxu0 %v8141
    %8286 = vmatprep.subr.bf16.mxu0 %v8150
    %8287 = vmatpush1.bf16.msra.mxu0 %v8149
    %8288 = vmatprep.subr.bf16.mxu0 %v8158
    %8289 = vmatpush1.bf16.msra.mxu0 %v8157
    %8290 = vmatprep.subr.bf16.mxu0 %v8166
    %8291 = vmatpush1.bf16.msra.mxu0 %v8165
    %8292 = vmatprep.subr.bf16.mxu0 0
    %8293 = vmatpush1.bf16.msra.mxu0 0
    %8294 = vmatprep.subr.bf16.mxu0 0
    %8295 = vmatpush1.bf16.msra.mxu0 0
    %8296 = vmatprep.subr.bf16.mxu0 0
    %8297 = vmatpush1.bf16.msra.mxu0 0
    %8298 = vmatprep.subr.bf16.mxu0 0
    %8299 = vmatpush1.bf16.msra.mxu0 0
    %8300 = vmatprep.subr.bf16.mxu0 0
    %8301 = vmatpush1.bf16.msra.mxu0 0
    %8302 = vmatprep.subr.bf16.mxu0 0
    %8303 = vmatpush1.bf16.msra.mxu0 0
    %8304 = vmatprep.subr.bf16.mxu0 0
    %8305 = vmatpush1.bf16.msra.mxu0 0
    %8306 = vmatprep.subr.bf16.mxu0 0
    %8307 = vmatpush1.bf16.msra.mxu0 0
    %8308 = vmatprep.mubr.bf16.mxu0 0
    %8309 = vmatmul.mubr.bf16.gmra.mrb[0].mxu0 %v7913
    %v8310 = vpop.f32.mrb[0].mxu0
    %v8311 = vadd.f32 0.0, %v8310
    %v8312 = vpop.f32.mrb[0].mxu0
    %v8313 = vadd.f32 0.0, %v8312
    %v8314 = vpop.f32.mrb[0].mxu0
    %v8315 = vpop.f32.mrb[0].mxu0
    %8316 = vdwg.mxu0
    %8317 = vmatprep.subr.bf16.mxu0 %v8112
    %8318 = vmatpush1.bf16.msra.mxu0 %v8111
    %8319 = vmatprep.subr.bf16.mxu0 %v8120
    %8320 = vmatpush1.bf16.msra.mxu0 %v8119
    %8321 = vmatprep.subr.bf16.mxu0 %v8128
    %8322 = vmatpush1.bf16.msra.mxu0 %v8127
    %8323 = vmatprep.subr.bf16.mxu0 %v8136
    %8324 = vmatpush1.bf16.msra.mxu0 %v8135
    %8325 = vmatprep.subr.bf16.mxu0 %v8144
    %8326 = vmatpush1.bf16.msra.mxu0 %v8143
    %8327 = vmatprep.subr.bf16.mxu0 %v8152
    %8328 = vmatpush1.bf16.msra.mxu0 %v8151
    %8329 = vmatprep.subr.bf16.mxu0 %v8160
    %8330 = vmatpush1.bf16.msra.mxu0 %v8159
    %8331 = vmatprep.subr.bf16.mxu0 %v8168
    %8332 = vmatpush1.bf16.msra.mxu0 %v8167
    %8333 = vmatprep.subr.bf16.mxu0 0
    %8334 = vmatpush1.bf16.msra.mxu0 0
    %8335 = vmatprep.subr.bf16.mxu0 0
    %8336 = vmatpush1.bf16.msra.mxu0 0
    %8337 = vmatprep.subr.bf16.mxu0 0
    %8338 = vmatpush1.bf16.msra.mxu0 0
    %8339 = vmatprep.subr.bf16.mxu0 0
    %8340 = vmatpush1.bf16.msra.mxu0 0
    %8341 = vmatprep.subr.bf16.mxu0 0
    %8342 = vmatpush1.bf16.msra.mxu0 0
    %8343 = vmatprep.subr.bf16.mxu0 0
    %8344 = vmatpush1.bf16.msra.mxu0 0
    %8345 = vmatprep.subr.bf16.mxu0 0
    %8346 = vmatpush1.bf16.msra.mxu0 0
    %8347 = vmatprep.subr.bf16.mxu0 0
    %8348 = vmatpush1.bf16.msra.mxu0 0
    %8349 = vmatprep.mubr.bf16.mxu0 0
    %8350 = vmatmul.mubr.bf16.gmra.mrb[0].mxu0 %v7913
    %v8351 = vpop.f32.mrb[0].mxu0
    %v8352 = vadd.f32 0.0, %v8351
    %v8353 = vpop.f32.mrb[0].mxu0
    %v8354 = vadd.f32 0.0, %v8353
    %v8355 = vpop.f32.mrb[0].mxu0
    %v8356 = vpop.f32.mrb[0].mxu0
    %8357 = vdwg.mxu0
    %8358 = vmatprep.subr.bf16.mxu0 %v8114
    %8359 = vmatpush1.bf16.msra.mxu0 %v8113
    %8360 = vmatprep.subr.bf16.mxu0 %v8122
    %8361 = vmatpush1.bf16.msra.mxu0 %v8121
    %8362 = vmatprep.subr.bf16.mxu0 %v8130
    %8363 = vmatpush1.bf16.msra.mxu0 %v8129
    %8364 = vmatprep.subr.bf16.mxu0 %v8138
    %8365 = vmatpush1.bf16.msra.mxu0 %v8137
    %8366 = vmatprep.subr.bf16.mxu0 %v8146
    %8367 = vmatpush1.bf16.msra.mxu0 %v8145
    %8368 = vmatprep.subr.bf16.mxu0 %v8154
    %8369 = vmatpush1.bf16.msra.mxu0 %v8153
    %8370 = vmatprep.subr.bf16.mxu0 %v8162
    %8371 = vmatpush1.bf16.msra.mxu0 %v8161
    %8372 = vmatprep.subr.bf16.mxu0 %v8170
    %8373 = vmatpush1.bf16.msra.mxu0 %v8169
    %8374 = vmatprep.subr.bf16.mxu0 0
    %8375 = vmatpush1.bf16.msra.mxu0 0
    %8376 = vmatprep.subr.bf16.mxu0 0
    %8377 = vmatpush1.bf16.msra.mxu0 0
    %8378 = vmatprep.subr.bf16.mxu0 0
    %8379 = vmatpush1.bf16.msra.mxu0 0
    %8380 = vmatprep.subr.bf16.mxu0 0
    %8381 = vmatpush1.bf16.msra.mxu0 0
    %8382 = vmatprep.subr.bf16.mxu0 0
    %8383 = vmatpush1.bf16.msra.mxu0 0
    %8384 = vmatprep.subr.bf16.mxu0 0
    %8385 = vmatpush1.bf16.msra.mxu0 0
    %8386 = vmatprep.subr.bf16.mxu0 0
    %8387 = vmatpush1.bf16.msra.mxu0 0
    %8388 = vmatprep.subr.bf16.mxu0 0
    %8389 = vmatpush1.bf16.msra.mxu0 0
    %8390 = vmatprep.mubr.bf16.mxu0 0
    %8391 = vmatmul.mubr.bf16.gmra.mrb[0].mxu0 %v7913
    %v8392 = vpop.f32.mrb[0].mxu0
    %v8393 = vadd.f32 0.0, %v8392
    %v8394 = vpop.f32.mrb[0].mxu0
    %v8395 = vadd.f32 0.0, %v8394
    %v8396 = vpop.f32.mrb[0].mxu0
    %v8397 = vpop.f32.mrb[0].mxu0
    %8398 = vdwg.mxu0
    %v8399 = vadd.f32 %v7831, %v8270
    %v8400 = vadd.f32 %v7832, %v8272
    %v8401 = vadd.f32 %v7833, %v8311
    %v8402 = vadd.f32 %v7834, %v8313
    %v8403 = vadd.f32 %v7835, %v8352
    %v8404 = vadd.f32 %v7836, %v8354
    %v8405 = vadd.f32 %v7837, %v8393
    %v8406 = vadd.f32 %v7838, %v8395
    %v8407 = vld [vmem:[#allocation2 + $0xe] sm:$0x1]
    %v8408 = vld [vmem:[#allocation2 + $0x1e] sm:$0x1]
    %v8409 = vpack.c.bf16 %v8407, %v8407
    %v8410 = vpack.c.bf16 %v8408, %v8408
    %v8411 = vld [vmem:[#allocation9 + $0x1c00] sm:$0xff]
    %v8412 = vld [vmem:[#allocation9 + $0x1c08] sm:$0xff]
    %v8413 = vld [vmem:[#allocation9 + $0x1c10] sm:$0xff]
    %v8414 = vld [vmem:[#allocation9 + $0x1c18] sm:$0xff]
    %v8415 = vld [vmem:[#allocation9 + $0x1c20] sm:$0xff]
    %v8416 = vld [vmem:[#allocation9 + $0x1c28] sm:$0xff]
    %v8417 = vld [vmem:[#allocation9 + $0x1c30] sm:$0xff]
    %v8418 = vld [vmem:[#allocation9 + $0x1c38] sm:$0xff]
    %v8419 = vld [vmem:[#allocation9 + $0x1c40] sm:$0xff]
    %v8420 = vld [vmem:[#allocation9 + $0x1c48] sm:$0xff]
    %v8421 = vld [vmem:[#allocation9 + $0x1c50] sm:$0xff]
    %v8422 = vld [vmem:[#allocation9 + $0x1c58] sm:$0xff]
    %v8423 = vld [vmem:[#allocation9 + $0x1c60] sm:$0xff]
    %v8424 = vld [vmem:[#allocation9 + $0x1c68] sm:$0xff]
    %v8425 = vld [vmem:[#allocation9 + $0x1c70] sm:$0xff]
    %v8426 = vld [vmem:[#allocation9 + $0x1c78] sm:$0xff]
    %v8427 = vld [vmem:[#allocation9 + $0x1c80] sm:$0xff]
    %v8428 = vld [vmem:[#allocation9 + $0x1c88] sm:$0xff]
    %v8429 = vld [vmem:[#allocation9 + $0x1c90] sm:$0xff]
    %v8430 = vld [vmem:[#allocation9 + $0x1c98] sm:$0xff]
    %v8431 = vld [vmem:[#allocation9 + $0x1ca0] sm:$0xff]
    %v8432 = vld [vmem:[#allocation9 + $0x1ca8] sm:$0xff]
    %v8433 = vld [vmem:[#allocation9 + $0x1cb0] sm:$0xff]
    %v8434 = vld [vmem:[#allocation9 + $0x1cb8] sm:$0xff]
    %v8435 = vld [vmem:[#allocation9 + $0x1cc0] sm:$0xff]
    %v8436 = vld [vmem:[#allocation9 + $0x1cc8] sm:$0xff]
    %v8437 = vld [vmem:[#allocation9 + $0x1cd0] sm:$0xff]
    %v8438 = vld [vmem:[#allocation9 + $0x1cd8] sm:$0xff]
    %v8439 = vld [vmem:[#allocation9 + $0x1ce0] sm:$0xff]
    %v8440 = vld [vmem:[#allocation9 + $0x1ce8] sm:$0xff]
    %v8441 = vld [vmem:[#allocation9 + $0x1cf0] sm:$0xff]
    %v8442 = vld [vmem:[#allocation9 + $0x1cf8] sm:$0xff]
    %v8443 = vld [vmem:[#allocation9 + $0x1d00] sm:$0xff]
    %v8444 = vld [vmem:[#allocation9 + $0x1d08] sm:$0xff]
    %v8445 = vld [vmem:[#allocation9 + $0x1d10] sm:$0xff]
    %v8446 = vld [vmem:[#allocation9 + $0x1d18] sm:$0xff]
    %v8447 = vld [vmem:[#allocation9 + $0x1d20] sm:$0xff]
    %v8448 = vld [vmem:[#allocation9 + $0x1d28] sm:$0xff]
    %v8449 = vld [vmem:[#allocation9 + $0x1d30] sm:$0xff]
    %v8450 = vld [vmem:[#allocation9 + $0x1d38] sm:$0xff]
    %v8451 = vld [vmem:[#allocation9 + $0x1d40] sm:$0xff]
    %v8452 = vld [vmem:[#allocation9 + $0x1d48] sm:$0xff]
    %v8453 = vld [vmem:[#allocation9 + $0x1d50] sm:$0xff]
    %v8454 = vld [vmem:[#allocation9 + $0x1d58] sm:$0xff]
    %v8455 = vld [vmem:[#allocation9 + $0x1d60] sm:$0xff]
    %v8456 = vld [vmem:[#allocation9 + $0x1d68] sm:$0xff]
    %v8457 = vld [vmem:[#allocation9 + $0x1d70] sm:$0xff]
    %v8458 = vld [vmem:[#allocation9 + $0x1d78] sm:$0xff]
    %v8459 = vld [vmem:[#allocation9 + $0x1d80] sm:$0xff]
    %v8460 = vld [vmem:[#allocation9 + $0x1d88] sm:$0xff]
    %v8461 = vld [vmem:[#allocation9 + $0x1d90] sm:$0xff]
    %v8462 = vld [vmem:[#allocation9 + $0x1d98] sm:$0xff]
    %v8463 = vld [vmem:[#allocation9 + $0x1da0] sm:$0xff]
    %v8464 = vld [vmem:[#allocation9 + $0x1da8] sm:$0xff]
    %v8465 = vld [vmem:[#allocation9 + $0x1db0] sm:$0xff]
    %v8466 = vld [vmem:[#allocation9 + $0x1db8] sm:$0xff]
    %v8467 = vld [vmem:[#allocation9 + $0x1dc0] sm:$0xff]
    %v8468 = vld [vmem:[#allocation9 + $0x1dc8] sm:$0xff]
    %v8469 = vld [vmem:[#allocation9 + $0x1dd0] sm:$0xff]
    %v8470 = vld [vmem:[#allocation9 + $0x1dd8] sm:$0xff]
    %v8471 = vld [vmem:[#allocation9 + $0x1de0] sm:$0xff]
    %v8472 = vld [vmem:[#allocation9 + $0x1de8] sm:$0xff]
    %v8473 = vld [vmem:[#allocation9 + $0x1df0] sm:$0xff]
    %v8474 = vld [vmem:[#allocation9 + $0x1df8] sm:$0xff]
    %v8477 = vunpack.c.l.b16 %v8409
    %v8478 = vunpack.c.l.b16 %v8410
    %v8479 = vrot.slane %v8478, 7
    %v8480 = vsel %vm611, %v8479, %v8477
    %v8481 = vpack.c.b16 %v8480, %v8480
    %v8547 = vunpack.c.l.b16 %v8411
    %v8548 = vunpack.c.h.b16 %v8411
    %v8549 = vunpack.c.l.b16 %v8412
    %v8550 = vunpack.c.h.b16 %v8412
    %v8551 = vunpack.c.l.b16 %v8413
    %v8552 = vunpack.c.h.b16 %v8413
    %v8553 = vunpack.c.l.b16 %v8414
    %v8554 = vunpack.c.h.b16 %v8414
    %v8555 = vunpack.c.l.b16 %v8415
    %v8556 = vunpack.c.h.b16 %v8415
    %v8557 = vunpack.c.l.b16 %v8416
    %v8558 = vunpack.c.h.b16 %v8416
    %v8559 = vunpack.c.l.b16 %v8417
    %v8560 = vunpack.c.h.b16 %v8417
    %v8561 = vunpack.c.l.b16 %v8418
    %v8562 = vunpack.c.h.b16 %v8418
    %v8563 = vunpack.c.l.b16 %v8419
    %v8564 = vunpack.c.h.b16 %v8419
    %v8565 = vunpack.c.l.b16 %v8420
    %v8566 = vunpack.c.h.b16 %v8420
    %v8567 = vunpack.c.l.b16 %v8421
    %v8568 = vunpack.c.h.b16 %v8421
    %v8569 = vunpack.c.l.b16 %v8422
    %v8570 = vunpack.c.h.b16 %v8422
    %v8571 = vunpack.c.l.b16 %v8423
    %v8572 = vunpack.c.h.b16 %v8423
    %v8573 = vunpack.c.l.b16 %v8424
    %v8574 = vunpack.c.h.b16 %v8424
    %v8575 = vunpack.c.l.b16 %v8425
    %v8576 = vunpack.c.h.b16 %v8425
    %v8577 = vunpack.c.l.b16 %v8426
    %v8578 = vunpack.c.h.b16 %v8426
    %v8579 = vunpack.c.l.b16 %v8427
    %v8580 = vunpack.c.h.b16 %v8427
    %v8581 = vunpack.c.l.b16 %v8428
    %v8582 = vunpack.c.h.b16 %v8428
    %v8583 = vunpack.c.l.b16 %v8429
    %v8584 = vunpack.c.h.b16 %v8429
    %v8585 = vunpack.c.l.b16 %v8430
    %v8586 = vunpack.c.h.b16 %v8430
    %v8587 = vunpack.c.l.b16 %v8431
    %v8588 = vunpack.c.h.b16 %v8431
    %v8589 = vunpack.c.l.b16 %v8432
    %v8590 = vunpack.c.h.b16 %v8432
    %v8591 = vunpack.c.l.b16 %v8433
    %v8592 = vunpack.c.h.b16 %v8433
    %v8593 = vunpack.c.l.b16 %v8434
    %v8594 = vunpack.c.h.b16 %v8434
    %v8595 = vunpack.c.l.b16 %v8435
    %v8596 = vunpack.c.h.b16 %v8435
    %v8597 = vunpack.c.l.b16 %v8436
    %v8598 = vunpack.c.h.b16 %v8436
    %v8599 = vunpack.c.l.b16 %v8437
    %v8600 = vunpack.c.h.b16 %v8437
    %v8601 = vunpack.c.l.b16 %v8438
    %v8602 = vunpack.c.h.b16 %v8438
    %v8603 = vunpack.c.l.b16 %v8439
    %v8604 = vunpack.c.h.b16 %v8439
    %v8605 = vunpack.c.l.b16 %v8440
    %v8606 = vunpack.c.h.b16 %v8440
    %v8607 = vunpack.c.l.b16 %v8441
    %v8608 = vunpack.c.h.b16 %v8441
    %v8609 = vunpack.c.l.b16 %v8442
    %v8610 = vunpack.c.h.b16 %v8442
    %v8611 = vunpack.c.l.b16 %v8443
    %v8612 = vunpack.c.h.b16 %v8443
    %v8613 = vunpack.c.l.b16 %v8444
    %v8614 = vunpack.c.h.b16 %v8444
    %v8615 = vunpack.c.l.b16 %v8445
    %v8616 = vunpack.c.h.b16 %v8445
    %v8617 = vunpack.c.l.b16 %v8446
    %v8618 = vunpack.c.h.b16 %v8446
    %v8619 = vunpack.c.l.b16 %v8447
    %v8620 = vunpack.c.h.b16 %v8447
    %v8621 = vunpack.c.l.b16 %v8448
    %v8622 = vunpack.c.h.b16 %v8448
    %v8623 = vunpack.c.l.b16 %v8449
    %v8624 = vunpack.c.h.b16 %v8449
    %v8625 = vunpack.c.l.b16 %v8450
    %v8626 = vunpack.c.h.b16 %v8450
    %v8627 = vunpack.c.l.b16 %v8451
    %v8628 = vunpack.c.h.b16 %v8451
    %v8629 = vunpack.c.l.b16 %v8452
    %v8630 = vunpack.c.h.b16 %v8452
    %v8631 = vunpack.c.l.b16 %v8453
    %v8632 = vunpack.c.h.b16 %v8453
    %v8633 = vunpack.c.l.b16 %v8454
    %v8634 = vunpack.c.h.b16 %v8454
    %v8635 = vunpack.c.l.b16 %v8455
    %v8636 = vunpack.c.h.b16 %v8455
    %v8637 = vunpack.c.l.b16 %v8456
    %v8638 = vunpack.c.h.b16 %v8456
    %v8639 = vunpack.c.l.b16 %v8457
    %v8640 = vunpack.c.h.b16 %v8457
    %v8641 = vunpack.c.l.b16 %v8458
    %v8642 = vunpack.c.h.b16 %v8458
    %v8643 = vunpack.c.l.b16 %v8459
    %v8644 = vunpack.c.h.b16 %v8459
    %v8645 = vunpack.c.l.b16 %v8460
    %v8646 = vunpack.c.h.b16 %v8460
    %v8647 = vunpack.c.l.b16 %v8461
    %v8648 = vunpack.c.h.b16 %v8461
    %v8649 = vunpack.c.l.b16 %v8462
    %v8650 = vunpack.c.h.b16 %v8462
    %v8651 = vunpack.c.l.b16 %v8463
    %v8652 = vunpack.c.h.b16 %v8463
    %v8653 = vunpack.c.l.b16 %v8464
    %v8654 = vunpack.c.h.b16 %v8464
    %v8655 = vunpack.c.l.b16 %v8465
    %v8656 = vunpack.c.h.b16 %v8465
    %v8657 = vunpack.c.l.b16 %v8466
    %v8658 = vunpack.c.h.b16 %v8466
    %v8659 = vunpack.c.l.b16 %v8467
    %v8660 = vunpack.c.h.b16 %v8467
    %v8661 = vunpack.c.l.b16 %v8468
    %v8662 = vunpack.c.h.b16 %v8468
    %v8663 = vunpack.c.l.b16 %v8469
    %v8664 = vunpack.c.h.b16 %v8469
    %v8665 = vunpack.c.l.b16 %v8470
    %v8666 = vunpack.c.h.b16 %v8470
    %v8667 = vunpack.c.l.b16 %v8471
    %v8668 = vunpack.c.h.b16 %v8471
    %v8669 = vunpack.c.l.b16 %v8472
    %v8670 = vunpack.c.h.b16 %v8472
    %v8671 = vunpack.c.l.b16 %v8473
    %v8672 = vunpack.c.h.b16 %v8473
    %v8673 = vunpack.c.l.b16 %v8474
    %v8674 = vunpack.c.h.b16 %v8474
    %v8675 = vpack.c.b16 %v8555, %v8547
    %v8676 = vpack.c.b16 %v8556, %v8548
    %v8677 = vpack.c.b16 %v8557, %v8549
    %v8678 = vpack.c.b16 %v8558, %v8550
    %v8679 = vpack.c.b16 %v8559, %v8551
    %v8680 = vpack.c.b16 %v8560, %v8552
    %v8681 = vpack.c.b16 %v8561, %v8553
    %v8682 = vpack.c.b16 %v8562, %v8554
    %v8683 = vpack.c.b16 %v8571, %v8563
    %v8684 = vpack.c.b16 %v8572, %v8564
    %v8685 = vpack.c.b16 %v8573, %v8565
    %v8686 = vpack.c.b16 %v8574, %v8566
    %v8687 = vpack.c.b16 %v8575, %v8567
    %v8688 = vpack.c.b16 %v8576, %v8568
    %v8689 = vpack.c.b16 %v8577, %v8569
    %v8690 = vpack.c.b16 %v8578, %v8570
    %v8691 = vpack.c.b16 %v8587, %v8579
    %v8692 = vpack.c.b16 %v8588, %v8580
    %v8693 = vpack.c.b16 %v8589, %v8581
    %v8694 = vpack.c.b16 %v8590, %v8582
    %v8695 = vpack.c.b16 %v8591, %v8583
    %v8696 = vpack.c.b16 %v8592, %v8584
    %v8697 = vpack.c.b16 %v8593, %v8585
    %v8698 = vpack.c.b16 %v8594, %v8586
    %v8699 = vpack.c.b16 %v8603, %v8595
    %v8700 = vpack.c.b16 %v8604, %v8596
    %v8701 = vpack.c.b16 %v8605, %v8597
    %v8702 = vpack.c.b16 %v8606, %v8598
    %v8703 = vpack.c.b16 %v8607, %v8599
    %v8704 = vpack.c.b16 %v8608, %v8600
    %v8705 = vpack.c.b16 %v8609, %v8601
    %v8706 = vpack.c.b16 %v8610, %v8602
    %v8707 = vpack.c.b16 %v8619, %v8611
    %v8708 = vpack.c.b16 %v8620, %v8612
    %v8709 = vpack.c.b16 %v8621, %v8613
    %v8710 = vpack.c.b16 %v8622, %v8614
    %v8711 = vpack.c.b16 %v8623, %v8615
    %v8712 = vpack.c.b16 %v8624, %v8616
    %v8713 = vpack.c.b16 %v8625, %v8617
    %v8714 = vpack.c.b16 %v8626, %v8618
    %v8715 = vpack.c.b16 %v8635, %v8627
    %v8716 = vpack.c.b16 %v8636, %v8628
    %v8717 = vpack.c.b16 %v8637, %v8629
    %v8718 = vpack.c.b16 %v8638, %v8630
    %v8719 = vpack.c.b16 %v8639, %v8631
    %v8720 = vpack.c.b16 %v8640, %v8632
    %v8721 = vpack.c.b16 %v8641, %v8633
    %v8722 = vpack.c.b16 %v8642, %v8634
    %v8723 = vpack.c.b16 %v8651, %v8643
    %v8724 = vpack.c.b16 %v8652, %v8644
    %v8725 = vpack.c.b16 %v8653, %v8645
    %v8726 = vpack.c.b16 %v8654, %v8646
    %v8727 = vpack.c.b16 %v8655, %v8647
    %v8728 = vpack.c.b16 %v8656, %v8648
    %v8729 = vpack.c.b16 %v8657, %v8649
    %v8730 = vpack.c.b16 %v8658, %v8650
    %v8731 = vpack.c.b16 %v8667, %v8659
    %v8732 = vpack.c.b16 %v8668, %v8660
    %v8733 = vpack.c.b16 %v8669, %v8661
    %v8734 = vpack.c.b16 %v8670, %v8662
    %v8735 = vpack.c.b16 %v8671, %v8663
    %v8736 = vpack.c.b16 %v8672, %v8664
    %v8737 = vpack.c.b16 %v8673, %v8665
    %v8738 = vpack.c.b16 %v8674, %v8666
    %8803 = vmatprep.subr.bf16.mxu0 %v8676
    %8804 = vmatpush1.bf16.msra.mxu0 %v8675
    %8805 = vmatprep.subr.bf16.mxu0 %v8684
    %8806 = vmatpush1.bf16.msra.mxu0 %v8683
    %8807 = vmatprep.subr.bf16.mxu0 %v8692
    %8808 = vmatpush1.bf16.msra.mxu0 %v8691
    %8809 = vmatprep.subr.bf16.mxu0 %v8700
    %8810 = vmatpush1.bf16.msra.mxu0 %v8699
    %8811 = vmatprep.subr.bf16.mxu0 %v8708
    %8812 = vmatpush1.bf16.msra.mxu0 %v8707
    %8813 = vmatprep.subr.bf16.mxu0 %v8716
    %8814 = vmatpush1.bf16.msra.mxu0 %v8715
    %8815 = vmatprep.subr.bf16.mxu0 %v8724
    %8816 = vmatpush1.bf16.msra.mxu0 %v8723
    %8817 = vmatprep.subr.bf16.mxu0 %v8732
    %8818 = vmatpush1.bf16.msra.mxu0 %v8731
    %8819 = vmatprep.subr.bf16.mxu0 0
    %8820 = vmatpush1.bf16.msra.mxu0 0
    %8821 = vmatprep.subr.bf16.mxu0 0
    %8822 = vmatpush1.bf16.msra.mxu0 0
    %8823 = vmatprep.subr.bf16.mxu0 0
    %8824 = vmatpush1.bf16.msra.mxu0 0
    %8825 = vmatprep.subr.bf16.mxu0 0
    %8826 = vmatpush1.bf16.msra.mxu0 0
    %8827 = vmatprep.subr.bf16.mxu0 0
    %8828 = vmatpush1.bf16.msra.mxu0 0
    %8829 = vmatprep.subr.bf16.mxu0 0
    %8830 = vmatpush1.bf16.msra.mxu0 0
    %8831 = vmatprep.subr.bf16.mxu0 0
    %8832 = vmatpush1.bf16.msra.mxu0 0
    %8833 = vmatprep.subr.bf16.mxu0 0
    %8834 = vmatpush1.bf16.msra.mxu0 0
    %8835 = vmatprep.mubr.bf16.mxu0 0
    %8836 = vmatmul.mubr.bf16.gmra.mrb[0].mxu0 %v8481
    %v8837 = vpop.f32.mrb[0].mxu0
    %v8838 = vadd.f32 0.0, %v8837
    %v8839 = vpop.f32.mrb[0].mxu0
    %v8840 = vadd.f32 0.0, %v8839
    %v8841 = vpop.f32.mrb[0].mxu0
    %v8842 = vpop.f32.mrb[0].mxu0
    %8843 = vdwg.mxu0
    %8844 = vmatprep.subr.bf16.mxu0 %v8678
    %8845 = vmatpush1.bf16.msra.mxu0 %v8677
    %8846 = vmatprep.subr.bf16.mxu0 %v8686
    %8847 = vmatpush1.bf16.msra.mxu0 %v8685
    %8848 = vmatprep.subr.bf16.mxu0 %v8694
    %8849 = vmatpush1.bf16.msra.mxu0 %v8693
    %8850 = vmatprep.subr.bf16.mxu0 %v8702
    %8851 = vmatpush1.bf16.msra.mxu0 %v8701
    %8852 = vmatprep.subr.bf16.mxu0 %v8710
    %8853 = vmatpush1.bf16.msra.mxu0 %v8709
    %8854 = vmatprep.subr.bf16.mxu0 %v8718
    %8855 = vmatpush1.bf16.msra.mxu0 %v8717
    %8856 = vmatprep.subr.bf16.mxu0 %v8726
    %8857 = vmatpush1.bf16.msra.mxu0 %v8725
    %8858 = vmatprep.subr.bf16.mxu0 %v8734
    %8859 = vmatpush1.bf16.msra.mxu0 %v8733
    %8860 = vmatprep.subr.bf16.mxu0 0
    %8861 = vmatpush1.bf16.msra.mxu0 0
    %8862 = vmatprep.subr.bf16.mxu0 0
    %8863 = vmatpush1.bf16.msra.mxu0 0
    %8864 = vmatprep.subr.bf16.mxu0 0
    %8865 = vmatpush1.bf16.msra.mxu0 0
    %8866 = vmatprep.subr.bf16.mxu0 0
    %8867 = vmatpush1.bf16.msra.mxu0 0
    %8868 = vmatprep.subr.bf16.mxu0 0
    %8869 = vmatpush1.bf16.msra.mxu0 0
    %8870 = vmatprep.subr.bf16.mxu0 0
    %8871 = vmatpush1.bf16.msra.mxu0 0
    %8872 = vmatprep.subr.bf16.mxu0 0
    %8873 = vmatpush1.bf16.msra.mxu0 0
    %8874 = vmatprep.subr.bf16.mxu0 0
    %8875 = vmatpush1.bf16.msra.mxu0 0
    %8876 = vmatprep.mubr.bf16.mxu0 0
    %8877 = vmatmul.mubr.bf16.gmra.mrb[0].mxu0 %v8481
    %v8878 = vpop.f32.mrb[0].mxu0
    %v8879 = vadd.f32 0.0, %v8878
    %v8880 = vpop.f32.mrb[0].mxu0
    %v8881 = vadd.f32 0.0, %v8880
    %v8882 = vpop.f32.mrb[0].mxu0
    %v8883 = vpop.f32.mrb[0].mxu0
    %8884 = vdwg.mxu0
    %8885 = vmatprep.subr.bf16.mxu0 %v8680
    %8886 = vmatpush1.bf16.msra.mxu0 %v8679
    %8887 = vmatprep.subr.bf16.mxu0 %v8688
    %8888 = vmatpush1.bf16.msra.mxu0 %v8687
    %8889 = vmatprep.subr.bf16.mxu0 %v8696
    %8890 = vmatpush1.bf16.msra.mxu0 %v8695
    %8891 = vmatprep.subr.bf16.mxu0 %v8704
    %8892 = vmatpush1.bf16.msra.mxu0 %v8703
    %8893 = vmatprep.subr.bf16.mxu0 %v8712
    %8894 = vmatpush1.bf16.msra.mxu0 %v8711
    %8895 = vmatprep.subr.bf16.mxu0 %v8720
    %8896 = vmatpush1.bf16.msra.mxu0 %v8719
    %8897 = vmatprep.subr.bf16.mxu0 %v8728
    %8898 = vmatpush1.bf16.msra.mxu0 %v8727
    %8899 = vmatprep.subr.bf16.mxu0 %v8736
    %8900 = vmatpush1.bf16.msra.mxu0 %v8735
    %8901 = vmatprep.subr.bf16.mxu0 0
    %8902 = vmatpush1.bf16.msra.mxu0 0
    %8903 = vmatprep.subr.bf16.mxu0 0
    %8904 = vmatpush1.bf16.msra.mxu0 0
    %8905 = vmatprep.subr.bf16.mxu0 0
    %8906 = vmatpush1.bf16.msra.mxu0 0
    %8907 = vmatprep.subr.bf16.mxu0 0
    %8908 = vmatpush1.bf16.msra.mxu0 0
    %8909 = vmatprep.subr.bf16.mxu0 0
    %8910 = vmatpush1.bf16.msra.mxu0 0
    %8911 = vmatprep.subr.bf16.mxu0 0
    %8912 = vmatpush1.bf16.msra.mxu0 0
    %8913 = vmatprep.subr.bf16.mxu0 0
    %8914 = vmatpush1.bf16.msra.mxu0 0
    %8915 = vmatprep.subr.bf16.mxu0 0
    %8916 = vmatpush1.bf16.msra.mxu0 0
    %8917 = vmatprep.mubr.bf16.mxu0 0
    %8918 = vmatmul.mubr.bf16.gmra.mrb[0].mxu0 %v8481
    %v8919 = vpop.f32.mrb[0].mxu0
    %v8920 = vadd.f32 0.0, %v8919
    %v8921 = vpop.f32.mrb[0].mxu0
    %v8922 = vadd.f32 0.0, %v8921
    %v8923 = vpop.f32.mrb[0].mxu0
    %v8924 = vpop.f32.mrb[0].mxu0
    %8925 = vdwg.mxu0
    %8926 = vmatprep.subr.bf16.mxu0 %v8682
    %8927 = vmatpush1.bf16.msra.mxu0 %v8681
    %8928 = vmatprep.subr.bf16.mxu0 %v8690
    %8929 = vmatpush1.bf16.msra.mxu0 %v8689
    %8930 = vmatprep.subr.bf16.mxu0 %v8698
    %8931 = vmatpush1.bf16.msra.mxu0 %v8697
    %8932 = vmatprep.subr.bf16.mxu0 %v8706
    %8933 = vmatpush1.bf16.msra.mxu0 %v8705
    %8934 = vmatprep.subr.bf16.mxu0 %v8714
    %8935 = vmatpush1.bf16.msra.mxu0 %v8713
    %8936 = vmatprep.subr.bf16.mxu0 %v8722
    %8937 = vmatpush1.bf16.msra.mxu0 %v8721
    %8938 = vmatprep.subr.bf16.mxu0 %v8730
    %8939 = vmatpush1.bf16.msra.mxu0 %v8729
    %8940 = vmatprep.subr.bf16.mxu0 %v8738
    %8941 = vmatpush1.bf16.msra.mxu0 %v8737
    %8942 = vmatprep.subr.bf16.mxu0 0
    %8943 = vmatpush1.bf16.msra.mxu0 0
    %8944 = vmatprep.subr.bf16.mxu0 0
    %8945 = vmatpush1.bf16.msra.mxu0 0
    %8946 = vmatprep.subr.bf16.mxu0 0
    %8947 = vmatpush1.bf16.msra.mxu0 0
    %8948 = vmatprep.subr.bf16.mxu0 0
    %8949 = vmatpush1.bf16.msra.mxu0 0
    %8950 = vmatprep.subr.bf16.mxu0 0
    %8951 = vmatpush1.bf16.msra.mxu0 0
    %8952 = vmatprep.subr.bf16.mxu0 0
    %8953 = vmatpush1.bf16.msra.mxu0 0
    %8954 = vmatprep.subr.bf16.mxu0 0
    %8955 = vmatpush1.bf16.msra.mxu0 0
    %8956 = vmatprep.subr.bf16.mxu0 0
    %8957 = vmatpush1.bf16.msra.mxu0 0
    %8958 = vmatprep.mubr.bf16.mxu0 0
    %8959 = vmatmul.mubr.bf16.gmra.mrb[0].mxu0 %v8481
    %v8960 = vpop.f32.mrb[0].mxu0
    %v8961 = vadd.f32 0.0, %v8960
    %v8962 = vpop.f32.mrb[0].mxu0
    %v8963 = vadd.f32 0.0, %v8962
    %v8964 = vpop.f32.mrb[0].mxu0
    %v8965 = vpop.f32.mrb[0].mxu0
    %8966 = vdwg.mxu0
    %v8967 = vadd.f32 %v8399, %v8838
    %v8968 = vadd.f32 %v8400, %v8840
    %v8969 = vadd.f32 %v8401, %v8879
    %v8970 = vadd.f32 %v8402, %v8881
    %v8971 = vadd.f32 %v8403, %v8920
    %v8972 = vadd.f32 %v8404, %v8922
    %v8973 = vadd.f32 %v8405, %v8961
    %v8974 = vadd.f32 %v8406, %v8963
    %v8975 = vld [vmem:[#allocation2 + $0xf] sm:$0x1]
    %v8976 = vld [vmem:[#allocation2 + $0x1f] sm:$0x1]
    %v8977 = vpack.c.bf16 %v8975, %v8975
    %v8978 = vpack.c.bf16 %v8976, %v8976
    %v8979 = vld [vmem:[#allocation9 + $0x1e00] sm:$0xff]
    %v8980 = vld [vmem:[#allocation9 + $0x1e08] sm:$0xff]
    %v8981 = vld [vmem:[#allocation9 + $0x1e10] sm:$0xff]
    %v8982 = vld [vmem:[#allocation9 + $0x1e18] sm:$0xff]
    %v8983 = vld [vmem:[#allocation9 + $0x1e20] sm:$0xff]
    %v8984 = vld [vmem:[#allocation9 + $0x1e28] sm:$0xff]
    %v8985 = vld [vmem:[#allocation9 + $0x1e30] sm:$0xff]
    %v8986 = vld [vmem:[#allocation9 + $0x1e38] sm:$0xff]
    %v8987 = vld [vmem:[#allocation9 + $0x1e40] sm:$0xff]
    %v8988 = vld [vmem:[#allocation9 + $0x1e48] sm:$0xff]
    %v8989 = vld [vmem:[#allocation9 + $0x1e50] sm:$0xff]
    %v8990 = vld [vmem:[#allocation9 + $0x1e58] sm:$0xff]
    %v8991 = vld [vmem:[#allocation9 + $0x1e60] sm:$0xff]
    %v8992 = vld [vmem:[#allocation9 + $0x1e68] sm:$0xff]
    %v8993 = vld [vmem:[#allocation9 + $0x1e70] sm:$0xff]
    %v8994 = vld [vmem:[#allocation9 + $0x1e78] sm:$0xff]
    %v8995 = vld [vmem:[#allocation9 + $0x1e80] sm:$0xff]
    %v8996 = vld [vmem:[#allocation9 + $0x1e88] sm:$0xff]
    %v8997 = vld [vmem:[#allocation9 + $0x1e90] sm:$0xff]
    %v8998 = vld [vmem:[#allocation9 + $0x1e98] sm:$0xff]
    %v8999 = vld [vmem:[#allocation9 + $0x1ea0] sm:$0xff]
    %v9000 = vld [vmem:[#allocation9 + $0x1ea8] sm:$0xff]
    %v9001 = vld [vmem:[#allocation9 + $0x1eb0] sm:$0xff]
    %v9002 = vld [vmem:[#allocation9 + $0x1eb8] sm:$0xff]
    %v9003 = vld [vmem:[#allocation9 + $0x1ec0] sm:$0xff]
    %v9004 = vld [vmem:[#allocation9 + $0x1ec8] sm:$0xff]
    %v9005 = vld [vmem:[#allocation9 + $0x1ed0] sm:$0xff]
    %v9006 = vld [vmem:[#allocation9 + $0x1ed8] sm:$0xff]
    %v9007 = vld [vmem:[#allocation9 + $0x1ee0] sm:$0xff]
    %v9008 = vld [vmem:[#allocation9 + $0x1ee8] sm:$0xff]
    %v9009 = vld [vmem:[#allocation9 + $0x1ef0] sm:$0xff]
    %v9010 = vld [vmem:[#allocation9 + $0x1ef8] sm:$0xff]
    %v9011 = vld [vmem:[#allocation9 + $0x1f00] sm:$0xff]
    %v9012 = vld [vmem:[#allocation9 + $0x1f08] sm:$0xff]
    %v9013 = vld [vmem:[#allocation9 + $0x1f10] sm:$0xff]
    %v9014 = vld [vmem:[#allocation9 + $0x1f18] sm:$0xff]
    %v9015 = vld [vmem:[#allocation9 + $0x1f20] sm:$0xff]
    %v9016 = vld [vmem:[#allocation9 + $0x1f28] sm:$0xff]
    %v9017 = vld [vmem:[#allocation9 + $0x1f30] sm:$0xff]
    %v9018 = vld [vmem:[#allocation9 + $0x1f38] sm:$0xff]
    %v9019 = vld [vmem:[#allocation9 + $0x1f40] sm:$0xff]
    %v9020 = vld [vmem:[#allocation9 + $0x1f48] sm:$0xff]
    %v9021 = vld [vmem:[#allocation9 + $0x1f50] sm:$0xff]
    %v9022 = vld [vmem:[#allocation9 + $0x1f58] sm:$0xff]
    %v9023 = vld [vmem:[#allocation9 + $0x1f60] sm:$0xff]
    %v9024 = vld [vmem:[#allocation9 + $0x1f68] sm:$0xff]
    %v9025 = vld [vmem:[#allocation9 + $0x1f70] sm:$0xff]
    %v9026 = vld [vmem:[#allocation9 + $0x1f78] sm:$0xff]
    %v9027 = vld [vmem:[#allocation9 + $0x1f80] sm:$0xff]
    %v9028 = vld [vmem:[#allocation9 + $0x1f88] sm:$0xff]
    %v9029 = vld [vmem:[#allocation9 + $0x1f90] sm:$0xff]
    %v9030 = vld [vmem:[#allocation9 + $0x1f98] sm:$0xff]
    %v9031 = vld [vmem:[#allocation9 + $0x1fa0] sm:$0xff]
    %v9032 = vld [vmem:[#allocation9 + $0x1fa8] sm:$0xff]
    %v9033 = vld [vmem:[#allocation9 + $0x1fb0] sm:$0xff]
    %v9034 = vld [vmem:[#allocation9 + $0x1fb8] sm:$0xff]
    %v9035 = vld [vmem:[#allocation9 + $0x1fc0] sm:$0xff]
    %v9036 = vld [vmem:[#allocation9 + $0x1fc8] sm:$0xff]
    %v9037 = vld [vmem:[#allocation9 + $0x1fd0] sm:$0xff]
    %v9038 = vld [vmem:[#allocation9 + $0x1fd8] sm:$0xff]
    %v9039 = vld [vmem:[#allocation9 + $0x1fe0] sm:$0xff]
    %v9040 = vld [vmem:[#allocation9 + $0x1fe8] sm:$0xff]
    %v9041 = vld [vmem:[#allocation9 + $0x1ff0] sm:$0xff]
    %v9042 = vld [vmem:[#allocation9 + $0x1ff8] sm:$0xff]
    %v9045 = vunpack.c.l.b16 %v8977
    %v9046 = vunpack.c.l.b16 %v8978
    %v9047 = vrot.slane %v9046, 7
    %v9048 = vsel %vm611, %v9047, %v9045
    %v9049 = vpack.c.b16 %v9048, %v9048
    %v9115 = vunpack.c.l.b16 %v8979
    %v9116 = vunpack.c.h.b16 %v8979
    %v9117 = vunpack.c.l.b16 %v8980
    %v9118 = vunpack.c.h.b16 %v8980
    %v9119 = vunpack.c.l.b16 %v8981
    %v9120 = vunpack.c.h.b16 %v8981
    %v9121 = vunpack.c.l.b16 %v8982
    %v9122 = vunpack.c.h.b16 %v8982
    %v9123 = vunpack.c.l.b16 %v8983
    %v9124 = vunpack.c.h.b16 %v8983
    %v9125 = vunpack.c.l.b16 %v8984
    %v9126 = vunpack.c.h.b16 %v8984
    %v9127 = vunpack.c.l.b16 %v8985
    %v9128 = vunpack.c.h.b16 %v8985
    %v9129 = vunpack.c.l.b16 %v8986
    %v9130 = vunpack.c.h.b16 %v8986
    %v9131 = vunpack.c.l.b16 %v8987
    %v9132 = vunpack.c.h.b16 %v8987
    %v9133 = vunpack.c.l.b16 %v8988
    %v9134 = vunpack.c.h.b16 %v8988
    %v9135 = vunpack.c.l.b16 %v8989
    %v9136 = vunpack.c.h.b16 %v8989
    %v9137 = vunpack.c.l.b16 %v8990
    %v9138 = vunpack.c.h.b16 %v8990
    %v9139 = vunpack.c.l.b16 %v8991
    %v9140 = vunpack.c.h.b16 %v8991
    %v9141 = vunpack.c.l.b16 %v8992
    %v9142 = vunpack.c.h.b16 %v8992
    %v9143 = vunpack.c.l.b16 %v8993
    %v9144 = vunpack.c.h.b16 %v8993
    %v9145 = vunpack.c.l.b16 %v8994
    %v9146 = vunpack.c.h.b16 %v8994
    %v9147 = vunpack.c.l.b16 %v8995
    %v9148 = vunpack.c.h.b16 %v8995
    %v9149 = vunpack.c.l.b16 %v8996
    %v9150 = vunpack.c.h.b16 %v8996
    %v9151 = vunpack.c.l.b16 %v8997
    %v9152 = vunpack.c.h.b16 %v8997
    %v9153 = vunpack.c.l.b16 %v8998
    %v9154 = vunpack.c.h.b16 %v8998
    %v9155 = vunpack.c.l.b16 %v8999
    %v9156 = vunpack.c.h.b16 %v8999
    %v9157 = vunpack.c.l.b16 %v9000
    %v9158 = vunpack.c.h.b16 %v9000
    %v9159 = vunpack.c.l.b16 %v9001
    %v9160 = vunpack.c.h.b16 %v9001
    %v9161 = vunpack.c.l.b16 %v9002
    %v9162 = vunpack.c.h.b16 %v9002
    %v9163 = vunpack.c.l.b16 %v9003
    %v9164 = vunpack.c.h.b16 %v9003
    %v9165 = vunpack.c.l.b16 %v9004
    %v9166 = vunpack.c.h.b16 %v9004
    %v9167 = vunpack.c.l.b16 %v9005
    %v9168 = vunpack.c.h.b16 %v9005
    %v9169 = vunpack.c.l.b16 %v9006
    %v9170 = vunpack.c.h.b16 %v9006
    %v9171 = vunpack.c.l.b16 %v9007
    %v9172 = vunpack.c.h.b16 %v9007
    %v9173 = vunpack.c.l.b16 %v9008
    %v9174 = vunpack.c.h.b16 %v9008
    %v9175 = vunpack.c.l.b16 %v9009
    %v9176 = vunpack.c.h.b16 %v9009
    %v9177 = vunpack.c.l.b16 %v9010
    %v9178 = vunpack.c.h.b16 %v9010
    %v9179 = vunpack.c.l.b16 %v9011
    %v9180 = vunpack.c.h.b16 %v9011
    %v9181 = vunpack.c.l.b16 %v9012
    %v9182 = vunpack.c.h.b16 %v9012
    %v9183 = vunpack.c.l.b16 %v9013
    %v9184 = vunpack.c.h.b16 %v9013
    %v9185 = vunpack.c.l.b16 %v9014
    %v9186 = vunpack.c.h.b16 %v9014
    %v9187 = vunpack.c.l.b16 %v9015
    %v9188 = vunpack.c.h.b16 %v9015
    %v9189 = vunpack.c.l.b16 %v9016
    %v9190 = vunpack.c.h.b16 %v9016
    %v9191 = vunpack.c.l.b16 %v9017
    %v9192 = vunpack.c.h.b16 %v9017
    %v9193 = vunpack.c.l.b16 %v9018
    %v9194 = vunpack.c.h.b16 %v9018
    %v9195 = vunpack.c.l.b16 %v9019
    %v9196 = vunpack.c.h.b16 %v9019
    %v9197 = vunpack.c.l.b16 %v9020
    %v9198 = vunpack.c.h.b16 %v9020
    %v9199 = vunpack.c.l.b16 %v9021
    %v9200 = vunpack.c.h.b16 %v9021
    %v9201 = vunpack.c.l.b16 %v9022
    %v9202 = vunpack.c.h.b16 %v9022
    %v9203 = vunpack.c.l.b16 %v9023
    %v9204 = vunpack.c.h.b16 %v9023
    %v9205 = vunpack.c.l.b16 %v9024
    %v9206 = vunpack.c.h.b16 %v9024
    %v9207 = vunpack.c.l.b16 %v9025
    %v9208 = vunpack.c.h.b16 %v9025
    %v9209 = vunpack.c.l.b16 %v9026
    %v9210 = vunpack.c.h.b16 %v9026
    %v9211 = vunpack.c.l.b16 %v9027
    %v9212 = vunpack.c.h.b16 %v9027
    %v9213 = vunpack.c.l.b16 %v9028
    %v9214 = vunpack.c.h.b16 %v9028
    %v9215 = vunpack.c.l.b16 %v9029
    %v9216 = vunpack.c.h.b16 %v9029
    %v9217 = vunpack.c.l.b16 %v9030
    %v9218 = vunpack.c.h.b16 %v9030
    %v9219 = vunpack.c.l.b16 %v9031
    %v9220 = vunpack.c.h.b16 %v9031
    %v9221 = vunpack.c.l.b16 %v9032
    %v9222 = vunpack.c.h.b16 %v9032
    %v9223 = vunpack.c.l.b16 %v9033
    %v9224 = vunpack.c.h.b16 %v9033
    %v9225 = vunpack.c.l.b16 %v9034
    %v9226 = vunpack.c.h.b16 %v9034
    %v9227 = vunpack.c.l.b16 %v9035
    %v9228 = vunpack.c.h.b16 %v9035
    %v9229 = vunpack.c.l.b16 %v9036
    %v9230 = vunpack.c.h.b16 %v9036
    %v9231 = vunpack.c.l.b16 %v9037
    %v9232 = vunpack.c.h.b16 %v9037
    %v9233 = vunpack.c.l.b16 %v9038
    %v9234 = vunpack.c.h.b16 %v9038
    %v9235 = vunpack.c.l.b16 %v9039
    %v9236 = vunpack.c.h.b16 %v9039
    %v9237 = vunpack.c.l.b16 %v9040
    %v9238 = vunpack.c.h.b16 %v9040
    %v9239 = vunpack.c.l.b16 %v9041
    %v9240 = vunpack.c.h.b16 %v9041
    %v9241 = vunpack.c.l.b16 %v9042
    %v9242 = vunpack.c.h.b16 %v9042
    %v9243 = vpack.c.b16 %v9123, %v9115
    %v9244 = vpack.c.b16 %v9124, %v9116
    %v9245 = vpack.c.b16 %v9125, %v9117
    %v9246 = vpack.c.b16 %v9126, %v9118
    %v9247 = vpack.c.b16 %v9127, %v9119
    %v9248 = vpack.c.b16 %v9128, %v9120
    %v9249 = vpack.c.b16 %v9129, %v9121
    %v9250 = vpack.c.b16 %v9130, %v9122
    %v9251 = vpack.c.b16 %v9139, %v9131
    %v9252 = vpack.c.b16 %v9140, %v9132
    %v9253 = vpack.c.b16 %v9141, %v9133
    %v9254 = vpack.c.b16 %v9142, %v9134
    %v9255 = vpack.c.b16 %v9143, %v9135
    %v9256 = vpack.c.b16 %v9144, %v9136
    %v9257 = vpack.c.b16 %v9145, %v9137
    %v9258 = vpack.c.b16 %v9146, %v9138
    %v9259 = vpack.c.b16 %v9155, %v9147
    %v9260 = vpack.c.b16 %v9156, %v9148
    %v9261 = vpack.c.b16 %v9157, %v9149
    %v9262 = vpack.c.b16 %v9158, %v9150
    %v9263 = vpack.c.b16 %v9159, %v9151
    %v9264 = vpack.c.b16 %v9160, %v9152
    %v9265 = vpack.c.b16 %v9161, %v9153
    %v9266 = vpack.c.b16 %v9162, %v9154
    %v9267 = vpack.c.b16 %v9171, %v9163
    %v9268 = vpack.c.b16 %v9172, %v9164
    %v9269 = vpack.c.b16 %v9173, %v9165
    %v9270 = vpack.c.b16 %v9174, %v9166
    %v9271 = vpack.c.b16 %v9175, %v9167
    %v9272 = vpack.c.b16 %v9176, %v9168
    %v9273 = vpack.c.b16 %v9177, %v9169
    %v9274 = vpack.c.b16 %v9178, %v9170
    %v9275 = vpack.c.b16 %v9187, %v9179
    %v9276 = vpack.c.b16 %v9188, %v9180
    %v9277 = vpack.c.b16 %v9189, %v9181
    %v9278 = vpack.c.b16 %v9190, %v9182
    %v9279 = vpack.c.b16 %v9191, %v9183
    %v9280 = vpack.c.b16 %v9192, %v9184
    %v9281 = vpack.c.b16 %v9193, %v9185
    %v9282 = vpack.c.b16 %v9194, %v9186
    %v9283 = vpack.c.b16 %v9203, %v9195
    %v9284 = vpack.c.b16 %v9204, %v9196
    %v9285 = vpack.c.b16 %v9205, %v9197
    %v9286 = vpack.c.b16 %v9206, %v9198
    %v9287 = vpack.c.b16 %v9207, %v9199
    %v9288 = vpack.c.b16 %v9208, %v9200
    %v9289 = vpack.c.b16 %v9209, %v9201
    %v9290 = vpack.c.b16 %v9210, %v9202
    %v9291 = vpack.c.b16 %v9219, %v9211
    %v9292 = vpack.c.b16 %v9220, %v9212
    %v9293 = vpack.c.b16 %v9221, %v9213
    %v9294 = vpack.c.b16 %v9222, %v9214
    %v9295 = vpack.c.b16 %v9223, %v9215
    %v9296 = vpack.c.b16 %v9224, %v9216
    %v9297 = vpack.c.b16 %v9225, %v9217
    %v9298 = vpack.c.b16 %v9226, %v9218
    %v9299 = vpack.c.b16 %v9235, %v9227
    %v9300 = vpack.c.b16 %v9236, %v9228
    %v9301 = vpack.c.b16 %v9237, %v9229
    %v9302 = vpack.c.b16 %v9238, %v9230
    %v9303 = vpack.c.b16 %v9239, %v9231
    %v9304 = vpack.c.b16 %v9240, %v9232
    %v9305 = vpack.c.b16 %v9241, %v9233
    %v9306 = vpack.c.b16 %v9242, %v9234
    %9371 = vmatprep.subr.bf16.mxu0 %v9244
    %9372 = vmatpush1.bf16.msra.mxu0 %v9243
    %9373 = vmatprep.subr.bf16.mxu0 %v9252
    %9374 = vmatpush1.bf16.msra.mxu0 %v9251
    %9375 = vmatprep.subr.bf16.mxu0 %v9260
    %9376 = vmatpush1.bf16.msra.mxu0 %v9259
    %9377 = vmatprep.subr.bf16.mxu0 %v9268
    %9378 = vmatpush1.bf16.msra.mxu0 %v9267
    %9379 = vmatprep.subr.bf16.mxu0 %v9276
    %9380 = vmatpush1.bf16.msra.mxu0 %v9275
    %9381 = vmatprep.subr.bf16.mxu0 %v9284
    %9382 = vmatpush1.bf16.msra.mxu0 %v9283
    %9383 = vmatprep.subr.bf16.mxu0 %v9292
    %9384 = vmatpush1.bf16.msra.mxu0 %v9291
    %9385 = vmatprep.subr.bf16.mxu0 %v9300
    %9386 = vmatpush1.bf16.msra.mxu0 %v9299
    %9387 = vmatprep.subr.bf16.mxu0 0
    %9388 = vmatpush1.bf16.msra.mxu0 0
    %9389 = vmatprep.subr.bf16.mxu0 0
    %9390 = vmatpush1.bf16.msra.mxu0 0
    %9391 = vmatprep.subr.bf16.mxu0 0
    %9392 = vmatpush1.bf16.msra.mxu0 0
    %9393 = vmatprep.subr.bf16.mxu0 0
    %9394 = vmatpush1.bf16.msra.mxu0 0
    %9395 = vmatprep.subr.bf16.mxu0 0
    %9396 = vmatpush1.bf16.msra.mxu0 0
    %9397 = vmatprep.subr.bf16.mxu0 0
    %9398 = vmatpush1.bf16.msra.mxu0 0
    %9399 = vmatprep.subr.bf16.mxu0 0
    %9400 = vmatpush1.bf16.msra.mxu0 0
    %9401 = vmatprep.subr.bf16.mxu0 0
    %9402 = vmatpush1.bf16.msra.mxu0 0
    %9403 = vmatprep.mubr.bf16.mxu0 0
    %9404 = vmatmul.mubr.bf16.gmra.mrb[0].mxu0 %v9049
    %v9405 = vpop.f32.mrb[0].mxu0
    %v9406 = vadd.f32 0.0, %v9405
    %v9407 = vpop.f32.mrb[0].mxu0
    %v9408 = vadd.f32 0.0, %v9407
    %v9409 = vpop.f32.mrb[0].mxu0
    %v9410 = vpop.f32.mrb[0].mxu0
    %9411 = vdwg.mxu0
    %9412 = vmatprep.subr.bf16.mxu0 %v9246
    %9413 = vmatpush1.bf16.msra.mxu0 %v9245
    %9414 = vmatprep.subr.bf16.mxu0 %v9254
    %9415 = vmatpush1.bf16.msra.mxu0 %v9253
    %9416 = vmatprep.subr.bf16.mxu0 %v9262
    %9417 = vmatpush1.bf16.msra.mxu0 %v9261
    %9418 = vmatprep.subr.bf16.mxu0 %v9270
    %9419 = vmatpush1.bf16.msra.mxu0 %v9269
    %9420 = vmatprep.subr.bf16.mxu0 %v9278
    %9421 = vmatpush1.bf16.msra.mxu0 %v9277
    %9422 = vmatprep.subr.bf16.mxu0 %v9286
    %9423 = vmatpush1.bf16.msra.mxu0 %v9285
    %9424 = vmatprep.subr.bf16.mxu0 %v9294
    %9425 = vmatpush1.bf16.msra.mxu0 %v9293
    %9426 = vmatprep.subr.bf16.mxu0 %v9302
    %9427 = vmatpush1.bf16.msra.mxu0 %v9301
    %9428 = vmatprep.subr.bf16.mxu0 0
    %9429 = vmatpush1.bf16.msra.mxu0 0
    %9430 = vmatprep.subr.bf16.mxu0 0
    %9431 = vmatpush1.bf16.msra.mxu0 0
    %9432 = vmatprep.subr.bf16.mxu0 0
    %9433 = vmatpush1.bf16.msra.mxu0 0
    %9434 = vmatprep.subr.bf16.mxu0 0
    %9435 = vmatpush1.bf16.msra.mxu0 0
    %9436 = vmatprep.subr.bf16.mxu0 0
    %9437 = vmatpush1.bf16.msra.mxu0 0
    %9438 = vmatprep.subr.bf16.mxu0 0
    %9439 = vmatpush1.bf16.msra.mxu0 0
    %9440 = vmatprep.subr.bf16.mxu0 0
    %9441 = vmatpush1.bf16.msra.mxu0 0
    %9442 = vmatprep.subr.bf16.mxu0 0
    %9443 = vmatpush1.bf16.msra.mxu0 0
    %9444 = vmatprep.mubr.bf16.mxu0 0
    %9445 = vmatmul.mubr.bf16.gmra.mrb[0].mxu0 %v9049
    %v9446 = vpop.f32.mrb[0].mxu0
    %v9447 = vadd.f32 0.0, %v9446
    %v9448 = vpop.f32.mrb[0].mxu0
    %v9449 = vadd.f32 0.0, %v9448
    %v9450 = vpop.f32.mrb[0].mxu0
    %v9451 = vpop.f32.mrb[0].mxu0
    %9452 = vdwg.mxu0
    %9453 = vmatprep.subr.bf16.mxu0 %v9248
    %9454 = vmatpush1.bf16.msra.mxu0 %v9247
    %9455 = vmatprep.subr.bf16.mxu0 %v9256
    %9456 = vmatpush1.bf16.msra.mxu0 %v9255
    %9457 = vmatprep.subr.bf16.mxu0 %v9264
    %9458 = vmatpush1.bf16.msra.mxu0 %v9263
    %9459 = vmatprep.subr.bf16.mxu0 %v9272
    %9460 = vmatpush1.bf16.msra.mxu0 %v9271
    %9461 = vmatprep.subr.bf16.mxu0 %v9280
    %9462 = vmatpush1.bf16.msra.mxu0 %v9279
    %9463 = vmatprep.subr.bf16.mxu0 %v9288
    %9464 = vmatpush1.bf16.msra.mxu0 %v9287
    %9465 = vmatprep.subr.bf16.mxu0 %v9296
    %9466 = vmatpush1.bf16.msra.mxu0 %v9295
    %9467 = vmatprep.subr.bf16.mxu0 %v9304
    %9468 = vmatpush1.bf16.msra.mxu0 %v9303
    %9469 = vmatprep.subr.bf16.mxu0 0
    %9470 = vmatpush1.bf16.msra.mxu0 0
    %9471 = vmatprep.subr.bf16.mxu0 0
    %9472 = vmatpush1.bf16.msra.mxu0 0
    %9473 = vmatprep.subr.bf16.mxu0 0
    %9474 = vmatpush1.bf16.msra.mxu0 0
    %9475 = vmatprep.subr.bf16.mxu0 0
    %9476 = vmatpush1.bf16.msra.mxu0 0
    %9477 = vmatprep.subr.bf16.mxu0 0
    %9478 = vmatpush1.bf16.msra.mxu0 0
    %9479 = vmatprep.subr.bf16.mxu0 0
    %9480 = vmatpush1.bf16.msra.mxu0 0
    %9481 = vmatprep.subr.bf16.mxu0 0
    %9482 = vmatpush1.bf16.msra.mxu0 0
    %9483 = vmatprep.subr.bf16.mxu0 0
    %9484 = vmatpush1.bf16.msra.mxu0 0
    %9485 = vmatprep.mubr.bf16.mxu0 0
    %9486 = vmatmul.mubr.bf16.gmra.mrb[0].mxu0 %v9049
    %v9487 = vpop.f32.mrb[0].mxu0
    %v9488 = vadd.f32 0.0, %v9487
    %v9489 = vpop.f32.mrb[0].mxu0
    %v9490 = vadd.f32 0.0, %v9489
    %v9491 = vpop.f32.mrb[0].mxu0
    %v9492 = vpop.f32.mrb[0].mxu0
    %9493 = vdwg.mxu0
    %9494 = vmatprep.subr.bf16.mxu0 %v9250
    %9495 = vmatpush1.bf16.msra.mxu0 %v9249
    %9496 = vmatprep.subr.bf16.mxu0 %v9258
    %9497 = vmatpush1.bf16.msra.mxu0 %v9257
    %9498 = vmatprep.subr.bf16.mxu0 %v9266
    %9499 = vmatpush1.bf16.msra.mxu0 %v9265
    %9500 = vmatprep.subr.bf16.mxu0 %v9274
    %9501 = vmatpush1.bf16.msra.mxu0 %v9273
    %9502 = vmatprep.subr.bf16.mxu0 %v9282
    %9503 = vmatpush1.bf16.msra.mxu0 %v9281
    %9504 = vmatprep.subr.bf16.mxu0 %v9290
    %9505 = vmatpush1.bf16.msra.mxu0 %v9289
    %9506 = vmatprep.subr.bf16.mxu0 %v9298
    %9507 = vmatpush1.bf16.msra.mxu0 %v9297
    %9508 = vmatprep.subr.bf16.mxu0 %v9306
    %9509 = vmatpush1.bf16.msra.mxu0 %v9305
    %9510 = vmatprep.subr.bf16.mxu0 0
    %9511 = vmatpush1.bf16.msra.mxu0 0
    %9512 = vmatprep.subr.bf16.mxu0 0
    %9513 = vmatpush1.bf16.msra.mxu0 0
    %9514 = vmatprep.subr.bf16.mxu0 0
    %9515 = vmatpush1.bf16.msra.mxu0 0
    %9516 = vmatprep.subr.bf16.mxu0 0
    %9517 = vmatpush1.bf16.msra.mxu0 0
    %9518 = vmatprep.subr.bf16.mxu0 0
    %9519 = vmatpush1.bf16.msra.mxu0 0
    %9520 = vmatprep.subr.bf16.mxu0 0
    %9521 = vmatpush1.bf16.msra.mxu0 0
    %9522 = vmatprep.subr.bf16.mxu0 0
    %9523 = vmatpush1.bf16.msra.mxu0 0
    %9524 = vmatprep.subr.bf16.mxu0 0
    %9525 = vmatpush1.bf16.msra.mxu0 0
    %9526 = vmatprep.mubr.bf16.mxu0 0
    %9527 = vmatmul.mubr.bf16.gmra.mrb[0].mxu0 %v9049
    %v9528 = vpop.f32.mrb[0].mxu0
    %v9529 = vadd.f32 0.0, %v9528
    %v9530 = vpop.f32.mrb[0].mxu0
    %v9531 = vadd.f32 0.0, %v9530
    %v9532 = vpop.f32.mrb[0].mxu0
    %v9533 = vpop.f32.mrb[0].mxu0
    %9534 = vdwg.mxu0
    %v9535 = vadd.f32 %v8967, %v9406
    %v9536 = vadd.f32 %v8968, %v9408
    %v9537 = vadd.f32 %v8969, %v9447
    %v9538 = vadd.f32 %v8970, %v9449
    %v9539 = vadd.f32 %v8971, %v9488
    %v9540 = vadd.f32 %v8972, %v9490
    %v9541 = vadd.f32 %v8973, %v9529
    %v9542 = vadd.f32 %v8974, %v9531
    %v9543 = vld [vmem:[#allocation11] sm:$0xff]
    %v9545 = vlaneseq
    %v9546 = vshrl.u32 %v9545, 7
    %v9547 = vsub.s32 0, %v9546
    %v9548 = vrot.slane %v9543, %v9547
    %v9549 = vlaneseq
    %v9550 = vshrl.u32 %v9549, 7
    %v9551 = vsub.s32 1, %v9550
    %v9552 = vrot.slane %v9543, %v9551
    %v9553 = vlaneseq
    %v9554 = vshrl.u32 %v9553, 7
    %v9555 = vsub.s32 2, %v9554
    %v9556 = vrot.slane %v9543, %v9555
    %v9557 = vlaneseq
    %v9558 = vshrl.u32 %v9557, 7
    %v9559 = vsub.s32 3, %v9558
    %v9560 = vrot.slane %v9543, %v9559
    %v9561 = vlaneseq
    %v9562 = vshrl.u32 %v9561, 7
    %v9563 = vsub.s32 4, %v9562
    %v9564 = vrot.slane %v9543, %v9563
    %v9565 = vlaneseq
    %v9566 = vshrl.u32 %v9565, 7
    %v9567 = vsub.s32 5, %v9566
    %v9568 = vrot.slane %v9543, %v9567
    %v9569 = vlaneseq
    %v9570 = vshrl.u32 %v9569, 7
    %v9571 = vsub.s32 6, %v9570
    %v9572 = vrot.slane %v9543, %v9571
    %v9573 = vlaneseq
    %v9574 = vshrl.u32 %v9573, 7
    %v9575 = vsub.s32 7, %v9574
    %v9576 = vrot.slane %v9543, %v9575
    %v9585 = vadd.f32 %v9535, %v9548
    %v9586 = vadd.f32 %v9536, %v9552
    %v9587 = vadd.f32 %v9537, %v9556
    %v9588 = vadd.f32 %v9538, %v9560
    %v9589 = vadd.f32 %v9539, %v9564
    %v9590 = vadd.f32 %v9540, %v9568
    %v9591 = vadd.f32 %v9541, %v9572
    %v9592 = vadd.f32 %v9542, %v9576
    %v9593 = vmax.f32 %v9585, 0.0
    %v9594 = vmax.f32 %v9586, 0.0
    %v9595 = vmax.f32 %v9587, 0.0
    %v9596 = vmax.f32 %v9588, 0.0
    %v9597 = vmax.f32 %v9589, 0.0
    %v9598 = vmax.f32 %v9590, 0.0
    %v9599 = vmax.f32 %v9591, 0.0
    %v9600 = vmax.f32 %v9592, 0.0
    %v9601 = vpack.c.bf16 %v9593, %v9593
    %v9602 = vpack.c.bf16 %v9594, %v9594
    %v9603 = vpack.c.bf16 %v9595, %v9595
    %v9604 = vpack.c.bf16 %v9596, %v9596
    %v9605 = vpack.c.bf16 %v9597, %v9597
    %v9606 = vpack.c.bf16 %v9598, %v9598
    %v9607 = vpack.c.bf16 %v9599, %v9599
    %v9608 = vpack.c.bf16 %v9600, %v9600
    %v9609 = vld [vmem:[#allocation12] sm:$0xf]
    %v9610 = vld [vmem:[#allocation12 + $0x4] sm:$0xf]
    %v9611 = vld [vmem:[#allocation12 + $0x8] sm:$0xf]
    %v9612 = vld [vmem:[#allocation12 + $0xc] sm:$0xf]
    %v9613 = vld [vmem:[#allocation12 + $0x10] sm:$0xf]
    %v9614 = vld [vmem:[#allocation12 + $0x14] sm:$0xf]
    %v9615 = vld [vmem:[#allocation12 + $0x18] sm:$0xf]
    %v9616 = vld [vmem:[#allocation12 + $0x1c] sm:$0xf]
    %v9617 = vld [vmem:[#allocation12 + $0x20] sm:$0xf]
    %v9618 = vld [vmem:[#allocation12 + $0x24] sm:$0xf]
    %v9619 = vld [vmem:[#allocation12 + $0x28] sm:$0xf]
    %v9620 = vld [vmem:[#allocation12 + $0x2c] sm:$0xf]
    %v9621 = vld [vmem:[#allocation12 + $0x30] sm:$0xf]
    %v9622 = vld [vmem:[#allocation12 + $0x34] sm:$0xf]
    %v9623 = vld [vmem:[#allocation12 + $0x38] sm:$0xf]
    %v9624 = vld [vmem:[#allocation12 + $0x3c] sm:$0xf]
    %v9625 = vld [vmem:[#allocation12 + $0x40] sm:$0xf]
    %v9626 = vld [vmem:[#allocation12 + $0x44] sm:$0xf]
    %v9627 = vld [vmem:[#allocation12 + $0x48] sm:$0xf]
    %v9628 = vld [vmem:[#allocation12 + $0x4c] sm:$0xf]
    %v9629 = vld [vmem:[#allocation12 + $0x50] sm:$0xf]
    %v9630 = vld [vmem:[#allocation12 + $0x54] sm:$0xf]
    %v9631 = vld [vmem:[#allocation12 + $0x58] sm:$0xf]
    %v9632 = vld [vmem:[#allocation12 + $0x5c] sm:$0xf]
    %v9633 = vld [vmem:[#allocation12 + $0x60] sm:$0xf]
    %v9634 = vld [vmem:[#allocation12 + $0x64] sm:$0xf]
    %v9635 = vld [vmem:[#allocation12 + $0x68] sm:$0xf]
    %v9636 = vld [vmem:[#allocation12 + $0x6c] sm:$0xf]
    %v9637 = vld [vmem:[#allocation12 + $0x70] sm:$0xf]
    %v9638 = vld [vmem:[#allocation12 + $0x74] sm:$0xf]
    %v9639 = vld [vmem:[#allocation12 + $0x78] sm:$0xf]
    %v9640 = vld [vmem:[#allocation12 + $0x7c] sm:$0xf]
    %v9641 = vld [vmem:[#allocation12 + $0x80] sm:$0xf]
    %v9642 = vld [vmem:[#allocation12 + $0x84] sm:$0xf]
    %v9643 = vld [vmem:[#allocation12 + $0x88] sm:$0xf]
    %v9644 = vld [vmem:[#allocation12 + $0x8c] sm:$0xf]
    %v9645 = vld [vmem:[#allocation12 + $0x90] sm:$0xf]
    %v9646 = vld [vmem:[#allocation12 + $0x94] sm:$0xf]
    %v9647 = vld [vmem:[#allocation12 + $0x98] sm:$0xf]
    %v9648 = vld [vmem:[#allocation12 + $0x9c] sm:$0xf]
    %v9649 = vld [vmem:[#allocation12 + $0xa0] sm:$0xf]
    %v9650 = vld [vmem:[#allocation12 + $0xa4] sm:$0xf]
    %v9651 = vld [vmem:[#allocation12 + $0xa8] sm:$0xf]
    %v9652 = vld [vmem:[#allocation12 + $0xac] sm:$0xf]
    %v9653 = vld [vmem:[#allocation12 + $0xb0] sm:$0xf]
    %v9654 = vld [vmem:[#allocation12 + $0xb4] sm:$0xf]
    %v9655 = vld [vmem:[#allocation12 + $0xb8] sm:$0xf]
    %v9656 = vld [vmem:[#allocation12 + $0xbc] sm:$0xf]
    %v9657 = vld [vmem:[#allocation12 + $0xc0] sm:$0xf]
    %v9658 = vld [vmem:[#allocation12 + $0xc4] sm:$0xf]
    %v9659 = vld [vmem:[#allocation12 + $0xc8] sm:$0xf]
    %v9660 = vld [vmem:[#allocation12 + $0xcc] sm:$0xf]
    %v9661 = vld [vmem:[#allocation12 + $0xd0] sm:$0xf]
    %v9662 = vld [vmem:[#allocation12 + $0xd4] sm:$0xf]
    %v9663 = vld [vmem:[#allocation12 + $0xd8] sm:$0xf]
    %v9664 = vld [vmem:[#allocation12 + $0xdc] sm:$0xf]
    %v9665 = vld [vmem:[#allocation12 + $0xe0] sm:$0xf]
    %v9666 = vld [vmem:[#allocation12 + $0xe4] sm:$0xf]
    %v9667 = vld [vmem:[#allocation12 + $0xe8] sm:$0xf]
    %v9668 = vld [vmem:[#allocation12 + $0xec] sm:$0xf]
    %v9669 = vld [vmem:[#allocation12 + $0xf0] sm:$0xf]
    %v9670 = vld [vmem:[#allocation12 + $0xf4] sm:$0xf]
    %v9671 = vld [vmem:[#allocation12 + $0xf8] sm:$0xf]
    %v9672 = vld [vmem:[#allocation12 + $0xfc] sm:$0xf]
    %v9673 = vld [vmem:[#allocation12 + $0x100] sm:$0xf]
    %v9674 = vld [vmem:[#allocation12 + $0x104] sm:$0xf]
    %v9675 = vld [vmem:[#allocation12 + $0x108] sm:$0xf]
    %v9676 = vld [vmem:[#allocation12 + $0x10c] sm:$0xf]
    %v9677 = vld [vmem:[#allocation12 + $0x110] sm:$0xf]
    %v9678 = vld [vmem:[#allocation12 + $0x114] sm:$0xf]
    %v9679 = vld [vmem:[#allocation12 + $0x118] sm:$0xf]
    %v9680 = vld [vmem:[#allocation12 + $0x11c] sm:$0xf]
    %v9681 = vld [vmem:[#allocation12 + $0x120] sm:$0xf]
    %v9682 = vld [vmem:[#allocation12 + $0x124] sm:$0xf]
    %v9683 = vld [vmem:[#allocation12 + $0x128] sm:$0xf]
    %v9684 = vld [vmem:[#allocation12 + $0x12c] sm:$0xf]
    %v9685 = vld [vmem:[#allocation12 + $0x130] sm:$0xf]
    %v9686 = vld [vmem:[#allocation12 + $0x134] sm:$0xf]
    %v9687 = vld [vmem:[#allocation12 + $0x138] sm:$0xf]
    %v9688 = vld [vmem:[#allocation12 + $0x13c] sm:$0xf]
    %v9689 = vld [vmem:[#allocation12 + $0x140] sm:$0xf]
    %v9690 = vld [vmem:[#allocation12 + $0x144] sm:$0xf]
    %v9691 = vld [vmem:[#allocation12 + $0x148] sm:$0xf]
    %v9692 = vld [vmem:[#allocation12 + $0x14c] sm:$0xf]
    %v9693 = vld [vmem:[#allocation12 + $0x150] sm:$0xf]
    %v9694 = vld [vmem:[#allocation12 + $0x154] sm:$0xf]
    %v9695 = vld [vmem:[#allocation12 + $0x158] sm:$0xf]
    %v9696 = vld [vmem:[#allocation12 + $0x15c] sm:$0xf]
    %v9697 = vld [vmem:[#allocation12 + $0x160] sm:$0xf]
    %v9698 = vld [vmem:[#allocation12 + $0x164] sm:$0xf]
    %v9699 = vld [vmem:[#allocation12 + $0x168] sm:$0xf]
    %v9700 = vld [vmem:[#allocation12 + $0x16c] sm:$0xf]
    %v9701 = vld [vmem:[#allocation12 + $0x170] sm:$0xf]
    %v9702 = vld [vmem:[#allocation12 + $0x174] sm:$0xf]
    %v9703 = vld [vmem:[#allocation12 + $0x178] sm:$0xf]
    %v9704 = vld [vmem:[#allocation12 + $0x17c] sm:$0xf]
    %v9705 = vld [vmem:[#allocation12 + $0x180] sm:$0xf]
    %v9706 = vld [vmem:[#allocation12 + $0x184] sm:$0xf]
    %v9707 = vld [vmem:[#allocation12 + $0x188] sm:$0xf]
    %v9708 = vld [vmem:[#allocation12 + $0x18c] sm:$0xf]
    %v9709 = vld [vmem:[#allocation12 + $0x190] sm:$0xf]
    %v9710 = vld [vmem:[#allocation12 + $0x194] sm:$0xf]
    %v9711 = vld [vmem:[#allocation12 + $0x198] sm:$0xf]
    %v9712 = vld [vmem:[#allocation12 + $0x19c] sm:$0xf]
    %v9713 = vld [vmem:[#allocation12 + $0x1a0] sm:$0xf]
    %v9714 = vld [vmem:[#allocation12 + $0x1a4] sm:$0xf]
    %v9715 = vld [vmem:[#allocation12 + $0x1a8] sm:$0xf]
    %v9716 = vld [vmem:[#allocation12 + $0x1ac] sm:$0xf]
    %v9717 = vld [vmem:[#allocation12 + $0x1b0] sm:$0xf]
    %v9718 = vld [vmem:[#allocation12 + $0x1b4] sm:$0xf]
    %v9719 = vld [vmem:[#allocation12 + $0x1b8] sm:$0xf]
    %v9720 = vld [vmem:[#allocation12 + $0x1bc] sm:$0xf]
    %v9721 = vld [vmem:[#allocation12 + $0x1c0] sm:$0xf]
    %v9722 = vld [vmem:[#allocation12 + $0x1c4] sm:$0xf]
    %v9723 = vld [vmem:[#allocation12 + $0x1c8] sm:$0xf]
    %v9724 = vld [vmem:[#allocation12 + $0x1cc] sm:$0xf]
    %v9725 = vld [vmem:[#allocation12 + $0x1d0] sm:$0xf]
    %v9726 = vld [vmem:[#allocation12 + $0x1d4] sm:$0xf]
    %v9727 = vld [vmem:[#allocation12 + $0x1d8] sm:$0xf]
    %v9728 = vld [vmem:[#allocation12 + $0x1dc] sm:$0xf]
    %v9729 = vld [vmem:[#allocation12 + $0x1e0] sm:$0xf]
    %v9730 = vld [vmem:[#allocation12 + $0x1e4] sm:$0xf]
    %v9731 = vld [vmem:[#allocation12 + $0x1e8] sm:$0xf]
    %v9732 = vld [vmem:[#allocation12 + $0x1ec] sm:$0xf]
    %v9733 = vld [vmem:[#allocation12 + $0x1f0] sm:$0xf]
    %v9734 = vld [vmem:[#allocation12 + $0x1f4] sm:$0xf]
    %v9735 = vld [vmem:[#allocation12 + $0x1f8] sm:$0xf]
    %v9736 = vld [vmem:[#allocation12 + $0x1fc] sm:$0xf]
    %v9737 = vld [vmem:[#allocation14] sm:$0x1]
    %p9738 = scmp.eq.s32.totalorder 0, 0
    %s9739 = scalar_select %p9738, 1, 0
    %s9740 = scvt.s32.f32 %s9739
    %v9741 = vstv %s9740
    %v9742 = vmul.f32 %v9737, %v9741
    %v9744 = vlaneseq
    %v9745 = vshrl.u32 %v9744, 7
    %v9746 = vsub.s32 0, %v9745
    %v9747 = vrot.slane %v9742, %v9746
    %v9877 = vunpack.c.l.b16 %v9609
    %v9878 = vunpack.c.l.b16 %v9610
    %v9879 = vunpack.c.l.b16 %v9611
    %v9880 = vunpack.c.l.b16 %v9612
    %v9881 = vunpack.c.l.b16 %v9613
    %v9882 = vunpack.c.l.b16 %v9614
    %v9883 = vunpack.c.l.b16 %v9615
    %v9884 = vunpack.c.l.b16 %v9616
    %v9885 = vunpack.c.l.b16 %v9617
    %v9886 = vunpack.c.l.b16 %v9618
    %v9887 = vunpack.c.l.b16 %v9619
    %v9888 = vunpack.c.l.b16 %v9620
    %v9889 = vunpack.c.l.b16 %v9621
    %v9890 = vunpack.c.l.b16 %v9622
    %v9891 = vunpack.c.l.b16 %v9623
    %v9892 = vunpack.c.l.b16 %v9624
    %v9893 = vunpack.c.l.b16 %v9625
    %v9894 = vunpack.c.l.b16 %v9626
    %v9895 = vunpack.c.l.b16 %v9627
    %v9896 = vunpack.c.l.b16 %v9628
    %v9897 = vunpack.c.l.b16 %v9629
    %v9898 = vunpack.c.l.b16 %v9630
    %v9899 = vunpack.c.l.b16 %v9631
    %v9900 = vunpack.c.l.b16 %v9632
    %v9901 = vunpack.c.l.b16 %v9633
    %v9902 = vunpack.c.l.b16 %v9634
    %v9903 = vunpack.c.l.b16 %v9635
    %v9904 = vunpack.c.l.b16 %v9636
    %v9905 = vunpack.c.l.b16 %v9637
    %v9906 = vunpack.c.l.b16 %v9638
    %v9907 = vunpack.c.l.b16 %v9639
    %v9908 = vunpack.c.l.b16 %v9640
    %v9909 = vunpack.c.l.b16 %v9641
    %v9910 = vunpack.c.l.b16 %v9642
    %v9911 = vunpack.c.l.b16 %v9643
    %v9912 = vunpack.c.l.b16 %v9644
    %v9913 = vunpack.c.l.b16 %v9645
    %v9914 = vunpack.c.l.b16 %v9646
    %v9915 = vunpack.c.l.b16 %v9647
    %v9916 = vunpack.c.l.b16 %v9648
    %v9917 = vunpack.c.l.b16 %v9649
    %v9918 = vunpack.c.l.b16 %v9650
    %v9919 = vunpack.c.l.b16 %v9651
    %v9920 = vunpack.c.l.b16 %v9652
    %v9921 = vunpack.c.l.b16 %v9653
    %v9922 = vunpack.c.l.b16 %v9654
    %v9923 = vunpack.c.l.b16 %v9655
    %v9924 = vunpack.c.l.b16 %v9656
    %v9925 = vunpack.c.l.b16 %v9657
    %v9926 = vunpack.c.l.b16 %v9658
    %v9927 = vunpack.c.l.b16 %v9659
    %v9928 = vunpack.c.l.b16 %v9660
    %v9929 = vunpack.c.l.b16 %v9661
    %v9930 = vunpack.c.l.b16 %v9662
    %v9931 = vunpack.c.l.b16 %v9663
    %v9932 = vunpack.c.l.b16 %v9664
    %v9933 = vunpack.c.l.b16 %v9665
    %v9934 = vunpack.c.l.b16 %v9666
    %v9935 = vunpack.c.l.b16 %v9667
    %v9936 = vunpack.c.l.b16 %v9668
    %v9937 = vunpack.c.l.b16 %v9669
    %v9938 = vunpack.c.l.b16 %v9670
    %v9939 = vunpack.c.l.b16 %v9671
    %v9940 = vunpack.c.l.b16 %v9672
    %v9941 = vunpack.c.l.b16 %v9673
    %v9942 = vunpack.c.l.b16 %v9674
    %v9943 = vunpack.c.l.b16 %v9675
    %v9944 = vunpack.c.l.b16 %v9676
    %v9945 = vunpack.c.l.b16 %v9677
    %v9946 = vunpack.c.l.b16 %v9678
    %v9947 = vunpack.c.l.b16 %v9679
    %v9948 = vunpack.c.l.b16 %v9680
    %v9949 = vunpack.c.l.b16 %v9681
    %v9950 = vunpack.c.l.b16 %v9682
    %v9951 = vunpack.c.l.b16 %v9683
    %v9952 = vunpack.c.l.b16 %v9684
    %v9953 = vunpack.c.l.b16 %v9685
    %v9954 = vunpack.c.l.b16 %v9686
    %v9955 = vunpack.c.l.b16 %v9687
    %v9956 = vunpack.c.l.b16 %v9688
    %v9957 = vunpack.c.l.b16 %v9689
    %v9958 = vunpack.c.l.b16 %v9690
    %v9959 = vunpack.c.l.b16 %v9691
    %v9960 = vunpack.c.l.b16 %v9692
    %v9961 = vunpack.c.l.b16 %v9693
    %v9962 = vunpack.c.l.b16 %v9694
    %v9963 = vunpack.c.l.b16 %v9695
    %v9964 = vunpack.c.l.b16 %v9696
    %v9965 = vunpack.c.l.b16 %v9697
    %v9966 = vunpack.c.l.b16 %v9698
    %v9967 = vunpack.c.l.b16 %v9699
    %v9968 = vunpack.c.l.b16 %v9700
    %v9969 = vunpack.c.l.b16 %v9701
    %v9970 = vunpack.c.l.b16 %v9702
    %v9971 = vunpack.c.l.b16 %v9703
    %v9972 = vunpack.c.l.b16 %v9704
    %v9973 = vunpack.c.l.b16 %v9705
    %v9974 = vunpack.c.l.b16 %v9706
    %v9975 = vunpack.c.l.b16 %v9707
    %v9976 = vunpack.c.l.b16 %v9708
    %v9977 = vunpack.c.l.b16 %v9709
    %v9978 = vunpack.c.l.b16 %v9710
    %v9979 = vunpack.c.l.b16 %v9711
    %v9980 = vunpack.c.l.b16 %v9712
    %v9981 = vunpack.c.l.b16 %v9713
    %v9982 = vunpack.c.l.b16 %v9714
    %v9983 = vunpack.c.l.b16 %v9715
    %v9984 = vunpack.c.l.b16 %v9716
    %v9985 = vunpack.c.l.b16 %v9717
    %v9986 = vunpack.c.l.b16 %v9718
    %v9987 = vunpack.c.l.b16 %v9719
    %v9988 = vunpack.c.l.b16 %v9720
    %v9989 = vunpack.c.l.b16 %v9721
    %v9990 = vunpack.c.l.b16 %v9722
    %v9991 = vunpack.c.l.b16 %v9723
    %v9992 = vunpack.c.l.b16 %v9724
    %v9993 = vunpack.c.l.b16 %v9725
    %v9994 = vunpack.c.l.b16 %v9726
    %v9995 = vunpack.c.l.b16 %v9727
    %v9996 = vunpack.c.l.b16 %v9728
    %v9997 = vunpack.c.l.b16 %v9729
    %v9998 = vunpack.c.l.b16 %v9730
    %v9999 = vunpack.c.l.b16 %v9731
    %v10000 = vunpack.c.l.b16 %v9732
    %v10001 = vunpack.c.l.b16 %v9733
    %v10002 = vunpack.c.l.b16 %v9734
    %v10003 = vunpack.c.l.b16 %v9735
    %v10004 = vunpack.c.l.b16 %v9736
    %v10005 = vpack.c.b16 %v9878, %v9877
    %v10006 = vpack.c.b16 %v9880, %v9879
    %v10007 = vpack.c.b16 %v9882, %v9881
    %v10008 = vpack.c.b16 %v9884, %v9883
    %v10009 = vpack.c.b16 %v9886, %v9885
    %v10010 = vpack.c.b16 %v9888, %v9887
    %v10011 = vpack.c.b16 %v9890, %v9889
    %v10012 = vpack.c.b16 %v9892, %v9891
    %v10013 = vpack.c.b16 %v9894, %v9893
    %v10014 = vpack.c.b16 %v9896, %v9895
    %v10015 = vpack.c.b16 %v9898, %v9897
    %v10016 = vpack.c.b16 %v9900, %v9899
    %v10017 = vpack.c.b16 %v9902, %v9901
    %v10018 = vpack.c.b16 %v9904, %v9903
    %v10019 = vpack.c.b16 %v9906, %v9905
    %v10020 = vpack.c.b16 %v9908, %v9907
    %v10021 = vpack.c.b16 %v9910, %v9909
    %v10022 = vpack.c.b16 %v9912, %v9911
    %v10023 = vpack.c.b16 %v9914, %v9913
    %v10024 = vpack.c.b16 %v9916, %v9915
    %v10025 = vpack.c.b16 %v9918, %v9917
    %v10026 = vpack.c.b16 %v9920, %v9919
    %v10027 = vpack.c.b16 %v9922, %v9921
    %v10028 = vpack.c.b16 %v9924, %v9923
    %v10029 = vpack.c.b16 %v9926, %v9925
    %v10030 = vpack.c.b16 %v9928, %v9927
    %v10031 = vpack.c.b16 %v9930, %v9929
    %v10032 = vpack.c.b16 %v9932, %v9931
    %v10033 = vpack.c.b16 %v9934, %v9933
    %v10034 = vpack.c.b16 %v9936, %v9935
    %v10035 = vpack.c.b16 %v9938, %v9937
    %v10036 = vpack.c.b16 %v9940, %v9939
    %v10037 = vpack.c.b16 %v9942, %v9941
    %v10038 = vpack.c.b16 %v9944, %v9943
    %v10039 = vpack.c.b16 %v9946, %v9945
    %v10040 = vpack.c.b16 %v9948, %v9947
    %v10041 = vpack.c.b16 %v9950, %v9949
    %v10042 = vpack.c.b16 %v9952, %v9951
    %v10043 = vpack.c.b16 %v9954, %v9953
    %v10044 = vpack.c.b16 %v9956, %v9955
    %v10045 = vpack.c.b16 %v9958, %v9957
    %v10046 = vpack.c.b16 %v9960, %v9959
    %v10047 = vpack.c.b16 %v9962, %v9961
    %v10048 = vpack.c.b16 %v9964, %v9963
    %v10049 = vpack.c.b16 %v9966, %v9965
    %v10050 = vpack.c.b16 %v9968, %v9967
    %v10051 = vpack.c.b16 %v9970, %v9969
    %v10052 = vpack.c.b16 %v9972, %v9971
    %v10053 = vpack.c.b16 %v9974, %v9973
    %v10054 = vpack.c.b16 %v9976, %v9975
    %v10055 = vpack.c.b16 %v9978, %v9977
    %v10056 = vpack.c.b16 %v9980, %v9979
    %v10057 = vpack.c.b16 %v9982, %v9981
    %v10058 = vpack.c.b16 %v9984, %v9983
    %v10059 = vpack.c.b16 %v9986, %v9985
    %v10060 = vpack.c.b16 %v9988, %v9987
    %v10061 = vpack.c.b16 %v9990, %v9989
    %v10062 = vpack.c.b16 %v9992, %v9991
    %v10063 = vpack.c.b16 %v9994, %v9993
    %v10064 = vpack.c.b16 %v9996, %v9995
    %v10065 = vpack.c.b16 %v9998, %v9997
    %v10066 = vpack.c.b16 %v10000, %v9999
    %v10067 = vpack.c.b16 %v10002, %v10001
    %v10068 = vpack.c.b16 %v10004, %v10003
    %10133 = vmatprep.subr.bf16.mxu0 0
    %10134 = vmatpush1.bf16.msra.mxu0 %v10005
    %10135 = vmatprep.subr.bf16.mxu0 0
    %10136 = vmatpush1.bf16.msra.mxu0 %v10006
    %10137 = vmatprep.subr.bf16.mxu0 0
    %10138 = vmatpush1.bf16.msra.mxu0 %v10007
    %10139 = vmatprep.subr.bf16.mxu0 0
    %10140 = vmatpush1.bf16.msra.mxu0 %v10008
    %10141 = vmatprep.subr.bf16.mxu0 0
    %10142 = vmatpush1.bf16.msra.mxu0 %v10009
    %10143 = vmatprep.subr.bf16.mxu0 0
    %10144 = vmatpush1.bf16.msra.mxu0 %v10010
    %10145 = vmatprep.subr.bf16.mxu0 0
    %10146 = vmatpush1.bf16.msra.mxu0 %v10011
    %10147 = vmatprep.subr.bf16.mxu0 0
    %10148 = vmatpush1.bf16.msra.mxu0 %v10012
    %10149 = vmatprep.subr.bf16.mxu0 0
    %10150 = vmatpush1.bf16.msra.mxu0 %v10013
    %10151 = vmatprep.subr.bf16.mxu0 0
    %10152 = vmatpush1.bf16.msra.mxu0 %v10014
    %10153 = vmatprep.subr.bf16.mxu0 0
    %10154 = vmatpush1.bf16.msra.mxu0 %v10015
    %10155 = vmatprep.subr.bf16.mxu0 0
    %10156 = vmatpush1.bf16.msra.mxu0 %v10016
    %10157 = vmatprep.subr.bf16.mxu0 0
    %10158 = vmatpush1.bf16.msra.mxu0 %v10017
    %10159 = vmatprep.subr.bf16.mxu0 0
    %10160 = vmatpush1.bf16.msra.mxu0 %v10018
    %10161 = vmatprep.subr.bf16.mxu0 0
    %10162 = vmatpush1.bf16.msra.mxu0 %v10019
    %10163 = vmatprep.subr.bf16.mxu0 0
    %10164 = vmatpush1.bf16.msra.mxu0 %v10020
    %10165 = vmatprep.mubr.bf16.mxu0 %v9602
    %10166 = vmatmul.mubr.bf16.gmra.mrb[0].mxu0 %v9601
    %v10167 = vpop.f32.mrb[0].mxu0
    %v10168 = vadd.f32 %v9747, %v10167
    %v10169 = vpop.f32.mrb[0].mxu0
    %v10170 = vpop.f32.mrb[0].mxu0
    %v10171 = vpop.f32.mrb[0].mxu0
    %10172 = vdwg.mxu0
    %10173 = vmatprep.subr.bf16.mxu0 0
    %10174 = vmatpush1.bf16.msra.mxu0 %v10021
    %10175 = vmatprep.subr.bf16.mxu0 0
    %10176 = vmatpush1.bf16.msra.mxu0 %v10022
    %10177 = vmatprep.subr.bf16.mxu0 0
    %10178 = vmatpush1.bf16.msra.mxu0 %v10023
    %10179 = vmatprep.subr.bf16.mxu0 0
    %10180 = vmatpush1.bf16.msra.mxu0 %v10024
    %10181 = vmatprep.subr.bf16.mxu0 0
    %10182 = vmatpush1.bf16.msra.mxu0 %v10025
    %10183 = vmatprep.subr.bf16.mxu0 0
    %10184 = vmatpush1.bf16.msra.mxu0 %v10026
    %10185 = vmatprep.subr.bf16.mxu0 0
    %10186 = vmatpush1.bf16.msra.mxu0 %v10027
    %10187 = vmatprep.subr.bf16.mxu0 0
    %10188 = vmatpush1.bf16.msra.mxu0 %v10028
    %10189 = vmatprep.subr.bf16.mxu0 0
    %10190 = vmatpush1.bf16.msra.mxu0 %v10029
    %10191 = vmatprep.subr.bf16.mxu0 0
    %10192 = vmatpush1.bf16.msra.mxu0 %v10030
    %10193 = vmatprep.subr.bf16.mxu0 0
    %10194 = vmatpush1.bf16.msra.mxu0 %v10031
    %10195 = vmatprep.subr.bf16.mxu0 0
    %10196 = vmatpush1.bf16.msra.mxu0 %v10032
    %10197 = vmatprep.subr.bf16.mxu0 0
    %10198 = vmatpush1.bf16.msra.mxu0 %v10033
    %10199 = vmatprep.subr.bf16.mxu0 0
    %10200 = vmatpush1.bf16.msra.mxu0 %v10034
    %10201 = vmatprep.subr.bf16.mxu0 0
    %10202 = vmatpush1.bf16.msra.mxu0 %v10035
    %10203 = vmatprep.subr.bf16.mxu0 0
    %10204 = vmatpush1.bf16.msra.mxu0 %v10036
    %10205 = vmatprep.mubr.bf16.mxu0 %v9604
    %10206 = vmatmul.mubr.bf16.gmra.mrb[0].mxu0 %v9603
    %v10207 = vpop.f32.mrb[0].mxu0
    %v10208 = vadd.f32 %v10168, %v10207
    %v10209 = vpop.f32.mrb[0].mxu0
    %v10210 = vpop.f32.mrb[0].mxu0
    %v10211 = vpop.f32.mrb[0].mxu0
    %10212 = vdwg.mxu0
    %10213 = vmatprep.subr.bf16.mxu0 0
    %10214 = vmatpush1.bf16.msra.mxu0 %v10037
    %10215 = vmatprep.subr.bf16.mxu0 0
    %10216 = vmatpush1.bf16.msra.mxu0 %v10038
    %10217 = vmatprep.subr.bf16.mxu0 0
    %10218 = vmatpush1.bf16.msra.mxu0 %v10039
    %10219 = vmatprep.subr.bf16.mxu0 0
    %10220 = vmatpush1.bf16.msra.mxu0 %v10040
    %10221 = vmatprep.subr.bf16.mxu0 0
    %10222 = vmatpush1.bf16.msra.mxu0 %v10041
    %10223 = vmatprep.subr.bf16.mxu0 0
    %10224 = vmatpush1.bf16.msra.mxu0 %v10042
    %10225 = vmatprep.subr.bf16.mxu0 0
    %10226 = vmatpush1.bf16.msra.mxu0 %v10043
    %10227 = vmatprep.subr.bf16.mxu0 0
    %10228 = vmatpush1.bf16.msra.mxu0 %v10044
    %10229 = vmatprep.subr.bf16.mxu0 0
    %10230 = vmatpush1.bf16.msra.mxu0 %v10045
    %10231 = vmatprep.subr.bf16.mxu0 0
    %10232 = vmatpush1.bf16.msra.mxu0 %v10046
    %10233 = vmatprep.subr.bf16.mxu0 0
    %10234 = vmatpush1.bf16.msra.mxu0 %v10047
    %10235 = vmatprep.subr.bf16.mxu0 0
    %10236 = vmatpush1.bf16.msra.mxu0 %v10048
    %10237 = vmatprep.subr.bf16.mxu0 0
    %10238 = vmatpush1.bf16.msra.mxu0 %v10049
    %10239 = vmatprep.subr.bf16.mxu0 0
    %10240 = vmatpush1.bf16.msra.mxu0 %v10050
    %10241 = vmatprep.subr.bf16.mxu0 0
    %10242 = vmatpush1.bf16.msra.mxu0 %v10051
    %10243 = vmatprep.subr.bf16.mxu0 0
    %10244 = vmatpush1.bf16.msra.mxu0 %v10052
    %10245 = vmatprep.mubr.bf16.mxu0 %v9606
    %10246 = vmatmul.mubr.bf16.gmra.mrb[0].mxu0 %v9605
    %v10247 = vpop.f32.mrb[0].mxu0
    %v10248 = vadd.f32 %v10208, %v10247
    %v10249 = vpop.f32.mrb[0].mxu0
    %v10250 = vpop.f32.mrb[0].mxu0
    %v10251 = vpop.f32.mrb[0].mxu0
    %10252 = vdwg.mxu0
    %10253 = vmatprep.subr.bf16.mxu0 0
    %10254 = vmatpush1.bf16.msra.mxu0 %v10053
    %10255 = vmatprep.subr.bf16.mxu0 0
    %10256 = vmatpush1.bf16.msra.mxu0 %v10054
    %10257 = vmatprep.subr.bf16.mxu0 0
    %10258 = vmatpush1.bf16.msra.mxu0 %v10055
    %10259 = vmatprep.subr.bf16.mxu0 0
    %10260 = vmatpush1.bf16.msra.mxu0 %v10056
    %10261 = vmatprep.subr.bf16.mxu0 0
    %10262 = vmatpush1.bf16.msra.mxu0 %v10057
    %10263 = vmatprep.subr.bf16.mxu0 0
    %10264 = vmatpush1.bf16.msra.mxu0 %v10058
    %10265 = vmatprep.subr.bf16.mxu0 0
    %10266 = vmatpush1.bf16.msra.mxu0 %v10059
    %10267 = vmatprep.subr.bf16.mxu0 0
    %10268 = vmatpush1.bf16.msra.mxu0 %v10060
    %10269 = vmatprep.subr.bf16.mxu0 0
    %10270 = vmatpush1.bf16.msra.mxu0 %v10061
    %10271 = vmatprep.subr.bf16.mxu0 0
    %10272 = vmatpush1.bf16.msra.mxu0 %v10062
    %10273 = vmatprep.subr.bf16.mxu0 0
    %10274 = vmatpush1.bf16.msra.mxu0 %v10063
    %10275 = vmatprep.subr.bf16.mxu0 0
    %10276 = vmatpush1.bf16.msra.mxu0 %v10064
    %10277 = vmatprep.subr.bf16.mxu0 0
    %10278 = vmatpush1.bf16.msra.mxu0 %v10065
    %10279 = vmatprep.subr.bf16.mxu0 0
    %10280 = vmatpush1.bf16.msra.mxu0 %v10066
    %10281 = vmatprep.subr.bf16.mxu0 0
    %10282 = vmatpush1.bf16.msra.mxu0 %v10067
    %10283 = vmatprep.subr.bf16.mxu0 0
    %10284 = vmatpush1.bf16.msra.mxu0 %v10068
    %10285 = vmatprep.mubr.bf16.mxu0 %v9608
    %10286 = vmatmul.mubr.bf16.gmra.mrb[0].mxu0 %v9607
    %v10287 = vpop.f32.mrb[0].mxu0
    %v10288 = vadd.f32 %v10248, %v10287
    %v10289 = vpop.f32.mrb[0].mxu0
    %v10290 = vpop.f32.mrb[0].mxu0
    %v10291 = vpop.f32.mrb[0].mxu0
    %10292 = vdwg.mxu0
    %10293 = vst [vmem:[#allocation15] sm:$0x3] %v10288
    // Predicated region
    $region62: #{inception_aux_forward.1} parent=1 // pred_check
      _
    $region63: #{inception_aux_forward.1} parent=1 // pred_check_branch
      %10295 = sbr.rel (0) target = $region65
    $region64: #{inception_aux_forward.1} parent=1 // pred_region
      %s10297 = ssub.s32 32, 32
      %10298 = vsyncadd [#allocation5], %s10297
      %s10300 = sshll.u32 [#allocation15], 4
      %s10301 = int_to_ptr.vmem [resolvable:$true] %s10300
      %10303 = dma.vmem_to_hbm [thread:$0]  %s10301, 32, %s8, [#allocation5]
    $region65: #{inception_aux_forward.1} parent=1 // pred_fallthru
      _
    // Predicated region
    $region66: #{inception_aux_forward.1} parent=1 // pred_check
      _
    $region67: #{inception_aux_forward.1} parent=1 // pred_check_branch
      %10305 = sbr.rel (0) target = $region69
    $region68: #{inception_aux_forward.1} parent=1 // pred_region
      %10306 = dma.done [#allocation5], 32
    $region69: #{inception_aux_forward.1} parent=1 // pred_fallthru
      _
    %10307 = vsyncpa [#allocation4], 1
    %10308 = vsyncpa [#allocation7], 1
    %10309 = vsyncpa [#allocation10], 1
    %10310 = vsyncpa [#allocation13], 1
    %10311 = vsyncpa [#allocation5], 1

</llo_original>
